<compile_context>
chip_gen: v7x
topology: tpu7x:2x2x1
jax: 0.10.0
libtpu: 0.0.40
codegen_flags: <defaults>
</compile_context>

<pallas_src>
import numpy as np

import jax
import jax.numpy as jnp
from jax import lax
from jax.experimental import pallas as pl
from jax.experimental.pallas import tpu as pltpu


# ---------------------------------------------------------------------------
# In-kernel: one decoder stage = bilinear 2x upsample + 3x3 'same' conv + act.
#   a      : (B*H, Cin*W)        bf16   layout-2 activation (pre-upsample)
#   uh_refs: 3 refs (B*2H, B*H)  bf16   S_kh @ UH, batch block-diagonal
#   m_refs : 3 refs (Cin*W, Cout*2W) bf16  blockdiag_Cin(UWT) @ M_kh
#   b_ref  : (1, Cout*2W)        f32
# returns (B*2H, Cout*2W) in out_dtype.
# ---------------------------------------------------------------------------
def _vae_layer(a, uh_refs, m_refs, b_ref, *, act, out_dtype):
    acc = None
    for kh in range(3):
        # H-axis upsample fused with the conv kernel-row shift (+kh-1);
        # zero padding rows are baked into UH_kh.
        t = jnp.dot(uh_refs[kh][...], a, preferred_element_type=jnp.float32)
        # W-axis upsample fused with kernel row kh of the 3x3 'same' conv.
        p = jnp.dot(t.astype(jnp.bfloat16), m_refs[kh][...],
                    preferred_element_type=jnp.float32)
        acc = p if acc is None else acc + p
    acc = acc + b_ref[...]
    if act == "relu":
        out = jnp.maximum(acc, 0.0)
    else:
        # sigmoid: exp and approximate reciprocal both run on the EUP slot
        out = pl.reciprocal(1.0 + jnp.exp(-acc), approx=True)
    return out.astype(out_dtype)


def _decoder_kernel(x_ref, *refs):
    o_ref = refs[-1]
    c = refs[:-1]
    a = x_ref[0]                                            # (B*H0, C0*W0) bf16
    a = _vae_layer(a, c[0:3], c[3:6], c[6], act="relu", out_dtype=jnp.bfloat16)
    a = _vae_layer(a, c[7:10], c[10:13], c[13], act="relu", out_dtype=jnp.bfloat16)
    a = _vae_layer(a, c[14:17], c[17:20], c[20], act="sigmoid",
                   out_dtype=o_ref.dtype)
    # layout-2 -> NCHW: per-sample, per-channel lane-dense (H, W) plane stores
    bsz, cout, ho, wo = o_ref.shape
    for b in range(bsz):
        for co in range(cout):
            o_ref[b, co, :, :] = a[b * ho:(b + 1) * ho, co * wo:(co + 1) * wo]


# ---------------------------------------------------------------------------
# Host-side constant preparation (tiny; traceable under jit)
# ---------------------------------------------------------------------------
def _up_matrix_np(n):
    """(2n, n) 1D bilinear 2x upsample, align_corners=False, edge-clamped."""
    u = np.zeros((2 * n, n), np.float32)
    for i in range(n):
        u[2 * i, i] += 0.75
        u[2 * i, max(i - 1, 0)] += 0.25
        u[2 * i + 1, i] += 0.75
        u[2 * i + 1, min(i + 1, n - 1)] += 0.25
    return u


def _uh_shift(h, kh, batch):
    """bf16 (batch*2h, batch*h) block-diagonal of S_kh @ UH: H-upsample fused
    with the 3x3-conv kernel-row shift (+kh-1) including its zero edge rows."""
    uh = _up_matrix_np(h)                                   # (2h, h)
    shifted = np.zeros_like(uh)
    src = np.arange(2 * h) + kh - 1
    ok = (src >= 0) & (src < 2 * h)
    shifted[ok] = uh[src[ok]]
    out = np.zeros((batch * 2 * h, batch * h), np.float32)
    for b in range(batch):
        out[b * 2 * h:(b + 1) * 2 * h, b * h:(b + 1) * h] = shifted
    return jnp.asarray(out).astype(jnp.bfloat16)


def _fused_conv_matrices(wgt, w_in):
    """Three bf16 (Cin*w_in, Cout*2*w_in) matrices M'_kh that fuse the W-axis
    2x bilinear upsample with kernel row kh of the 3x3 'same' conv:
        M'_kh = blockdiag_Cin(UWT) @ M_kh,
        M_kh[ci*2W + w', co*2W + w] = wgt[co, ci, kh, kw]  iff  w' == w+kw-1."""
    cin, cout = wgt.shape[1], wgt.shape[0]
    wo = 2 * w_in
    uwt = jnp.asarray(_up_matrix_np(w_in).T)                # (w_in, 2*w_in)
    mats = []
    for kh in range(3):
        m = jnp.zeros((cin * w_in, cout * wo), jnp.float32)
        for kw in range(3):
            band = jnp.eye(wo, k=1 - kw, dtype=jnp.float32)
            m = m + jnp.kron(jnp.transpose(wgt[:, :, kh, kw]), uwt @ band)
        mats.append(m.astype(jnp.bfloat16))
    return mats


def _pick_batch_block(n, max_block=4):
    """Samples per grid step: raise matmul M toward the MXU tile size while
    keeping >= 2 grid steps (so both v7x TensorCores have work)."""
    for b in range(min(max_block, n), 1, -1):
        if n % b == 0 and n // b >= 2:
            return b
    return 1


# ---------------------------------------------------------------------------
# Full conv_decoder forward (single fused pallas_call)
# ---------------------------------------------------------------------------
def conv_decoder_forward(x, params):
    n, c0, h0, w0 = x.shape
    w1, b1 = params["w1"], params["b1"]
    w2, b2 = params["w2"], params["b2"]
    w3, b3 = params["w3"], params["b3"]
    c3 = w3.shape[0]

    h1, wd1 = 2 * h0, 2 * w0          # conv1 input spatial size
    h2, wd2 = 2 * h1, 2 * wd1         # conv2 input spatial size
    h3, wd3 = 2 * h2, 2 * wd2         # conv3 input / output spatial size

    bsz = _pick_batch_block(n)        # samples per grid step
    n_steps = n // bsz

    consts = []
    for h_in, w_in, wgt, bias in ((h0, w0, w1, b1), (h1, wd1, w2, b2),
                                  (h2, wd2, w3, b3)):
        consts += [_uh_shift(h_in, kh, bsz) for kh in range(3)]
        consts += _fused_conv_matrices(wgt, w_in)
        consts.append(jnp.repeat(bias, 2 * w_in)[None, :].astype(jnp.float32))

    # layout-2 input, bsz samples stacked along rows: (n_steps, bsz*H0, C0*W0)
    x_l2 = jnp.transpose(x, (0, 2, 1, 3)).reshape(n, h0, c0 * w0)
    x_l2 = x_l2.reshape(n_steps, bsz * h0, c0 * w0).astype(jnp.bfloat16)

    def _const_spec(arr):
        return pl.BlockSpec(arr.shape, lambda i: (0,) * arr.ndim)

    out = pl.pallas_call(
        _decoder_kernel,
        out_shape=jax.ShapeDtypeStruct((n, c3, h3, wd3), jnp.float32),
        grid_spec=pl.GridSpec(
            grid=(n_steps,),
            in_specs=[pl.BlockSpec((1, bsz * h0, c0 * w0), lambda i: (i, 0, 0))]
                     + [_const_spec(a) for a in consts],
            out_specs=pl.BlockSpec((bsz, c3, h3, wd3), lambda i: (i, 0, 0, 0)),
        ),
        compiler_params=pltpu.CompilerParams(
            dimension_semantics=("parallel",),
            vmem_limit_bytes=32 * 1024 * 1024),
    )(x_l2, *consts)
    return out


# ---------------------------------------------------------------------------
# Pure-JAX reference (correctness check) and parameter init
# ---------------------------------------------------------------------------
def _upsample2x_ref(x):
    def up(a, axis):
        nax = a.shape[axis]
        left = jnp.concatenate([lax.slice_in_dim(a, 0, 1, axis=axis),
                                lax.slice_in_dim(a, 0, nax - 1, axis=axis)], axis=axis)
        right = jnp.concatenate([lax.slice_in_dim(a, 1, nax, axis=axis),
                                 lax.slice_in_dim(a, nax - 1, nax, axis=axis)], axis=axis)
        even = 0.25 * left + 0.75 * a
        odd = 0.75 * a + 0.25 * right
        out = jnp.stack([even, odd], axis=axis + 1)
        return out.reshape(a.shape[:axis] + (2 * nax,) + a.shape[axis + 1:])
    return up(up(x, 2), 3)


def _conv_ref(x, w, b):
    y = lax.conv_general_dilated(x, w, (1, 1), "SAME",
                                 dimension_numbers=("NCHW", "OIHW", "NCHW"))
    return y + b[None, :, None, None]


def conv_decoder_reference(x, params):
    a = jax.nn.relu(_conv_ref(_upsample2x_ref(x), params["w1"], params["b1"]))
    a = jax.nn.relu(_conv_ref(_upsample2x_ref(a), params["w2"], params["b2"]))
    return jax.nn.sigmoid(_conv_ref(_upsample2x_ref(a), params["w3"], params["b3"]))


def init_params(key, latent_dim, hidden_dim_1, hidden_dim_2, output_dim, k=3):
    ks = jax.random.split(key, 6)

    def conv_init(kw_, kb_, cout, cin):
        fan_in = cin * k * k
        bound = float(1.0 / np.sqrt(fan_in))
        w = jax.random.uniform(kw_, (cout, cin, k, k), jnp.float32, -bound, bound)
        b = jax.random.uniform(kb_, (cout,), jnp.float32, -bound, bound)
        return w, b

    w1, b1 = conv_init(ks[0], ks[1], hidden_dim_1, latent_dim)
    w2, b2 = conv_init(ks[2], ks[3], hidden_dim_2, hidden_dim_1)
    w3, b3 = conv_init(ks[4], ks[5], output_dim, hidden_dim_2)
    return {"w1": w1, "b1": b1, "w2": w2, "b2": b2, "w3": w3, "b3": b3}


if __name__ == "__main__":
    key = jax.random.PRNGKey(0)
    k_x, k_p, k_x2 = jax.random.split(key, 3)

    latent_dim, hidden_dim_1, hidden_dim_2, output_dim = 4, 8, 8, 3
    N, H, W = 2, 16, 16

    x = jax.random.normal(k_x, (N, latent_dim, H, W), jnp.float32)
    params = init_params(k_p, latent_dim, hidden_dim_1, hidden_dim_2, output_dim)

    fwd = jax.jit(conv_decoder_forward)
    ref_fn = jax.jit(conv_decoder_reference)

    out = jax.block_until_ready(fwd(x, params))
    assert out.shape == (N, output_dim, 8 * H, 8 * W), out.shape
    assert bool(jnp.all(jnp.isfinite(out)))
    # sigmoid range (approx reciprocal may overshoot 1.0 by ~2^-12)
    assert bool(jnp.all((out >= 0.0) & (out <= 1.0 + 1e-3)))
    ref = ref_fn(x, params)
    max_err = float(jnp.max(jnp.abs(out - ref)))
    assert max_err < 5e-2, max_err

    # Also exercise the multi-sample-per-grid-step path (bsz=2 at N=4).
    x4 = jax.random.normal(k_x2, (4, latent_dim, H, W), jnp.float32)
    out4 = jax.block_until_ready(fwd(x4, params))
    max_err4 = float(jnp.max(jnp.abs(out4 - ref_fn(x4, params))))
    assert max_err4 < 5e-2, max_err4

    print("KERNEL_OK")
</pallas_src>

<mosaic_0001>
module attributes {stable_mosaic.version = 11 : i64} {
  func.func @_decoder_kernel(%arg0: i32, %arg1: memref<1x16x64xbf16, #tpu.memory_space<vmem>>, %arg2: memref<32x16xbf16, #tpu.memory_space<vmem>>, %arg3: memref<32x16xbf16, #tpu.memory_space<vmem>>, %arg4: memref<32x16xbf16, #tpu.memory_space<vmem>>, %arg5: memref<64x256xbf16, #tpu.memory_space<vmem>>, %arg6: memref<64x256xbf16, #tpu.memory_space<vmem>>, %arg7: memref<64x256xbf16, #tpu.memory_space<vmem>>, %arg8: memref<1x256xf32, #tpu.memory_space<vmem>>, %arg9: memref<64x32xbf16, #tpu.memory_space<vmem>>, %arg10: memref<64x32xbf16, #tpu.memory_space<vmem>>, %arg11: memref<64x32xbf16, #tpu.memory_space<vmem>>, %arg12: memref<256x512xbf16, #tpu.memory_space<vmem>>, %arg13: memref<256x512xbf16, #tpu.memory_space<vmem>>, %arg14: memref<256x512xbf16, #tpu.memory_space<vmem>>, %arg15: memref<1x512xf32, #tpu.memory_space<vmem>>, %arg16: memref<128x64xbf16, #tpu.memory_space<vmem>>, %arg17: memref<128x64xbf16, #tpu.memory_space<vmem>>, %arg18: memref<128x64xbf16, #tpu.memory_space<vmem>>, %arg19: memref<512x384xbf16, #tpu.memory_space<vmem>>, %arg20: memref<512x384xbf16, #tpu.memory_space<vmem>>, %arg21: memref<512x384xbf16, #tpu.memory_space<vmem>>, %arg22: memref<1x384xf32, #tpu.memory_space<vmem>>, %arg23: memref<1x3x128x128xf32, #tpu.memory_space<vmem>>) attributes {dimension_semantics = [#tpu.dimension_semantics<parallel>], iteration_bounds = array<i64: 2>, scalar_prefetch = 0 : i64, scratch_operands = 0 : i64, tpu.core_type = #tpu.core_type<tc>, window_params = [{transform_indices = @transform_0, window_bounds = array<i64: 1, 16, 64>}, {pipeline_mode = #tpu.pipeline_mode<synchronous>, transform_indices = @transform_1, window_bounds = array<i64: 32, 16>}, {pipeline_mode = #tpu.pipeline_mode<synchronous>, transform_indices = @transform_2, window_bounds = array<i64: 32, 16>}, {pipeline_mode = #tpu.pipeline_mode<synchronous>, transform_indices = @transform_3, window_bounds = array<i64: 32, 16>}, {pipeline_mode = #tpu.pipeline_mode<synchronous>, transform_indices = @transform_4, window_bounds = array<i64: 64, 256>}, {pipeline_mode = #tpu.pipeline_mode<synchronous>, transform_indices = @transform_5, window_bounds = array<i64: 64, 256>}, {pipeline_mode = #tpu.pipeline_mode<synchronous>, transform_indices = @transform_6, window_bounds = array<i64: 64, 256>}, {pipeline_mode = #tpu.pipeline_mode<synchronous>, transform_indices = @transform_7, window_bounds = array<i64: 1, 256>}, {pipeline_mode = #tpu.pipeline_mode<synchronous>, transform_indices = @transform_8, window_bounds = array<i64: 64, 32>}, {pipeline_mode = #tpu.pipeline_mode<synchronous>, transform_indices = @transform_9, window_bounds = array<i64: 64, 32>}, {pipeline_mode = #tpu.pipeline_mode<synchronous>, transform_indices = @transform_10, window_bounds = array<i64: 64, 32>}, {pipeline_mode = #tpu.pipeline_mode<synchronous>, transform_indices = @transform_11, window_bounds = array<i64: 256, 512>}, {pipeline_mode = #tpu.pipeline_mode<synchronous>, transform_indices = @transform_12, window_bounds = array<i64: 256, 512>}, {pipeline_mode = #tpu.pipeline_mode<synchronous>, transform_indices = @transform_13, window_bounds = array<i64: 256, 512>}, {pipeline_mode = #tpu.pipeline_mode<synchronous>, transform_indices = @transform_14, window_bounds = array<i64: 1, 512>}, {pipeline_mode = #tpu.pipeline_mode<synchronous>, transform_indices = @transform_15, window_bounds = array<i64: 128, 64>}, {pipeline_mode = #tpu.pipeline_mode<synchronous>, transform_indices = @transform_16, window_bounds = array<i64: 128, 64>}, {pipeline_mode = #tpu.pipeline_mode<synchronous>, transform_indices = @transform_17, window_bounds = array<i64: 128, 64>}, {pipeline_mode = #tpu.pipeline_mode<synchronous>, transform_indices = @transform_18, window_bounds = array<i64: 512, 384>}, {pipeline_mode = #tpu.pipeline_mode<synchronous>, transform_indices = @transform_19, window_bounds = array<i64: 512, 384>}, {pipeline_mode = #tpu.pipeline_mode<synchronous>, transform_indices = @transform_20, window_bounds = array<i64: 512, 384>}, {pipeline_mode = #tpu.pipeline_mode<synchronous>, transform_indices = @transform_21, window_bounds = array<i64: 1, 384>}, {transform_indices = @transform_22, window_bounds = array<i64: 1, 3, 128, 128>}]} {
    %c0 = arith.constant 0 : index
    %c0_0 = arith.constant 0 : index
    %c0_1 = arith.constant 0 : index
    %0 = vector.load %arg1[%c0, %c0_0, %c0_1] : memref<1x16x64xbf16, #tpu.memory_space<vmem>>, vector<1x16x64xbf16>
    %1 = vector.shape_cast %0 : vector<1x16x64xbf16> to vector<16x64xbf16>
    %c0_2 = arith.constant 0 : index
    %c0_3 = arith.constant 0 : index
    %2 = vector.load %arg2[%c0_2, %c0_3] : memref<32x16xbf16, #tpu.memory_space<vmem>>, vector<32x16xbf16>
    %cst = arith.constant dense<0.000000e+00> : vector<32x64xf32>
    %3 = tpu.matmul %2, %1, %cst {dimension_numbers = #tpu.dot_dimension_numbers<[1], [0], [0], [1], [0, 0, 1, 1], [], []>} : vector<32x16xbf16>, vector<16x64xbf16>, vector<32x64xf32> -> vector<32x64xf32>
    %4 = arith.truncf %3 : vector<32x64xf32> to vector<32x64xbf16>
    %c0_4 = arith.constant 0 : index
    %c0_5 = arith.constant 0 : index
    %5 = vector.load %arg5[%c0_4, %c0_5] : memref<64x256xbf16, #tpu.memory_space<vmem>>, vector<64x256xbf16>
    %cst_6 = arith.constant dense<0.000000e+00> : vector<32x256xf32>
    %6 = tpu.matmul %4, %5, %cst_6 {dimension_numbers = #tpu.dot_dimension_numbers<[1], [0], [0], [1], [0, 0, 1, 1], [], []>} : vector<32x64xbf16>, vector<64x256xbf16>, vector<32x256xf32> -> vector<32x256xf32>
    %c0_7 = arith.constant 0 : index
    %c0_8 = arith.constant 0 : index
    %7 = vector.load %arg3[%c0_7, %c0_8] : memref<32x16xbf16, #tpu.memory_space<vmem>>, vector<32x16xbf16>
    %cst_9 = arith.constant dense<0.000000e+00> : vector<32x64xf32>
    %8 = tpu.matmul %7, %1, %cst_9 {dimension_numbers = #tpu.dot_dimension_numbers<[1], [0], [0], [1], [0, 0, 1, 1], [], []>} : vector<32x16xbf16>, vector<16x64xbf16>, vector<32x64xf32> -> vector<32x64xf32>
    %9 = arith.truncf %8 : vector<32x64xf32> to vector<32x64xbf16>
    %c0_10 = arith.constant 0 : index
    %c0_11 = arith.constant 0 : index
    %10 = vector.load %arg6[%c0_10, %c0_11] : memref<64x256xbf16, #tpu.memory_space<vmem>>, vector<64x256xbf16>
    %cst_12 = arith.constant dense<0.000000e+00> : vector<32x256xf32>
    %11 = tpu.matmul %9, %10, %cst_12 {dimension_numbers = #tpu.dot_dimension_numbers<[1], [0], [0], [1], [0, 0, 1, 1], [], []>} : vector<32x64xbf16>, vector<64x256xbf16>, vector<32x256xf32> -> vector<32x256xf32>
    %12 = arith.addf %6, %11 : vector<32x256xf32>
    %c0_13 = arith.constant 0 : index
    %c0_14 = arith.constant 0 : index
    %13 = vector.load %arg4[%c0_13, %c0_14] : memref<32x16xbf16, #tpu.memory_space<vmem>>, vector<32x16xbf16>
    %cst_15 = arith.constant dense<0.000000e+00> : vector<32x64xf32>
    %14 = tpu.matmul %13, %1, %cst_15 {dimension_numbers = #tpu.dot_dimension_numbers<[1], [0], [0], [1], [0, 0, 1, 1], [], []>} : vector<32x16xbf16>, vector<16x64xbf16>, vector<32x64xf32> -> vector<32x64xf32>
    %15 = arith.truncf %14 : vector<32x64xf32> to vector<32x64xbf16>
    %c0_16 = arith.constant 0 : index
    %c0_17 = arith.constant 0 : index
    %16 = vector.load %arg7[%c0_16, %c0_17] : memref<64x256xbf16, #tpu.memory_space<vmem>>, vector<64x256xbf16>
    %cst_18 = arith.constant dense<0.000000e+00> : vector<32x256xf32>
    %17 = tpu.matmul %15, %16, %cst_18 {dimension_numbers = #tpu.dot_dimension_numbers<[1], [0], [0], [1], [0, 0, 1, 1], [], []>} : vector<32x64xbf16>, vector<64x256xbf16>, vector<32x256xf32> -> vector<32x256xf32>
    %18 = arith.addf %12, %17 : vector<32x256xf32>
    %c0_19 = arith.constant 0 : index
    %c0_20 = arith.constant 0 : index
    %19 = vector.load %arg8[%c0_19, %c0_20] : memref<1x256xf32, #tpu.memory_space<vmem>>, vector<1x256xf32>
    %20 = vector.broadcast %19 : vector<1x256xf32> to vector<32x256xf32>
    %21 = arith.addf %18, %20 : vector<32x256xf32>
    %cst_21 = arith.constant 0.000000e+00 : f32
    %22 = vector.broadcast %cst_21 : f32 to vector<32x256xf32>
    %23 = arith.maximumf %21, %22 : vector<32x256xf32>
    %24 = arith.truncf %23 : vector<32x256xf32> to vector<32x256xbf16>
    %c0_22 = arith.constant 0 : index
    %c0_23 = arith.constant 0 : index
    %25 = vector.load %arg9[%c0_22, %c0_23] : memref<64x32xbf16, #tpu.memory_space<vmem>>, vector<64x32xbf16>
    %cst_24 = arith.constant dense<0.000000e+00> : vector<64x256xf32>
    %26 = tpu.matmul %25, %24, %cst_24 {dimension_numbers = #tpu.dot_dimension_numbers<[1], [0], [0], [1], [0, 0, 1, 1], [], []>} : vector<64x32xbf16>, vector<32x256xbf16>, vector<64x256xf32> -> vector<64x256xf32>
    %27 = arith.truncf %26 : vector<64x256xf32> to vector<64x256xbf16>
    %c0_25 = arith.constant 0 : index
    %c0_26 = arith.constant 0 : index
    %28 = vector.load %arg12[%c0_25, %c0_26] : memref<256x512xbf16, #tpu.memory_space<vmem>>, vector<256x512xbf16>
    %cst_27 = arith.constant dense<0.000000e+00> : vector<64x512xf32>
    %29 = tpu.matmul %27, %28, %cst_27 {dimension_numbers = #tpu.dot_dimension_numbers<[1], [0], [0], [1], [0, 0, 1, 1], [], []>} : vector<64x256xbf16>, vector<256x512xbf16>, vector<64x512xf32> -> vector<64x512xf32>
    %c0_28 = arith.constant 0 : index
    %c0_29 = arith.constant 0 : index
    %30 = vector.load %arg10[%c0_28, %c0_29] : memref<64x32xbf16, #tpu.memory_space<vmem>>, vector<64x32xbf16>
    %cst_30 = arith.constant dense<0.000000e+00> : vector<64x256xf32>
    %31 = tpu.matmul %30, %24, %cst_30 {dimension_numbers = #tpu.dot_dimension_numbers<[1], [0], [0], [1], [0, 0, 1, 1], [], []>} : vector<64x32xbf16>, vector<32x256xbf16>, vector<64x256xf32> -> vector<64x256xf32>
    %32 = arith.truncf %31 : vector<64x256xf32> to vector<64x256xbf16>
    %c0_31 = arith.constant 0 : index
    %c0_32 = arith.constant 0 : index
    %33 = vector.load %arg13[%c0_31, %c0_32] : memref<256x512xbf16, #tpu.memory_space<vmem>>, vector<256x512xbf16>
    %cst_33 = arith.constant dense<0.000000e+00> : vector<64x512xf32>
    %34 = tpu.matmul %32, %33, %cst_33 {dimension_numbers = #tpu.dot_dimension_numbers<[1], [0], [0], [1], [0, 0, 1, 1], [], []>} : vector<64x256xbf16>, vector<256x512xbf16>, vector<64x512xf32> -> vector<64x512xf32>
    %35 = arith.addf %29, %34 : vector<64x512xf32>
    %c0_34 = arith.constant 0 : index
    %c0_35 = arith.constant 0 : index
    %36 = vector.load %arg11[%c0_34, %c0_35] : memref<64x32xbf16, #tpu.memory_space<vmem>>, vector<64x32xbf16>
    %cst_36 = arith.constant dense<0.000000e+00> : vector<64x256xf32>
    %37 = tpu.matmul %36, %24, %cst_36 {dimension_numbers = #tpu.dot_dimension_numbers<[1], [0], [0], [1], [0, 0, 1, 1], [], []>} : vector<64x32xbf16>, vector<32x256xbf16>, vector<64x256xf32> -> vector<64x256xf32>
    %38 = arith.truncf %37 : vector<64x256xf32> to vector<64x256xbf16>
    %c0_37 = arith.constant 0 : index
    %c0_38 = arith.constant 0 : index
    %39 = vector.load %arg14[%c0_37, %c0_38] : memref<256x512xbf16, #tpu.memory_space<vmem>>, vector<256x512xbf16>
    %cst_39 = arith.constant dense<0.000000e+00> : vector<64x512xf32>
    %40 = tpu.matmul %38, %39, %cst_39 {dimension_numbers = #tpu.dot_dimension_numbers<[1], [0], [0], [1], [0, 0, 1, 1], [], []>} : vector<64x256xbf16>, vector<256x512xbf16>, vector<64x512xf32> -> vector<64x512xf32>
    %41 = arith.addf %35, %40 : vector<64x512xf32>
    %c0_40 = arith.constant 0 : index
    %c0_41 = arith.constant 0 : index
    %42 = vector.load %arg15[%c0_40, %c0_41] : memref<1x512xf32, #tpu.memory_space<vmem>>, vector<1x512xf32>
    %43 = vector.broadcast %42 : vector<1x512xf32> to vector<64x512xf32>
    %44 = arith.addf %41, %43 : vector<64x512xf32>
    %cst_42 = arith.constant 0.000000e+00 : f32
    %45 = vector.broadcast %cst_42 : f32 to vector<64x512xf32>
    %46 = arith.maximumf %44, %45 : vector<64x512xf32>
    %47 = arith.truncf %46 : vector<64x512xf32> to vector<64x512xbf16>
    %c0_43 = arith.constant 0 : index
    %c0_44 = arith.constant 0 : index
    %48 = vector.load %arg16[%c0_43, %c0_44] : memref<128x64xbf16, #tpu.memory_space<vmem>>, vector<128x64xbf16>
    %cst_45 = arith.constant dense<0.000000e+00> : vector<128x512xf32>
    %49 = tpu.matmul %48, %47, %cst_45 {dimension_numbers = #tpu.dot_dimension_numbers<[1], [0], [0], [1], [0, 0, 1, 1], [], []>} : vector<128x64xbf16>, vector<64x512xbf16>, vector<128x512xf32> -> vector<128x512xf32>
    %50 = arith.truncf %49 : vector<128x512xf32> to vector<128x512xbf16>
    %c0_46 = arith.constant 0 : index
    %c0_47 = arith.constant 0 : index
    %51 = vector.load %arg19[%c0_46, %c0_47] : memref<512x384xbf16, #tpu.memory_space<vmem>>, vector<512x384xbf16>
    %cst_48 = arith.constant dense<0.000000e+00> : vector<128x384xf32>
    %52 = tpu.matmul %50, %51, %cst_48 {dimension_numbers = #tpu.dot_dimension_numbers<[1], [0], [0], [1], [0, 0, 1, 1], [], []>} : vector<128x512xbf16>, vector<512x384xbf16>, vector<128x384xf32> -> vector<128x384xf32>
    %c0_49 = arith.constant 0 : index
    %c0_50 = arith.constant 0 : index
    %53 = vector.load %arg17[%c0_49, %c0_50] : memref<128x64xbf16, #tpu.memory_space<vmem>>, vector<128x64xbf16>
    %cst_51 = arith.constant dense<0.000000e+00> : vector<128x512xf32>
    %54 = tpu.matmul %53, %47, %cst_51 {dimension_numbers = #tpu.dot_dimension_numbers<[1], [0], [0], [1], [0, 0, 1, 1], [], []>} : vector<128x64xbf16>, vector<64x512xbf16>, vector<128x512xf32> -> vector<128x512xf32>
    %55 = arith.truncf %54 : vector<128x512xf32> to vector<128x512xbf16>
    %c0_52 = arith.constant 0 : index
    %c0_53 = arith.constant 0 : index
    %56 = vector.load %arg20[%c0_52, %c0_53] : memref<512x384xbf16, #tpu.memory_space<vmem>>, vector<512x384xbf16>
    %cst_54 = arith.constant dense<0.000000e+00> : vector<128x384xf32>
    %57 = tpu.matmul %55, %56, %cst_54 {dimension_numbers = #tpu.dot_dimension_numbers<[1], [0], [0], [1], [0, 0, 1, 1], [], []>} : vector<128x512xbf16>, vector<512x384xbf16>, vector<128x384xf32> -> vector<128x384xf32>
    %58 = arith.addf %52, %57 : vector<128x384xf32>
    %c0_55 = arith.constant 0 : index
    %c0_56 = arith.constant 0 : index
    %59 = vector.load %arg18[%c0_55, %c0_56] : memref<128x64xbf16, #tpu.memory_space<vmem>>, vector<128x64xbf16>
    %cst_57 = arith.constant dense<0.000000e+00> : vector<128x512xf32>
    %60 = tpu.matmul %59, %47, %cst_57 {dimension_numbers = #tpu.dot_dimension_numbers<[1], [0], [0], [1], [0, 0, 1, 1], [], []>} : vector<128x64xbf16>, vector<64x512xbf16>, vector<128x512xf32> -> vector<128x512xf32>
    %61 = arith.truncf %60 : vector<128x512xf32> to vector<128x512xbf16>
    %c0_58 = arith.constant 0 : index
    %c0_59 = arith.constant 0 : index
    %62 = vector.load %arg21[%c0_58, %c0_59] : memref<512x384xbf16, #tpu.memory_space<vmem>>, vector<512x384xbf16>
    %cst_60 = arith.constant dense<0.000000e+00> : vector<128x384xf32>
    %63 = tpu.matmul %61, %62, %cst_60 {dimension_numbers = #tpu.dot_dimension_numbers<[1], [0], [0], [1], [0, 0, 1, 1], [], []>} : vector<128x512xbf16>, vector<512x384xbf16>, vector<128x384xf32> -> vector<128x384xf32>
    %64 = arith.addf %58, %63 : vector<128x384xf32>
    %c0_61 = arith.constant 0 : index
    %c0_62 = arith.constant 0 : index
    %65 = vector.load %arg22[%c0_61, %c0_62] : memref<1x384xf32, #tpu.memory_space<vmem>>, vector<1x384xf32>
    %66 = vector.broadcast %65 : vector<1x384xf32> to vector<128x384xf32>
    %67 = arith.addf %64, %66 : vector<128x384xf32>
    %cst_63 = arith.constant 0.000000e+00 : f32
    %68 = vector.broadcast %cst_63 : f32 to vector<128x384xf32>
    %69 = arith.subf %68, %67 : vector<128x384xf32>
    %70 = math.exp %69 : vector<128x384xf32>
    %cst_64 = arith.constant 1.000000e+00 : f32
    %71 = vector.broadcast %cst_64 : f32 to vector<128x384xf32>
    %72 = arith.addf %71, %70 : vector<128x384xf32>
    %73 = tpu.reciprocal %72 {approx = true} : vector<128x384xf32> -> vector<128x384xf32>
    %74 = vector.extract_strided_slice %73 {offsets = [0, 0], sizes = [128, 128], strides = [1, 1]} : vector<128x384xf32> to vector<128x128xf32>
    %c0_65 = arith.constant 0 : index
    %c0_66 = arith.constant 0 : index
    %c0_67 = arith.constant 0 : index
    %c0_68 = arith.constant 0 : index
    %75 = vector.load %arg23[%c0_65, %c0_66, %c0_67, %c0_68] : memref<1x3x128x128xf32, #tpu.memory_space<vmem>>, vector<1x1x128x128xf32>
    %76 = vector.shape_cast %75 : vector<1x1x128x128xf32> to vector<128x128xf32>
    %77 = vector.shape_cast %74 : vector<128x128xf32> to vector<1x1x128x128xf32>
    tpu.vector_store %arg23[%c0_65, %c0_66, %c0_67, %c0_68], %77 {strides = array<i32>} : memref<1x3x128x128xf32, #tpu.memory_space<vmem>>, vector<1x1x128x128xf32>,
    %78 = vector.extract_strided_slice %73 {offsets = [0, 128], sizes = [128, 128], strides = [1, 1]} : vector<128x384xf32> to vector<128x128xf32>
    %c0_69 = arith.constant 0 : index
    %c1 = arith.constant 1 : index
    %c0_70 = arith.constant 0 : index
    %c0_71 = arith.constant 0 : index
    %79 = vector.load %arg23[%c0_69, %c1, %c0_70, %c0_71] : memref<1x3x128x128xf32, #tpu.memory_space<vmem>>, vector<1x1x128x128xf32>
    %80 = vector.shape_cast %79 : vector<1x1x128x128xf32> to vector<128x128xf32>
    %81 = vector.shape_cast %78 : vector<128x128xf32> to vector<1x1x128x128xf32>
    tpu.vector_store %arg23[%c0_69, %c1, %c0_70, %c0_71], %81 {strides = array<i32>} : memref<1x3x128x128xf32, #tpu.memory_space<vmem>>, vector<1x1x128x128xf32>,
    %82 = vector.extract_strided_slice %73 {offsets = [0, 256], sizes = [128, 128], strides = [1, 1]} : vector<128x384xf32> to vector<128x128xf32>
    %c0_72 = arith.constant 0 : index
    %c2 = arith.constant 2 : index
    %c0_73 = arith.constant 0 : index
    %c0_74 = arith.constant 0 : index
    %83 = vector.load %arg23[%c0_72, %c2, %c0_73, %c0_74] : memref<1x3x128x128xf32, #tpu.memory_space<vmem>>, vector<1x1x128x128xf32>
    %84 = vector.shape_cast %83 : vector<1x1x128x128xf32> to vector<128x128xf32>
    %85 = vector.shape_cast %82 : vector<128x128xf32> to vector<1x1x128x128xf32>
    tpu.vector_store %arg23[%c0_72, %c2, %c0_73, %c0_74], %85 {strides = array<i32>} : memref<1x3x128x128xf32, #tpu.memory_space<vmem>>, vector<1x1x128x128xf32>,
    return
  }
  func.func @transform_0(%arg0: i32) -> (i32, i32, i32) {
    %c0_i32 = arith.constant 0 : i32
    %c0_i32_0 = arith.constant 0 : i32
    %c0_i32_1 = arith.constant 0 : i32
    return %arg0, %c0_i32, %c0_i32_0 : i32, i32, i32
  }
  func.func @transform_1(%arg0: i32) -> (i32, i32) {
    %c0_i32 = arith.constant 0 : i32
    %c0_i32_0 = arith.constant 0 : i32
    %c0_i32_1 = arith.constant 0 : i32
    return %c0_i32, %c0_i32_0 : i32, i32
  }
  func.func @transform_2(%arg0: i32) -> (i32, i32) {
    %c0_i32 = arith.constant 0 : i32
    %c0_i32_0 = arith.constant 0 : i32
    %c0_i32_1 = arith.constant 0 : i32
    return %c0_i32, %c0_i32_0 : i32, i32
  }
  func.func @transform_3(%arg0: i32) -> (i32, i32) {
    %c0_i32 = arith.constant 0 : i32
    %c0_i32_0 = arith.constant 0 : i32
    %c0_i32_1 = arith.constant 0 : i32
    return %c0_i32, %c0_i32_0 : i32, i32
  }
  func.func @transform_4(%arg0: i32) -> (i32, i32) {
    %c0_i32 = arith.constant 0 : i32
    %c0_i32_0 = arith.constant 0 : i32
    %c0_i32_1 = arith.constant 0 : i32
    return %c0_i32, %c0_i32_0 : i32, i32
  }
  func.func @transform_5(%arg0: i32) -> (i32, i32) {
    %c0_i32 = arith.constant 0 : i32
    %c0_i32_0 = arith.constant 0 : i32
    %c0_i32_1 = arith.constant 0 : i32
    return %c0_i32, %c0_i32_0 : i32, i32
  }
  func.func @transform_6(%arg0: i32) -> (i32, i32) {
    %c0_i32 = arith.constant 0 : i32
    %c0_i32_0 = arith.constant 0 : i32
    %c0_i32_1 = arith.constant 0 : i32
    return %c0_i32, %c0_i32_0 : i32, i32
  }
  func.func @transform_7(%arg0: i32) -> (i32, i32) {
    %c0_i32 = arith.constant 0 : i32
    %c0_i32_0 = arith.constant 0 : i32
    %c0_i32_1 = arith.constant 0 : i32
    return %c0_i32, %c0_i32_0 : i32, i32
  }
  func.func @transform_8(%arg0: i32) -> (i32, i32) {
    %c0_i32 = arith.constant 0 : i32
    %c0_i32_0 = arith.constant 0 : i32
    %c0_i32_1 = arith.constant 0 : i32
    return %c0_i32, %c0_i32_0 : i32, i32
  }
  func.func @transform_9(%arg0: i32) -> (i32, i32) {
    %c0_i32 = arith.constant 0 : i32
    %c0_i32_0 = arith.constant 0 : i32
    %c0_i32_1 = arith.constant 0 : i32
    return %c0_i32, %c0_i32_0 : i32, i32
  }
  func.func @transform_10(%arg0: i32) -> (i32, i32) {
    %c0_i32 = arith.constant 0 : i32
    %c0_i32_0 = arith.constant 0 : i32
    %c0_i32_1 = arith.constant 0 : i32
    return %c0_i32, %c0_i32_0 : i32, i32
  }
  func.func @transform_11(%arg0: i32) -> (i32, i32) {
    %c0_i32 = arith.constant 0 : i32
    %c0_i32_0 = arith.constant 0 : i32
    %c0_i32_1 = arith.constant 0 : i32
    return %c0_i32, %c0_i32_0 : i32, i32
  }
  func.func @transform_12(%arg0: i32) -> (i32, i32) {
    %c0_i32 = arith.constant 0 : i32
    %c0_i32_0 = arith.constant 0 : i32
    %c0_i32_1 = arith.constant 0 : i32
    return %c0_i32, %c0_i32_0 : i32, i32
  }
  func.func @transform_13(%arg0: i32) -> (i32, i32) {
    %c0_i32 = arith.constant 0 : i32
    %c0_i32_0 = arith.constant 0 : i32
    %c0_i32_1 = arith.constant 0 : i32
    return %c0_i32, %c0_i32_0 : i32, i32
  }
  func.func @transform_14(%arg0: i32) -> (i32, i32) {
    %c0_i32 = arith.constant 0 : i32
    %c0_i32_0 = arith.constant 0 : i32
    %c0_i32_1 = arith.constant 0 : i32
    return %c0_i32, %c0_i32_0 : i32, i32
  }
  func.func @transform_15(%arg0: i32) -> (i32, i32) {
    %c0_i32 = arith.constant 0 : i32
    %c0_i32_0 = arith.constant 0 : i32
    %c0_i32_1 = arith.constant 0 : i32
    return %c0_i32, %c0_i32_0 : i32, i32
  }
  func.func @transform_16(%arg0: i32) -> (i32, i32) {
    %c0_i32 = arith.constant 0 : i32
    %c0_i32_0 = arith.constant 0 : i32
    %c0_i32_1 = arith.constant 0 : i32
    return %c0_i32, %c0_i32_0 : i32, i32
  }
  func.func @transform_17(%arg0: i32) -> (i32, i32) {
    %c0_i32 = arith.constant 0 : i32
    %c0_i32_0 = arith.constant 0 : i32
    %c0_i32_1 = arith.constant 0 : i32
    return %c0_i32, %c0_i32_0 : i32, i32
  }
  func.func @transform_18(%arg0: i32) -> (i32, i32) {
    %c0_i32 = arith.constant 0 : i32
    %c0_i32_0 = arith.constant 0 : i32
    %c0_i32_1 = arith.constant 0 : i32
    return %c0_i32, %c0_i32_0 : i32, i32
  }
  func.func @transform_19(%arg0: i32) -> (i32, i32) {
    %c0_i32 = arith.constant 0 : i32
    %c0_i32_0 = arith.constant 0 : i32
    %c0_i32_1 = arith.constant 0 : i32
    return %c0_i32, %c0_i32_0 : i32, i32
  }
  func.func @transform_20(%arg0: i32) -> (i32, i32) {
    %c0_i32 = arith.constant 0 : i32
    %c0_i32_0 = arith.constant 0 : i32
    %c0_i32_1 = arith.constant 0 : i32
    return %c0_i32, %c0_i32_0 : i32, i32
  }
  func.func @transform_21(%arg0: i32) -> (i32, i32) {
    %c0_i32 = arith.constant 0 : i32
    %c0_i32_0 = arith.constant 0 : i32
    %c0_i32_1 = arith.constant 0 : i32
    return %c0_i32, %c0_i32_0 : i32, i32
  }
  func.func @transform_22(%arg0: i32) -> (i32, i32, i32, i32) {
    %c0_i32 = arith.constant 0 : i32
    %c0_i32_0 = arith.constant 0 : i32
    %c0_i32_1 = arith.constant 0 : i32
    %c0_i32_2 = arith.constant 0 : i32
    return %arg0, %c0_i32, %c0_i32_0, %c0_i32_1 : i32, i32, i32, i32
  }
}

</mosaic_0001>

<llo_original>
// kernel: conv_decoder_forward.1
$region0: #{conv_decoder_forward.1}
  #allocation0 [shape = 'u32[]', space=smem, size = 0x4, offset = 0x4, fixed_abs, tag = 'smem constant byte address 0x4 - core index']
  #allocation1 [shape = 'u32[144,128]{1,0:T(1,128)}', space=vmem, size = 0x12000, scoped, tag = 'internal scratch']
  %s0 = inlined_call_operand.vmem [shape: bf16[2,16,64], index: 0, kind: input, shape index: {}]
  %s1 = inlined_call_operand.vmem [shape: bf16[32,16], index: 1, kind: input, shape index: {}]
  %s2 = inlined_call_operand.vmem [shape: bf16[32,16], index: 2, kind: input, shape index: {}]
  %s3 = inlined_call_operand.vmem [shape: bf16[32,16], index: 3, kind: input, shape index: {}]
  %s4 = inlined_call_operand.vmem [shape: bf16[64,256], index: 4, kind: input, shape index: {}]
  %s5 = inlined_call_operand.vmem [shape: bf16[64,256], index: 5, kind: input, shape index: {}]
  %s6 = inlined_call_operand.vmem [shape: bf16[64,256], index: 6, kind: input, shape index: {}]
  %s7 = inlined_call_operand.vmem [shape: f32[1,256], index: 7, kind: input, shape index: {}]
  %s8 = inlined_call_operand.vmem [shape: bf16[64,32], index: 8, kind: input, shape index: {}]
  %s9 = inlined_call_operand.vmem [shape: bf16[64,32], index: 9, kind: input, shape index: {}]
  %s10 = inlined_call_operand.vmem [shape: bf16[64,32], index: 10, kind: input, shape index: {}]
  %s11 = inlined_call_operand.vmem [shape: bf16[256,512], index: 11, kind: input, shape index: {}]
  %s12 = inlined_call_operand.vmem [shape: bf16[256,512], index: 12, kind: input, shape index: {}]
  %s13 = inlined_call_operand.vmem [shape: bf16[256,512], index: 13, kind: input, shape index: {}]
  %s14 = inlined_call_operand.vmem [shape: f32[1,512], index: 14, kind: input, shape index: {}]
  %s15 = inlined_call_operand.vmem [shape: bf16[128,64], index: 15, kind: input, shape index: {}]
  %s16 = inlined_call_operand.vmem [shape: bf16[128,64], index: 16, kind: input, shape index: {}]
  %s17 = inlined_call_operand.vmem [shape: bf16[128,64], index: 17, kind: input, shape index: {}]
  %s18 = inlined_call_operand.vmem [shape: bf16[512,384], index: 18, kind: input, shape index: {}]
  %s19 = inlined_call_operand.vmem [shape: bf16[512,384], index: 19, kind: input, shape index: {}]
  %s20 = inlined_call_operand.vmem [shape: bf16[512,384], index: 20, kind: input, shape index: {}]
  %s21 = inlined_call_operand.vmem [shape: f32[1,384], index: 21, kind: input, shape index: {}]
  %s22 = inlined_call_operand.hbm [shape: f32[2,3,128,128], index: 22, kind: output, shape index: {}]
  %s23 = sld [smem:[#allocation0]]
  $region121: #{conv_decoder_forward.1} parent=0
    _
  %s25 = ssub.s32 1, %s23
  %s26 = scalar_select 0, %s25, %s23
  $region1: #{conv_decoder_forward.1} parent=0
    #allocation2 [shape = 'u8[393216]{0}', space=vmem, size = 0x60000, scoped, tag = 'output window, operand 0']
    #allocation3 [shape = 's32[2]{0}', space=sflag, size = 0x8, scoped, tag = 'scoped memory for conv_decoder_forward.1']
    %27 = vsyncpa [#allocation3], 0
    %s28 = scalar_lea.sflag [#allocation3], 1
    %29 = vsyncpa %s28, 0
    loop: start=0, step=1, limit=4
    $region2: #{conv_decoder_forward.1} parent=1 // loop_pre_header
      _
    $region3: #{conv_decoder_forward.1} parent=1 // loop_header
      %s31 = sphi 0, %s35
      %p32 = scmp.ge.s32.totalorder %s31, 4
      %s41 = sphi 0, %s43
      %s44 = sphi 0, %s41
      %s45 = sphi 0, %s44
      %s61 = sphi 0, %s45
      %s65 = sphi 0, %s65
      %s67 = sphi 0, %s65
      %s68 = sphi 0, %s67
      %s82 = sphi 0, %s68
      %s86 = sphi 0, %s86
      %s88 = sphi 0, %s86
      %s89 = sphi 0, %s88
      %s103 = sphi 0, %s89
      %s107 = sphi 0, %s107
      %s109 = sphi 0, %s107
      %s110 = sphi 0, %s109
      %s124 = sphi 0, %s110
      %s128 = sphi 0, %s128
      %s130 = sphi 0, %s128
      %s131 = sphi 0, %s130
      %s145 = sphi 0, %s131
      %s149 = sphi 0, %s149
      %s151 = sphi 0, %s149
      %s152 = sphi 0, %s151
      %s166 = sphi 0, %s152
      %s170 = sphi 0, %s170
      %s172 = sphi 0, %s170
      %s173 = sphi 0, %s172
      %s187 = sphi 0, %s173
      %s191 = sphi 0, %s191
      %s193 = sphi 0, %s191
      %s194 = sphi 0, %s193
      %s208 = sphi 0, %s194
      %s212 = sphi 0, %s212
      %s214 = sphi 0, %s212
      %s215 = sphi 0, %s214
      %s229 = sphi 0, %s215
      %s233 = sphi 0, %s233
      %s235 = sphi 0, %s233
      %s236 = sphi 0, %s235
      %s250 = sphi 0, %s236
      %s254 = sphi 0, %s254
      %s256 = sphi 0, %s254
      %s257 = sphi 0, %s256
      %s271 = sphi 0, %s257
      %s275 = sphi 0, %s275
      %s277 = sphi 0, %s275
      %s278 = sphi 0, %s277
      %s292 = sphi 0, %s278
      %s296 = sphi 0, %s296
      %s298 = sphi 0, %s296
      %s299 = sphi 0, %s298
      %s313 = sphi 0, %s299
      %s317 = sphi 0, %s317
      %s319 = sphi 0, %s317
      %s320 = sphi 0, %s319
      %s334 = sphi 0, %s320
      %s338 = sphi 0, %s338
      %s340 = sphi 0, %s338
      %s341 = sphi 0, %s340
      %s355 = sphi 0, %s341
      %s359 = sphi 0, %s359
      %s361 = sphi 0, %s359
      %s362 = sphi 0, %s361
      %s376 = sphi 0, %s362
      %s380 = sphi 0, %s380
      %s382 = sphi 0, %s380
      %s383 = sphi 0, %s382
      %s397 = sphi 0, %s383
      %s401 = sphi 0, %s401
      %s403 = sphi 0, %s401
      %s404 = sphi 0, %s403
      %s418 = sphi 0, %s404
      %s422 = sphi 0, %s422
      %s424 = sphi 0, %s422
      %s425 = sphi 0, %s424
      %s439 = sphi 0, %s425
      %s443 = sphi 0, %s443
      %s445 = sphi 0, %s443
      %s446 = sphi 0, %s445
      %s460 = sphi 0, %s446
      %s464 = sphi 0, %s464
      %s466 = sphi 0, %s464
      %s467 = sphi 0, %s466
      %s481 = sphi 0, %s467
      %s485 = sphi 0, %s485
      %s487 = sphi 0, %s485
      %s488 = sphi 0, %s487
      %s502 = sphi 0, %s488
      %s508 = sphi 0, %s510
      %s511 = sphi 0, %s508
      %s512 = sphi 0, %s511
      %s528 = sphi 0, %s512
    $region4: #{conv_decoder_forward.1} parent=1 // loop_header_branch
      %34 = sbr.rel (%p32) target = $region8
    $region5: #{conv_decoder_forward.1} parent=1 // loop_body
      %s36 = ssub.s32 %s31, 1
      %s37 = ssub.s32 %s31, 2
      %s38 = sadd.s32 %s31, 1
      %s39 = ssub.s32 %s31, %s38
      %p40 = scmp.eq.s32.totalorder %s39, 0
      %s42 = sadd.s32 %s41, 1
      %s43 = scalar_select %p40, %s41, %s42
      %p46 = pneg %p40
      %p47 = scmp.eq.s32.totalorder %s31, 1
      %p48 = por %p46, %p47
      %p49 = scmp.ne.s32.totalorder %s41, %s44
      %p50 = scmp.eq.s32.totalorder %s31, 0
      %p51 = por %p49, %p50
      %p52 = scmp.ne.s32.totalorder %s41, %s44
      %p53 = scmp.eq.s32.totalorder %s36, 1
      %p54 = por %p52, %p53
      %p55 = scmp.ne.s32.totalorder %s44, %s45
      %p56 = scmp.eq.s32.totalorder %s36, 0
      %p57 = por %p55, %p56
      %p58 = scmp.ne.s32.totalorder %s44, %s45
      %p59 = scmp.eq.s32.totalorder %s37, 1
      %p60 = por %p58, %p59
      %p62 = scmp.ne.s32.totalorder %s45, %s61
      %p63 = scmp.eq.s32.totalorder %s37, 0
      %p64 = por %p62, %p63
      %s66 = sadd.s32 %s65, 1
      %p69 = scmp.eq.s32.totalorder %s31, 1
      %p70 = scmp.ne.s32.totalorder %s65, %s67
      %p71 = scmp.eq.s32.totalorder %s31, 0
      %p72 = por %p70, %p71
      %p73 = scmp.ne.s32.totalorder %s65, %s67
      %p74 = scmp.eq.s32.totalorder %s36, 1
      %p75 = por %p73, %p74
      %p76 = scmp.ne.s32.totalorder %s67, %s68
      %p77 = scmp.eq.s32.totalorder %s36, 0
      %p78 = por %p76, %p77
      %p79 = scmp.ne.s32.totalorder %s67, %s68
      %p80 = scmp.eq.s32.totalorder %s37, 1
      %p81 = por %p79, %p80
      %p83 = scmp.ne.s32.totalorder %s68, %s82
      %p84 = scmp.eq.s32.totalorder %s37, 0
      %p85 = por %p83, %p84
      %s87 = sadd.s32 %s86, 1
      %p90 = scmp.eq.s32.totalorder %s31, 1
      %p91 = scmp.ne.s32.totalorder %s86, %s88
      %p92 = scmp.eq.s32.totalorder %s31, 0
      %p93 = por %p91, %p92
      %p94 = scmp.ne.s32.totalorder %s86, %s88
      %p95 = scmp.eq.s32.totalorder %s36, 1
      %p96 = por %p94, %p95
      %p97 = scmp.ne.s32.totalorder %s88, %s89
      %p98 = scmp.eq.s32.totalorder %s36, 0
      %p99 = por %p97, %p98
      %p100 = scmp.ne.s32.totalorder %s88, %s89
      %p101 = scmp.eq.s32.totalorder %s37, 1
      %p102 = por %p100, %p101
      %p104 = scmp.ne.s32.totalorder %s89, %s103
      %p105 = scmp.eq.s32.totalorder %s37, 0
      %p106 = por %p104, %p105
      %s108 = sadd.s32 %s107, 1
      %p111 = scmp.eq.s32.totalorder %s31, 1
      %p112 = scmp.ne.s32.totalorder %s107, %s109
      %p113 = scmp.eq.s32.totalorder %s31, 0
      %p114 = por %p112, %p113
      %p115 = scmp.ne.s32.totalorder %s107, %s109
      %p116 = scmp.eq.s32.totalorder %s36, 1
      %p117 = por %p115, %p116
      %p118 = scmp.ne.s32.totalorder %s109, %s110
      %p119 = scmp.eq.s32.totalorder %s36, 0
      %p120 = por %p118, %p119
      %p121 = scmp.ne.s32.totalorder %s109, %s110
      %p122 = scmp.eq.s32.totalorder %s37, 1
      %p123 = por %p121, %p122
      %p125 = scmp.ne.s32.totalorder %s110, %s124
      %p126 = scmp.eq.s32.totalorder %s37, 0
      %p127 = por %p125, %p126
      %s129 = sadd.s32 %s128, 1
      %p132 = scmp.eq.s32.totalorder %s31, 1
      %p133 = scmp.ne.s32.totalorder %s128, %s130
      %p134 = scmp.eq.s32.totalorder %s31, 0
      %p135 = por %p133, %p134
      %p136 = scmp.ne.s32.totalorder %s128, %s130
      %p137 = scmp.eq.s32.totalorder %s36, 1
      %p138 = por %p136, %p137
      %p139 = scmp.ne.s32.totalorder %s130, %s131
      %p140 = scmp.eq.s32.totalorder %s36, 0
      %p141 = por %p139, %p140
      %p142 = scmp.ne.s32.totalorder %s130, %s131
      %p143 = scmp.eq.s32.totalorder %s37, 1
      %p144 = por %p142, %p143
      %p146 = scmp.ne.s32.totalorder %s131, %s145
      %p147 = scmp.eq.s32.totalorder %s37, 0
      %p148 = por %p146, %p147
      %s150 = sadd.s32 %s149, 1
      %p153 = scmp.eq.s32.totalorder %s31, 1
      %p154 = scmp.ne.s32.totalorder %s149, %s151
      %p155 = scmp.eq.s32.totalorder %s31, 0
      %p156 = por %p154, %p155
      %p157 = scmp.ne.s32.totalorder %s149, %s151
      %p158 = scmp.eq.s32.totalorder %s36, 1
      %p159 = por %p157, %p158
      %p160 = scmp.ne.s32.totalorder %s151, %s152
      %p161 = scmp.eq.s32.totalorder %s36, 0
      %p162 = por %p160, %p161
      %p163 = scmp.ne.s32.totalorder %s151, %s152
      %p164 = scmp.eq.s32.totalorder %s37, 1
      %p165 = por %p163, %p164
      %p167 = scmp.ne.s32.totalorder %s152, %s166
      %p168 = scmp.eq.s32.totalorder %s37, 0
      %p169 = por %p167, %p168
      %s171 = sadd.s32 %s170, 1
      %p174 = scmp.eq.s32.totalorder %s31, 1
      %p175 = scmp.ne.s32.totalorder %s170, %s172
      %p176 = scmp.eq.s32.totalorder %s31, 0
      %p177 = por %p175, %p176
      %p178 = scmp.ne.s32.totalorder %s170, %s172
      %p179 = scmp.eq.s32.totalorder %s36, 1
      %p180 = por %p178, %p179
      %p181 = scmp.ne.s32.totalorder %s172, %s173
      %p182 = scmp.eq.s32.totalorder %s36, 0
      %p183 = por %p181, %p182
      %p184 = scmp.ne.s32.totalorder %s172, %s173
      %p185 = scmp.eq.s32.totalorder %s37, 1
      %p186 = por %p184, %p185
      %p188 = scmp.ne.s32.totalorder %s173, %s187
      %p189 = scmp.eq.s32.totalorder %s37, 0
      %p190 = por %p188, %p189
      %s192 = sadd.s32 %s191, 1
      %p195 = scmp.eq.s32.totalorder %s31, 1
      %p196 = scmp.ne.s32.totalorder %s191, %s193
      %p197 = scmp.eq.s32.totalorder %s31, 0
      %p198 = por %p196, %p197
      %p199 = scmp.ne.s32.totalorder %s191, %s193
      %p200 = scmp.eq.s32.totalorder %s36, 1
      %p201 = por %p199, %p200
      %p202 = scmp.ne.s32.totalorder %s193, %s194
      %p203 = scmp.eq.s32.totalorder %s36, 0
      %p204 = por %p202, %p203
      %p205 = scmp.ne.s32.totalorder %s193, %s194
      %p206 = scmp.eq.s32.totalorder %s37, 1
      %p207 = por %p205, %p206
      %p209 = scmp.ne.s32.totalorder %s194, %s208
      %p210 = scmp.eq.s32.totalorder %s37, 0
      %p211 = por %p209, %p210
      %s213 = sadd.s32 %s212, 1
      %p216 = scmp.eq.s32.totalorder %s31, 1
      %p217 = scmp.ne.s32.totalorder %s212, %s214
      %p218 = scmp.eq.s32.totalorder %s31, 0
      %p219 = por %p217, %p218
      %p220 = scmp.ne.s32.totalorder %s212, %s214
      %p221 = scmp.eq.s32.totalorder %s36, 1
      %p222 = por %p220, %p221
      %p223 = scmp.ne.s32.totalorder %s214, %s215
      %p224 = scmp.eq.s32.totalorder %s36, 0
      %p225 = por %p223, %p224
      %p226 = scmp.ne.s32.totalorder %s214, %s215
      %p227 = scmp.eq.s32.totalorder %s37, 1
      %p228 = por %p226, %p227
      %p230 = scmp.ne.s32.totalorder %s215, %s229
      %p231 = scmp.eq.s32.totalorder %s37, 0
      %p232 = por %p230, %p231
      %s234 = sadd.s32 %s233, 1
      %p237 = scmp.eq.s32.totalorder %s31, 1
      %p238 = scmp.ne.s32.totalorder %s233, %s235
      %p239 = scmp.eq.s32.totalorder %s31, 0
      %p240 = por %p238, %p239
      %p241 = scmp.ne.s32.totalorder %s233, %s235
      %p242 = scmp.eq.s32.totalorder %s36, 1
      %p243 = por %p241, %p242
      %p244 = scmp.ne.s32.totalorder %s235, %s236
      %p245 = scmp.eq.s32.totalorder %s36, 0
      %p246 = por %p244, %p245
      %p247 = scmp.ne.s32.totalorder %s235, %s236
      %p248 = scmp.eq.s32.totalorder %s37, 1
      %p249 = por %p247, %p248
      %p251 = scmp.ne.s32.totalorder %s236, %s250
      %p252 = scmp.eq.s32.totalorder %s37, 0
      %p253 = por %p251, %p252
      %s255 = sadd.s32 %s254, 1
      %p258 = scmp.eq.s32.totalorder %s31, 1
      %p259 = scmp.ne.s32.totalorder %s254, %s256
      %p260 = scmp.eq.s32.totalorder %s31, 0
      %p261 = por %p259, %p260
      %p262 = scmp.ne.s32.totalorder %s254, %s256
      %p263 = scmp.eq.s32.totalorder %s36, 1
      %p264 = por %p262, %p263
      %p265 = scmp.ne.s32.totalorder %s256, %s257
      %p266 = scmp.eq.s32.totalorder %s36, 0
      %p267 = por %p265, %p266
      %p268 = scmp.ne.s32.totalorder %s256, %s257
      %p269 = scmp.eq.s32.totalorder %s37, 1
      %p270 = por %p268, %p269
      %p272 = scmp.ne.s32.totalorder %s257, %s271
      %p273 = scmp.eq.s32.totalorder %s37, 0
      %p274 = por %p272, %p273
      %s276 = sadd.s32 %s275, 1
      %p279 = scmp.eq.s32.totalorder %s31, 1
      %p280 = scmp.ne.s32.totalorder %s275, %s277
      %p281 = scmp.eq.s32.totalorder %s31, 0
      %p282 = por %p280, %p281
      %p283 = scmp.ne.s32.totalorder %s275, %s277
      %p284 = scmp.eq.s32.totalorder %s36, 1
      %p285 = por %p283, %p284
      %p286 = scmp.ne.s32.totalorder %s277, %s278
      %p287 = scmp.eq.s32.totalorder %s36, 0
      %p288 = por %p286, %p287
      %p289 = scmp.ne.s32.totalorder %s277, %s278
      %p290 = scmp.eq.s32.totalorder %s37, 1
      %p291 = por %p289, %p290
      %p293 = scmp.ne.s32.totalorder %s278, %s292
      %p294 = scmp.eq.s32.totalorder %s37, 0
      %p295 = por %p293, %p294
      %s297 = sadd.s32 %s296, 1
      %p300 = scmp.eq.s32.totalorder %s31, 1
      %p301 = scmp.ne.s32.totalorder %s296, %s298
      %p302 = scmp.eq.s32.totalorder %s31, 0
      %p303 = por %p301, %p302
      %p304 = scmp.ne.s32.totalorder %s296, %s298
      %p305 = scmp.eq.s32.totalorder %s36, 1
      %p306 = por %p304, %p305
      %p307 = scmp.ne.s32.totalorder %s298, %s299
      %p308 = scmp.eq.s32.totalorder %s36, 0
      %p309 = por %p307, %p308
      %p310 = scmp.ne.s32.totalorder %s298, %s299
      %p311 = scmp.eq.s32.totalorder %s37, 1
      %p312 = por %p310, %p311
      %p314 = scmp.ne.s32.totalorder %s299, %s313
      %p315 = scmp.eq.s32.totalorder %s37, 0
      %p316 = por %p314, %p315
      %s318 = sadd.s32 %s317, 1
      %p321 = scmp.eq.s32.totalorder %s31, 1
      %p322 = scmp.ne.s32.totalorder %s317, %s319
      %p323 = scmp.eq.s32.totalorder %s31, 0
      %p324 = por %p322, %p323
      %p325 = scmp.ne.s32.totalorder %s317, %s319
      %p326 = scmp.eq.s32.totalorder %s36, 1
      %p327 = por %p325, %p326
      %p328 = scmp.ne.s32.totalorder %s319, %s320
      %p329 = scmp.eq.s32.totalorder %s36, 0
      %p330 = por %p328, %p329
      %p331 = scmp.ne.s32.totalorder %s319, %s320
      %p332 = scmp.eq.s32.totalorder %s37, 1
      %p333 = por %p331, %p332
      %p335 = scmp.ne.s32.totalorder %s320, %s334
      %p336 = scmp.eq.s32.totalorder %s37, 0
      %p337 = por %p335, %p336
      %s339 = sadd.s32 %s338, 1
      %p342 = scmp.eq.s32.totalorder %s31, 1
      %p343 = scmp.ne.s32.totalorder %s338, %s340
      %p344 = scmp.eq.s32.totalorder %s31, 0
      %p345 = por %p343, %p344
      %p346 = scmp.ne.s32.totalorder %s338, %s340
      %p347 = scmp.eq.s32.totalorder %s36, 1
      %p348 = por %p346, %p347
      %p349 = scmp.ne.s32.totalorder %s340, %s341
      %p350 = scmp.eq.s32.totalorder %s36, 0
      %p351 = por %p349, %p350
      %p352 = scmp.ne.s32.totalorder %s340, %s341
      %p353 = scmp.eq.s32.totalorder %s37, 1
      %p354 = por %p352, %p353
      %p356 = scmp.ne.s32.totalorder %s341, %s355
      %p357 = scmp.eq.s32.totalorder %s37, 0
      %p358 = por %p356, %p357
      %s360 = sadd.s32 %s359, 1
      %p363 = scmp.eq.s32.totalorder %s31, 1
      %p364 = scmp.ne.s32.totalorder %s359, %s361
      %p365 = scmp.eq.s32.totalorder %s31, 0
      %p366 = por %p364, %p365
      %p367 = scmp.ne.s32.totalorder %s359, %s361
      %p368 = scmp.eq.s32.totalorder %s36, 1
      %p369 = por %p367, %p368
      %p370 = scmp.ne.s32.totalorder %s361, %s362
      %p371 = scmp.eq.s32.totalorder %s36, 0
      %p372 = por %p370, %p371
      %p373 = scmp.ne.s32.totalorder %s361, %s362
      %p374 = scmp.eq.s32.totalorder %s37, 1
      %p375 = por %p373, %p374
      %p377 = scmp.ne.s32.totalorder %s362, %s376
      %p378 = scmp.eq.s32.totalorder %s37, 0
      %p379 = por %p377, %p378
      %s381 = sadd.s32 %s380, 1
      %p384 = scmp.eq.s32.totalorder %s31, 1
      %p385 = scmp.ne.s32.totalorder %s380, %s382
      %p386 = scmp.eq.s32.totalorder %s31, 0
      %p387 = por %p385, %p386
      %p388 = scmp.ne.s32.totalorder %s380, %s382
      %p389 = scmp.eq.s32.totalorder %s36, 1
      %p390 = por %p388, %p389
      %p391 = scmp.ne.s32.totalorder %s382, %s383
      %p392 = scmp.eq.s32.totalorder %s36, 0
      %p393 = por %p391, %p392
      %p394 = scmp.ne.s32.totalorder %s382, %s383
      %p395 = scmp.eq.s32.totalorder %s37, 1
      %p396 = por %p394, %p395
      %p398 = scmp.ne.s32.totalorder %s383, %s397
      %p399 = scmp.eq.s32.totalorder %s37, 0
      %p400 = por %p398, %p399
      %s402 = sadd.s32 %s401, 1
      %p405 = scmp.eq.s32.totalorder %s31, 1
      %p406 = scmp.ne.s32.totalorder %s401, %s403
      %p407 = scmp.eq.s32.totalorder %s31, 0
      %p408 = por %p406, %p407
      %p409 = scmp.ne.s32.totalorder %s401, %s403
      %p410 = scmp.eq.s32.totalorder %s36, 1
      %p411 = por %p409, %p410
      %p412 = scmp.ne.s32.totalorder %s403, %s404
      %p413 = scmp.eq.s32.totalorder %s36, 0
      %p414 = por %p412, %p413
      %p415 = scmp.ne.s32.totalorder %s403, %s404
      %p416 = scmp.eq.s32.totalorder %s37, 1
      %p417 = por %p415, %p416
      %p419 = scmp.ne.s32.totalorder %s404, %s418
      %p420 = scmp.eq.s32.totalorder %s37, 0
      %p421 = por %p419, %p420
      %s423 = sadd.s32 %s422, 1
      %p426 = scmp.eq.s32.totalorder %s31, 1
      %p427 = scmp.ne.s32.totalorder %s422, %s424
      %p428 = scmp.eq.s32.totalorder %s31, 0
      %p429 = por %p427, %p428
      %p430 = scmp.ne.s32.totalorder %s422, %s424
      %p431 = scmp.eq.s32.totalorder %s36, 1
      %p432 = por %p430, %p431
      %p433 = scmp.ne.s32.totalorder %s424, %s425
      %p434 = scmp.eq.s32.totalorder %s36, 0
      %p435 = por %p433, %p434
      %p436 = scmp.ne.s32.totalorder %s424, %s425
      %p437 = scmp.eq.s32.totalorder %s37, 1
      %p438 = por %p436, %p437
      %p440 = scmp.ne.s32.totalorder %s425, %s439
      %p441 = scmp.eq.s32.totalorder %s37, 0
      %p442 = por %p440, %p441
      %s444 = sadd.s32 %s443, 1
      %p447 = scmp.eq.s32.totalorder %s31, 1
      %p448 = scmp.ne.s32.totalorder %s443, %s445
      %p449 = scmp.eq.s32.totalorder %s31, 0
      %p450 = por %p448, %p449
      %p451 = scmp.ne.s32.totalorder %s443, %s445
      %p452 = scmp.eq.s32.totalorder %s36, 1
      %p453 = por %p451, %p452
      %p454 = scmp.ne.s32.totalorder %s445, %s446
      %p455 = scmp.eq.s32.totalorder %s36, 0
      %p456 = por %p454, %p455
      %p457 = scmp.ne.s32.totalorder %s445, %s446
      %p458 = scmp.eq.s32.totalorder %s37, 1
      %p459 = por %p457, %p458
      %p461 = scmp.ne.s32.totalorder %s446, %s460
      %p462 = scmp.eq.s32.totalorder %s37, 0
      %p463 = por %p461, %p462
      %s465 = sadd.s32 %s464, 1
      %p468 = scmp.eq.s32.totalorder %s31, 1
      %p469 = scmp.ne.s32.totalorder %s464, %s466
      %p470 = scmp.eq.s32.totalorder %s31, 0
      %p471 = por %p469, %p470
      %p472 = scmp.ne.s32.totalorder %s464, %s466
      %p473 = scmp.eq.s32.totalorder %s36, 1
      %p474 = por %p472, %p473
      %p475 = scmp.ne.s32.totalorder %s466, %s467
      %p476 = scmp.eq.s32.totalorder %s36, 0
      %p477 = por %p475, %p476
      %p478 = scmp.ne.s32.totalorder %s466, %s467
      %p479 = scmp.eq.s32.totalorder %s37, 1
      %p480 = por %p478, %p479
      %p482 = scmp.ne.s32.totalorder %s467, %s481
      %p483 = scmp.eq.s32.totalorder %s37, 0
      %p484 = por %p482, %p483
      %s486 = sadd.s32 %s485, 1
      %p489 = scmp.eq.s32.totalorder %s31, 1
      %p490 = scmp.ne.s32.totalorder %s485, %s487
      %p491 = scmp.eq.s32.totalorder %s31, 0
      %p492 = por %p490, %p491
      %p493 = scmp.ne.s32.totalorder %s485, %s487
      %p494 = scmp.eq.s32.totalorder %s36, 1
      %p495 = por %p493, %p494
      %p496 = scmp.ne.s32.totalorder %s487, %s488
      %p497 = scmp.eq.s32.totalorder %s36, 0
      %p498 = por %p496, %p497
      %p499 = scmp.ne.s32.totalorder %s487, %s488
      %p500 = scmp.eq.s32.totalorder %s37, 1
      %p501 = por %p499, %p500
      %p503 = scmp.ne.s32.totalorder %s488, %s502
      %p504 = scmp.eq.s32.totalorder %s37, 0
      %p505 = por %p503, %p504
      %s506 = ssub.s32 %s31, %s38
      %p507 = scmp.eq.s32.totalorder %s506, 0
      %s509 = sadd.s32 %s508, 1
      %s510 = scalar_select %p507, %s508, %s509
      %p513 = pneg %p507
      %p514 = scmp.eq.s32.totalorder %s31, 1
      %p515 = por %p513, %p514
      %p516 = scmp.ne.s32.totalorder %s508, %s511
      %p517 = scmp.eq.s32.totalorder %s31, 0
      %p518 = por %p516, %p517
      %p519 = scmp.ne.s32.totalorder %s508, %s511
      %p520 = scmp.eq.s32.totalorder %s36, 1
      %p521 = por %p519, %p520
      %p522 = scmp.ne.s32.totalorder %s511, %s512
      %p523 = scmp.eq.s32.totalorder %s36, 0
      %p524 = por %p522, %p523
      %p525 = scmp.ne.s32.totalorder %s511, %s512
      %p526 = scmp.eq.s32.totalorder %s37, 1
      %p527 = por %p525, %p526
      %p529 = scmp.ne.s32.totalorder %s512, %s528
      %p530 = scmp.eq.s32.totalorder %s37, 0
      %p531 = por %p529, %p530
      %p532 = scmp.le.s32.totalorder 1, %s31
      %p533 = scmp.lt.s32.totalorder %s31, 3
      %p534 = pnand %p532, %p533
      %p535 = pneg %p534
      // Predicated region
      $region9: #{conv_decoder_forward.1} parent=5 // pred_check
        _
      $region10: #{conv_decoder_forward.1} parent=5 // pred_check_branch
        %537 = sbr.rel (%p534) target = $region12
      $region11: #{conv_decoder_forward.1} parent=5 // pred_region
        %s538 = ssub.s32 %s31, 1
        // Predicated region
        $region13: #{conv_decoder_forward.1} parent=11 // pred_check
          %p539 = pneg %p78
        $region14: #{conv_decoder_forward.1} parent=11 // pred_check_branch
          %541 = sbr.rel (%p539) target = $region16
        $region15: #{conv_decoder_forward.1} parent=11 // pred_region
          _
        $region16: #{conv_decoder_forward.1} parent=11 // pred_fallthru
          _
        // Predicated region
        $region17: #{conv_decoder_forward.1} parent=11 // pred_check
          %p542 = pneg %p99
        $region18: #{conv_decoder_forward.1} parent=11 // pred_check_branch
          %544 = sbr.rel (%p542) target = $region20
        $region19: #{conv_decoder_forward.1} parent=11 // pred_region
          _
        $region20: #{conv_decoder_forward.1} parent=11 // pred_fallthru
          _
        // Predicated region
        $region21: #{conv_decoder_forward.1} parent=11 // pred_check
          %p545 = pneg %p120
        $region22: #{conv_decoder_forward.1} parent=11 // pred_check_branch
          %547 = sbr.rel (%p545) target = $region24
        $region23: #{conv_decoder_forward.1} parent=11 // pred_region
          _
        $region24: #{conv_decoder_forward.1} parent=11 // pred_fallthru
          _
        // Predicated region
        $region25: #{conv_decoder_forward.1} parent=11 // pred_check
          %p548 = pneg %p141
        $region26: #{conv_decoder_forward.1} parent=11 // pred_check_branch
          %550 = sbr.rel (%p548) target = $region28
        $region27: #{conv_decoder_forward.1} parent=11 // pred_region
          _
        $region28: #{conv_decoder_forward.1} parent=11 // pred_fallthru
          _
        // Predicated region
        $region29: #{conv_decoder_forward.1} parent=11 // pred_check
          %p551 = pneg %p162
        $region30: #{conv_decoder_forward.1} parent=11 // pred_check_branch
          %553 = sbr.rel (%p551) target = $region32
        $region31: #{conv_decoder_forward.1} parent=11 // pred_region
          _
        $region32: #{conv_decoder_forward.1} parent=11 // pred_fallthru
          _
        // Predicated region
        $region33: #{conv_decoder_forward.1} parent=11 // pred_check
          %p554 = pneg %p183
        $region34: #{conv_decoder_forward.1} parent=11 // pred_check_branch
          %556 = sbr.rel (%p554) target = $region36
        $region35: #{conv_decoder_forward.1} parent=11 // pred_region
          _
        $region36: #{conv_decoder_forward.1} parent=11 // pred_fallthru
          _
        // Predicated region
        $region37: #{conv_decoder_forward.1} parent=11 // pred_check
          %p557 = pneg %p204
        $region38: #{conv_decoder_forward.1} parent=11 // pred_check_branch
          %559 = sbr.rel (%p557) target = $region40
        $region39: #{conv_decoder_forward.1} parent=11 // pred_region
          _
        $region40: #{conv_decoder_forward.1} parent=11 // pred_fallthru
          _
        // Predicated region
        $region41: #{conv_decoder_forward.1} parent=11 // pred_check
          %p560 = pneg %p225
        $region42: #{conv_decoder_forward.1} parent=11 // pred_check_branch
          %562 = sbr.rel (%p560) target = $region44
        $region43: #{conv_decoder_forward.1} parent=11 // pred_region
          _
        $region44: #{conv_decoder_forward.1} parent=11 // pred_fallthru
          _
        // Predicated region
        $region45: #{conv_decoder_forward.1} parent=11 // pred_check
          %p563 = pneg %p246
        $region46: #{conv_decoder_forward.1} parent=11 // pred_check_branch
          %565 = sbr.rel (%p563) target = $region48
        $region47: #{conv_decoder_forward.1} parent=11 // pred_region
          _
        $region48: #{conv_decoder_forward.1} parent=11 // pred_fallthru
          _
        // Predicated region
        $region49: #{conv_decoder_forward.1} parent=11 // pred_check
          %p566 = pneg %p267
        $region50: #{conv_decoder_forward.1} parent=11 // pred_check_branch
          %568 = sbr.rel (%p566) target = $region52
        $region51: #{conv_decoder_forward.1} parent=11 // pred_region
          _
        $region52: #{conv_decoder_forward.1} parent=11 // pred_fallthru
          _
        // Predicated region
        $region53: #{conv_decoder_forward.1} parent=11 // pred_check
          %p569 = pneg %p288
        $region54: #{conv_decoder_forward.1} parent=11 // pred_check_branch
          %571 = sbr.rel (%p569) target = $region56
        $region55: #{conv_decoder_forward.1} parent=11 // pred_region
          _
        $region56: #{conv_decoder_forward.1} parent=11 // pred_fallthru
          _
        // Predicated region
        $region57: #{conv_decoder_forward.1} parent=11 // pred_check
          %p572 = pneg %p309
        $region58: #{conv_decoder_forward.1} parent=11 // pred_check_branch
          %574 = sbr.rel (%p572) target = $region60
        $region59: #{conv_decoder_forward.1} parent=11 // pred_region
          _
        $region60: #{conv_decoder_forward.1} parent=11 // pred_fallthru
          _
        // Predicated region
        $region61: #{conv_decoder_forward.1} parent=11 // pred_check
          %p575 = pneg %p330
        $region62: #{conv_decoder_forward.1} parent=11 // pred_check_branch
          %577 = sbr.rel (%p575) target = $region64
        $region63: #{conv_decoder_forward.1} parent=11 // pred_region
          _
        $region64: #{conv_decoder_forward.1} parent=11 // pred_fallthru
          _
        // Predicated region
        $region65: #{conv_decoder_forward.1} parent=11 // pred_check
          %p578 = pneg %p351
        $region66: #{conv_decoder_forward.1} parent=11 // pred_check_branch
          %580 = sbr.rel (%p578) target = $region68
        $region67: #{conv_decoder_forward.1} parent=11 // pred_region
          _
        $region68: #{conv_decoder_forward.1} parent=11 // pred_fallthru
          _
        // Predicated region
        $region69: #{conv_decoder_forward.1} parent=11 // pred_check
          %p581 = pneg %p372
        $region70: #{conv_decoder_forward.1} parent=11 // pred_check_branch
          %583 = sbr.rel (%p581) target = $region72
        $region71: #{conv_decoder_forward.1} parent=11 // pred_region
          _
        $region72: #{conv_decoder_forward.1} parent=11 // pred_fallthru
          _
        // Predicated region
        $region73: #{conv_decoder_forward.1} parent=11 // pred_check
          %p584 = pneg %p393
        $region74: #{conv_decoder_forward.1} parent=11 // pred_check_branch
          %586 = sbr.rel (%p584) target = $region76
        $region75: #{conv_decoder_forward.1} parent=11 // pred_region
          _
        $region76: #{conv_decoder_forward.1} parent=11 // pred_fallthru
          _
        // Predicated region
        $region77: #{conv_decoder_forward.1} parent=11 // pred_check
          %p587 = pneg %p414
        $region78: #{conv_decoder_forward.1} parent=11 // pred_check_branch
          %589 = sbr.rel (%p587) target = $region80
        $region79: #{conv_decoder_forward.1} parent=11 // pred_region
          _
        $region80: #{conv_decoder_forward.1} parent=11 // pred_fallthru
          _
        // Predicated region
        $region81: #{conv_decoder_forward.1} parent=11 // pred_check
          %p590 = pneg %p435
        $region82: #{conv_decoder_forward.1} parent=11 // pred_check_branch
          %592 = sbr.rel (%p590) target = $region84
        $region83: #{conv_decoder_forward.1} parent=11 // pred_region
          _
        $region84: #{conv_decoder_forward.1} parent=11 // pred_fallthru
          _
        // Predicated region
        $region85: #{conv_decoder_forward.1} parent=11 // pred_check
          %p593 = pneg %p456
        $region86: #{conv_decoder_forward.1} parent=11 // pred_check_branch
          %595 = sbr.rel (%p593) target = $region88
        $region87: #{conv_decoder_forward.1} parent=11 // pred_region
          _
        $region88: #{conv_decoder_forward.1} parent=11 // pred_fallthru
          _
        // Predicated region
        $region89: #{conv_decoder_forward.1} parent=11 // pred_check
          %p596 = pneg %p477
        $region90: #{conv_decoder_forward.1} parent=11 // pred_check_branch
          %598 = sbr.rel (%p596) target = $region92
        $region91: #{conv_decoder_forward.1} parent=11 // pred_region
          _
        $region92: #{conv_decoder_forward.1} parent=11 // pred_fallthru
          _
        // Predicated region
        $region93: #{conv_decoder_forward.1} parent=11 // pred_check
          %p599 = pneg %p498
        $region94: #{conv_decoder_forward.1} parent=11 // pred_check_branch
          %601 = sbr.rel (%p599) target = $region96
        $region95: #{conv_decoder_forward.1} parent=11 // pred_region
          _
        $region96: #{conv_decoder_forward.1} parent=11 // pred_fallthru
          _
      $region12: #{conv_decoder_forward.1} parent=5 // pred_fallthru
        _
      %p602 = scmp.lt.s32.totalorder %s31, 2
      // Predicated region
      $region97: #{conv_decoder_forward.1} parent=5 // pred_check
        %p603 = pneg %p602
      $region98: #{conv_decoder_forward.1} parent=5 // pred_check_branch
        %605 = sbr.rel (%p603) target = $region100
      $region99: #{conv_decoder_forward.1} parent=5 // pred_region
        // Predicated region
        $region101: #{conv_decoder_forward.1} parent=99 // pred_check
          %p606 = pneg %p51
        $region102: #{conv_decoder_forward.1} parent=99 // pred_check_branch
          %608 = sbr.rel (%p606) target = $region104
        $region103: #{conv_decoder_forward.1} parent=99 // pred_region
          %p609 = scmp.lt.s32.totalorder %s31, 1
          %s610 = scalar_select %p609, %s31, 1
          %s611 = smul.addr %s610, 2
          %s612 = smul.addr %s611, 4
          %s613 = scalar_lea.vmem %s0, %s612
        $region104: #{conv_decoder_forward.1} parent=99 // pred_fallthru
          _
      $region100: #{conv_decoder_forward.1} parent=5 // pred_fallthru
        _
      %p614 = scmp.le.s32.totalorder 1, %s31
      %p615 = scmp.lt.s32.totalorder %s31, 3
      %p616 = pnand %p614, %p615
      %p617 = pneg %p616
      // Predicated region
      $region105: #{conv_decoder_forward.1} parent=5 // pred_check
        _
      $region106: #{conv_decoder_forward.1} parent=5 // pred_check_branch
        %619 = sbr.rel (%p616) target = $region108
      $region107: #{conv_decoder_forward.1} parent=5 // pred_region
        %s620 = ssub.s32 %s31, 1
        %p621 = scmp.lt.s32.totalorder %s36, 1
        %s622 = scalar_select %p621, %s36, 1
        %s623 = smul.addr %s622, 2
        %s624 = smul.addr %s623, 4
        %s625 = scalar_lea.vmem %s0, %s624
        %p626 = pneg %p57
        %p627 = pneg %p54
        %p628 = pneg %p78
        %p629 = pneg %p75
        %p630 = pneg %p99
        %p631 = pneg %p96
        %p632 = pneg %p120
        %p633 = pneg %p117
        %p634 = pneg %p141
        %p635 = pneg %p138
        %p636 = pneg %p162
        %p637 = pneg %p159
        %p638 = pneg %p183
        %p639 = pneg %p180
        %p640 = pneg %p204
        %p641 = pneg %p201
        %p642 = pneg %p225
        %p643 = pneg %p222
        %p644 = pneg %p246
        %p645 = pneg %p243
        %p646 = pneg %p267
        %p647 = pneg %p264
        %p648 = pneg %p288
        %p649 = pneg %p285
        %p650 = pneg %p309
        %p651 = pneg %p306
        %p652 = pneg %p330
        %p653 = pneg %p327
        %p654 = pneg %p351
        %p655 = pneg %p348
        %p656 = pneg %p372
        %p657 = pneg %p369
        %p658 = pneg %p393
        %p659 = pneg %p390
        %p660 = pneg %p414
        %p661 = pneg %p411
        %p662 = pneg %p435
        %p663 = pneg %p432
        %p664 = pneg %p456
        %p665 = pneg %p453
        %p666 = pneg %p477
        %p667 = pneg %p474
        %p668 = pneg %p498
        %p669 = pneg %p495
        %p670 = pneg %p524
        %p671 = pneg %p521
        %s672 = sand.u32 %s511, 1
        %s673 = scalar_lea.sflag [#allocation3], %s672
        %s674 = sand.u32 %s511, 1
        %s675 = smul.addr %s674, 384
        %s676 = scalar_lea.vmem [#allocation2], %s675
        %p677 = scmp.lt.s32.totalorder %s36, 1
        %s678 = scalar_select %p677, %s36, 1
        %s679 = smul.addr %s678, 2
        %s680 = smul.addr %s679, 4
        %s681 = scalar_lea.vmem %s0, %s680
        %v683 = vld [vmem:[%s681] sm:$0xf]
        %v684 = vld [vmem:[%s681 + $0x4] sm:$0xf]
        %v685 = vld [vmem:[%s1] sm:$0xf]
        %v686 = vld [vmem:[%s1 + $0x4] sm:$0xf]
        %v687 = vld [vmem:[%s1 + $0x8] sm:$0xf]
        %v688 = vld [vmem:[%s1 + $0xc] sm:$0xf]
        %v693 = vunpack.c.l.b16 %v685
        %v694 = vunpack.c.l.b16 %v686
        %v695 = vunpack.c.l.b16 %v687
        %v696 = vunpack.c.l.b16 %v688
        %v697 = vpack.c.b16 %v694, %v693
        %v698 = vpack.c.b16 %v696, %v695
        %v701 = vunpack.c.l.b16 %v683
        %v702 = vunpack.c.l.b16 %v684
        %v703 = vpack.c.b16 %v702, %v701
        %vm705 = vcmask 130048
        %v707 = vsel %vm705, %v697, 0
        %v710 = vsel %vm705, %v698, 0
        %712 = vmatprep.subr.bf16.mxu0 0
        %713 = vmatpush1.bf16.msra.mxu0 %v703
        %714 = vmatprep.subr.bf16.mxu0 0
        %715 = vmatpush1.bf16.msra.mxu0 0
        %716 = vmatprep.subr.bf16.mxu0 0
        %717 = vmatpush1.bf16.msra.mxu0 0
        %718 = vmatprep.subr.bf16.mxu0 0
        %719 = vmatpush1.bf16.msra.mxu0 0
        %720 = vmatprep.subr.bf16.mxu0 0
        %721 = vmatpush1.bf16.msra.mxu0 0
        %722 = vmatprep.subr.bf16.mxu0 0
        %723 = vmatpush1.bf16.msra.mxu0 0
        %724 = vmatprep.subr.bf16.mxu0 0
        %725 = vmatpush1.bf16.msra.mxu0 0
        %726 = vmatprep.subr.bf16.mxu0 0
        %727 = vmatpush1.bf16.msra.mxu0 0
        %728 = vmatprep.subr.bf16.mxu0 0
        %729 = vmatpush1.bf16.msra.mxu0 0
        %730 = vmatprep.subr.bf16.mxu0 0
        %731 = vmatpush1.bf16.msra.mxu0 0
        %732 = vmatprep.subr.bf16.mxu0 0
        %733 = vmatpush1.bf16.msra.mxu0 0
        %734 = vmatprep.subr.bf16.mxu0 0
        %735 = vmatpush1.bf16.msra.mxu0 0
        %736 = vmatprep.subr.bf16.mxu0 0
        %737 = vmatpush1.bf16.msra.mxu0 0
        %738 = vmatprep.subr.bf16.mxu0 0
        %739 = vmatpush1.bf16.msra.mxu0 0
        %740 = vmatprep.subr.bf16.mxu0 0
        %741 = vmatpush1.bf16.msra.mxu0 0
        %742 = vmatprep.subr.bf16.mxu0 0
        %743 = vmatpush1.bf16.msra.mxu0 0
        %744 = vmatprep.mubr.bf16.mxu0 0
        %745 = vmatmul.mubr.bf16.gmra.mrb[0].mxu0 %v707
        %v746 = vpop.f32.mrb[0].mxu0
        %v747 = vadd.f32 0.0, %v746
        %v748 = vpop.f32.mrb[0].mxu0
        %v749 = vpop.f32.mrb[0].mxu0
        %v750 = vadd.f32 0.0, %v749
        %v751 = vpop.f32.mrb[0].mxu0
        %752 = vmatprep.mubr.bf16.mxu0 0
        %753 = vmatmul.mubr.bf16.gmra.mrb[0].mxu0 %v710
        %v754 = vpop.f32.mrb[0].mxu0
        %v755 = vadd.f32 0.0, %v754
        %v756 = vpop.f32.mrb[0].mxu0
        %v757 = vpop.f32.mrb[0].mxu0
        %v758 = vadd.f32 0.0, %v757
        %v759 = vpop.f32.mrb[0].mxu0
        %760 = vdwg.mxu0
        %v761 = vpack.c.bf16 %v750, %v747
        %v762 = vpack.c.bf16 %v758, %v755
        %v763 = vld [vmem:[%s4] sm:$0xff]
        %v764 = vld [vmem:[%s4 + $0x8] sm:$0xff]
        %v765 = vld [vmem:[%s4 + $0x10] sm:$0xff]
        %v766 = vld [vmem:[%s4 + $0x18] sm:$0xff]
        %v767 = vld [vmem:[%s4 + $0x20] sm:$0xff]
        %v768 = vld [vmem:[%s4 + $0x28] sm:$0xff]
        %v769 = vld [vmem:[%s4 + $0x30] sm:$0xff]
        %v770 = vld [vmem:[%s4 + $0x38] sm:$0xff]
        %v771 = vld [vmem:[%s2] sm:$0xf]
        %v772 = vld [vmem:[%s2 + $0x4] sm:$0xf]
        %v773 = vld [vmem:[%s2 + $0x8] sm:$0xf]
        %v774 = vld [vmem:[%s2 + $0xc] sm:$0xf]
        %v779 = vunpack.c.l.b16 %v771
        %v780 = vunpack.c.l.b16 %v772
        %v781 = vunpack.c.l.b16 %v773
        %v782 = vunpack.c.l.b16 %v774
        %v783 = vpack.c.b16 %v780, %v779
        %v784 = vpack.c.b16 %v782, %v781
        %v786 = vsel %vm705, %v783, 0
        %v789 = vsel %vm705, %v784, 0
        %791 = vmatprep.subr.bf16.mxu0 0
        %792 = vmatpush1.bf16.msra.mxu0 %v703
        %793 = vmatprep.subr.bf16.mxu0 0
        %794 = vmatpush1.bf16.msra.mxu0 0
        %795 = vmatprep.subr.bf16.mxu0 0
        %796 = vmatpush1.bf16.msra.mxu0 0
        %797 = vmatprep.subr.bf16.mxu0 0
        %798 = vmatpush1.bf16.msra.mxu0 0
        %799 = vmatprep.subr.bf16.mxu0 0
        %800 = vmatpush1.bf16.msra.mxu0 0
        %801 = vmatprep.subr.bf16.mxu0 0
        %802 = vmatpush1.bf16.msra.mxu0 0
        %803 = vmatprep.subr.bf16.mxu0 0
        %804 = vmatpush1.bf16.msra.mxu0 0
        %805 = vmatprep.subr.bf16.mxu0 0
        %806 = vmatpush1.bf16.msra.mxu0 0
        %807 = vmatprep.subr.bf16.mxu0 0
        %808 = vmatpush1.bf16.msra.mxu0 0
        %809 = vmatprep.subr.bf16.mxu0 0
        %810 = vmatpush1.bf16.msra.mxu0 0
        %811 = vmatprep.subr.bf16.mxu0 0
        %812 = vmatpush1.bf16.msra.mxu0 0
        %813 = vmatprep.subr.bf16.mxu0 0
        %814 = vmatpush1.bf16.msra.mxu0 0
        %815 = vmatprep.subr.bf16.mxu0 0
        %816 = vmatpush1.bf16.msra.mxu0 0
        %817 = vmatprep.subr.bf16.mxu0 0
        %818 = vmatpush1.bf16.msra.mxu0 0
        %819 = vmatprep.subr.bf16.mxu0 0
        %820 = vmatpush1.bf16.msra.mxu0 0
        %821 = vmatprep.subr.bf16.mxu0 0
        %822 = vmatpush1.bf16.msra.mxu0 0
        %823 = vmatprep.mubr.bf16.mxu0 0
        %824 = vmatmul.mubr.bf16.gmra.mrb[0].mxu0 %v786
        %v825 = vpop.f32.mrb[0].mxu0
        %v826 = vadd.f32 0.0, %v825
        %v827 = vpop.f32.mrb[0].mxu0
        %v828 = vpop.f32.mrb[0].mxu0
        %v829 = vadd.f32 0.0, %v828
        %v830 = vpop.f32.mrb[0].mxu0
        %831 = vmatprep.mubr.bf16.mxu0 0
        %832 = vmatmul.mubr.bf16.gmra.mrb[0].mxu0 %v789
        %v833 = vpop.f32.mrb[0].mxu0
        %v834 = vadd.f32 0.0, %v833
        %v835 = vpop.f32.mrb[0].mxu0
        %v836 = vpop.f32.mrb[0].mxu0
        %v837 = vadd.f32 0.0, %v836
        %v838 = vpop.f32.mrb[0].mxu0
        %839 = vdwg.mxu0
        %v840 = vpack.c.bf16 %v829, %v826
        %v841 = vpack.c.bf16 %v837, %v834
        %v842 = vld [vmem:[%s5] sm:$0xff]
        %v843 = vld [vmem:[%s5 + $0x8] sm:$0xff]
        %v844 = vld [vmem:[%s5 + $0x10] sm:$0xff]
        %v845 = vld [vmem:[%s5 + $0x18] sm:$0xff]
        %v846 = vld [vmem:[%s5 + $0x20] sm:$0xff]
        %v847 = vld [vmem:[%s5 + $0x28] sm:$0xff]
        %v848 = vld [vmem:[%s5 + $0x30] sm:$0xff]
        %v849 = vld [vmem:[%s5 + $0x38] sm:$0xff]
        %v858 = vunpack.c.l.b16 %v842
        %v859 = vunpack.c.h.b16 %v842
        %v860 = vunpack.c.l.b16 %v843
        %v861 = vunpack.c.h.b16 %v843
        %v862 = vunpack.c.l.b16 %v844
        %v863 = vunpack.c.h.b16 %v844
        %v864 = vunpack.c.l.b16 %v845
        %v865 = vunpack.c.h.b16 %v845
        %v866 = vunpack.c.l.b16 %v846
        %v867 = vunpack.c.h.b16 %v846
        %v868 = vunpack.c.l.b16 %v847
        %v869 = vunpack.c.h.b16 %v847
        %v870 = vunpack.c.l.b16 %v848
        %v871 = vunpack.c.h.b16 %v848
        %v872 = vunpack.c.l.b16 %v849
        %v873 = vunpack.c.h.b16 %v849
        %v874 = vpack.c.b16 %v860, %v858
        %v875 = vpack.c.b16 %v861, %v859
        %v876 = vpack.c.b16 %v864, %v862
        %v877 = vpack.c.b16 %v865, %v863
        %v878 = vpack.c.b16 %v868, %v866
        %v879 = vpack.c.b16 %v869, %v867
        %v880 = vpack.c.b16 %v872, %v870
        %v881 = vpack.c.b16 %v873, %v871
        %vm890 = vcmask 523264
        %v892 = vsel %vm890, %v840, 0
        %v895 = vsel %vm890, %v841, 0
        %897 = vmatprep.subr.bf16.mxu0 %v875
        %898 = vmatpush1.bf16.msra.mxu0 %v874
        %899 = vmatprep.subr.bf16.mxu0 %v877
        %900 = vmatpush1.bf16.msra.mxu0 %v876
        %901 = vmatprep.subr.bf16.mxu0 %v879
        %902 = vmatpush1.bf16.msra.mxu0 %v878
        %903 = vmatprep.subr.bf16.mxu0 %v881
        %904 = vmatpush1.bf16.msra.mxu0 %v880
        %905 = vmatprep.subr.bf16.mxu0 0
        %906 = vmatpush1.bf16.msra.mxu0 0
        %907 = vmatprep.subr.bf16.mxu0 0
        %908 = vmatpush1.bf16.msra.mxu0 0
        %909 = vmatprep.subr.bf16.mxu0 0
        %910 = vmatpush1.bf16.msra.mxu0 0
        %911 = vmatprep.subr.bf16.mxu0 0
        %912 = vmatpush1.bf16.msra.mxu0 0
        %913 = vmatprep.subr.bf16.mxu0 0
        %914 = vmatpush1.bf16.msra.mxu0 0
        %915 = vmatprep.subr.bf16.mxu0 0
        %916 = vmatpush1.bf16.msra.mxu0 0
        %917 = vmatprep.subr.bf16.mxu0 0
        %918 = vmatpush1.bf16.msra.mxu0 0
        %919 = vmatprep.subr.bf16.mxu0 0
        %920 = vmatpush1.bf16.msra.mxu0 0
        %921 = vmatprep.subr.bf16.mxu0 0
        %922 = vmatpush1.bf16.msra.mxu0 0
        %923 = vmatprep.subr.bf16.mxu0 0
        %924 = vmatpush1.bf16.msra.mxu0 0
        %925 = vmatprep.subr.bf16.mxu0 0
        %926 = vmatpush1.bf16.msra.mxu0 0
        %927 = vmatprep.subr.bf16.mxu0 0
        %928 = vmatpush1.bf16.msra.mxu0 0
        %929 = vmatprep.mubr.bf16.mxu0 0
        %930 = vmatmul.mubr.bf16.gmra.mrb[0].mxu0 %v892
        %v931 = vpop.f32.mrb[0].mxu0
        %v932 = vadd.f32 0.0, %v931
        %v933 = vpop.f32.mrb[0].mxu0
        %v934 = vadd.f32 0.0, %v933
        %v935 = vpop.f32.mrb[0].mxu0
        %v936 = vadd.f32 0.0, %v935
        %v937 = vpop.f32.mrb[0].mxu0
        %v938 = vadd.f32 0.0, %v937
        %939 = vmatprep.mubr.bf16.mxu0 0
        %940 = vmatmul.mubr.bf16.gmra.mrb[0].mxu0 %v895
        %v941 = vpop.f32.mrb[0].mxu0
        %v942 = vadd.f32 0.0, %v941
        %v943 = vpop.f32.mrb[0].mxu0
        %v944 = vadd.f32 0.0, %v943
        %v945 = vpop.f32.mrb[0].mxu0
        %v946 = vadd.f32 0.0, %v945
        %v947 = vpop.f32.mrb[0].mxu0
        %v948 = vadd.f32 0.0, %v947
        %949 = vdwg.mxu0
        %v958 = vunpack.c.l.b16 %v763
        %v959 = vunpack.c.h.b16 %v763
        %v960 = vunpack.c.l.b16 %v764
        %v961 = vunpack.c.h.b16 %v764
        %v962 = vunpack.c.l.b16 %v765
        %v963 = vunpack.c.h.b16 %v765
        %v964 = vunpack.c.l.b16 %v766
        %v965 = vunpack.c.h.b16 %v766
        %v966 = vunpack.c.l.b16 %v767
        %v967 = vunpack.c.h.b16 %v767
        %v968 = vunpack.c.l.b16 %v768
        %v969 = vunpack.c.h.b16 %v768
        %v970 = vunpack.c.l.b16 %v769
        %v971 = vunpack.c.h.b16 %v769
        %v972 = vunpack.c.l.b16 %v770
        %v973 = vunpack.c.h.b16 %v770
        %v974 = vpack.c.b16 %v960, %v958
        %v975 = vpack.c.b16 %v961, %v959
        %v976 = vpack.c.b16 %v964, %v962
        %v977 = vpack.c.b16 %v965, %v963
        %v978 = vpack.c.b16 %v968, %v966
        %v979 = vpack.c.b16 %v969, %v967
        %v980 = vpack.c.b16 %v972, %v970
        %v981 = vpack.c.b16 %v973, %v971
        %v991 = vsel %vm890, %v761, 0
        %v994 = vsel %vm890, %v762, 0
        %996 = vmatprep.subr.bf16.mxu0 %v975
        %997 = vmatpush1.bf16.msra.mxu0 %v974
        %998 = vmatprep.subr.bf16.mxu0 %v977
        %999 = vmatpush1.bf16.msra.mxu0 %v976
        %1000 = vmatprep.subr.bf16.mxu0 %v979
        %1001 = vmatpush1.bf16.msra.mxu0 %v978
        %1002 = vmatprep.subr.bf16.mxu0 %v981
        %1003 = vmatpush1.bf16.msra.mxu0 %v980
        %1004 = vmatprep.subr.bf16.mxu0 0
        %1005 = vmatpush1.bf16.msra.mxu0 0
        %1006 = vmatprep.subr.bf16.mxu0 0
        %1007 = vmatpush1.bf16.msra.mxu0 0
        %1008 = vmatprep.subr.bf16.mxu0 0
        %1009 = vmatpush1.bf16.msra.mxu0 0
        %1010 = vmatprep.subr.bf16.mxu0 0
        %1011 = vmatpush1.bf16.msra.mxu0 0
        %1012 = vmatprep.subr.bf16.mxu0 0
        %1013 = vmatpush1.bf16.msra.mxu0 0
        %1014 = vmatprep.subr.bf16.mxu0 0
        %1015 = vmatpush1.bf16.msra.mxu0 0
        %1016 = vmatprep.subr.bf16.mxu0 0
        %1017 = vmatpush1.bf16.msra.mxu0 0
        %1018 = vmatprep.subr.bf16.mxu0 0
        %1019 = vmatpush1.bf16.msra.mxu0 0
        %1020 = vmatprep.subr.bf16.mxu0 0
        %1021 = vmatpush1.bf16.msra.mxu0 0
        %1022 = vmatprep.subr.bf16.mxu0 0
        %1023 = vmatpush1.bf16.msra.mxu0 0
        %1024 = vmatprep.subr.bf16.mxu0 0
        %1025 = vmatpush1.bf16.msra.mxu0 0
        %1026 = vmatprep.subr.bf16.mxu0 0
        %1027 = vmatpush1.bf16.msra.mxu0 0
        %1028 = vmatprep.mubr.bf16.mxu0 0
        %1029 = vmatmul.mubr.bf16.gmra.mrb[0].mxu0 %v991
        %v1030 = vpop.f32.mrb[0].mxu0
        %v1031 = vadd.f32 %v932, %v1030
        %v1032 = vpop.f32.mrb[0].mxu0
        %v1033 = vadd.f32 %v934, %v1032
        %v1034 = vpop.f32.mrb[0].mxu0
        %v1035 = vadd.f32 %v936, %v1034
        %v1036 = vpop.f32.mrb[0].mxu0
        %v1037 = vadd.f32 %v938, %v1036
        %1038 = vmatprep.mubr.bf16.mxu0 0
        %1039 = vmatmul.mubr.bf16.gmra.mrb[0].mxu0 %v994
        %v1040 = vpop.f32.mrb[0].mxu0
        %v1041 = vadd.f32 %v942, %v1040
        %v1042 = vpop.f32.mrb[0].mxu0
        %v1043 = vadd.f32 %v944, %v1042
        %v1044 = vpop.f32.mrb[0].mxu0
        %v1045 = vadd.f32 %v946, %v1044
        %v1046 = vpop.f32.mrb[0].mxu0
        %v1047 = vadd.f32 %v948, %v1046
        %1048 = vdwg.mxu0
        %v1049 = vld [vmem:[%s3] sm:$0xf]
        %v1050 = vld [vmem:[%s3 + $0x4] sm:$0xf]
        %v1051 = vld [vmem:[%s3 + $0x8] sm:$0xf]
        %v1052 = vld [vmem:[%s3 + $0xc] sm:$0xf]
        %v1057 = vunpack.c.l.b16 %v1049
        %v1058 = vunpack.c.l.b16 %v1050
        %v1059 = vunpack.c.l.b16 %v1051
        %v1060 = vunpack.c.l.b16 %v1052
        %v1061 = vpack.c.b16 %v1058, %v1057
        %v1062 = vpack.c.b16 %v1060, %v1059
        %v1064 = vsel %vm705, %v1061, 0
        %v1067 = vsel %vm705, %v1062, 0
        %1069 = vmatprep.subr.bf16.mxu0 0
        %1070 = vmatpush1.bf16.msra.mxu0 %v703
        %1071 = vmatprep.subr.bf16.mxu0 0
        %1072 = vmatpush1.bf16.msra.mxu0 0
        %1073 = vmatprep.subr.bf16.mxu0 0
        %1074 = vmatpush1.bf16.msra.mxu0 0
        %1075 = vmatprep.subr.bf16.mxu0 0
        %1076 = vmatpush1.bf16.msra.mxu0 0
        %1077 = vmatprep.subr.bf16.mxu0 0
        %1078 = vmatpush1.bf16.msra.mxu0 0
        %1079 = vmatprep.subr.bf16.mxu0 0
        %1080 = vmatpush1.bf16.msra.mxu0 0
        %1081 = vmatprep.subr.bf16.mxu0 0
        %1082 = vmatpush1.bf16.msra.mxu0 0
        %1083 = vmatprep.subr.bf16.mxu0 0
        %1084 = vmatpush1.bf16.msra.mxu0 0
        %1085 = vmatprep.subr.bf16.mxu0 0
        %1086 = vmatpush1.bf16.msra.mxu0 0
        %1087 = vmatprep.subr.bf16.mxu0 0
        %1088 = vmatpush1.bf16.msra.mxu0 0
        %1089 = vmatprep.subr.bf16.mxu0 0
        %1090 = vmatpush1.bf16.msra.mxu0 0
        %1091 = vmatprep.subr.bf16.mxu0 0
        %1092 = vmatpush1.bf16.msra.mxu0 0
        %1093 = vmatprep.subr.bf16.mxu0 0
        %1094 = vmatpush1.bf16.msra.mxu0 0
        %1095 = vmatprep.subr.bf16.mxu0 0
        %1096 = vmatpush1.bf16.msra.mxu0 0
        %1097 = vmatprep.subr.bf16.mxu0 0
        %1098 = vmatpush1.bf16.msra.mxu0 0
        %1099 = vmatprep.subr.bf16.mxu0 0
        %1100 = vmatpush1.bf16.msra.mxu0 0
        %1101 = vmatprep.mubr.bf16.mxu0 0
        %1102 = vmatmul.mubr.bf16.gmra.mrb[0].mxu0 %v1064
        %v1103 = vpop.f32.mrb[0].mxu0
        %v1104 = vadd.f32 0.0, %v1103
        %v1105 = vpop.f32.mrb[0].mxu0
        %v1106 = vpop.f32.mrb[0].mxu0
        %v1107 = vadd.f32 0.0, %v1106
        %v1108 = vpop.f32.mrb[0].mxu0
        %1109 = vmatprep.mubr.bf16.mxu0 0
        %1110 = vmatmul.mubr.bf16.gmra.mrb[0].mxu0 %v1067
        %v1111 = vpop.f32.mrb[0].mxu0
        %v1112 = vadd.f32 0.0, %v1111
        %v1113 = vpop.f32.mrb[0].mxu0
        %v1114 = vpop.f32.mrb[0].mxu0
        %v1115 = vadd.f32 0.0, %v1114
        %v1116 = vpop.f32.mrb[0].mxu0
        %1117 = vdwg.mxu0
        %v1118 = vpack.c.bf16 %v1107, %v1104
        %v1119 = vpack.c.bf16 %v1115, %v1112
        %v1120 = vld [vmem:[%s6] sm:$0xff]
        %v1121 = vld [vmem:[%s6 + $0x8] sm:$0xff]
        %v1122 = vld [vmem:[%s6 + $0x10] sm:$0xff]
        %v1123 = vld [vmem:[%s6 + $0x18] sm:$0xff]
        %v1124 = vld [vmem:[%s6 + $0x20] sm:$0xff]
        %v1125 = vld [vmem:[%s6 + $0x28] sm:$0xff]
        %v1126 = vld [vmem:[%s6 + $0x30] sm:$0xff]
        %v1127 = vld [vmem:[%s6 + $0x38] sm:$0xff]
        %v1136 = vunpack.c.l.b16 %v1120
        %v1137 = vunpack.c.h.b16 %v1120
        %v1138 = vunpack.c.l.b16 %v1121
        %v1139 = vunpack.c.h.b16 %v1121
        %v1140 = vunpack.c.l.b16 %v1122
        %v1141 = vunpack.c.h.b16 %v1122
        %v1142 = vunpack.c.l.b16 %v1123
        %v1143 = vunpack.c.h.b16 %v1123
        %v1144 = vunpack.c.l.b16 %v1124
        %v1145 = vunpack.c.h.b16 %v1124
        %v1146 = vunpack.c.l.b16 %v1125
        %v1147 = vunpack.c.h.b16 %v1125
        %v1148 = vunpack.c.l.b16 %v1126
        %v1149 = vunpack.c.h.b16 %v1126
        %v1150 = vunpack.c.l.b16 %v1127
        %v1151 = vunpack.c.h.b16 %v1127
        %v1152 = vpack.c.b16 %v1138, %v1136
        %v1153 = vpack.c.b16 %v1139, %v1137
        %v1154 = vpack.c.b16 %v1142, %v1140
        %v1155 = vpack.c.b16 %v1143, %v1141
        %v1156 = vpack.c.b16 %v1146, %v1144
        %v1157 = vpack.c.b16 %v1147, %v1145
        %v1158 = vpack.c.b16 %v1150, %v1148
        %v1159 = vpack.c.b16 %v1151, %v1149
        %v1169 = vsel %vm890, %v1118, 0
        %v1172 = vsel %vm890, %v1119, 0
        %1174 = vmatprep.subr.bf16.mxu0 %v1153
        %1175 = vmatpush1.bf16.msra.mxu0 %v1152
        %1176 = vmatprep.subr.bf16.mxu0 %v1155
        %1177 = vmatpush1.bf16.msra.mxu0 %v1154
        %1178 = vmatprep.subr.bf16.mxu0 %v1157
        %1179 = vmatpush1.bf16.msra.mxu0 %v1156
        %1180 = vmatprep.subr.bf16.mxu0 %v1159
        %1181 = vmatpush1.bf16.msra.mxu0 %v1158
        %1182 = vmatprep.subr.bf16.mxu0 0
        %1183 = vmatpush1.bf16.msra.mxu0 0
        %1184 = vmatprep.subr.bf16.mxu0 0
        %1185 = vmatpush1.bf16.msra.mxu0 0
        %1186 = vmatprep.subr.bf16.mxu0 0
        %1187 = vmatpush1.bf16.msra.mxu0 0
        %1188 = vmatprep.subr.bf16.mxu0 0
        %1189 = vmatpush1.bf16.msra.mxu0 0
        %1190 = vmatprep.subr.bf16.mxu0 0
        %1191 = vmatpush1.bf16.msra.mxu0 0
        %1192 = vmatprep.subr.bf16.mxu0 0
        %1193 = vmatpush1.bf16.msra.mxu0 0
        %1194 = vmatprep.subr.bf16.mxu0 0
        %1195 = vmatpush1.bf16.msra.mxu0 0
        %1196 = vmatprep.subr.bf16.mxu0 0
        %1197 = vmatpush1.bf16.msra.mxu0 0
        %1198 = vmatprep.subr.bf16.mxu0 0
        %1199 = vmatpush1.bf16.msra.mxu0 0
        %1200 = vmatprep.subr.bf16.mxu0 0
        %1201 = vmatpush1.bf16.msra.mxu0 0
        %1202 = vmatprep.subr.bf16.mxu0 0
        %1203 = vmatpush1.bf16.msra.mxu0 0
        %1204 = vmatprep.subr.bf16.mxu0 0
        %1205 = vmatpush1.bf16.msra.mxu0 0
        %1206 = vmatprep.mubr.bf16.mxu0 0
        %1207 = vmatmul.mubr.bf16.gmra.mrb[0].mxu0 %v1169
        %v1208 = vpop.f32.mrb[0].mxu0
        %v1209 = vadd.f32 0.0, %v1208
        %v1210 = vpop.f32.mrb[0].mxu0
        %v1211 = vadd.f32 0.0, %v1210
        %v1212 = vpop.f32.mrb[0].mxu0
        %v1213 = vadd.f32 0.0, %v1212
        %v1214 = vpop.f32.mrb[0].mxu0
        %v1215 = vadd.f32 0.0, %v1214
        %1216 = vmatprep.mubr.bf16.mxu0 0
        %1217 = vmatmul.mubr.bf16.gmra.mrb[0].mxu0 %v1172
        %v1218 = vpop.f32.mrb[0].mxu0
        %v1219 = vadd.f32 0.0, %v1218
        %v1220 = vpop.f32.mrb[0].mxu0
        %v1221 = vadd.f32 0.0, %v1220
        %v1222 = vpop.f32.mrb[0].mxu0
        %v1223 = vadd.f32 0.0, %v1222
        %v1224 = vpop.f32.mrb[0].mxu0
        %v1225 = vadd.f32 0.0, %v1224
        %1226 = vdwg.mxu0
        %v1227 = vadd.f32 %v1031, %v1209
        %v1228 = vadd.f32 %v1033, %v1211
        %v1229 = vadd.f32 %v1035, %v1213
        %v1230 = vadd.f32 %v1037, %v1215
        %v1231 = vadd.f32 %v1041, %v1219
        %v1232 = vadd.f32 %v1043, %v1221
        %v1233 = vadd.f32 %v1045, %v1223
        %v1234 = vadd.f32 %v1047, %v1225
        %v1235 = vld [vmem:[%s7] sm:$0x3]
        %v1237 = vlaneseq
        %v1238 = vshrl.u32 %v1237, 7
        %v1239 = vsub.s32 0, %v1238
        %v1240 = vrot.slane %v1235, %v1239
        %v1241 = vlaneseq
        %v1242 = vshrl.u32 %v1241, 7
        %v1243 = vsub.s32 1, %v1242
        %v1244 = vrot.slane %v1235, %v1243
        %v1247 = vadd.f32 %v1227, %v1240
        %v1248 = vadd.f32 %v1228, %v1244
        %v1249 = vadd.f32 %v1229, %v1240
        %v1250 = vadd.f32 %v1230, %v1244
        %v1251 = vadd.f32 %v1231, %v1240
        %v1252 = vadd.f32 %v1232, %v1244
        %v1253 = vadd.f32 %v1233, %v1240
        %v1254 = vadd.f32 %v1234, %v1244
        %v1255 = vmax.f32 %v1247, 0.0
        %v1256 = vmax.f32 %v1248, 0.0
        %v1257 = vmax.f32 %v1249, 0.0
        %v1258 = vmax.f32 %v1250, 0.0
        %v1259 = vmax.f32 %v1251, 0.0
        %v1260 = vmax.f32 %v1252, 0.0
        %v1261 = vmax.f32 %v1253, 0.0
        %v1262 = vmax.f32 %v1254, 0.0
        %v1263 = vpack.c.bf16 %v1257, %v1255
        %v1264 = vpack.c.bf16 %v1258, %v1256
        %v1265 = vpack.c.bf16 %v1261, %v1259
        %v1266 = vpack.c.bf16 %v1262, %v1260
        %v1267 = vld [vmem:[%s8] sm:$0xf]
        %v1268 = vld [vmem:[%s8 + $0x4] sm:$0xf]
        %v1269 = vld [vmem:[%s8 + $0x8] sm:$0xf]
        %v1270 = vld [vmem:[%s8 + $0xc] sm:$0xf]
        %v1271 = vld [vmem:[%s8 + $0x10] sm:$0xf]
        %v1272 = vld [vmem:[%s8 + $0x14] sm:$0xf]
        %v1273 = vld [vmem:[%s8 + $0x18] sm:$0xf]
        %v1274 = vld [vmem:[%s8 + $0x1c] sm:$0xf]
        %v1283 = vunpack.c.l.b16 %v1267
        %v1284 = vunpack.c.l.b16 %v1268
        %v1285 = vunpack.c.l.b16 %v1269
        %v1286 = vunpack.c.l.b16 %v1270
        %v1287 = vunpack.c.l.b16 %v1271
        %v1288 = vunpack.c.l.b16 %v1272
        %v1289 = vunpack.c.l.b16 %v1273
        %v1290 = vunpack.c.l.b16 %v1274
        %v1291 = vpack.c.b16 %v1284, %v1283
        %v1292 = vpack.c.b16 %v1286, %v1285
        %v1293 = vpack.c.b16 %v1288, %v1287
        %v1294 = vpack.c.b16 %v1290, %v1289
        %vm1295 = vcmask 261120
        %v1297 = vsel %vm1295, %v1291, 0
        %v1300 = vsel %vm1295, %v1292, 0
        %v1303 = vsel %vm1295, %v1293, 0
        %v1306 = vsel %vm1295, %v1294, 0
        %1308 = vmatprep.subr.bf16.mxu0 %v1264
        %1309 = vmatpush1.bf16.msra.mxu0 %v1263
        %1310 = vmatprep.subr.bf16.mxu0 %v1266
        %1311 = vmatpush1.bf16.msra.mxu0 %v1265
        %1312 = vmatprep.subr.bf16.mxu0 0
        %1313 = vmatpush1.bf16.msra.mxu0 0
        %1314 = vmatprep.subr.bf16.mxu0 0
        %1315 = vmatpush1.bf16.msra.mxu0 0
        %1316 = vmatprep.subr.bf16.mxu0 0
        %1317 = vmatpush1.bf16.msra.mxu0 0
        %1318 = vmatprep.subr.bf16.mxu0 0
        %1319 = vmatpush1.bf16.msra.mxu0 0
        %1320 = vmatprep.subr.bf16.mxu0 0
        %1321 = vmatpush1.bf16.msra.mxu0 0
        %1322 = vmatprep.subr.bf16.mxu0 0
        %1323 = vmatpush1.bf16.msra.mxu0 0
        %1324 = vmatprep.subr.bf16.mxu0 0
        %1325 = vmatpush1.bf16.msra.mxu0 0
        %1326 = vmatprep.subr.bf16.mxu0 0
        %1327 = vmatpush1.bf16.msra.mxu0 0
        %1328 = vmatprep.subr.bf16.mxu0 0
        %1329 = vmatpush1.bf16.msra.mxu0 0
        %1330 = vmatprep.subr.bf16.mxu0 0
        %1331 = vmatpush1.bf16.msra.mxu0 0
        %1332 = vmatprep.subr.bf16.mxu0 0
        %1333 = vmatpush1.bf16.msra.mxu0 0
        %1334 = vmatprep.subr.bf16.mxu0 0
        %1335 = vmatpush1.bf16.msra.mxu0 0
        %1336 = vmatprep.subr.bf16.mxu0 0
        %1337 = vmatpush1.bf16.msra.mxu0 0
        %1338 = vmatprep.subr.bf16.mxu0 0
        %1339 = vmatpush1.bf16.msra.mxu0 0
        %1340 = vmatprep.mubr.bf16.mxu0 0
        %1341 = vmatmul.mubr.bf16.gmra.mrb[0].mxu0 %v1297
        %v1342 = vpop.f32.mrb[0].mxu0
        %v1343 = vadd.f32 0.0, %v1342
        %v1344 = vpop.f32.mrb[0].mxu0
        %v1345 = vadd.f32 0.0, %v1344
        %v1346 = vpop.f32.mrb[0].mxu0
        %v1347 = vadd.f32 0.0, %v1346
        %v1348 = vpop.f32.mrb[0].mxu0
        %v1349 = vadd.f32 0.0, %v1348
        %1350 = vmatprep.mubr.bf16.mxu0 0
        %1351 = vmatmul.mubr.bf16.gmra.mrb[0].mxu0 %v1300
        %v1352 = vpop.f32.mrb[0].mxu0
        %v1353 = vadd.f32 0.0, %v1352
        %v1354 = vpop.f32.mrb[0].mxu0
        %v1355 = vadd.f32 0.0, %v1354
        %v1356 = vpop.f32.mrb[0].mxu0
        %v1357 = vadd.f32 0.0, %v1356
        %v1358 = vpop.f32.mrb[0].mxu0
        %v1359 = vadd.f32 0.0, %v1358
        %1360 = vmatprep.mubr.bf16.mxu0 0
        %1361 = vmatmul.mubr.bf16.gmra.mrb[0].mxu0 %v1303
        %v1362 = vpop.f32.mrb[0].mxu0
        %v1363 = vadd.f32 0.0, %v1362
        %v1364 = vpop.f32.mrb[0].mxu0
        %v1365 = vadd.f32 0.0, %v1364
        %v1366 = vpop.f32.mrb[0].mxu0
        %v1367 = vadd.f32 0.0, %v1366
        %v1368 = vpop.f32.mrb[0].mxu0
        %v1369 = vadd.f32 0.0, %v1368
        %1370 = vmatprep.mubr.bf16.mxu0 0
        %1371 = vmatmul.mubr.bf16.gmra.mrb[0].mxu0 %v1306
        %v1372 = vpop.f32.mrb[0].mxu0
        %v1373 = vadd.f32 0.0, %v1372
        %v1374 = vpop.f32.mrb[0].mxu0
        %v1375 = vadd.f32 0.0, %v1374
        %v1376 = vpop.f32.mrb[0].mxu0
        %v1377 = vadd.f32 0.0, %v1376
        %v1378 = vpop.f32.mrb[0].mxu0
        %v1379 = vadd.f32 0.0, %v1378
        %1380 = vdwg.mxu0
        %v1381 = vpack.c.bf16 %v1347, %v1343
        %v1382 = vpack.c.bf16 %v1349, %v1345
        %v1383 = vpack.c.bf16 %v1357, %v1353
        %v1384 = vpack.c.bf16 %v1359, %v1355
        %v1385 = vpack.c.bf16 %v1367, %v1363
        %v1386 = vpack.c.bf16 %v1369, %v1365
        %v1387 = vpack.c.bf16 %v1377, %v1373
        %v1388 = vpack.c.bf16 %v1379, %v1375
        %v1389 = vld [vmem:[%s11] sm:$0xff]
        %v1390 = vld [vmem:[%s11 + $0x8] sm:$0xff]
        %v1391 = vld [vmem:[%s11 + $0x10] sm:$0xff]
        %v1392 = vld [vmem:[%s11 + $0x18] sm:$0xff]
        %v1393 = vld [vmem:[%s11 + $0x20] sm:$0xff]
        %v1394 = vld [vmem:[%s11 + $0x28] sm:$0xff]
        %v1395 = vld [vmem:[%s11 + $0x30] sm:$0xff]
        %v1396 = vld [vmem:[%s11 + $0x38] sm:$0xff]
        %v1397 = vld [vmem:[%s11 + $0x40] sm:$0xff]
        %v1398 = vld [vmem:[%s11 + $0x48] sm:$0xff]
        %v1399 = vld [vmem:[%s11 + $0x50] sm:$0xff]
        %v1400 = vld [vmem:[%s11 + $0x58] sm:$0xff]
        %v1401 = vld [vmem:[%s11 + $0x60] sm:$0xff]
        %v1402 = vld [vmem:[%s11 + $0x68] sm:$0xff]
        %v1403 = vld [vmem:[%s11 + $0x70] sm:$0xff]
        %v1404 = vld [vmem:[%s11 + $0x78] sm:$0xff]
        %v1405 = vld [vmem:[%s11 + $0x80] sm:$0xff]
        %v1406 = vld [vmem:[%s11 + $0x88] sm:$0xff]
        %v1407 = vld [vmem:[%s11 + $0x90] sm:$0xff]
        %v1408 = vld [vmem:[%s11 + $0x98] sm:$0xff]
        %v1409 = vld [vmem:[%s11 + $0xa0] sm:$0xff]
        %v1410 = vld [vmem:[%s11 + $0xa8] sm:$0xff]
        %v1411 = vld [vmem:[%s11 + $0xb0] sm:$0xff]
        %v1412 = vld [vmem:[%s11 + $0xb8] sm:$0xff]
        %v1413 = vld [vmem:[%s11 + $0xc0] sm:$0xff]
        %v1414 = vld [vmem:[%s11 + $0xc8] sm:$0xff]
        %v1415 = vld [vmem:[%s11 + $0xd0] sm:$0xff]
        %v1416 = vld [vmem:[%s11 + $0xd8] sm:$0xff]
        %v1417 = vld [vmem:[%s11 + $0xe0] sm:$0xff]
        %v1418 = vld [vmem:[%s11 + $0xe8] sm:$0xff]
        %v1419 = vld [vmem:[%s11 + $0xf0] sm:$0xff]
        %v1420 = vld [vmem:[%s11 + $0xf8] sm:$0xff]
        %v1421 = vld [vmem:[%s11 + $0x100] sm:$0xff]
        %v1422 = vld [vmem:[%s11 + $0x108] sm:$0xff]
        %v1423 = vld [vmem:[%s11 + $0x110] sm:$0xff]
        %v1424 = vld [vmem:[%s11 + $0x118] sm:$0xff]
        %v1425 = vld [vmem:[%s11 + $0x120] sm:$0xff]
        %v1426 = vld [vmem:[%s11 + $0x128] sm:$0xff]
        %v1427 = vld [vmem:[%s11 + $0x130] sm:$0xff]
        %v1428 = vld [vmem:[%s11 + $0x138] sm:$0xff]
        %v1429 = vld [vmem:[%s11 + $0x140] sm:$0xff]
        %v1430 = vld [vmem:[%s11 + $0x148] sm:$0xff]
        %v1431 = vld [vmem:[%s11 + $0x150] sm:$0xff]
        %v1432 = vld [vmem:[%s11 + $0x158] sm:$0xff]
        %v1433 = vld [vmem:[%s11 + $0x160] sm:$0xff]
        %v1434 = vld [vmem:[%s11 + $0x168] sm:$0xff]
        %v1435 = vld [vmem:[%s11 + $0x170] sm:$0xff]
        %v1436 = vld [vmem:[%s11 + $0x178] sm:$0xff]
        %v1437 = vld [vmem:[%s11 + $0x180] sm:$0xff]
        %v1438 = vld [vmem:[%s11 + $0x188] sm:$0xff]
        %v1439 = vld [vmem:[%s11 + $0x190] sm:$0xff]
        %v1440 = vld [vmem:[%s11 + $0x198] sm:$0xff]
        %v1441 = vld [vmem:[%s11 + $0x1a0] sm:$0xff]
        %v1442 = vld [vmem:[%s11 + $0x1a8] sm:$0xff]
        %v1443 = vld [vmem:[%s11 + $0x1b0] sm:$0xff]
        %v1444 = vld [vmem:[%s11 + $0x1b8] sm:$0xff]
        %v1445 = vld [vmem:[%s11 + $0x1c0] sm:$0xff]
        %v1446 = vld [vmem:[%s11 + $0x1c8] sm:$0xff]
        %v1447 = vld [vmem:[%s11 + $0x1d0] sm:$0xff]
        %v1448 = vld [vmem:[%s11 + $0x1d8] sm:$0xff]
        %v1449 = vld [vmem:[%s11 + $0x1e0] sm:$0xff]
        %v1450 = vld [vmem:[%s11 + $0x1e8] sm:$0xff]
        %v1451 = vld [vmem:[%s11 + $0x1f0] sm:$0xff]
        %v1452 = vld [vmem:[%s11 + $0x1f8] sm:$0xff]
        %v1453 = vld [vmem:[%s9] sm:$0xf]
        %v1454 = vld [vmem:[%s9 + $0x4] sm:$0xf]
        %v1455 = vld [vmem:[%s9 + $0x8] sm:$0xf]
        %v1456 = vld [vmem:[%s9 + $0xc] sm:$0xf]
        %v1457 = vld [vmem:[%s9 + $0x10] sm:$0xf]
        %v1458 = vld [vmem:[%s9 + $0x14] sm:$0xf]
        %v1459 = vld [vmem:[%s9 + $0x18] sm:$0xf]
        %v1460 = vld [vmem:[%s9 + $0x1c] sm:$0xf]
        %v1469 = vunpack.c.l.b16 %v1453
        %v1470 = vunpack.c.l.b16 %v1454
        %v1471 = vunpack.c.l.b16 %v1455
        %v1472 = vunpack.c.l.b16 %v1456
        %v1473 = vunpack.c.l.b16 %v1457
        %v1474 = vunpack.c.l.b16 %v1458
        %v1475 = vunpack.c.l.b16 %v1459
        %v1476 = vunpack.c.l.b16 %v1460
        %v1477 = vpack.c.b16 %v1470, %v1469
        %v1478 = vpack.c.b16 %v1472, %v1471
        %v1479 = vpack.c.b16 %v1474, %v1473
        %v1480 = vpack.c.b16 %v1476, %v1475
        %v1482 = vsel %vm1295, %v1477, 0
        %v1485 = vsel %vm1295, %v1478, 0
        %v1488 = vsel %vm1295, %v1479, 0
        %v1491 = vsel %vm1295, %v1480, 0
        %1493 = vmatprep.subr.bf16.mxu0 %v1264
        %1494 = vmatpush1.bf16.msra.mxu0 %v1263
        %1495 = vmatprep.subr.bf16.mxu0 %v1266
        %1496 = vmatpush1.bf16.msra.mxu0 %v1265
        %1497 = vmatprep.subr.bf16.mxu0 0
        %1498 = vmatpush1.bf16.msra.mxu0 0
        %1499 = vmatprep.subr.bf16.mxu0 0
        %1500 = vmatpush1.bf16.msra.mxu0 0
        %1501 = vmatprep.subr.bf16.mxu0 0
        %1502 = vmatpush1.bf16.msra.mxu0 0
        %1503 = vmatprep.subr.bf16.mxu0 0
        %1504 = vmatpush1.bf16.msra.mxu0 0
        %1505 = vmatprep.subr.bf16.mxu0 0
        %1506 = vmatpush1.bf16.msra.mxu0 0
        %1507 = vmatprep.subr.bf16.mxu0 0
        %1508 = vmatpush1.bf16.msra.mxu0 0
        %1509 = vmatprep.subr.bf16.mxu0 0
        %1510 = vmatpush1.bf16.msra.mxu0 0
        %1511 = vmatprep.subr.bf16.mxu0 0
        %1512 = vmatpush1.bf16.msra.mxu0 0
        %1513 = vmatprep.subr.bf16.mxu0 0
        %1514 = vmatpush1.bf16.msra.mxu0 0
        %1515 = vmatprep.subr.bf16.mxu0 0
        %1516 = vmatpush1.bf16.msra.mxu0 0
        %1517 = vmatprep.subr.bf16.mxu0 0
        %1518 = vmatpush1.bf16.msra.mxu0 0
        %1519 = vmatprep.subr.bf16.mxu0 0
        %1520 = vmatpush1.bf16.msra.mxu0 0
        %1521 = vmatprep.subr.bf16.mxu0 0
        %1522 = vmatpush1.bf16.msra.mxu0 0
        %1523 = vmatprep.subr.bf16.mxu0 0
        %1524 = vmatpush1.bf16.msra.mxu0 0
        %1525 = vmatprep.mubr.bf16.mxu0 0
        %1526 = vmatmul.mubr.bf16.gmra.mrb[0].mxu0 %v1482
        %v1527 = vpop.f32.mrb[0].mxu0
        %v1528 = vadd.f32 0.0, %v1527
        %v1529 = vpop.f32.mrb[0].mxu0
        %v1530 = vadd.f32 0.0, %v1529
        %v1531 = vpop.f32.mrb[0].mxu0
        %v1532 = vadd.f32 0.0, %v1531
        %v1533 = vpop.f32.mrb[0].mxu0
        %v1534 = vadd.f32 0.0, %v1533
        %1535 = vmatprep.mubr.bf16.mxu0 0
        %1536 = vmatmul.mubr.bf16.gmra.mrb[0].mxu0 %v1485
        %v1537 = vpop.f32.mrb[0].mxu0
        %v1538 = vadd.f32 0.0, %v1537
        %v1539 = vpop.f32.mrb[0].mxu0
        %v1540 = vadd.f32 0.0, %v1539
        %v1541 = vpop.f32.mrb[0].mxu0
        %v1542 = vadd.f32 0.0, %v1541
        %v1543 = vpop.f32.mrb[0].mxu0
        %v1544 = vadd.f32 0.0, %v1543
        %1545 = vmatprep.mubr.bf16.mxu0 0
        %1546 = vmatmul.mubr.bf16.gmra.mrb[0].mxu0 %v1488
        %v1547 = vpop.f32.mrb[0].mxu0
        %v1548 = vadd.f32 0.0, %v1547
        %v1549 = vpop.f32.mrb[0].mxu0
        %v1550 = vadd.f32 0.0, %v1549
        %v1551 = vpop.f32.mrb[0].mxu0
        %v1552 = vadd.f32 0.0, %v1551
        %v1553 = vpop.f32.mrb[0].mxu0
        %v1554 = vadd.f32 0.0, %v1553
        %1555 = vmatprep.mubr.bf16.mxu0 0
        %1556 = vmatmul.mubr.bf16.gmra.mrb[0].mxu0 %v1491
        %v1557 = vpop.f32.mrb[0].mxu0
        %v1558 = vadd.f32 0.0, %v1557
        %v1559 = vpop.f32.mrb[0].mxu0
        %v1560 = vadd.f32 0.0, %v1559
        %v1561 = vpop.f32.mrb[0].mxu0
        %v1562 = vadd.f32 0.0, %v1561
        %v1563 = vpop.f32.mrb[0].mxu0
        %v1564 = vadd.f32 0.0, %v1563
        %1565 = vdwg.mxu0
        %v1566 = vpack.c.bf16 %v1532, %v1528
        %v1567 = vpack.c.bf16 %v1534, %v1530
        %v1568 = vpack.c.bf16 %v1542, %v1538
        %v1569 = vpack.c.bf16 %v1544, %v1540
        %v1570 = vpack.c.bf16 %v1552, %v1548
        %v1571 = vpack.c.bf16 %v1554, %v1550
        %v1572 = vpack.c.bf16 %v1562, %v1558
        %v1573 = vpack.c.bf16 %v1564, %v1560
        %v1574 = vld [vmem:[%s12] sm:$0xff]
        %v1575 = vld [vmem:[%s12 + $0x8] sm:$0xff]
        %v1576 = vld [vmem:[%s12 + $0x10] sm:$0xff]
        %v1577 = vld [vmem:[%s12 + $0x18] sm:$0xff]
        %v1578 = vld [vmem:[%s12 + $0x20] sm:$0xff]
        %v1579 = vld [vmem:[%s12 + $0x28] sm:$0xff]
        %v1580 = vld [vmem:[%s12 + $0x30] sm:$0xff]
        %v1581 = vld [vmem:[%s12 + $0x38] sm:$0xff]
        %v1582 = vld [vmem:[%s12 + $0x40] sm:$0xff]
        %v1583 = vld [vmem:[%s12 + $0x48] sm:$0xff]
        %v1584 = vld [vmem:[%s12 + $0x50] sm:$0xff]
        %v1585 = vld [vmem:[%s12 + $0x58] sm:$0xff]
        %v1586 = vld [vmem:[%s12 + $0x60] sm:$0xff]
        %v1587 = vld [vmem:[%s12 + $0x68] sm:$0xff]
        %v1588 = vld [vmem:[%s12 + $0x70] sm:$0xff]
        %v1589 = vld [vmem:[%s12 + $0x78] sm:$0xff]
        %v1590 = vld [vmem:[%s12 + $0x80] sm:$0xff]
        %v1591 = vld [vmem:[%s12 + $0x88] sm:$0xff]
        %v1592 = vld [vmem:[%s12 + $0x90] sm:$0xff]
        %v1593 = vld [vmem:[%s12 + $0x98] sm:$0xff]
        %v1594 = vld [vmem:[%s12 + $0xa0] sm:$0xff]
        %v1595 = vld [vmem:[%s12 + $0xa8] sm:$0xff]
        %v1596 = vld [vmem:[%s12 + $0xb0] sm:$0xff]
        %v1597 = vld [vmem:[%s12 + $0xb8] sm:$0xff]
        %v1598 = vld [vmem:[%s12 + $0xc0] sm:$0xff]
        %v1599 = vld [vmem:[%s12 + $0xc8] sm:$0xff]
        %v1600 = vld [vmem:[%s12 + $0xd0] sm:$0xff]
        %v1601 = vld [vmem:[%s12 + $0xd8] sm:$0xff]
        %v1602 = vld [vmem:[%s12 + $0xe0] sm:$0xff]
        %v1603 = vld [vmem:[%s12 + $0xe8] sm:$0xff]
        %v1604 = vld [vmem:[%s12 + $0xf0] sm:$0xff]
        %v1605 = vld [vmem:[%s12 + $0xf8] sm:$0xff]
        %v1606 = vld [vmem:[%s12 + $0x100] sm:$0xff]
        %v1607 = vld [vmem:[%s12 + $0x108] sm:$0xff]
        %v1608 = vld [vmem:[%s12 + $0x110] sm:$0xff]
        %v1609 = vld [vmem:[%s12 + $0x118] sm:$0xff]
        %v1610 = vld [vmem:[%s12 + $0x120] sm:$0xff]
        %v1611 = vld [vmem:[%s12 + $0x128] sm:$0xff]
        %v1612 = vld [vmem:[%s12 + $0x130] sm:$0xff]
        %v1613 = vld [vmem:[%s12 + $0x138] sm:$0xff]
        %v1614 = vld [vmem:[%s12 + $0x140] sm:$0xff]
        %v1615 = vld [vmem:[%s12 + $0x148] sm:$0xff]
        %v1616 = vld [vmem:[%s12 + $0x150] sm:$0xff]
        %v1617 = vld [vmem:[%s12 + $0x158] sm:$0xff]
        %v1618 = vld [vmem:[%s12 + $0x160] sm:$0xff]
        %v1619 = vld [vmem:[%s12 + $0x168] sm:$0xff]
        %v1620 = vld [vmem:[%s12 + $0x170] sm:$0xff]
        %v1621 = vld [vmem:[%s12 + $0x178] sm:$0xff]
        %v1622 = vld [vmem:[%s12 + $0x180] sm:$0xff]
        %v1623 = vld [vmem:[%s12 + $0x188] sm:$0xff]
        %v1624 = vld [vmem:[%s12 + $0x190] sm:$0xff]
        %v1625 = vld [vmem:[%s12 + $0x198] sm:$0xff]
        %v1626 = vld [vmem:[%s12 + $0x1a0] sm:$0xff]
        %v1627 = vld [vmem:[%s12 + $0x1a8] sm:$0xff]
        %v1628 = vld [vmem:[%s12 + $0x1b0] sm:$0xff]
        %v1629 = vld [vmem:[%s12 + $0x1b8] sm:$0xff]
        %v1630 = vld [vmem:[%s12 + $0x1c0] sm:$0xff]
        %v1631 = vld [vmem:[%s12 + $0x1c8] sm:$0xff]
        %v1632 = vld [vmem:[%s12 + $0x1d0] sm:$0xff]
        %v1633 = vld [vmem:[%s12 + $0x1d8] sm:$0xff]
        %v1634 = vld [vmem:[%s12 + $0x1e0] sm:$0xff]
        %v1635 = vld [vmem:[%s12 + $0x1e8] sm:$0xff]
        %v1636 = vld [vmem:[%s12 + $0x1f0] sm:$0xff]
        %v1637 = vld [vmem:[%s12 + $0x1f8] sm:$0xff]
        %v1702 = vunpack.c.l.b16 %v1574
        %v1703 = vunpack.c.h.b16 %v1574
        %v1704 = vunpack.c.l.b16 %v1575
        %v1705 = vunpack.c.h.b16 %v1575
        %v1706 = vunpack.c.l.b16 %v1576
        %v1707 = vunpack.c.h.b16 %v1576
        %v1708 = vunpack.c.l.b16 %v1577
        %v1709 = vunpack.c.h.b16 %v1577
        %v1710 = vunpack.c.l.b16 %v1578
        %v1711 = vunpack.c.h.b16 %v1578
        %v1712 = vunpack.c.l.b16 %v1579
        %v1713 = vunpack.c.h.b16 %v1579
        %v1714 = vunpack.c.l.b16 %v1580
        %v1715 = vunpack.c.h.b16 %v1580
        %v1716 = vunpack.c.l.b16 %v1581
        %v1717 = vunpack.c.h.b16 %v1581
        %v1718 = vunpack.c.l.b16 %v1582
        %v1719 = vunpack.c.h.b16 %v1582
        %v1720 = vunpack.c.l.b16 %v1583
        %v1721 = vunpack.c.h.b16 %v1583
        %v1722 = vunpack.c.l.b16 %v1584
        %v1723 = vunpack.c.h.b16 %v1584
        %v1724 = vunpack.c.l.b16 %v1585
        %v1725 = vunpack.c.h.b16 %v1585
        %v1726 = vunpack.c.l.b16 %v1586
        %v1727 = vunpack.c.h.b16 %v1586
        %v1728 = vunpack.c.l.b16 %v1587
        %v1729 = vunpack.c.h.b16 %v1587
        %v1730 = vunpack.c.l.b16 %v1588
        %v1731 = vunpack.c.h.b16 %v1588
        %v1732 = vunpack.c.l.b16 %v1589
        %v1733 = vunpack.c.h.b16 %v1589
        %v1734 = vunpack.c.l.b16 %v1590
        %v1735 = vunpack.c.h.b16 %v1590
        %v1736 = vunpack.c.l.b16 %v1591
        %v1737 = vunpack.c.h.b16 %v1591
        %v1738 = vunpack.c.l.b16 %v1592
        %v1739 = vunpack.c.h.b16 %v1592
        %v1740 = vunpack.c.l.b16 %v1593
        %v1741 = vunpack.c.h.b16 %v1593
        %v1742 = vunpack.c.l.b16 %v1594
        %v1743 = vunpack.c.h.b16 %v1594
        %v1744 = vunpack.c.l.b16 %v1595
        %v1745 = vunpack.c.h.b16 %v1595
        %v1746 = vunpack.c.l.b16 %v1596
        %v1747 = vunpack.c.h.b16 %v1596
        %v1748 = vunpack.c.l.b16 %v1597
        %v1749 = vunpack.c.h.b16 %v1597
        %v1750 = vunpack.c.l.b16 %v1598
        %v1751 = vunpack.c.h.b16 %v1598
        %v1752 = vunpack.c.l.b16 %v1599
        %v1753 = vunpack.c.h.b16 %v1599
        %v1754 = vunpack.c.l.b16 %v1600
        %v1755 = vunpack.c.h.b16 %v1600
        %v1756 = vunpack.c.l.b16 %v1601
        %v1757 = vunpack.c.h.b16 %v1601
        %v1758 = vunpack.c.l.b16 %v1602
        %v1759 = vunpack.c.h.b16 %v1602
        %v1760 = vunpack.c.l.b16 %v1603
        %v1761 = vunpack.c.h.b16 %v1603
        %v1762 = vunpack.c.l.b16 %v1604
        %v1763 = vunpack.c.h.b16 %v1604
        %v1764 = vunpack.c.l.b16 %v1605
        %v1765 = vunpack.c.h.b16 %v1605
        %v1766 = vunpack.c.l.b16 %v1606
        %v1767 = vunpack.c.h.b16 %v1606
        %v1768 = vunpack.c.l.b16 %v1607
        %v1769 = vunpack.c.h.b16 %v1607
        %v1770 = vunpack.c.l.b16 %v1608
        %v1771 = vunpack.c.h.b16 %v1608
        %v1772 = vunpack.c.l.b16 %v1609
        %v1773 = vunpack.c.h.b16 %v1609
        %v1774 = vunpack.c.l.b16 %v1610
        %v1775 = vunpack.c.h.b16 %v1610
        %v1776 = vunpack.c.l.b16 %v1611
        %v1777 = vunpack.c.h.b16 %v1611
        %v1778 = vunpack.c.l.b16 %v1612
        %v1779 = vunpack.c.h.b16 %v1612
        %v1780 = vunpack.c.l.b16 %v1613
        %v1781 = vunpack.c.h.b16 %v1613
        %v1782 = vunpack.c.l.b16 %v1614
        %v1783 = vunpack.c.h.b16 %v1614
        %v1784 = vunpack.c.l.b16 %v1615
        %v1785 = vunpack.c.h.b16 %v1615
        %v1786 = vunpack.c.l.b16 %v1616
        %v1787 = vunpack.c.h.b16 %v1616
        %v1788 = vunpack.c.l.b16 %v1617
        %v1789 = vunpack.c.h.b16 %v1617
        %v1790 = vunpack.c.l.b16 %v1618
        %v1791 = vunpack.c.h.b16 %v1618
        %v1792 = vunpack.c.l.b16 %v1619
        %v1793 = vunpack.c.h.b16 %v1619
        %v1794 = vunpack.c.l.b16 %v1620
        %v1795 = vunpack.c.h.b16 %v1620
        %v1796 = vunpack.c.l.b16 %v1621
        %v1797 = vunpack.c.h.b16 %v1621
        %v1798 = vunpack.c.l.b16 %v1622
        %v1799 = vunpack.c.h.b16 %v1622
        %v1800 = vunpack.c.l.b16 %v1623
        %v1801 = vunpack.c.h.b16 %v1623
        %v1802 = vunpack.c.l.b16 %v1624
        %v1803 = vunpack.c.h.b16 %v1624
        %v1804 = vunpack.c.l.b16 %v1625
        %v1805 = vunpack.c.h.b16 %v1625
        %v1806 = vunpack.c.l.b16 %v1626
        %v1807 = vunpack.c.h.b16 %v1626
        %v1808 = vunpack.c.l.b16 %v1627
        %v1809 = vunpack.c.h.b16 %v1627
        %v1810 = vunpack.c.l.b16 %v1628
        %v1811 = vunpack.c.h.b16 %v1628
        %v1812 = vunpack.c.l.b16 %v1629
        %v1813 = vunpack.c.h.b16 %v1629
        %v1814 = vunpack.c.l.b16 %v1630
        %v1815 = vunpack.c.h.b16 %v1630
        %v1816 = vunpack.c.l.b16 %v1631
        %v1817 = vunpack.c.h.b16 %v1631
        %v1818 = vunpack.c.l.b16 %v1632
        %v1819 = vunpack.c.h.b16 %v1632
        %v1820 = vunpack.c.l.b16 %v1633
        %v1821 = vunpack.c.h.b16 %v1633
        %v1822 = vunpack.c.l.b16 %v1634
        %v1823 = vunpack.c.h.b16 %v1634
        %v1824 = vunpack.c.l.b16 %v1635
        %v1825 = vunpack.c.h.b16 %v1635
        %v1826 = vunpack.c.l.b16 %v1636
        %v1827 = vunpack.c.h.b16 %v1636
        %v1828 = vunpack.c.l.b16 %v1637
        %v1829 = vunpack.c.h.b16 %v1637
        %v1830 = vpack.c.b16 %v1706, %v1702
        %v1831 = vpack.c.b16 %v1707, %v1703
        %v1832 = vpack.c.b16 %v1708, %v1704
        %v1833 = vpack.c.b16 %v1709, %v1705
        %v1834 = vpack.c.b16 %v1714, %v1710
        %v1835 = vpack.c.b16 %v1715, %v1711
        %v1836 = vpack.c.b16 %v1716, %v1712
        %v1837 = vpack.c.b16 %v1717, %v1713
        %v1838 = vpack.c.b16 %v1722, %v1718
        %v1839 = vpack.c.b16 %v1723, %v1719
        %v1840 = vpack.c.b16 %v1724, %v1720
        %v1841 = vpack.c.b16 %v1725, %v1721
        %v1842 = vpack.c.b16 %v1730, %v1726
        %v1843 = vpack.c.b16 %v1731, %v1727
        %v1844 = vpack.c.b16 %v1732, %v1728
        %v1845 = vpack.c.b16 %v1733, %v1729
        %v1846 = vpack.c.b16 %v1738, %v1734
        %v1847 = vpack.c.b16 %v1739, %v1735
        %v1848 = vpack.c.b16 %v1740, %v1736
        %v1849 = vpack.c.b16 %v1741, %v1737
        %v1850 = vpack.c.b16 %v1746, %v1742
        %v1851 = vpack.c.b16 %v1747, %v1743
        %v1852 = vpack.c.b16 %v1748, %v1744
        %v1853 = vpack.c.b16 %v1749, %v1745
        %v1854 = vpack.c.b16 %v1754, %v1750
        %v1855 = vpack.c.b16 %v1755, %v1751
        %v1856 = vpack.c.b16 %v1756, %v1752
        %v1857 = vpack.c.b16 %v1757, %v1753
        %v1858 = vpack.c.b16 %v1762, %v1758
        %v1859 = vpack.c.b16 %v1763, %v1759
        %v1860 = vpack.c.b16 %v1764, %v1760
        %v1861 = vpack.c.b16 %v1765, %v1761
        %v1862 = vpack.c.b16 %v1770, %v1766
        %v1863 = vpack.c.b16 %v1771, %v1767
        %v1864 = vpack.c.b16 %v1772, %v1768
        %v1865 = vpack.c.b16 %v1773, %v1769
        %v1866 = vpack.c.b16 %v1778, %v1774
        %v1867 = vpack.c.b16 %v1779, %v1775
        %v1868 = vpack.c.b16 %v1780, %v1776
        %v1869 = vpack.c.b16 %v1781, %v1777
        %v1870 = vpack.c.b16 %v1786, %v1782
        %v1871 = vpack.c.b16 %v1787, %v1783
        %v1872 = vpack.c.b16 %v1788, %v1784
        %v1873 = vpack.c.b16 %v1789, %v1785
        %v1874 = vpack.c.b16 %v1794, %v1790
        %v1875 = vpack.c.b16 %v1795, %v1791
        %v1876 = vpack.c.b16 %v1796, %v1792
        %v1877 = vpack.c.b16 %v1797, %v1793
        %v1878 = vpack.c.b16 %v1802, %v1798
        %v1879 = vpack.c.b16 %v1803, %v1799
        %v1880 = vpack.c.b16 %v1804, %v1800
        %v1881 = vpack.c.b16 %v1805, %v1801
        %v1882 = vpack.c.b16 %v1810, %v1806
        %v1883 = vpack.c.b16 %v1811, %v1807
        %v1884 = vpack.c.b16 %v1812, %v1808
        %v1885 = vpack.c.b16 %v1813, %v1809
        %v1886 = vpack.c.b16 %v1818, %v1814
        %v1887 = vpack.c.b16 %v1819, %v1815
        %v1888 = vpack.c.b16 %v1820, %v1816
        %v1889 = vpack.c.b16 %v1821, %v1817
        %v1890 = vpack.c.b16 %v1826, %v1822
        %v1891 = vpack.c.b16 %v1827, %v1823
        %v1892 = vpack.c.b16 %v1828, %v1824
        %v1893 = vpack.c.b16 %v1829, %v1825
        %1958 = vmatprep.subr.bf16.mxu0 %v1831
        %1959 = vmatpush1.bf16.msra.mxu0 %v1830
        %1960 = vmatprep.subr.bf16.mxu0 %v1835
        %1961 = vmatpush1.bf16.msra.mxu0 %v1834
        %1962 = vmatprep.subr.bf16.mxu0 %v1839
        %1963 = vmatpush1.bf16.msra.mxu0 %v1838
        %1964 = vmatprep.subr.bf16.mxu0 %v1843
        %1965 = vmatpush1.bf16.msra.mxu0 %v1842
        %1966 = vmatprep.subr.bf16.mxu0 %v1847
        %1967 = vmatpush1.bf16.msra.mxu0 %v1846
        %1968 = vmatprep.subr.bf16.mxu0 %v1851
        %1969 = vmatpush1.bf16.msra.mxu0 %v1850
        %1970 = vmatprep.subr.bf16.mxu0 %v1855
        %1971 = vmatpush1.bf16.msra.mxu0 %v1854
        %1972 = vmatprep.subr.bf16.mxu0 %v1859
        %1973 = vmatpush1.bf16.msra.mxu0 %v1858
        %1974 = vmatprep.subr.bf16.mxu0 %v1863
        %1975 = vmatpush1.bf16.msra.mxu0 %v1862
        %1976 = vmatprep.subr.bf16.mxu0 %v1867
        %1977 = vmatpush1.bf16.msra.mxu0 %v1866
        %1978 = vmatprep.subr.bf16.mxu0 %v1871
        %1979 = vmatpush1.bf16.msra.mxu0 %v1870
        %1980 = vmatprep.subr.bf16.mxu0 %v1875
        %1981 = vmatpush1.bf16.msra.mxu0 %v1874
        %1982 = vmatprep.subr.bf16.mxu0 %v1879
        %1983 = vmatpush1.bf16.msra.mxu0 %v1878
        %1984 = vmatprep.subr.bf16.mxu0 %v1883
        %1985 = vmatpush1.bf16.msra.mxu0 %v1882
        %1986 = vmatprep.subr.bf16.mxu0 %v1887
        %1987 = vmatpush1.bf16.msra.mxu0 %v1886
        %1988 = vmatprep.subr.bf16.mxu0 %v1891
        %1989 = vmatpush1.bf16.msra.mxu0 %v1890
        %1990 = vmatprep.mubr.bf16.mxu0 %v1567
        %1991 = vmatmul.mubr.bf16.gmra.mrb[0].mxu0 %v1566
        %v1992 = vpop.f32.mrb[0].mxu0
        %v1993 = vadd.f32 0.0, %v1992
        %v1994 = vpop.f32.mrb[0].mxu0
        %v1995 = vadd.f32 0.0, %v1994
        %v1996 = vpop.f32.mrb[0].mxu0
        %v1997 = vadd.f32 0.0, %v1996
        %v1998 = vpop.f32.mrb[0].mxu0
        %v1999 = vadd.f32 0.0, %v1998
        %2000 = vmatprep.mubr.bf16.mxu0 %v1569
        %2001 = vmatmul.mubr.bf16.gmra.mrb[0].mxu0 %v1568
        %v2002 = vpop.f32.mrb[0].mxu0
        %v2003 = vadd.f32 0.0, %v2002
        %v2004 = vpop.f32.mrb[0].mxu0
        %v2005 = vadd.f32 0.0, %v2004
        %v2006 = vpop.f32.mrb[0].mxu0
        %v2007 = vadd.f32 0.0, %v2006
        %v2008 = vpop.f32.mrb[0].mxu0
        %v2009 = vadd.f32 0.0, %v2008
        %2010 = vmatprep.mubr.bf16.mxu0 %v1571
        %2011 = vmatmul.mubr.bf16.gmra.mrb[0].mxu0 %v1570
        %v2012 = vpop.f32.mrb[0].mxu0
        %v2013 = vadd.f32 0.0, %v2012
        %v2014 = vpop.f32.mrb[0].mxu0
        %v2015 = vadd.f32 0.0, %v2014
        %v2016 = vpop.f32.mrb[0].mxu0
        %v2017 = vadd.f32 0.0, %v2016
        %v2018 = vpop.f32.mrb[0].mxu0
        %v2019 = vadd.f32 0.0, %v2018
        %2020 = vmatprep.mubr.bf16.mxu0 %v1573
        %2021 = vmatmul.mubr.bf16.gmra.mrb[0].mxu0 %v1572
        %v2022 = vpop.f32.mrb[0].mxu0
        %v2023 = vadd.f32 0.0, %v2022
        %v2024 = vpop.f32.mrb[0].mxu0
        %v2025 = vadd.f32 0.0, %v2024
        %v2026 = vpop.f32.mrb[0].mxu0
        %v2027 = vadd.f32 0.0, %v2026
        %v2028 = vpop.f32.mrb[0].mxu0
        %v2029 = vadd.f32 0.0, %v2028
        %2030 = vdwg.mxu0
        %2031 = vmatprep.subr.bf16.mxu0 %v1833
        %2032 = vmatpush1.bf16.msra.mxu0 %v1832
        %2033 = vmatprep.subr.bf16.mxu0 %v1837
        %2034 = vmatpush1.bf16.msra.mxu0 %v1836
        %2035 = vmatprep.subr.bf16.mxu0 %v1841
        %2036 = vmatpush1.bf16.msra.mxu0 %v1840
        %2037 = vmatprep.subr.bf16.mxu0 %v1845
        %2038 = vmatpush1.bf16.msra.mxu0 %v1844
        %2039 = vmatprep.subr.bf16.mxu0 %v1849
        %2040 = vmatpush1.bf16.msra.mxu0 %v1848
        %2041 = vmatprep.subr.bf16.mxu0 %v1853
        %2042 = vmatpush1.bf16.msra.mxu0 %v1852
        %2043 = vmatprep.subr.bf16.mxu0 %v1857
        %2044 = vmatpush1.bf16.msra.mxu0 %v1856
        %2045 = vmatprep.subr.bf16.mxu0 %v1861
        %2046 = vmatpush1.bf16.msra.mxu0 %v1860
        %2047 = vmatprep.subr.bf16.mxu0 %v1865
        %2048 = vmatpush1.bf16.msra.mxu0 %v1864
        %2049 = vmatprep.subr.bf16.mxu0 %v1869
        %2050 = vmatpush1.bf16.msra.mxu0 %v1868
        %2051 = vmatprep.subr.bf16.mxu0 %v1873
        %2052 = vmatpush1.bf16.msra.mxu0 %v1872
        %2053 = vmatprep.subr.bf16.mxu0 %v1877
        %2054 = vmatpush1.bf16.msra.mxu0 %v1876
        %2055 = vmatprep.subr.bf16.mxu0 %v1881
        %2056 = vmatpush1.bf16.msra.mxu0 %v1880
        %2057 = vmatprep.subr.bf16.mxu0 %v1885
        %2058 = vmatpush1.bf16.msra.mxu0 %v1884
        %2059 = vmatprep.subr.bf16.mxu0 %v1889
        %2060 = vmatpush1.bf16.msra.mxu0 %v1888
        %2061 = vmatprep.subr.bf16.mxu0 %v1893
        %2062 = vmatpush1.bf16.msra.mxu0 %v1892
        %2063 = vmatprep.mubr.bf16.mxu0 %v1567
        %2064 = vmatmul.mubr.bf16.gmra.mrb[0].mxu0 %v1566
        %v2065 = vpop.f32.mrb[0].mxu0
        %v2066 = vadd.f32 0.0, %v2065
        %v2067 = vpop.f32.mrb[0].mxu0
        %v2068 = vadd.f32 0.0, %v2067
        %v2069 = vpop.f32.mrb[0].mxu0
        %v2070 = vadd.f32 0.0, %v2069
        %v2071 = vpop.f32.mrb[0].mxu0
        %v2072 = vadd.f32 0.0, %v2071
        %2073 = vmatprep.mubr.bf16.mxu0 %v1569
        %2074 = vmatmul.mubr.bf16.gmra.mrb[0].mxu0 %v1568
        %v2075 = vpop.f32.mrb[0].mxu0
        %v2076 = vadd.f32 0.0, %v2075
        %v2077 = vpop.f32.mrb[0].mxu0
        %v2078 = vadd.f32 0.0, %v2077
        %v2079 = vpop.f32.mrb[0].mxu0
        %v2080 = vadd.f32 0.0, %v2079
        %v2081 = vpop.f32.mrb[0].mxu0
        %v2082 = vadd.f32 0.0, %v2081
        %2083 = vmatprep.mubr.bf16.mxu0 %v1571
        %2084 = vmatmul.mubr.bf16.gmra.mrb[0].mxu0 %v1570
        %v2085 = vpop.f32.mrb[0].mxu0
        %v2086 = vadd.f32 0.0, %v2085
        %v2087 = vpop.f32.mrb[0].mxu0
        %v2088 = vadd.f32 0.0, %v2087
        %v2089 = vpop.f32.mrb[0].mxu0
        %v2090 = vadd.f32 0.0, %v2089
        %v2091 = vpop.f32.mrb[0].mxu0
        %v2092 = vadd.f32 0.0, %v2091
        %2093 = vmatprep.mubr.bf16.mxu0 %v1573
        %2094 = vmatmul.mubr.bf16.gmra.mrb[0].mxu0 %v1572
        %v2095 = vpop.f32.mrb[0].mxu0
        %v2096 = vadd.f32 0.0, %v2095
        %v2097 = vpop.f32.mrb[0].mxu0
        %v2098 = vadd.f32 0.0, %v2097
        %v2099 = vpop.f32.mrb[0].mxu0
        %v2100 = vadd.f32 0.0, %v2099
        %v2101 = vpop.f32.mrb[0].mxu0
        %v2102 = vadd.f32 0.0, %v2101
        %2103 = vdwg.mxu0
        %v2168 = vunpack.c.l.b16 %v1389
        %v2169 = vunpack.c.h.b16 %v1389
        %v2170 = vunpack.c.l.b16 %v1390
        %v2171 = vunpack.c.h.b16 %v1390
        %v2172 = vunpack.c.l.b16 %v1391
        %v2173 = vunpack.c.h.b16 %v1391
        %v2174 = vunpack.c.l.b16 %v1392
        %v2175 = vunpack.c.h.b16 %v1392
        %v2176 = vunpack.c.l.b16 %v1393
        %v2177 = vunpack.c.h.b16 %v1393
        %v2178 = vunpack.c.l.b16 %v1394
        %v2179 = vunpack.c.h.b16 %v1394
        %v2180 = vunpack.c.l.b16 %v1395
        %v2181 = vunpack.c.h.b16 %v1395
        %v2182 = vunpack.c.l.b16 %v1396
        %v2183 = vunpack.c.h.b16 %v1396
        %v2184 = vunpack.c.l.b16 %v1397
        %v2185 = vunpack.c.h.b16 %v1397
        %v2186 = vunpack.c.l.b16 %v1398
        %v2187 = vunpack.c.h.b16 %v1398
        %v2188 = vunpack.c.l.b16 %v1399
        %v2189 = vunpack.c.h.b16 %v1399
        %v2190 = vunpack.c.l.b16 %v1400
        %v2191 = vunpack.c.h.b16 %v1400
        %v2192 = vunpack.c.l.b16 %v1401
        %v2193 = vunpack.c.h.b16 %v1401
        %v2194 = vunpack.c.l.b16 %v1402
        %v2195 = vunpack.c.h.b16 %v1402
        %v2196 = vunpack.c.l.b16 %v1403
        %v2197 = vunpack.c.h.b16 %v1403
        %v2198 = vunpack.c.l.b16 %v1404
        %v2199 = vunpack.c.h.b16 %v1404
        %v2200 = vunpack.c.l.b16 %v1405
        %v2201 = vunpack.c.h.b16 %v1405
        %v2202 = vunpack.c.l.b16 %v1406
        %v2203 = vunpack.c.h.b16 %v1406
        %v2204 = vunpack.c.l.b16 %v1407
        %v2205 = vunpack.c.h.b16 %v1407
        %v2206 = vunpack.c.l.b16 %v1408
        %v2207 = vunpack.c.h.b16 %v1408
        %v2208 = vunpack.c.l.b16 %v1409
        %v2209 = vunpack.c.h.b16 %v1409
        %v2210 = vunpack.c.l.b16 %v1410
        %v2211 = vunpack.c.h.b16 %v1410
        %v2212 = vunpack.c.l.b16 %v1411
        %v2213 = vunpack.c.h.b16 %v1411
        %v2214 = vunpack.c.l.b16 %v1412
        %v2215 = vunpack.c.h.b16 %v1412
        %v2216 = vunpack.c.l.b16 %v1413
        %v2217 = vunpack.c.h.b16 %v1413
        %v2218 = vunpack.c.l.b16 %v1414
        %v2219 = vunpack.c.h.b16 %v1414
        %v2220 = vunpack.c.l.b16 %v1415
        %v2221 = vunpack.c.h.b16 %v1415
        %v2222 = vunpack.c.l.b16 %v1416
        %v2223 = vunpack.c.h.b16 %v1416
        %v2224 = vunpack.c.l.b16 %v1417
        %v2225 = vunpack.c.h.b16 %v1417
        %v2226 = vunpack.c.l.b16 %v1418
        %v2227 = vunpack.c.h.b16 %v1418
        %v2228 = vunpack.c.l.b16 %v1419
        %v2229 = vunpack.c.h.b16 %v1419
        %v2230 = vunpack.c.l.b16 %v1420
        %v2231 = vunpack.c.h.b16 %v1420
        %v2232 = vunpack.c.l.b16 %v1421
        %v2233 = vunpack.c.h.b16 %v1421
        %v2234 = vunpack.c.l.b16 %v1422
        %v2235 = vunpack.c.h.b16 %v1422
        %v2236 = vunpack.c.l.b16 %v1423
        %v2237 = vunpack.c.h.b16 %v1423
        %v2238 = vunpack.c.l.b16 %v1424
        %v2239 = vunpack.c.h.b16 %v1424
        %v2240 = vunpack.c.l.b16 %v1425
        %v2241 = vunpack.c.h.b16 %v1425
        %v2242 = vunpack.c.l.b16 %v1426
        %v2243 = vunpack.c.h.b16 %v1426
        %v2244 = vunpack.c.l.b16 %v1427
        %v2245 = vunpack.c.h.b16 %v1427
        %v2246 = vunpack.c.l.b16 %v1428
        %v2247 = vunpack.c.h.b16 %v1428
        %v2248 = vunpack.c.l.b16 %v1429
        %v2249 = vunpack.c.h.b16 %v1429
        %v2250 = vunpack.c.l.b16 %v1430
        %v2251 = vunpack.c.h.b16 %v1430
        %v2252 = vunpack.c.l.b16 %v1431
        %v2253 = vunpack.c.h.b16 %v1431
        %v2254 = vunpack.c.l.b16 %v1432
        %v2255 = vunpack.c.h.b16 %v1432
        %v2256 = vunpack.c.l.b16 %v1433
        %v2257 = vunpack.c.h.b16 %v1433
        %v2258 = vunpack.c.l.b16 %v1434
        %v2259 = vunpack.c.h.b16 %v1434
        %v2260 = vunpack.c.l.b16 %v1435
        %v2261 = vunpack.c.h.b16 %v1435
        %v2262 = vunpack.c.l.b16 %v1436
        %v2263 = vunpack.c.h.b16 %v1436
        %v2264 = vunpack.c.l.b16 %v1437
        %v2265 = vunpack.c.h.b16 %v1437
        %v2266 = vunpack.c.l.b16 %v1438
        %v2267 = vunpack.c.h.b16 %v1438
        %v2268 = vunpack.c.l.b16 %v1439
        %v2269 = vunpack.c.h.b16 %v1439
        %v2270 = vunpack.c.l.b16 %v1440
        %v2271 = vunpack.c.h.b16 %v1440
        %v2272 = vunpack.c.l.b16 %v1441
        %v2273 = vunpack.c.h.b16 %v1441
        %v2274 = vunpack.c.l.b16 %v1442
        %v2275 = vunpack.c.h.b16 %v1442
        %v2276 = vunpack.c.l.b16 %v1443
        %v2277 = vunpack.c.h.b16 %v1443
        %v2278 = vunpack.c.l.b16 %v1444
        %v2279 = vunpack.c.h.b16 %v1444
        %v2280 = vunpack.c.l.b16 %v1445
        %v2281 = vunpack.c.h.b16 %v1445
        %v2282 = vunpack.c.l.b16 %v1446
        %v2283 = vunpack.c.h.b16 %v1446
        %v2284 = vunpack.c.l.b16 %v1447
        %v2285 = vunpack.c.h.b16 %v1447
        %v2286 = vunpack.c.l.b16 %v1448
        %v2287 = vunpack.c.h.b16 %v1448
        %v2288 = vunpack.c.l.b16 %v1449
        %v2289 = vunpack.c.h.b16 %v1449
        %v2290 = vunpack.c.l.b16 %v1450
        %v2291 = vunpack.c.h.b16 %v1450
        %v2292 = vunpack.c.l.b16 %v1451
        %v2293 = vunpack.c.h.b16 %v1451
        %v2294 = vunpack.c.l.b16 %v1452
        %v2295 = vunpack.c.h.b16 %v1452
        %v2296 = vpack.c.b16 %v2172, %v2168
        %v2297 = vpack.c.b16 %v2173, %v2169
        %v2298 = vpack.c.b16 %v2174, %v2170
        %v2299 = vpack.c.b16 %v2175, %v2171
        %v2300 = vpack.c.b16 %v2180, %v2176
        %v2301 = vpack.c.b16 %v2181, %v2177
        %v2302 = vpack.c.b16 %v2182, %v2178
        %v2303 = vpack.c.b16 %v2183, %v2179
        %v2304 = vpack.c.b16 %v2188, %v2184
        %v2305 = vpack.c.b16 %v2189, %v2185
        %v2306 = vpack.c.b16 %v2190, %v2186
        %v2307 = vpack.c.b16 %v2191, %v2187
        %v2308 = vpack.c.b16 %v2196, %v2192
        %v2309 = vpack.c.b16 %v2197, %v2193
        %v2310 = vpack.c.b16 %v2198, %v2194
        %v2311 = vpack.c.b16 %v2199, %v2195
        %v2312 = vpack.c.b16 %v2204, %v2200
        %v2313 = vpack.c.b16 %v2205, %v2201
        %v2314 = vpack.c.b16 %v2206, %v2202
        %v2315 = vpack.c.b16 %v2207, %v2203
        %v2316 = vpack.c.b16 %v2212, %v2208
        %v2317 = vpack.c.b16 %v2213, %v2209
        %v2318 = vpack.c.b16 %v2214, %v2210
        %v2319 = vpack.c.b16 %v2215, %v2211
        %v2320 = vpack.c.b16 %v2220, %v2216
        %v2321 = vpack.c.b16 %v2221, %v2217
        %v2322 = vpack.c.b16 %v2222, %v2218
        %v2323 = vpack.c.b16 %v2223, %v2219
        %v2324 = vpack.c.b16 %v2228, %v2224
        %v2325 = vpack.c.b16 %v2229, %v2225
        %v2326 = vpack.c.b16 %v2230, %v2226
        %v2327 = vpack.c.b16 %v2231, %v2227
        %v2328 = vpack.c.b16 %v2236, %v2232
        %v2329 = vpack.c.b16 %v2237, %v2233
        %v2330 = vpack.c.b16 %v2238, %v2234
        %v2331 = vpack.c.b16 %v2239, %v2235
        %v2332 = vpack.c.b16 %v2244, %v2240
        %v2333 = vpack.c.b16 %v2245, %v2241
        %v2334 = vpack.c.b16 %v2246, %v2242
        %v2335 = vpack.c.b16 %v2247, %v2243
        %v2336 = vpack.c.b16 %v2252, %v2248
        %v2337 = vpack.c.b16 %v2253, %v2249
        %v2338 = vpack.c.b16 %v2254, %v2250
        %v2339 = vpack.c.b16 %v2255, %v2251
        %v2340 = vpack.c.b16 %v2260, %v2256
        %v2341 = vpack.c.b16 %v2261, %v2257
        %v2342 = vpack.c.b16 %v2262, %v2258
        %v2343 = vpack.c.b16 %v2263, %v2259
        %v2344 = vpack.c.b16 %v2268, %v2264
        %v2345 = vpack.c.b16 %v2269, %v2265
        %v2346 = vpack.c.b16 %v2270, %v2266
        %v2347 = vpack.c.b16 %v2271, %v2267
        %v2348 = vpack.c.b16 %v2276, %v2272
        %v2349 = vpack.c.b16 %v2277, %v2273
        %v2350 = vpack.c.b16 %v2278, %v2274
        %v2351 = vpack.c.b16 %v2279, %v2275
        %v2352 = vpack.c.b16 %v2284, %v2280
        %v2353 = vpack.c.b16 %v2285, %v2281
        %v2354 = vpack.c.b16 %v2286, %v2282
        %v2355 = vpack.c.b16 %v2287, %v2283
        %v2356 = vpack.c.b16 %v2292, %v2288
        %v2357 = vpack.c.b16 %v2293, %v2289
        %v2358 = vpack.c.b16 %v2294, %v2290
        %v2359 = vpack.c.b16 %v2295, %v2291
        %2424 = vmatprep.subr.bf16.mxu0 %v2297
        %2425 = vmatpush1.bf16.msra.mxu0 %v2296
        %2426 = vmatprep.subr.bf16.mxu0 %v2301
        %2427 = vmatpush1.bf16.msra.mxu0 %v2300
        %2428 = vmatprep.subr.bf16.mxu0 %v2305
        %2429 = vmatpush1.bf16.msra.mxu0 %v2304
        %2430 = vmatprep.subr.bf16.mxu0 %v2309
        %2431 = vmatpush1.bf16.msra.mxu0 %v2308
        %2432 = vmatprep.subr.bf16.mxu0 %v2313
        %2433 = vmatpush1.bf16.msra.mxu0 %v2312
        %2434 = vmatprep.subr.bf16.mxu0 %v2317
        %2435 = vmatpush1.bf16.msra.mxu0 %v2316
        %2436 = vmatprep.subr.bf16.mxu0 %v2321
        %2437 = vmatpush1.bf16.msra.mxu0 %v2320
        %2438 = vmatprep.subr.bf16.mxu0 %v2325
        %2439 = vmatpush1.bf16.msra.mxu0 %v2324
        %2440 = vmatprep.subr.bf16.mxu0 %v2329
        %2441 = vmatpush1.bf16.msra.mxu0 %v2328
        %2442 = vmatprep.subr.bf16.mxu0 %v2333
        %2443 = vmatpush1.bf16.msra.mxu0 %v2332
        %2444 = vmatprep.subr.bf16.mxu0 %v2337
        %2445 = vmatpush1.bf16.msra.mxu0 %v2336
        %2446 = vmatprep.subr.bf16.mxu0 %v2341
        %2447 = vmatpush1.bf16.msra.mxu0 %v2340
        %2448 = vmatprep.subr.bf16.mxu0 %v2345
        %2449 = vmatpush1.bf16.msra.mxu0 %v2344
        %2450 = vmatprep.subr.bf16.mxu0 %v2349
        %2451 = vmatpush1.bf16.msra.mxu0 %v2348
        %2452 = vmatprep.subr.bf16.mxu0 %v2353
        %2453 = vmatpush1.bf16.msra.mxu0 %v2352
        %2454 = vmatprep.subr.bf16.mxu0 %v2357
        %2455 = vmatpush1.bf16.msra.mxu0 %v2356
        %2456 = vmatprep.mubr.bf16.mxu0 %v1382
        %2457 = vmatmul.mubr.bf16.gmra.mrb[0].mxu0 %v1381
        %v2458 = vpop.f32.mrb[0].mxu0
        %v2459 = vadd.f32 %v1993, %v2458
        %v2460 = vpop.f32.mrb[0].mxu0
        %v2461 = vadd.f32 %v1995, %v2460
        %v2462 = vpop.f32.mrb[0].mxu0
        %v2463 = vadd.f32 %v1997, %v2462
        %v2464 = vpop.f32.mrb[0].mxu0
        %v2465 = vadd.f32 %v1999, %v2464
        %2466 = vmatprep.mubr.bf16.mxu0 %v1384
        %2467 = vmatmul.mubr.bf16.gmra.mrb[0].mxu0 %v1383
        %v2468 = vpop.f32.mrb[0].mxu0
        %v2469 = vadd.f32 %v2003, %v2468
        %v2470 = vpop.f32.mrb[0].mxu0
        %v2471 = vadd.f32 %v2005, %v2470
        %v2472 = vpop.f32.mrb[0].mxu0
        %v2473 = vadd.f32 %v2007, %v2472
        %v2474 = vpop.f32.mrb[0].mxu0
        %v2475 = vadd.f32 %v2009, %v2474
        %2476 = vmatprep.mubr.bf16.mxu0 %v1386
        %2477 = vmatmul.mubr.bf16.gmra.mrb[0].mxu0 %v1385
        %v2478 = vpop.f32.mrb[0].mxu0
        %v2479 = vadd.f32 %v2013, %v2478
        %v2480 = vpop.f32.mrb[0].mxu0
        %v2481 = vadd.f32 %v2015, %v2480
        %v2482 = vpop.f32.mrb[0].mxu0
        %v2483 = vadd.f32 %v2017, %v2482
        %v2484 = vpop.f32.mrb[0].mxu0
        %v2485 = vadd.f32 %v2019, %v2484
        %2486 = vmatprep.mubr.bf16.mxu0 %v1388
        %2487 = vmatmul.mubr.bf16.gmra.mrb[0].mxu0 %v1387
        %v2488 = vpop.f32.mrb[0].mxu0
        %v2489 = vadd.f32 %v2023, %v2488
        %v2490 = vpop.f32.mrb[0].mxu0
        %v2491 = vadd.f32 %v2025, %v2490
        %v2492 = vpop.f32.mrb[0].mxu0
        %v2493 = vadd.f32 %v2027, %v2492
        %v2494 = vpop.f32.mrb[0].mxu0
        %v2495 = vadd.f32 %v2029, %v2494
        %2496 = vdwg.mxu0
        %2497 = vmatprep.subr.bf16.mxu0 %v2299
        %2498 = vmatpush1.bf16.msra.mxu0 %v2298
        %2499 = vmatprep.subr.bf16.mxu0 %v2303
        %2500 = vmatpush1.bf16.msra.mxu0 %v2302
        %2501 = vmatprep.subr.bf16.mxu0 %v2307
        %2502 = vmatpush1.bf16.msra.mxu0 %v2306
        %2503 = vmatprep.subr.bf16.mxu0 %v2311
        %2504 = vmatpush1.bf16.msra.mxu0 %v2310
        %2505 = vmatprep.subr.bf16.mxu0 %v2315
        %2506 = vmatpush1.bf16.msra.mxu0 %v2314
        %2507 = vmatprep.subr.bf16.mxu0 %v2319
        %2508 = vmatpush1.bf16.msra.mxu0 %v2318
        %2509 = vmatprep.subr.bf16.mxu0 %v2323
        %2510 = vmatpush1.bf16.msra.mxu0 %v2322
        %2511 = vmatprep.subr.bf16.mxu0 %v2327
        %2512 = vmatpush1.bf16.msra.mxu0 %v2326
        %2513 = vmatprep.subr.bf16.mxu0 %v2331
        %2514 = vmatpush1.bf16.msra.mxu0 %v2330
        %2515 = vmatprep.subr.bf16.mxu0 %v2335
        %2516 = vmatpush1.bf16.msra.mxu0 %v2334
        %2517 = vmatprep.subr.bf16.mxu0 %v2339
        %2518 = vmatpush1.bf16.msra.mxu0 %v2338
        %2519 = vmatprep.subr.bf16.mxu0 %v2343
        %2520 = vmatpush1.bf16.msra.mxu0 %v2342
        %2521 = vmatprep.subr.bf16.mxu0 %v2347
        %2522 = vmatpush1.bf16.msra.mxu0 %v2346
        %2523 = vmatprep.subr.bf16.mxu0 %v2351
        %2524 = vmatpush1.bf16.msra.mxu0 %v2350
        %2525 = vmatprep.subr.bf16.mxu0 %v2355
        %2526 = vmatpush1.bf16.msra.mxu0 %v2354
        %2527 = vmatprep.subr.bf16.mxu0 %v2359
        %2528 = vmatpush1.bf16.msra.mxu0 %v2358
        %2529 = vmatprep.mubr.bf16.mxu0 %v1382
        %2530 = vmatmul.mubr.bf16.gmra.mrb[0].mxu0 %v1381
        %v2531 = vpop.f32.mrb[0].mxu0
        %v2532 = vadd.f32 %v2066, %v2531
        %v2533 = vpop.f32.mrb[0].mxu0
        %v2534 = vadd.f32 %v2068, %v2533
        %v2535 = vpop.f32.mrb[0].mxu0
        %v2536 = vadd.f32 %v2070, %v2535
        %v2537 = vpop.f32.mrb[0].mxu0
        %v2538 = vadd.f32 %v2072, %v2537
        %2539 = vmatprep.mubr.bf16.mxu0 %v1384
        %2540 = vmatmul.mubr.bf16.gmra.mrb[0].mxu0 %v1383
        %v2541 = vpop.f32.mrb[0].mxu0
        %v2542 = vadd.f32 %v2076, %v2541
        %v2543 = vpop.f32.mrb[0].mxu0
        %v2544 = vadd.f32 %v2078, %v2543
        %v2545 = vpop.f32.mrb[0].mxu0
        %v2546 = vadd.f32 %v2080, %v2545
        %v2547 = vpop.f32.mrb[0].mxu0
        %v2548 = vadd.f32 %v2082, %v2547
        %2549 = vmatprep.mubr.bf16.mxu0 %v1386
        %2550 = vmatmul.mubr.bf16.gmra.mrb[0].mxu0 %v1385
        %v2551 = vpop.f32.mrb[0].mxu0
        %v2552 = vadd.f32 %v2086, %v2551
        %v2553 = vpop.f32.mrb[0].mxu0
        %v2554 = vadd.f32 %v2088, %v2553
        %v2555 = vpop.f32.mrb[0].mxu0
        %v2556 = vadd.f32 %v2090, %v2555
        %v2557 = vpop.f32.mrb[0].mxu0
        %v2558 = vadd.f32 %v2092, %v2557
        %2559 = vmatprep.mubr.bf16.mxu0 %v1388
        %2560 = vmatmul.mubr.bf16.gmra.mrb[0].mxu0 %v1387
        %v2561 = vpop.f32.mrb[0].mxu0
        %v2562 = vadd.f32 %v2096, %v2561
        %v2563 = vpop.f32.mrb[0].mxu0
        %v2564 = vadd.f32 %v2098, %v2563
        %v2565 = vpop.f32.mrb[0].mxu0
        %v2566 = vadd.f32 %v2100, %v2565
        %v2567 = vpop.f32.mrb[0].mxu0
        %v2568 = vadd.f32 %v2102, %v2567
        %2569 = vdwg.mxu0
        %v2570 = vld [vmem:[%s10] sm:$0xf]
        %v2571 = vld [vmem:[%s10 + $0x4] sm:$0xf]
        %v2572 = vld [vmem:[%s10 + $0x8] sm:$0xf]
        %v2573 = vld [vmem:[%s10 + $0xc] sm:$0xf]
        %v2574 = vld [vmem:[%s10 + $0x10] sm:$0xf]
        %v2575 = vld [vmem:[%s10 + $0x14] sm:$0xf]
        %v2576 = vld [vmem:[%s10 + $0x18] sm:$0xf]
        %v2577 = vld [vmem:[%s10 + $0x1c] sm:$0xf]
        %v2586 = vunpack.c.l.b16 %v2570
        %v2587 = vunpack.c.l.b16 %v2571
        %v2588 = vunpack.c.l.b16 %v2572
        %v2589 = vunpack.c.l.b16 %v2573
        %v2590 = vunpack.c.l.b16 %v2574
        %v2591 = vunpack.c.l.b16 %v2575
        %v2592 = vunpack.c.l.b16 %v2576
        %v2593 = vunpack.c.l.b16 %v2577
        %v2594 = vpack.c.b16 %v2587, %v2586
        %v2595 = vpack.c.b16 %v2589, %v2588
        %v2596 = vpack.c.b16 %v2591, %v2590
        %v2597 = vpack.c.b16 %v2593, %v2592
        %v2599 = vsel %vm1295, %v2594, 0
        %v2602 = vsel %vm1295, %v2595, 0
        %v2605 = vsel %vm1295, %v2596, 0
        %v2608 = vsel %vm1295, %v2597, 0
        %2610 = vmatprep.subr.bf16.mxu0 %v1264
        %2611 = vmatpush1.bf16.msra.mxu0 %v1263
        %2612 = vmatprep.subr.bf16.mxu0 %v1266
        %2613 = vmatpush1.bf16.msra.mxu0 %v1265
        %2614 = vmatprep.subr.bf16.mxu0 0
        %2615 = vmatpush1.bf16.msra.mxu0 0
        %2616 = vmatprep.subr.bf16.mxu0 0
        %2617 = vmatpush1.bf16.msra.mxu0 0
        %2618 = vmatprep.subr.bf16.mxu0 0
        %2619 = vmatpush1.bf16.msra.mxu0 0
        %2620 = vmatprep.subr.bf16.mxu0 0
        %2621 = vmatpush1.bf16.msra.mxu0 0
        %2622 = vmatprep.subr.bf16.mxu0 0
        %2623 = vmatpush1.bf16.msra.mxu0 0
        %2624 = vmatprep.subr.bf16.mxu0 0
        %2625 = vmatpush1.bf16.msra.mxu0 0
        %2626 = vmatprep.subr.bf16.mxu0 0
        %2627 = vmatpush1.bf16.msra.mxu0 0
        %2628 = vmatprep.subr.bf16.mxu0 0
        %2629 = vmatpush1.bf16.msra.mxu0 0
        %2630 = vmatprep.subr.bf16.mxu0 0
        %2631 = vmatpush1.bf16.msra.mxu0 0
        %2632 = vmatprep.subr.bf16.mxu0 0
        %2633 = vmatpush1.bf16.msra.mxu0 0
        %2634 = vmatprep.subr.bf16.mxu0 0
        %2635 = vmatpush1.bf16.msra.mxu0 0
        %2636 = vmatprep.subr.bf16.mxu0 0
        %2637 = vmatpush1.bf16.msra.mxu0 0
        %2638 = vmatprep.subr.bf16.mxu0 0
        %2639 = vmatpush1.bf16.msra.mxu0 0
        %2640 = vmatprep.subr.bf16.mxu0 0
        %2641 = vmatpush1.bf16.msra.mxu0 0
        %2642 = vmatprep.mubr.bf16.mxu0 0
        %2643 = vmatmul.mubr.bf16.gmra.mrb[0].mxu0 %v2599
        %v2644 = vpop.f32.mrb[0].mxu0
        %v2645 = vadd.f32 0.0, %v2644
        %v2646 = vpop.f32.mrb[0].mxu0
        %v2647 = vadd.f32 0.0, %v2646
        %v2648 = vpop.f32.mrb[0].mxu0
        %v2649 = vadd.f32 0.0, %v2648
        %v2650 = vpop.f32.mrb[0].mxu0
        %v2651 = vadd.f32 0.0, %v2650
        %2652 = vmatprep.mubr.bf16.mxu0 0
        %2653 = vmatmul.mubr.bf16.gmra.mrb[0].mxu0 %v2602
        %v2654 = vpop.f32.mrb[0].mxu0
        %v2655 = vadd.f32 0.0, %v2654
        %v2656 = vpop.f32.mrb[0].mxu0
        %v2657 = vadd.f32 0.0, %v2656
        %v2658 = vpop.f32.mrb[0].mxu0
        %v2659 = vadd.f32 0.0, %v2658
        %v2660 = vpop.f32.mrb[0].mxu0
        %v2661 = vadd.f32 0.0, %v2660
        %2662 = vmatprep.mubr.bf16.mxu0 0
        %2663 = vmatmul.mubr.bf16.gmra.mrb[0].mxu0 %v2605
        %v2664 = vpop.f32.mrb[0].mxu0
        %v2665 = vadd.f32 0.0, %v2664
        %v2666 = vpop.f32.mrb[0].mxu0
        %v2667 = vadd.f32 0.0, %v2666
        %v2668 = vpop.f32.mrb[0].mxu0
        %v2669 = vadd.f32 0.0, %v2668
        %v2670 = vpop.f32.mrb[0].mxu0
        %v2671 = vadd.f32 0.0, %v2670
        %2672 = vmatprep.mubr.bf16.mxu0 0
        %2673 = vmatmul.mubr.bf16.gmra.mrb[0].mxu0 %v2608
        %v2674 = vpop.f32.mrb[0].mxu0
        %v2675 = vadd.f32 0.0, %v2674
        %v2676 = vpop.f32.mrb[0].mxu0
        %v2677 = vadd.f32 0.0, %v2676
        %v2678 = vpop.f32.mrb[0].mxu0
        %v2679 = vadd.f32 0.0, %v2678
        %v2680 = vpop.f32.mrb[0].mxu0
        %v2681 = vadd.f32 0.0, %v2680
        %2682 = vdwg.mxu0
        %v2683 = vpack.c.bf16 %v2649, %v2645
        %v2684 = vpack.c.bf16 %v2651, %v2647
        %v2685 = vpack.c.bf16 %v2659, %v2655
        %v2686 = vpack.c.bf16 %v2661, %v2657
        %v2687 = vpack.c.bf16 %v2669, %v2665
        %v2688 = vpack.c.bf16 %v2671, %v2667
        %v2689 = vpack.c.bf16 %v2679, %v2675
        %v2690 = vpack.c.bf16 %v2681, %v2677
        %v2691 = vld [vmem:[%s13] sm:$0xff]
        %v2692 = vld [vmem:[%s13 + $0x8] sm:$0xff]
        %v2693 = vld [vmem:[%s13 + $0x10] sm:$0xff]
        %v2694 = vld [vmem:[%s13 + $0x18] sm:$0xff]
        %v2695 = vld [vmem:[%s13 + $0x20] sm:$0xff]
        %v2696 = vld [vmem:[%s13 + $0x28] sm:$0xff]
        %v2697 = vld [vmem:[%s13 + $0x30] sm:$0xff]
        %v2698 = vld [vmem:[%s13 + $0x38] sm:$0xff]
        %v2699 = vld [vmem:[%s13 + $0x40] sm:$0xff]
        %v2700 = vld [vmem:[%s13 + $0x48] sm:$0xff]
        %v2701 = vld [vmem:[%s13 + $0x50] sm:$0xff]
        %v2702 = vld [vmem:[%s13 + $0x58] sm:$0xff]
        %v2703 = vld [vmem:[%s13 + $0x60] sm:$0xff]
        %v2704 = vld [vmem:[%s13 + $0x68] sm:$0xff]
        %v2705 = vld [vmem:[%s13 + $0x70] sm:$0xff]
        %v2706 = vld [vmem:[%s13 + $0x78] sm:$0xff]
        %v2707 = vld [vmem:[%s13 + $0x80] sm:$0xff]
        %v2708 = vld [vmem:[%s13 + $0x88] sm:$0xff]
        %v2709 = vld [vmem:[%s13 + $0x90] sm:$0xff]
        %v2710 = vld [vmem:[%s13 + $0x98] sm:$0xff]
        %v2711 = vld [vmem:[%s13 + $0xa0] sm:$0xff]
        %v2712 = vld [vmem:[%s13 + $0xa8] sm:$0xff]
        %v2713 = vld [vmem:[%s13 + $0xb0] sm:$0xff]
        %v2714 = vld [vmem:[%s13 + $0xb8] sm:$0xff]
        %v2715 = vld [vmem:[%s13 + $0xc0] sm:$0xff]
        %v2716 = vld [vmem:[%s13 + $0xc8] sm:$0xff]
        %v2717 = vld [vmem:[%s13 + $0xd0] sm:$0xff]
        %v2718 = vld [vmem:[%s13 + $0xd8] sm:$0xff]
        %v2719 = vld [vmem:[%s13 + $0xe0] sm:$0xff]
        %v2720 = vld [vmem:[%s13 + $0xe8] sm:$0xff]
        %v2721 = vld [vmem:[%s13 + $0xf0] sm:$0xff]
        %v2722 = vld [vmem:[%s13 + $0xf8] sm:$0xff]
        %v2723 = vld [vmem:[%s13 + $0x100] sm:$0xff]
        %v2724 = vld [vmem:[%s13 + $0x108] sm:$0xff]
        %v2725 = vld [vmem:[%s13 + $0x110] sm:$0xff]
        %v2726 = vld [vmem:[%s13 + $0x118] sm:$0xff]
        %v2727 = vld [vmem:[%s13 + $0x120] sm:$0xff]
        %v2728 = vld [vmem:[%s13 + $0x128] sm:$0xff]
        %v2729 = vld [vmem:[%s13 + $0x130] sm:$0xff]
        %v2730 = vld [vmem:[%s13 + $0x138] sm:$0xff]
        %v2731 = vld [vmem:[%s13 + $0x140] sm:$0xff]
        %v2732 = vld [vmem:[%s13 + $0x148] sm:$0xff]
        %v2733 = vld [vmem:[%s13 + $0x150] sm:$0xff]
        %v2734 = vld [vmem:[%s13 + $0x158] sm:$0xff]
        %v2735 = vld [vmem:[%s13 + $0x160] sm:$0xff]
        %v2736 = vld [vmem:[%s13 + $0x168] sm:$0xff]
        %v2737 = vld [vmem:[%s13 + $0x170] sm:$0xff]
        %v2738 = vld [vmem:[%s13 + $0x178] sm:$0xff]
        %v2739 = vld [vmem:[%s13 + $0x180] sm:$0xff]
        %v2740 = vld [vmem:[%s13 + $0x188] sm:$0xff]
        %v2741 = vld [vmem:[%s13 + $0x190] sm:$0xff]
        %v2742 = vld [vmem:[%s13 + $0x198] sm:$0xff]
        %v2743 = vld [vmem:[%s13 + $0x1a0] sm:$0xff]
        %v2744 = vld [vmem:[%s13 + $0x1a8] sm:$0xff]
        %v2745 = vld [vmem:[%s13 + $0x1b0] sm:$0xff]
        %v2746 = vld [vmem:[%s13 + $0x1b8] sm:$0xff]
        %v2747 = vld [vmem:[%s13 + $0x1c0] sm:$0xff]
        %v2748 = vld [vmem:[%s13 + $0x1c8] sm:$0xff]
        %v2749 = vld [vmem:[%s13 + $0x1d0] sm:$0xff]
        %v2750 = vld [vmem:[%s13 + $0x1d8] sm:$0xff]
        %v2751 = vld [vmem:[%s13 + $0x1e0] sm:$0xff]
        %v2752 = vld [vmem:[%s13 + $0x1e8] sm:$0xff]
        %v2753 = vld [vmem:[%s13 + $0x1f0] sm:$0xff]
        %v2754 = vld [vmem:[%s13 + $0x1f8] sm:$0xff]
        %v2819 = vunpack.c.l.b16 %v2691
        %v2820 = vunpack.c.h.b16 %v2691
        %v2821 = vunpack.c.l.b16 %v2692
        %v2822 = vunpack.c.h.b16 %v2692
        %v2823 = vunpack.c.l.b16 %v2693
        %v2824 = vunpack.c.h.b16 %v2693
        %v2825 = vunpack.c.l.b16 %v2694
        %v2826 = vunpack.c.h.b16 %v2694
        %v2827 = vunpack.c.l.b16 %v2695
        %v2828 = vunpack.c.h.b16 %v2695
        %v2829 = vunpack.c.l.b16 %v2696
        %v2830 = vunpack.c.h.b16 %v2696
        %v2831 = vunpack.c.l.b16 %v2697
        %v2832 = vunpack.c.h.b16 %v2697
        %v2833 = vunpack.c.l.b16 %v2698
        %v2834 = vunpack.c.h.b16 %v2698
        %v2835 = vunpack.c.l.b16 %v2699
        %v2836 = vunpack.c.h.b16 %v2699
        %v2837 = vunpack.c.l.b16 %v2700
        %v2838 = vunpack.c.h.b16 %v2700
        %v2839 = vunpack.c.l.b16 %v2701
        %v2840 = vunpack.c.h.b16 %v2701
        %v2841 = vunpack.c.l.b16 %v2702
        %v2842 = vunpack.c.h.b16 %v2702
        %v2843 = vunpack.c.l.b16 %v2703
        %v2844 = vunpack.c.h.b16 %v2703
        %v2845 = vunpack.c.l.b16 %v2704
        %v2846 = vunpack.c.h.b16 %v2704
        %v2847 = vunpack.c.l.b16 %v2705
        %v2848 = vunpack.c.h.b16 %v2705
        %v2849 = vunpack.c.l.b16 %v2706
        %v2850 = vunpack.c.h.b16 %v2706
        %v2851 = vunpack.c.l.b16 %v2707
        %v2852 = vunpack.c.h.b16 %v2707
        %v2853 = vunpack.c.l.b16 %v2708
        %v2854 = vunpack.c.h.b16 %v2708
        %v2855 = vunpack.c.l.b16 %v2709
        %v2856 = vunpack.c.h.b16 %v2709
        %v2857 = vunpack.c.l.b16 %v2710
        %v2858 = vunpack.c.h.b16 %v2710
        %v2859 = vunpack.c.l.b16 %v2711
        %v2860 = vunpack.c.h.b16 %v2711
        %v2861 = vunpack.c.l.b16 %v2712
        %v2862 = vunpack.c.h.b16 %v2712
        %v2863 = vunpack.c.l.b16 %v2713
        %v2864 = vunpack.c.h.b16 %v2713
        %v2865 = vunpack.c.l.b16 %v2714
        %v2866 = vunpack.c.h.b16 %v2714
        %v2867 = vunpack.c.l.b16 %v2715
        %v2868 = vunpack.c.h.b16 %v2715
        %v2869 = vunpack.c.l.b16 %v2716
        %v2870 = vunpack.c.h.b16 %v2716
        %v2871 = vunpack.c.l.b16 %v2717
        %v2872 = vunpack.c.h.b16 %v2717
        %v2873 = vunpack.c.l.b16 %v2718
        %v2874 = vunpack.c.h.b16 %v2718
        %v2875 = vunpack.c.l.b16 %v2719
        %v2876 = vunpack.c.h.b16 %v2719
        %v2877 = vunpack.c.l.b16 %v2720
        %v2878 = vunpack.c.h.b16 %v2720
        %v2879 = vunpack.c.l.b16 %v2721
        %v2880 = vunpack.c.h.b16 %v2721
        %v2881 = vunpack.c.l.b16 %v2722
        %v2882 = vunpack.c.h.b16 %v2722
        %v2883 = vunpack.c.l.b16 %v2723
        %v2884 = vunpack.c.h.b16 %v2723
        %v2885 = vunpack.c.l.b16 %v2724
        %v2886 = vunpack.c.h.b16 %v2724
        %v2887 = vunpack.c.l.b16 %v2725
        %v2888 = vunpack.c.h.b16 %v2725
        %v2889 = vunpack.c.l.b16 %v2726
        %v2890 = vunpack.c.h.b16 %v2726
        %v2891 = vunpack.c.l.b16 %v2727
        %v2892 = vunpack.c.h.b16 %v2727
        %v2893 = vunpack.c.l.b16 %v2728
        %v2894 = vunpack.c.h.b16 %v2728
        %v2895 = vunpack.c.l.b16 %v2729
        %v2896 = vunpack.c.h.b16 %v2729
        %v2897 = vunpack.c.l.b16 %v2730
        %v2898 = vunpack.c.h.b16 %v2730
        %v2899 = vunpack.c.l.b16 %v2731
        %v2900 = vunpack.c.h.b16 %v2731
        %v2901 = vunpack.c.l.b16 %v2732
        %v2902 = vunpack.c.h.b16 %v2732
        %v2903 = vunpack.c.l.b16 %v2733
        %v2904 = vunpack.c.h.b16 %v2733
        %v2905 = vunpack.c.l.b16 %v2734
        %v2906 = vunpack.c.h.b16 %v2734
        %v2907 = vunpack.c.l.b16 %v2735
        %v2908 = vunpack.c.h.b16 %v2735
        %v2909 = vunpack.c.l.b16 %v2736
        %v2910 = vunpack.c.h.b16 %v2736
        %v2911 = vunpack.c.l.b16 %v2737
        %v2912 = vunpack.c.h.b16 %v2737
        %v2913 = vunpack.c.l.b16 %v2738
        %v2914 = vunpack.c.h.b16 %v2738
        %v2915 = vunpack.c.l.b16 %v2739
        %v2916 = vunpack.c.h.b16 %v2739
        %v2917 = vunpack.c.l.b16 %v2740
        %v2918 = vunpack.c.h.b16 %v2740
        %v2919 = vunpack.c.l.b16 %v2741
        %v2920 = vunpack.c.h.b16 %v2741
        %v2921 = vunpack.c.l.b16 %v2742
        %v2922 = vunpack.c.h.b16 %v2742
        %v2923 = vunpack.c.l.b16 %v2743
        %v2924 = vunpack.c.h.b16 %v2743
        %v2925 = vunpack.c.l.b16 %v2744
        %v2926 = vunpack.c.h.b16 %v2744
        %v2927 = vunpack.c.l.b16 %v2745
        %v2928 = vunpack.c.h.b16 %v2745
        %v2929 = vunpack.c.l.b16 %v2746
        %v2930 = vunpack.c.h.b16 %v2746
        %v2931 = vunpack.c.l.b16 %v2747
        %v2932 = vunpack.c.h.b16 %v2747
        %v2933 = vunpack.c.l.b16 %v2748
        %v2934 = vunpack.c.h.b16 %v2748
        %v2935 = vunpack.c.l.b16 %v2749
        %v2936 = vunpack.c.h.b16 %v2749
        %v2937 = vunpack.c.l.b16 %v2750
        %v2938 = vunpack.c.h.b16 %v2750
        %v2939 = vunpack.c.l.b16 %v2751
        %v2940 = vunpack.c.h.b16 %v2751
        %v2941 = vunpack.c.l.b16 %v2752
        %v2942 = vunpack.c.h.b16 %v2752
        %v2943 = vunpack.c.l.b16 %v2753
        %v2944 = vunpack.c.h.b16 %v2753
        %v2945 = vunpack.c.l.b16 %v2754
        %v2946 = vunpack.c.h.b16 %v2754
        %v2947 = vpack.c.b16 %v2823, %v2819
        %v2948 = vpack.c.b16 %v2824, %v2820
        %v2949 = vpack.c.b16 %v2825, %v2821
        %v2950 = vpack.c.b16 %v2826, %v2822
        %v2951 = vpack.c.b16 %v2831, %v2827
        %v2952 = vpack.c.b16 %v2832, %v2828
        %v2953 = vpack.c.b16 %v2833, %v2829
        %v2954 = vpack.c.b16 %v2834, %v2830
        %v2955 = vpack.c.b16 %v2839, %v2835
        %v2956 = vpack.c.b16 %v2840, %v2836
        %v2957 = vpack.c.b16 %v2841, %v2837
        %v2958 = vpack.c.b16 %v2842, %v2838
        %v2959 = vpack.c.b16 %v2847, %v2843
        %v2960 = vpack.c.b16 %v2848, %v2844
        %v2961 = vpack.c.b16 %v2849, %v2845
        %v2962 = vpack.c.b16 %v2850, %v2846
        %v2963 = vpack.c.b16 %v2855, %v2851
        %v2964 = vpack.c.b16 %v2856, %v2852
        %v2965 = vpack.c.b16 %v2857, %v2853
        %v2966 = vpack.c.b16 %v2858, %v2854
        %v2967 = vpack.c.b16 %v2863, %v2859
        %v2968 = vpack.c.b16 %v2864, %v2860
        %v2969 = vpack.c.b16 %v2865, %v2861
        %v2970 = vpack.c.b16 %v2866, %v2862
        %v2971 = vpack.c.b16 %v2871, %v2867
        %v2972 = vpack.c.b16 %v2872, %v2868
        %v2973 = vpack.c.b16 %v2873, %v2869
        %v2974 = vpack.c.b16 %v2874, %v2870
        %v2975 = vpack.c.b16 %v2879, %v2875
        %v2976 = vpack.c.b16 %v2880, %v2876
        %v2977 = vpack.c.b16 %v2881, %v2877
        %v2978 = vpack.c.b16 %v2882, %v2878
        %v2979 = vpack.c.b16 %v2887, %v2883
        %v2980 = vpack.c.b16 %v2888, %v2884
        %v2981 = vpack.c.b16 %v2889, %v2885
        %v2982 = vpack.c.b16 %v2890, %v2886
        %v2983 = vpack.c.b16 %v2895, %v2891
        %v2984 = vpack.c.b16 %v2896, %v2892
        %v2985 = vpack.c.b16 %v2897, %v2893
        %v2986 = vpack.c.b16 %v2898, %v2894
        %v2987 = vpack.c.b16 %v2903, %v2899
        %v2988 = vpack.c.b16 %v2904, %v2900
        %v2989 = vpack.c.b16 %v2905, %v2901
        %v2990 = vpack.c.b16 %v2906, %v2902
        %v2991 = vpack.c.b16 %v2911, %v2907
        %v2992 = vpack.c.b16 %v2912, %v2908
        %v2993 = vpack.c.b16 %v2913, %v2909
        %v2994 = vpack.c.b16 %v2914, %v2910
        %v2995 = vpack.c.b16 %v2919, %v2915
        %v2996 = vpack.c.b16 %v2920, %v2916
        %v2997 = vpack.c.b16 %v2921, %v2917
        %v2998 = vpack.c.b16 %v2922, %v2918
        %v2999 = vpack.c.b16 %v2927, %v2923
        %v3000 = vpack.c.b16 %v2928, %v2924
        %v3001 = vpack.c.b16 %v2929, %v2925
        %v3002 = vpack.c.b16 %v2930, %v2926
        %v3003 = vpack.c.b16 %v2935, %v2931
        %v3004 = vpack.c.b16 %v2936, %v2932
        %v3005 = vpack.c.b16 %v2937, %v2933
        %v3006 = vpack.c.b16 %v2938, %v2934
        %v3007 = vpack.c.b16 %v2943, %v2939
        %v3008 = vpack.c.b16 %v2944, %v2940
        %v3009 = vpack.c.b16 %v2945, %v2941
        %v3010 = vpack.c.b16 %v2946, %v2942
        %3075 = vmatprep.subr.bf16.mxu0 %v2948
        %3076 = vmatpush1.bf16.msra.mxu0 %v2947
        %3077 = vmatprep.subr.bf16.mxu0 %v2952
        %3078 = vmatpush1.bf16.msra.mxu0 %v2951
        %3079 = vmatprep.subr.bf16.mxu0 %v2956
        %3080 = vmatpush1.bf16.msra.mxu0 %v2955
        %3081 = vmatprep.subr.bf16.mxu0 %v2960
        %3082 = vmatpush1.bf16.msra.mxu0 %v2959
        %3083 = vmatprep.subr.bf16.mxu0 %v2964
        %3084 = vmatpush1.bf16.msra.mxu0 %v2963
        %3085 = vmatprep.subr.bf16.mxu0 %v2968
        %3086 = vmatpush1.bf16.msra.mxu0 %v2967
        %3087 = vmatprep.subr.bf16.mxu0 %v2972
        %3088 = vmatpush1.bf16.msra.mxu0 %v2971
        %3089 = vmatprep.subr.bf16.mxu0 %v2976
        %3090 = vmatpush1.bf16.msra.mxu0 %v2975
        %3091 = vmatprep.subr.bf16.mxu0 %v2980
        %3092 = vmatpush1.bf16.msra.mxu0 %v2979
        %3093 = vmatprep.subr.bf16.mxu0 %v2984
        %3094 = vmatpush1.bf16.msra.mxu0 %v2983
        %3095 = vmatprep.subr.bf16.mxu0 %v2988
        %3096 = vmatpush1.bf16.msra.mxu0 %v2987
        %3097 = vmatprep.subr.bf16.mxu0 %v2992
        %3098 = vmatpush1.bf16.msra.mxu0 %v2991
        %3099 = vmatprep.subr.bf16.mxu0 %v2996
        %3100 = vmatpush1.bf16.msra.mxu0 %v2995
        %3101 = vmatprep.subr.bf16.mxu0 %v3000
        %3102 = vmatpush1.bf16.msra.mxu0 %v2999
        %3103 = vmatprep.subr.bf16.mxu0 %v3004
        %3104 = vmatpush1.bf16.msra.mxu0 %v3003
        %3105 = vmatprep.subr.bf16.mxu0 %v3008
        %3106 = vmatpush1.bf16.msra.mxu0 %v3007
        %3107 = vmatprep.mubr.bf16.mxu0 %v2684
        %3108 = vmatmul.mubr.bf16.gmra.mrb[0].mxu0 %v2683
        %v3109 = vpop.f32.mrb[0].mxu0
        %v3110 = vadd.f32 0.0, %v3109
        %v3111 = vpop.f32.mrb[0].mxu0
        %v3112 = vadd.f32 0.0, %v3111
        %v3113 = vpop.f32.mrb[0].mxu0
        %v3114 = vadd.f32 0.0, %v3113
        %v3115 = vpop.f32.mrb[0].mxu0
        %v3116 = vadd.f32 0.0, %v3115
        %3117 = vmatprep.mubr.bf16.mxu0 %v2686
        %3118 = vmatmul.mubr.bf16.gmra.mrb[0].mxu0 %v2685
        %v3119 = vpop.f32.mrb[0].mxu0
        %v3120 = vadd.f32 0.0, %v3119
        %v3121 = vpop.f32.mrb[0].mxu0
        %v3122 = vadd.f32 0.0, %v3121
        %v3123 = vpop.f32.mrb[0].mxu0
        %v3124 = vadd.f32 0.0, %v3123
        %v3125 = vpop.f32.mrb[0].mxu0
        %v3126 = vadd.f32 0.0, %v3125
        %3127 = vmatprep.mubr.bf16.mxu0 %v2688
        %3128 = vmatmul.mubr.bf16.gmra.mrb[0].mxu0 %v2687
        %v3129 = vpop.f32.mrb[0].mxu0
        %v3130 = vadd.f32 0.0, %v3129
        %v3131 = vpop.f32.mrb[0].mxu0
        %v3132 = vadd.f32 0.0, %v3131
        %v3133 = vpop.f32.mrb[0].mxu0
        %v3134 = vadd.f32 0.0, %v3133
        %v3135 = vpop.f32.mrb[0].mxu0
        %v3136 = vadd.f32 0.0, %v3135
        %3137 = vmatprep.mubr.bf16.mxu0 %v2690
        %3138 = vmatmul.mubr.bf16.gmra.mrb[0].mxu0 %v2689
        %v3139 = vpop.f32.mrb[0].mxu0
        %v3140 = vadd.f32 0.0, %v3139
        %v3141 = vpop.f32.mrb[0].mxu0
        %v3142 = vadd.f32 0.0, %v3141
        %v3143 = vpop.f32.mrb[0].mxu0
        %v3144 = vadd.f32 0.0, %v3143
        %v3145 = vpop.f32.mrb[0].mxu0
        %v3146 = vadd.f32 0.0, %v3145
        %3147 = vdwg.mxu0
        %3148 = vmatprep.subr.bf16.mxu0 %v2950
        %3149 = vmatpush1.bf16.msra.mxu0 %v2949
        %3150 = vmatprep.subr.bf16.mxu0 %v2954
        %3151 = vmatpush1.bf16.msra.mxu0 %v2953
        %3152 = vmatprep.subr.bf16.mxu0 %v2958
        %3153 = vmatpush1.bf16.msra.mxu0 %v2957
        %3154 = vmatprep.subr.bf16.mxu0 %v2962
        %3155 = vmatpush1.bf16.msra.mxu0 %v2961
        %3156 = vmatprep.subr.bf16.mxu0 %v2966
        %3157 = vmatpush1.bf16.msra.mxu0 %v2965
        %3158 = vmatprep.subr.bf16.mxu0 %v2970
        %3159 = vmatpush1.bf16.msra.mxu0 %v2969
        %3160 = vmatprep.subr.bf16.mxu0 %v2974
        %3161 = vmatpush1.bf16.msra.mxu0 %v2973
        %3162 = vmatprep.subr.bf16.mxu0 %v2978
        %3163 = vmatpush1.bf16.msra.mxu0 %v2977
        %3164 = vmatprep.subr.bf16.mxu0 %v2982
        %3165 = vmatpush1.bf16.msra.mxu0 %v2981
        %3166 = vmatprep.subr.bf16.mxu0 %v2986
        %3167 = vmatpush1.bf16.msra.mxu0 %v2985
        %3168 = vmatprep.subr.bf16.mxu0 %v2990
        %3169 = vmatpush1.bf16.msra.mxu0 %v2989
        %3170 = vmatprep.subr.bf16.mxu0 %v2994
        %3171 = vmatpush1.bf16.msra.mxu0 %v2993
        %3172 = vmatprep.subr.bf16.mxu0 %v2998
        %3173 = vmatpush1.bf16.msra.mxu0 %v2997
        %3174 = vmatprep.subr.bf16.mxu0 %v3002
        %3175 = vmatpush1.bf16.msra.mxu0 %v3001
        %3176 = vmatprep.subr.bf16.mxu0 %v3006
        %3177 = vmatpush1.bf16.msra.mxu0 %v3005
        %3178 = vmatprep.subr.bf16.mxu0 %v3010
        %3179 = vmatpush1.bf16.msra.mxu0 %v3009
        %3180 = vmatprep.mubr.bf16.mxu0 %v2684
        %3181 = vmatmul.mubr.bf16.gmra.mrb[0].mxu0 %v2683
        %v3182 = vpop.f32.mrb[0].mxu0
        %v3183 = vadd.f32 0.0, %v3182
        %v3184 = vpop.f32.mrb[0].mxu0
        %v3185 = vadd.f32 0.0, %v3184
        %v3186 = vpop.f32.mrb[0].mxu0
        %v3187 = vadd.f32 0.0, %v3186
        %v3188 = vpop.f32.mrb[0].mxu0
        %v3189 = vadd.f32 0.0, %v3188
        %3190 = vmatprep.mubr.bf16.mxu0 %v2686
        %3191 = vmatmul.mubr.bf16.gmra.mrb[0].mxu0 %v2685
        %v3192 = vpop.f32.mrb[0].mxu0
        %v3193 = vadd.f32 0.0, %v3192
        %v3194 = vpop.f32.mrb[0].mxu0
        %v3195 = vadd.f32 0.0, %v3194
        %v3196 = vpop.f32.mrb[0].mxu0
        %v3197 = vadd.f32 0.0, %v3196
        %v3198 = vpop.f32.mrb[0].mxu0
        %v3199 = vadd.f32 0.0, %v3198
        %3200 = vmatprep.mubr.bf16.mxu0 %v2688
        %3201 = vmatmul.mubr.bf16.gmra.mrb[0].mxu0 %v2687
        %v3202 = vpop.f32.mrb[0].mxu0
        %v3203 = vadd.f32 0.0, %v3202
        %v3204 = vpop.f32.mrb[0].mxu0
        %v3205 = vadd.f32 0.0, %v3204
        %v3206 = vpop.f32.mrb[0].mxu0
        %v3207 = vadd.f32 0.0, %v3206
        %v3208 = vpop.f32.mrb[0].mxu0
        %v3209 = vadd.f32 0.0, %v3208
        %3210 = vmatprep.mubr.bf16.mxu0 %v2690
        %3211 = vmatmul.mubr.bf16.gmra.mrb[0].mxu0 %v2689
        %v3212 = vpop.f32.mrb[0].mxu0
        %v3213 = vadd.f32 0.0, %v3212
        %v3214 = vpop.f32.mrb[0].mxu0
        %v3215 = vadd.f32 0.0, %v3214
        %v3216 = vpop.f32.mrb[0].mxu0
        %v3217 = vadd.f32 0.0, %v3216
        %v3218 = vpop.f32.mrb[0].mxu0
        %v3219 = vadd.f32 0.0, %v3218
        %3220 = vdwg.mxu0
        %v3221 = vadd.f32 %v2459, %v3110
        %v3222 = vadd.f32 %v2461, %v3112
        %v3223 = vadd.f32 %v2532, %v3183
        %v3224 = vadd.f32 %v2534, %v3185
        %v3225 = vadd.f32 %v2463, %v3114
        %v3226 = vadd.f32 %v2465, %v3116
        %v3227 = vadd.f32 %v2536, %v3187
        %v3228 = vadd.f32 %v2538, %v3189
        %v3229 = vadd.f32 %v2469, %v3120
        %v3230 = vadd.f32 %v2471, %v3122
        %v3231 = vadd.f32 %v2542, %v3193
        %v3232 = vadd.f32 %v2544, %v3195
        %v3233 = vadd.f32 %v2473, %v3124
        %v3234 = vadd.f32 %v2475, %v3126
        %v3235 = vadd.f32 %v2546, %v3197
        %v3236 = vadd.f32 %v2548, %v3199
        %v3237 = vadd.f32 %v2479, %v3130
        %v3238 = vadd.f32 %v2481, %v3132
        %v3239 = vadd.f32 %v2552, %v3203
        %v3240 = vadd.f32 %v2554, %v3205
        %v3241 = vadd.f32 %v2483, %v3134
        %v3242 = vadd.f32 %v2485, %v3136
        %v3243 = vadd.f32 %v2556, %v3207
        %v3244 = vadd.f32 %v2558, %v3209
        %v3245 = vadd.f32 %v2489, %v3140
        %v3246 = vadd.f32 %v2491, %v3142
        %v3247 = vadd.f32 %v2562, %v3213
        %v3248 = vadd.f32 %v2564, %v3215
        %v3249 = vadd.f32 %v2493, %v3144
        %v3250 = vadd.f32 %v2495, %v3146
        %v3251 = vadd.f32 %v2566, %v3217
        %v3252 = vadd.f32 %v2568, %v3219
        %v3253 = vld [vmem:[%s14] sm:$0xf]
        %v3255 = vlaneseq
        %v3256 = vshrl.u32 %v3255, 7
        %v3257 = vsub.s32 0, %v3256
        %v3258 = vrot.slane %v3253, %v3257
        %v3259 = vlaneseq
        %v3260 = vshrl.u32 %v3259, 7
        %v3261 = vsub.s32 1, %v3260
        %v3262 = vrot.slane %v3253, %v3261
        %v3263 = vlaneseq
        %v3264 = vshrl.u32 %v3263, 7
        %v3265 = vsub.s32 2, %v3264
        %v3266 = vrot.slane %v3253, %v3265
        %v3267 = vlaneseq
        %v3268 = vshrl.u32 %v3267, 7
        %v3269 = vsub.s32 3, %v3268
        %v3270 = vrot.slane %v3253, %v3269
        %v3275 = vadd.f32 %v3221, %v3258
        %v3276 = vadd.f32 %v3222, %v3262
        %v3277 = vadd.f32 %v3223, %v3266
        %v3278 = vadd.f32 %v3224, %v3270
        %v3279 = vadd.f32 %v3225, %v3258
        %v3280 = vadd.f32 %v3226, %v3262
        %v3281 = vadd.f32 %v3227, %v3266
        %v3282 = vadd.f32 %v3228, %v3270
        %v3283 = vadd.f32 %v3229, %v3258
        %v3284 = vadd.f32 %v3230, %v3262
        %v3285 = vadd.f32 %v3231, %v3266
        %v3286 = vadd.f32 %v3232, %v3270
        %v3287 = vadd.f32 %v3233, %v3258
        %v3288 = vadd.f32 %v3234, %v3262
        %v3289 = vadd.f32 %v3235, %v3266
        %v3290 = vadd.f32 %v3236, %v3270
        %v3291 = vadd.f32 %v3237, %v3258
        %v3292 = vadd.f32 %v3238, %v3262
        %v3293 = vadd.f32 %v3239, %v3266
        %v3294 = vadd.f32 %v3240, %v3270
        %v3295 = vadd.f32 %v3241, %v3258
        %v3296 = vadd.f32 %v3242, %v3262
        %v3297 = vadd.f32 %v3243, %v3266
        %v3298 = vadd.f32 %v3244, %v3270
        %v3299 = vadd.f32 %v3245, %v3258
        %v3300 = vadd.f32 %v3246, %v3262
        %v3301 = vadd.f32 %v3247, %v3266
        %v3302 = vadd.f32 %v3248, %v3270
        %v3303 = vadd.f32 %v3249, %v3258
        %v3304 = vadd.f32 %v3250, %v3262
        %v3305 = vadd.f32 %v3251, %v3266
        %v3306 = vadd.f32 %v3252, %v3270
        %v3307 = vmax.f32 %v3275, 0.0
        %v3308 = vmax.f32 %v3276, 0.0
        %v3309 = vmax.f32 %v3277, 0.0
        %v3310 = vmax.f32 %v3278, 0.0
        %v3311 = vmax.f32 %v3279, 0.0
        %v3312 = vmax.f32 %v3280, 0.0
        %v3313 = vmax.f32 %v3281, 0.0
        %v3314 = vmax.f32 %v3282, 0.0
        %v3315 = vmax.f32 %v3283, 0.0
        %v3316 = vmax.f32 %v3284, 0.0
        %v3317 = vmax.f32 %v3285, 0.0
        %v3318 = vmax.f32 %v3286, 0.0
        %v3319 = vmax.f32 %v3287, 0.0
        %v3320 = vmax.f32 %v3288, 0.0
        %v3321 = vmax.f32 %v3289, 0.0
        %v3322 = vmax.f32 %v3290, 0.0
        %v3323 = vmax.f32 %v3291, 0.0
        %v3324 = vmax.f32 %v3292, 0.0
        %v3325 = vmax.f32 %v3293, 0.0
        %v3326 = vmax.f32 %v3294, 0.0
        %v3327 = vmax.f32 %v3295, 0.0
        %v3328 = vmax.f32 %v3296, 0.0
        %v3329 = vmax.f32 %v3297, 0.0
        %v3330 = vmax.f32 %v3298, 0.0
        %v3331 = vmax.f32 %v3299, 0.0
        %v3332 = vmax.f32 %v3300, 0.0
        %v3333 = vmax.f32 %v3301, 0.0
        %v3334 = vmax.f32 %v3302, 0.0
        %v3335 = vmax.f32 %v3303, 0.0
        %v3336 = vmax.f32 %v3304, 0.0
        %v3337 = vmax.f32 %v3305, 0.0
        %v3338 = vmax.f32 %v3306, 0.0
        %v3339 = vpack.c.bf16 %v3311, %v3307
        %v3340 = vpack.c.bf16 %v3312, %v3308
        %v3341 = vpack.c.bf16 %v3313, %v3309
        %v3342 = vpack.c.bf16 %v3314, %v3310
        %v3343 = vpack.c.bf16 %v3319, %v3315
        %v3344 = vpack.c.bf16 %v3320, %v3316
        %v3345 = vpack.c.bf16 %v3321, %v3317
        %v3346 = vpack.c.bf16 %v3322, %v3318
        %v3347 = vpack.c.bf16 %v3327, %v3323
        %v3348 = vpack.c.bf16 %v3328, %v3324
        %v3349 = vpack.c.bf16 %v3329, %v3325
        %v3350 = vpack.c.bf16 %v3330, %v3326
        %v3351 = vpack.c.bf16 %v3335, %v3331
        %v3352 = vpack.c.bf16 %v3336, %v3332
        %v3353 = vpack.c.bf16 %v3337, %v3333
        %v3354 = vpack.c.bf16 %v3338, %v3334
        %v3355 = vld [vmem:[%s15] sm:$0xf]
        %v3356 = vld [vmem:[%s15 + $0x4] sm:$0xf]
        %v3357 = vld [vmem:[%s15 + $0x8] sm:$0xf]
        %v3358 = vld [vmem:[%s15 + $0xc] sm:$0xf]
        %v3359 = vld [vmem:[%s15 + $0x10] sm:$0xf]
        %v3360 = vld [vmem:[%s15 + $0x14] sm:$0xf]
        %v3361 = vld [vmem:[%s15 + $0x18] sm:$0xf]
        %v3362 = vld [vmem:[%s15 + $0x1c] sm:$0xf]
        %v3363 = vld [vmem:[%s15 + $0x20] sm:$0xf]
        %v3364 = vld [vmem:[%s15 + $0x24] sm:$0xf]
        %v3365 = vld [vmem:[%s15 + $0x28] sm:$0xf]
        %v3366 = vld [vmem:[%s15 + $0x2c] sm:$0xf]
        %v3367 = vld [vmem:[%s15 + $0x30] sm:$0xf]
        %v3368 = vld [vmem:[%s15 + $0x34] sm:$0xf]
        %v3369 = vld [vmem:[%s15 + $0x38] sm:$0xf]
        %v3370 = vld [vmem:[%s15 + $0x3c] sm:$0xf]
        %v3387 = vunpack.c.l.b16 %v3355
        %v3388 = vunpack.c.l.b16 %v3356
        %v3389 = vunpack.c.l.b16 %v3357
        %v3390 = vunpack.c.l.b16 %v3358
        %v3391 = vunpack.c.l.b16 %v3359
        %v3392 = vunpack.c.l.b16 %v3360
        %v3393 = vunpack.c.l.b16 %v3361
        %v3394 = vunpack.c.l.b16 %v3362
        %v3395 = vunpack.c.l.b16 %v3363
        %v3396 = vunpack.c.l.b16 %v3364
        %v3397 = vunpack.c.l.b16 %v3365
        %v3398 = vunpack.c.l.b16 %v3366
        %v3399 = vunpack.c.l.b16 %v3367
        %v3400 = vunpack.c.l.b16 %v3368
        %v3401 = vunpack.c.l.b16 %v3369
        %v3402 = vunpack.c.l.b16 %v3370
        %v3403 = vpack.c.b16 %v3388, %v3387
        %v3404 = vpack.c.b16 %v3390, %v3389
        %v3405 = vpack.c.b16 %v3392, %v3391
        %v3406 = vpack.c.b16 %v3394, %v3393
        %v3407 = vpack.c.b16 %v3396, %v3395
        %v3408 = vpack.c.b16 %v3398, %v3397
        %v3409 = vpack.c.b16 %v3400, %v3399
        %v3410 = vpack.c.b16 %v3402, %v3401
        %v3412 = vsel %vm890, %v3403, 0
        %v3415 = vsel %vm890, %v3404, 0
        %v3418 = vsel %vm890, %v3405, 0
        %v3421 = vsel %vm890, %v3406, 0
        %v3424 = vsel %vm890, %v3407, 0
        %v3427 = vsel %vm890, %v3408, 0
        %v3430 = vsel %vm890, %v3409, 0
        %v3433 = vsel %vm890, %v3410, 0
        %3435 = vmatprep.subr.bf16.mxu0 %v3340
        %3436 = vmatpush1.bf16.msra.mxu0 %v3339
        %3437 = vmatprep.subr.bf16.mxu0 %v3344
        %3438 = vmatpush1.bf16.msra.mxu0 %v3343
        %3439 = vmatprep.subr.bf16.mxu0 %v3348
        %3440 = vmatpush1.bf16.msra.mxu0 %v3347
        %3441 = vmatprep.subr.bf16.mxu0 %v3352
        %3442 = vmatpush1.bf16.msra.mxu0 %v3351
        %3443 = vmatprep.subr.bf16.mxu0 0
        %3444 = vmatpush1.bf16.msra.mxu0 0
        %3445 = vmatprep.subr.bf16.mxu0 0
        %3446 = vmatpush1.bf16.msra.mxu0 0
        %3447 = vmatprep.subr.bf16.mxu0 0
        %3448 = vmatpush1.bf16.msra.mxu0 0
        %3449 = vmatprep.subr.bf16.mxu0 0
        %3450 = vmatpush1.bf16.msra.mxu0 0
        %3451 = vmatprep.subr.bf16.mxu0 0
        %3452 = vmatpush1.bf16.msra.mxu0 0
        %3453 = vmatprep.subr.bf16.mxu0 0
        %3454 = vmatpush1.bf16.msra.mxu0 0
        %3455 = vmatprep.subr.bf16.mxu0 0
        %3456 = vmatpush1.bf16.msra.mxu0 0
        %3457 = vmatprep.subr.bf16.mxu0 0
        %3458 = vmatpush1.bf16.msra.mxu0 0
        %3459 = vmatprep.subr.bf16.mxu0 0
        %3460 = vmatpush1.bf16.msra.mxu0 0
        %3461 = vmatprep.subr.bf16.mxu0 0
        %3462 = vmatpush1.bf16.msra.mxu0 0
        %3463 = vmatprep.subr.bf16.mxu0 0
        %3464 = vmatpush1.bf16.msra.mxu0 0
        %3465 = vmatprep.subr.bf16.mxu0 0
        %3466 = vmatpush1.bf16.msra.mxu0 0
        %3467 = vmatprep.mubr.bf16.mxu0 0
        %3468 = vmatmul.mubr.bf16.gmra.mrb[0].mxu0 %v3412
        %v3469 = vpop.f32.mrb[0].mxu0
        %v3470 = vadd.f32 0.0, %v3469
        %v3471 = vpop.f32.mrb[0].mxu0
        %v3472 = vadd.f32 0.0, %v3471
        %v3473 = vpop.f32.mrb[0].mxu0
        %v3474 = vadd.f32 0.0, %v3473
        %v3475 = vpop.f32.mrb[0].mxu0
        %v3476 = vadd.f32 0.0, %v3475
        %3477 = vmatprep.mubr.bf16.mxu0 0
        %3478 = vmatmul.mubr.bf16.gmra.mrb[0].mxu0 %v3415
        %v3479 = vpop.f32.mrb[0].mxu0
        %v3480 = vadd.f32 0.0, %v3479
        %v3481 = vpop.f32.mrb[0].mxu0
        %v3482 = vadd.f32 0.0, %v3481
        %v3483 = vpop.f32.mrb[0].mxu0
        %v3484 = vadd.f32 0.0, %v3483
        %v3485 = vpop.f32.mrb[0].mxu0
        %v3486 = vadd.f32 0.0, %v3485
        %3487 = vmatprep.mubr.bf16.mxu0 0
        %3488 = vmatmul.mubr.bf16.gmra.mrb[0].mxu0 %v3418
        %v3489 = vpop.f32.mrb[0].mxu0
        %v3490 = vadd.f32 0.0, %v3489
        %v3491 = vpop.f32.mrb[0].mxu0
        %v3492 = vadd.f32 0.0, %v3491
        %v3493 = vpop.f32.mrb[0].mxu0
        %v3494 = vadd.f32 0.0, %v3493
        %v3495 = vpop.f32.mrb[0].mxu0
        %v3496 = vadd.f32 0.0, %v3495
        %3497 = vmatprep.mubr.bf16.mxu0 0
        %3498 = vmatmul.mubr.bf16.gmra.mrb[0].mxu0 %v3421
        %v3499 = vpop.f32.mrb[0].mxu0
        %v3500 = vadd.f32 0.0, %v3499
        %v3501 = vpop.f32.mrb[0].mxu0
        %v3502 = vadd.f32 0.0, %v3501
        %v3503 = vpop.f32.mrb[0].mxu0
        %v3504 = vadd.f32 0.0, %v3503
        %v3505 = vpop.f32.mrb[0].mxu0
        %v3506 = vadd.f32 0.0, %v3505
        %3507 = vmatprep.mubr.bf16.mxu0 0
        %3508 = vmatmul.mubr.bf16.gmra.mrb[0].mxu0 %v3424
        %v3509 = vpop.f32.mrb[0].mxu0
        %v3510 = vadd.f32 0.0, %v3509
        %v3511 = vpop.f32.mrb[0].mxu0
        %v3512 = vadd.f32 0.0, %v3511
        %v3513 = vpop.f32.mrb[0].mxu0
        %v3514 = vadd.f32 0.0, %v3513
        %v3515 = vpop.f32.mrb[0].mxu0
        %v3516 = vadd.f32 0.0, %v3515
        %3517 = vmatprep.mubr.bf16.mxu0 0
        %3518 = vmatmul.mubr.bf16.gmra.mrb[0].mxu0 %v3427
        %v3519 = vpop.f32.mrb[0].mxu0
        %v3520 = vadd.f32 0.0, %v3519
        %v3521 = vpop.f32.mrb[0].mxu0
        %v3522 = vadd.f32 0.0, %v3521
        %v3523 = vpop.f32.mrb[0].mxu0
        %v3524 = vadd.f32 0.0, %v3523
        %v3525 = vpop.f32.mrb[0].mxu0
        %v3526 = vadd.f32 0.0, %v3525
        %3527 = vmatprep.mubr.bf16.mxu0 0
        %3528 = vmatmul.mubr.bf16.gmra.mrb[0].mxu0 %v3430
        %v3529 = vpop.f32.mrb[0].mxu0
        %v3530 = vadd.f32 0.0, %v3529
        %v3531 = vpop.f32.mrb[0].mxu0
        %v3532 = vadd.f32 0.0, %v3531
        %v3533 = vpop.f32.mrb[0].mxu0
        %v3534 = vadd.f32 0.0, %v3533
        %v3535 = vpop.f32.mrb[0].mxu0
        %v3536 = vadd.f32 0.0, %v3535
        %3537 = vmatprep.mubr.bf16.mxu0 0
        %3538 = vmatmul.mubr.bf16.gmra.mrb[0].mxu0 %v3433
        %v3539 = vpop.f32.mrb[0].mxu0
        %v3540 = vadd.f32 0.0, %v3539
        %v3541 = vpop.f32.mrb[0].mxu0
        %v3542 = vadd.f32 0.0, %v3541
        %v3543 = vpop.f32.mrb[0].mxu0
        %v3544 = vadd.f32 0.0, %v3543
        %v3545 = vpop.f32.mrb[0].mxu0
        %v3546 = vadd.f32 0.0, %v3545
        %3547 = vdwg.mxu0
        %3548 = vmatprep.subr.bf16.mxu0 %v3342
        %3549 = vmatpush1.bf16.msra.mxu0 %v3341
        %3550 = vmatprep.subr.bf16.mxu0 %v3346
        %3551 = vmatpush1.bf16.msra.mxu0 %v3345
        %3552 = vmatprep.subr.bf16.mxu0 %v3350
        %3553 = vmatpush1.bf16.msra.mxu0 %v3349
        %3554 = vmatprep.subr.bf16.mxu0 %v3354
        %3555 = vmatpush1.bf16.msra.mxu0 %v3353
        %3556 = vmatprep.subr.bf16.mxu0 0
        %3557 = vmatpush1.bf16.msra.mxu0 0
        %3558 = vmatprep.subr.bf16.mxu0 0
        %3559 = vmatpush1.bf16.msra.mxu0 0
        %3560 = vmatprep.subr.bf16.mxu0 0
        %3561 = vmatpush1.bf16.msra.mxu0 0
        %3562 = vmatprep.subr.bf16.mxu0 0
        %3563 = vmatpush1.bf16.msra.mxu0 0
        %3564 = vmatprep.subr.bf16.mxu0 0
        %3565 = vmatpush1.bf16.msra.mxu0 0
        %3566 = vmatprep.subr.bf16.mxu0 0
        %3567 = vmatpush1.bf16.msra.mxu0 0
        %3568 = vmatprep.subr.bf16.mxu0 0
        %3569 = vmatpush1.bf16.msra.mxu0 0
        %3570 = vmatprep.subr.bf16.mxu0 0
        %3571 = vmatpush1.bf16.msra.mxu0 0
        %3572 = vmatprep.subr.bf16.mxu0 0
        %3573 = vmatpush1.bf16.msra.mxu0 0
        %3574 = vmatprep.subr.bf16.mxu0 0
        %3575 = vmatpush1.bf16.msra.mxu0 0
        %3576 = vmatprep.subr.bf16.mxu0 0
        %3577 = vmatpush1.bf16.msra.mxu0 0
        %3578 = vmatprep.subr.bf16.mxu0 0
        %3579 = vmatpush1.bf16.msra.mxu0 0
        %3580 = vmatprep.mubr.bf16.mxu0 0
        %3581 = vmatmul.mubr.bf16.gmra.mrb[0].mxu0 %v3412
        %v3582 = vpop.f32.mrb[0].mxu0
        %v3583 = vadd.f32 0.0, %v3582
        %v3584 = vpop.f32.mrb[0].mxu0
        %v3585 = vadd.f32 0.0, %v3584
        %v3586 = vpop.f32.mrb[0].mxu0
        %v3587 = vadd.f32 0.0, %v3586
        %v3588 = vpop.f32.mrb[0].mxu0
        %v3589 = vadd.f32 0.0, %v3588
        %3590 = vmatprep.mubr.bf16.mxu0 0
        %3591 = vmatmul.mubr.bf16.gmra.mrb[0].mxu0 %v3415
        %v3592 = vpop.f32.mrb[0].mxu0
        %v3593 = vadd.f32 0.0, %v3592
        %v3594 = vpop.f32.mrb[0].mxu0
        %v3595 = vadd.f32 0.0, %v3594
        %v3596 = vpop.f32.mrb[0].mxu0
        %v3597 = vadd.f32 0.0, %v3596
        %v3598 = vpop.f32.mrb[0].mxu0
        %v3599 = vadd.f32 0.0, %v3598
        %3600 = vmatprep.mubr.bf16.mxu0 0
        %3601 = vmatmul.mubr.bf16.gmra.mrb[0].mxu0 %v3418
        %v3602 = vpop.f32.mrb[0].mxu0
        %v3603 = vadd.f32 0.0, %v3602
        %v3604 = vpop.f32.mrb[0].mxu0
        %v3605 = vadd.f32 0.0, %v3604
        %v3606 = vpop.f32.mrb[0].mxu0
        %v3607 = vadd.f32 0.0, %v3606
        %v3608 = vpop.f32.mrb[0].mxu0
        %v3609 = vadd.f32 0.0, %v3608
        %3610 = vmatprep.mubr.bf16.mxu0 0
        %3611 = vmatmul.mubr.bf16.gmra.mrb[0].mxu0 %v3421
        %v3612 = vpop.f32.mrb[0].mxu0
        %v3613 = vadd.f32 0.0, %v3612
        %v3614 = vpop.f32.mrb[0].mxu0
        %v3615 = vadd.f32 0.0, %v3614
        %v3616 = vpop.f32.mrb[0].mxu0
        %v3617 = vadd.f32 0.0, %v3616
        %v3618 = vpop.f32.mrb[0].mxu0
        %v3619 = vadd.f32 0.0, %v3618
        %3620 = vmatprep.mubr.bf16.mxu0 0
        %3621 = vmatmul.mubr.bf16.gmra.mrb[0].mxu0 %v3424
        %v3622 = vpop.f32.mrb[0].mxu0
        %v3623 = vadd.f32 0.0, %v3622
        %v3624 = vpop.f32.mrb[0].mxu0
        %v3625 = vadd.f32 0.0, %v3624
        %v3626 = vpop.f32.mrb[0].mxu0
        %v3627 = vadd.f32 0.0, %v3626
        %v3628 = vpop.f32.mrb[0].mxu0
        %v3629 = vadd.f32 0.0, %v3628
        %3630 = vmatprep.mubr.bf16.mxu0 0
        %3631 = vmatmul.mubr.bf16.gmra.mrb[0].mxu0 %v3427
        %v3632 = vpop.f32.mrb[0].mxu0
        %v3633 = vadd.f32 0.0, %v3632
        %v3634 = vpop.f32.mrb[0].mxu0
        %v3635 = vadd.f32 0.0, %v3634
        %v3636 = vpop.f32.mrb[0].mxu0
        %v3637 = vadd.f32 0.0, %v3636
        %v3638 = vpop.f32.mrb[0].mxu0
        %v3639 = vadd.f32 0.0, %v3638
        %3640 = vmatprep.mubr.bf16.mxu0 0
        %3641 = vmatmul.mubr.bf16.gmra.mrb[0].mxu0 %v3430
        %v3642 = vpop.f32.mrb[0].mxu0
        %v3643 = vadd.f32 0.0, %v3642
        %v3644 = vpop.f32.mrb[0].mxu0
        %v3645 = vadd.f32 0.0, %v3644
        %v3646 = vpop.f32.mrb[0].mxu0
        %v3647 = vadd.f32 0.0, %v3646
        %v3648 = vpop.f32.mrb[0].mxu0
        %v3649 = vadd.f32 0.0, %v3648
        %3650 = vmatprep.mubr.bf16.mxu0 0
        %3651 = vmatmul.mubr.bf16.gmra.mrb[0].mxu0 %v3433
        %v3652 = vpop.f32.mrb[0].mxu0
        %v3653 = vadd.f32 0.0, %v3652
        %v3654 = vpop.f32.mrb[0].mxu0
        %v3655 = vadd.f32 0.0, %v3654
        %v3656 = vpop.f32.mrb[0].mxu0
        %v3657 = vadd.f32 0.0, %v3656
        %v3658 = vpop.f32.mrb[0].mxu0
        %v3659 = vadd.f32 0.0, %v3658
        %3660 = vdwg.mxu0
        %v3661 = vpack.c.bf16 %v3474, %v3470
        %v3662 = vpack.c.bf16 %v3476, %v3472
        %v3663 = vpack.c.bf16 %v3587, %v3583
        %v3664 = vpack.c.bf16 %v3589, %v3585
        %v3665 = vpack.c.bf16 %v3484, %v3480
        %v3666 = vpack.c.bf16 %v3486, %v3482
        %v3667 = vpack.c.bf16 %v3597, %v3593
        %v3668 = vpack.c.bf16 %v3599, %v3595
        %v3669 = vpack.c.bf16 %v3494, %v3490
        %v3670 = vpack.c.bf16 %v3496, %v3492
        %v3671 = vpack.c.bf16 %v3607, %v3603
        %v3672 = vpack.c.bf16 %v3609, %v3605
        %v3673 = vpack.c.bf16 %v3504, %v3500
        %v3674 = vpack.c.bf16 %v3506, %v3502
        %v3675 = vpack.c.bf16 %v3617, %v3613
        %v3676 = vpack.c.bf16 %v3619, %v3615
        %v3677 = vpack.c.bf16 %v3514, %v3510
        %v3678 = vpack.c.bf16 %v3516, %v3512
        %v3679 = vpack.c.bf16 %v3627, %v3623
        %v3680 = vpack.c.bf16 %v3629, %v3625
        %v3681 = vpack.c.bf16 %v3524, %v3520
        %v3682 = vpack.c.bf16 %v3526, %v3522
        %v3683 = vpack.c.bf16 %v3637, %v3633
        %v3684 = vpack.c.bf16 %v3639, %v3635
        %v3685 = vpack.c.bf16 %v3534, %v3530
        %v3686 = vpack.c.bf16 %v3536, %v3532
        %v3687 = vpack.c.bf16 %v3647, %v3643
        %v3688 = vpack.c.bf16 %v3649, %v3645
        %v3689 = vpack.c.bf16 %v3544, %v3540
        %v3690 = vpack.c.bf16 %v3546, %v3542
        %v3691 = vpack.c.bf16 %v3657, %v3653
        %v3692 = vpack.c.bf16 %v3659, %v3655
        %v3693 = vld [vmem:[%s18] sm:$0xff]
        %v3694 = vld [vmem:[%s18 + $0x8] sm:$0xf]
        %v3695 = vld [vmem:[%s18 + $0xc] sm:$0xff]
        %v3696 = vld [vmem:[%s18 + $0x14] sm:$0xf]
        %v3697 = vld [vmem:[%s18 + $0x18] sm:$0xff]
        %v3698 = vld [vmem:[%s18 + $0x20] sm:$0xf]
        %v3699 = vld [vmem:[%s18 + $0x24] sm:$0xff]
        %v3700 = vld [vmem:[%s18 + $0x2c] sm:$0xf]
        %v3701 = vld [vmem:[%s18 + $0x30] sm:$0xff]
        %v3702 = vld [vmem:[%s18 + $0x38] sm:$0xf]
        %v3703 = vld [vmem:[%s18 + $0x3c] sm:$0xff]
        %v3704 = vld [vmem:[%s18 + $0x44] sm:$0xf]
        %v3705 = vld [vmem:[%s18 + $0x48] sm:$0xff]
        %v3706 = vld [vmem:[%s18 + $0x50] sm:$0xf]
        %v3707 = vld [vmem:[%s18 + $0x54] sm:$0xff]
        %v3708 = vld [vmem:[%s18 + $0x5c] sm:$0xf]
        %v3709 = vld [vmem:[%s18 + $0x60] sm:$0xff]
        %v3710 = vld [vmem:[%s18 + $0x68] sm:$0xf]
        %v3711 = vld [vmem:[%s18 + $0x6c] sm:$0xff]
        %v3712 = vld [vmem:[%s18 + $0x74] sm:$0xf]
        %v3713 = vld [vmem:[%s18 + $0x78] sm:$0xff]
        %v3714 = vld [vmem:[%s18 + $0x80] sm:$0xf]
        %v3715 = vld [vmem:[%s18 + $0x84] sm:$0xff]
        %v3716 = vld [vmem:[%s18 + $0x8c] sm:$0xf]
        %v3717 = vld [vmem:[%s18 + $0x90] sm:$0xff]
        %v3718 = vld [vmem:[%s18 + $0x98] sm:$0xf]
        %v3719 = vld [vmem:[%s18 + $0x9c] sm:$0xff]
        %v3720 = vld [vmem:[%s18 + $0xa4] sm:$0xf]
        %v3721 = vld [vmem:[%s18 + $0xa8] sm:$0xff]
        %v3722 = vld [vmem:[%s18 + $0xb0] sm:$0xf]
        %v3723 = vld [vmem:[%s18 + $0xb4] sm:$0xff]
        %v3724 = vld [vmem:[%s18 + $0xbc] sm:$0xf]
        %v3725 = vld [vmem:[%s18 + $0xc0] sm:$0xff]
        %v3726 = vld [vmem:[%s18 + $0xc8] sm:$0xf]
        %v3727 = vld [vmem:[%s18 + $0xcc] sm:$0xff]
        %v3728 = vld [vmem:[%s18 + $0xd4] sm:$0xf]
        %v3729 = vld [vmem:[%s18 + $0xd8] sm:$0xff]
        %v3730 = vld [vmem:[%s18 + $0xe0] sm:$0xf]
        %v3731 = vld [vmem:[%s18 + $0xe4] sm:$0xff]
        %v3732 = vld [vmem:[%s18 + $0xec] sm:$0xf]
        %v3733 = vld [vmem:[%s18 + $0xf0] sm:$0xff]
        %v3734 = vld [vmem:[%s18 + $0xf8] sm:$0xf]
        %v3735 = vld [vmem:[%s18 + $0xfc] sm:$0xff]
        %v3736 = vld [vmem:[%s18 + $0x104] sm:$0xf]
        %v3737 = vld [vmem:[%s18 + $0x108] sm:$0xff]
        %v3738 = vld [vmem:[%s18 + $0x110] sm:$0xf]
        %v3739 = vld [vmem:[%s18 + $0x114] sm:$0xff]
        %v3740 = vld [vmem:[%s18 + $0x11c] sm:$0xf]
        %v3741 = vld [vmem:[%s18 + $0x120] sm:$0xff]
        %v3742 = vld [vmem:[%s18 + $0x128] sm:$0xf]
        %v3743 = vld [vmem:[%s18 + $0x12c] sm:$0xff]
        %v3744 = vld [vmem:[%s18 + $0x134] sm:$0xf]
        %v3745 = vld [vmem:[%s18 + $0x138] sm:$0xff]
        %v3746 = vld [vmem:[%s18 + $0x140] sm:$0xf]
        %v3747 = vld [vmem:[%s18 + $0x144] sm:$0xff]
        %v3748 = vld [vmem:[%s18 + $0x14c] sm:$0xf]
        %v3749 = vld [vmem:[%s18 + $0x150] sm:$0xff]
        %v3750 = vld [vmem:[%s18 + $0x158] sm:$0xf]
        %v3751 = vld [vmem:[%s18 + $0x15c] sm:$0xff]
        %v3752 = vld [vmem:[%s18 + $0x164] sm:$0xf]
        %v3753 = vld [vmem:[%s18 + $0x168] sm:$0xff]
        %v3754 = vld [vmem:[%s18 + $0x170] sm:$0xf]
        %v3755 = vld [vmem:[%s18 + $0x174] sm:$0xff]
        %v3756 = vld [vmem:[%s18 + $0x17c] sm:$0xf]
        %v3757 = vld [vmem:[%s18 + $0x180] sm:$0xff]
        %v3758 = vld [vmem:[%s18 + $0x188] sm:$0xf]
        %v3759 = vld [vmem:[%s18 + $0x18c] sm:$0xff]
        %v3760 = vld [vmem:[%s18 + $0x194] sm:$0xf]
        %v3761 = vld [vmem:[%s18 + $0x198] sm:$0xff]
        %v3762 = vld [vmem:[%s18 + $0x1a0] sm:$0xf]
        %v3763 = vld [vmem:[%s18 + $0x1a4] sm:$0xff]
        %v3764 = vld [vmem:[%s18 + $0x1ac] sm:$0xf]
        %v3765 = vld [vmem:[%s18 + $0x1b0] sm:$0xff]
        %v3766 = vld [vmem:[%s18 + $0x1b8] sm:$0xf]
        %v3767 = vld [vmem:[%s18 + $0x1bc] sm:$0xff]
        %v3768 = vld [vmem:[%s18 + $0x1c4] sm:$0xf]
        %v3769 = vld [vmem:[%s18 + $0x1c8] sm:$0xff]
        %v3770 = vld [vmem:[%s18 + $0x1d0] sm:$0xf]
        %v3771 = vld [vmem:[%s18 + $0x1d4] sm:$0xff]
        %v3772 = vld [vmem:[%s18 + $0x1dc] sm:$0xf]
        %v3773 = vld [vmem:[%s18 + $0x1e0] sm:$0xff]
        %v3774 = vld [vmem:[%s18 + $0x1e8] sm:$0xf]
        %v3775 = vld [vmem:[%s18 + $0x1ec] sm:$0xff]
        %v3776 = vld [vmem:[%s18 + $0x1f4] sm:$0xf]
        %v3777 = vld [vmem:[%s18 + $0x1f8] sm:$0xff]
        %v3778 = vld [vmem:[%s18 + $0x200] sm:$0xf]
        %v3779 = vld [vmem:[%s18 + $0x204] sm:$0xff]
        %v3780 = vld [vmem:[%s18 + $0x20c] sm:$0xf]
        %v3781 = vld [vmem:[%s18 + $0x210] sm:$0xff]
        %v3782 = vld [vmem:[%s18 + $0x218] sm:$0xf]
        %v3783 = vld [vmem:[%s18 + $0x21c] sm:$0xff]
        %v3784 = vld [vmem:[%s18 + $0x224] sm:$0xf]
        %v3785 = vld [vmem:[%s18 + $0x228] sm:$0xff]
        %v3786 = vld [vmem:[%s18 + $0x230] sm:$0xf]
        %v3787 = vld [vmem:[%s18 + $0x234] sm:$0xff]
        %v3788 = vld [vmem:[%s18 + $0x23c] sm:$0xf]
        %v3789 = vld [vmem:[%s18 + $0x240] sm:$0xff]
        %v3790 = vld [vmem:[%s18 + $0x248] sm:$0xf]
        %v3791 = vld [vmem:[%s18 + $0x24c] sm:$0xff]
        %v3792 = vld [vmem:[%s18 + $0x254] sm:$0xf]
        %v3793 = vld [vmem:[%s18 + $0x258] sm:$0xff]
        %v3794 = vld [vmem:[%s18 + $0x260] sm:$0xf]
        %v3795 = vld [vmem:[%s18 + $0x264] sm:$0xff]
        %v3796 = vld [vmem:[%s18 + $0x26c] sm:$0xf]
        %v3797 = vld [vmem:[%s18 + $0x270] sm:$0xff]
        %v3798 = vld [vmem:[%s18 + $0x278] sm:$0xf]
        %v3799 = vld [vmem:[%s18 + $0x27c] sm:$0xff]
        %v3800 = vld [vmem:[%s18 + $0x284] sm:$0xf]
        %v3801 = vld [vmem:[%s18 + $0x288] sm:$0xff]
        %v3802 = vld [vmem:[%s18 + $0x290] sm:$0xf]
        %v3803 = vld [vmem:[%s18 + $0x294] sm:$0xff]
        %v3804 = vld [vmem:[%s18 + $0x29c] sm:$0xf]
        %v3805 = vld [vmem:[%s18 + $0x2a0] sm:$0xff]
        %v3806 = vld [vmem:[%s18 + $0x2a8] sm:$0xf]
        %v3807 = vld [vmem:[%s18 + $0x2ac] sm:$0xff]
        %v3808 = vld [vmem:[%s18 + $0x2b4] sm:$0xf]
        %v3809 = vld [vmem:[%s18 + $0x2b8] sm:$0xff]
        %v3810 = vld [vmem:[%s18 + $0x2c0] sm:$0xf]
        %v3811 = vld [vmem:[%s18 + $0x2c4] sm:$0xff]
        %v3812 = vld [vmem:[%s18 + $0x2cc] sm:$0xf]
        %v3813 = vld [vmem:[%s18 + $0x2d0] sm:$0xff]
        %v3814 = vld [vmem:[%s18 + $0x2d8] sm:$0xf]
        %v3815 = vld [vmem:[%s18 + $0x2dc] sm:$0xff]
        %v3816 = vld [vmem:[%s18 + $0x2e4] sm:$0xf]
        %v3817 = vld [vmem:[%s18 + $0x2e8] sm:$0xff]
        %v3818 = vld [vmem:[%s18 + $0x2f0] sm:$0xf]
        %v3819 = vld [vmem:[%s18 + $0x2f4] sm:$0xff]
        %v3820 = vld [vmem:[%s18 + $0x2fc] sm:$0xf]
        %v3821 = vld [vmem:[%s16] sm:$0xf]
        %v3822 = vld [vmem:[%s16 + $0x4] sm:$0xf]
        %v3823 = vld [vmem:[%s16 + $0x8] sm:$0xf]
        %v3824 = vld [vmem:[%s16 + $0xc] sm:$0xf]
        %v3825 = vld [vmem:[%s16 + $0x10] sm:$0xf]
        %v3826 = vld [vmem:[%s16 + $0x14] sm:$0xf]
        %v3827 = vld [vmem:[%s16 + $0x18] sm:$0xf]
        %v3828 = vld [vmem:[%s16 + $0x1c] sm:$0xf]
        %v3829 = vld [vmem:[%s16 + $0x20] sm:$0xf]
        %v3830 = vld [vmem:[%s16 + $0x24] sm:$0xf]
        %v3831 = vld [vmem:[%s16 + $0x28] sm:$0xf]
        %v3832 = vld [vmem:[%s16 + $0x2c] sm:$0xf]
        %v3833 = vld [vmem:[%s16 + $0x30] sm:$0xf]
        %v3834 = vld [vmem:[%s16 + $0x34] sm:$0xf]
        %v3835 = vld [vmem:[%s16 + $0x38] sm:$0xf]
        %v3836 = vld [vmem:[%s16 + $0x3c] sm:$0xf]
        %v3853 = vunpack.c.l.b16 %v3821
        %v3854 = vunpack.c.l.b16 %v3822
        %v3855 = vunpack.c.l.b16 %v3823
        %v3856 = vunpack.c.l.b16 %v3824
        %v3857 = vunpack.c.l.b16 %v3825
        %v3858 = vunpack.c.l.b16 %v3826
        %v3859 = vunpack.c.l.b16 %v3827
        %v3860 = vunpack.c.l.b16 %v3828
        %v3861 = vunpack.c.l.b16 %v3829
        %v3862 = vunpack.c.l.b16 %v3830
        %v3863 = vunpack.c.l.b16 %v3831
        %v3864 = vunpack.c.l.b16 %v3832
        %v3865 = vunpack.c.l.b16 %v3833
        %v3866 = vunpack.c.l.b16 %v3834
        %v3867 = vunpack.c.l.b16 %v3835
        %v3868 = vunpack.c.l.b16 %v3836
        %v3869 = vpack.c.b16 %v3854, %v3853
        %v3870 = vpack.c.b16 %v3856, %v3855
        %v3871 = vpack.c.b16 %v3858, %v3857
        %v3872 = vpack.c.b16 %v3860, %v3859
        %v3873 = vpack.c.b16 %v3862, %v3861
        %v3874 = vpack.c.b16 %v3864, %v3863
        %v3875 = vpack.c.b16 %v3866, %v3865
        %v3876 = vpack.c.b16 %v3868, %v3867
        %v3878 = vsel %vm890, %v3869, 0
        %v3881 = vsel %vm890, %v3870, 0
        %v3884 = vsel %vm890, %v3871, 0
        %v3887 = vsel %vm890, %v3872, 0
        %v3890 = vsel %vm890, %v3873, 0
        %v3893 = vsel %vm890, %v3874, 0
        %v3896 = vsel %vm890, %v3875, 0
        %v3899 = vsel %vm890, %v3876, 0
        %3901 = vmatprep.subr.bf16.mxu0 %v3340
        %3902 = vmatpush1.bf16.msra.mxu0 %v3339
        %3903 = vmatprep.subr.bf16.mxu0 %v3344
        %3904 = vmatpush1.bf16.msra.mxu0 %v3343
        %3905 = vmatprep.subr.bf16.mxu0 %v3348
        %3906 = vmatpush1.bf16.msra.mxu0 %v3347
        %3907 = vmatprep.subr.bf16.mxu0 %v3352
        %3908 = vmatpush1.bf16.msra.mxu0 %v3351
        %3909 = vmatprep.subr.bf16.mxu0 0
        %3910 = vmatpush1.bf16.msra.mxu0 0
        %3911 = vmatprep.subr.bf16.mxu0 0
        %3912 = vmatpush1.bf16.msra.mxu0 0
        %3913 = vmatprep.subr.bf16.mxu0 0
        %3914 = vmatpush1.bf16.msra.mxu0 0
        %3915 = vmatprep.subr.bf16.mxu0 0
        %3916 = vmatpush1.bf16.msra.mxu0 0
        %3917 = vmatprep.subr.bf16.mxu0 0
        %3918 = vmatpush1.bf16.msra.mxu0 0
        %3919 = vmatprep.subr.bf16.mxu0 0
        %3920 = vmatpush1.bf16.msra.mxu0 0
        %3921 = vmatprep.subr.bf16.mxu0 0
        %3922 = vmatpush1.bf16.msra.mxu0 0
        %3923 = vmatprep.subr.bf16.mxu0 0
        %3924 = vmatpush1.bf16.msra.mxu0 0
        %3925 = vmatprep.subr.bf16.mxu0 0
        %3926 = vmatpush1.bf16.msra.mxu0 0
        %3927 = vmatprep.subr.bf16.mxu0 0
        %3928 = vmatpush1.bf16.msra.mxu0 0
        %3929 = vmatprep.subr.bf16.mxu0 0
        %3930 = vmatpush1.bf16.msra.mxu0 0
        %3931 = vmatprep.subr.bf16.mxu0 0
        %3932 = vmatpush1.bf16.msra.mxu0 0
        %3933 = vmatprep.mubr.bf16.mxu0 0
        %3934 = vmatmul.mubr.bf16.gmra.mrb[0].mxu0 %v3878
        %v3935 = vpop.f32.mrb[0].mxu0
        %v3936 = vadd.f32 0.0, %v3935
        %v3937 = vpop.f32.mrb[0].mxu0
        %v3938 = vadd.f32 0.0, %v3937
        %v3939 = vpop.f32.mrb[0].mxu0
        %v3940 = vadd.f32 0.0, %v3939
        %v3941 = vpop.f32.mrb[0].mxu0
        %v3942 = vadd.f32 0.0, %v3941
        %3943 = vmatprep.mubr.bf16.mxu0 0
        %3944 = vmatmul.mubr.bf16.gmra.mrb[0].mxu0 %v3881
        %v3945 = vpop.f32.mrb[0].mxu0
        %v3946 = vadd.f32 0.0, %v3945
        %v3947 = vpop.f32.mrb[0].mxu0
        %v3948 = vadd.f32 0.0, %v3947
        %v3949 = vpop.f32.mrb[0].mxu0
        %v3950 = vadd.f32 0.0, %v3949
        %v3951 = vpop.f32.mrb[0].mxu0
        %v3952 = vadd.f32 0.0, %v3951
        %3953 = vmatprep.mubr.bf16.mxu0 0
        %3954 = vmatmul.mubr.bf16.gmra.mrb[0].mxu0 %v3884
        %v3955 = vpop.f32.mrb[0].mxu0
        %v3956 = vadd.f32 0.0, %v3955
        %v3957 = vpop.f32.mrb[0].mxu0
        %v3958 = vadd.f32 0.0, %v3957
        %v3959 = vpop.f32.mrb[0].mxu0
        %v3960 = vadd.f32 0.0, %v3959
        %v3961 = vpop.f32.mrb[0].mxu0
        %v3962 = vadd.f32 0.0, %v3961
        %3963 = vmatprep.mubr.bf16.mxu0 0
        %3964 = vmatmul.mubr.bf16.gmra.mrb[0].mxu0 %v3887
        %v3965 = vpop.f32.mrb[0].mxu0
        %v3966 = vadd.f32 0.0, %v3965
        %v3967 = vpop.f32.mrb[0].mxu0
        %v3968 = vadd.f32 0.0, %v3967
        %v3969 = vpop.f32.mrb[0].mxu0
        %v3970 = vadd.f32 0.0, %v3969
        %v3971 = vpop.f32.mrb[0].mxu0
        %v3972 = vadd.f32 0.0, %v3971
        %3973 = vmatprep.mubr.bf16.mxu0 0
        %3974 = vmatmul.mubr.bf16.gmra.mrb[0].mxu0 %v3890
        %v3975 = vpop.f32.mrb[0].mxu0
        %v3976 = vadd.f32 0.0, %v3975
        %v3977 = vpop.f32.mrb[0].mxu0
        %v3978 = vadd.f32 0.0, %v3977
        %v3979 = vpop.f32.mrb[0].mxu0
        %v3980 = vadd.f32 0.0, %v3979
        %v3981 = vpop.f32.mrb[0].mxu0
        %v3982 = vadd.f32 0.0, %v3981
        %3983 = vmatprep.mubr.bf16.mxu0 0
        %3984 = vmatmul.mubr.bf16.gmra.mrb[0].mxu0 %v3893
        %v3985 = vpop.f32.mrb[0].mxu0
        %v3986 = vadd.f32 0.0, %v3985
        %v3987 = vpop.f32.mrb[0].mxu0
        %v3988 = vadd.f32 0.0, %v3987
        %v3989 = vpop.f32.mrb[0].mxu0
        %v3990 = vadd.f32 0.0, %v3989
        %v3991 = vpop.f32.mrb[0].mxu0
        %v3992 = vadd.f32 0.0, %v3991
        %3993 = vmatprep.mubr.bf16.mxu0 0
        %3994 = vmatmul.mubr.bf16.gmra.mrb[0].mxu0 %v3896
        %v3995 = vpop.f32.mrb[0].mxu0
        %v3996 = vadd.f32 0.0, %v3995
        %v3997 = vpop.f32.mrb[0].mxu0
        %v3998 = vadd.f32 0.0, %v3997
        %v3999 = vpop.f32.mrb[0].mxu0
        %v4000 = vadd.f32 0.0, %v3999
        %v4001 = vpop.f32.mrb[0].mxu0
        %v4002 = vadd.f32 0.0, %v4001
        %4003 = vmatprep.mubr.bf16.mxu0 0
        %4004 = vmatmul.mubr.bf16.gmra.mrb[0].mxu0 %v3899
        %v4005 = vpop.f32.mrb[0].mxu0
        %v4006 = vadd.f32 0.0, %v4005
        %v4007 = vpop.f32.mrb[0].mxu0
        %v4008 = vadd.f32 0.0, %v4007
        %v4009 = vpop.f32.mrb[0].mxu0
        %v4010 = vadd.f32 0.0, %v4009
        %v4011 = vpop.f32.mrb[0].mxu0
        %v4012 = vadd.f32 0.0, %v4011
        %4013 = vdwg.mxu0
        %4014 = vmatprep.subr.bf16.mxu0 %v3342
        %4015 = vmatpush1.bf16.msra.mxu0 %v3341
        %4016 = vmatprep.subr.bf16.mxu0 %v3346
        %4017 = vmatpush1.bf16.msra.mxu0 %v3345
        %4018 = vmatprep.subr.bf16.mxu0 %v3350
        %4019 = vmatpush1.bf16.msra.mxu0 %v3349
        %4020 = vmatprep.subr.bf16.mxu0 %v3354
        %4021 = vmatpush1.bf16.msra.mxu0 %v3353
        %4022 = vmatprep.subr.bf16.mxu0 0
        %4023 = vmatpush1.bf16.msra.mxu0 0
        %4024 = vmatprep.subr.bf16.mxu0 0
        %4025 = vmatpush1.bf16.msra.mxu0 0
        %4026 = vmatprep.subr.bf16.mxu0 0
        %4027 = vmatpush1.bf16.msra.mxu0 0
        %4028 = vmatprep.subr.bf16.mxu0 0
        %4029 = vmatpush1.bf16.msra.mxu0 0
        %4030 = vmatprep.subr.bf16.mxu0 0
        %4031 = vmatpush1.bf16.msra.mxu0 0
        %4032 = vmatprep.subr.bf16.mxu0 0
        %4033 = vmatpush1.bf16.msra.mxu0 0
        %4034 = vmatprep.subr.bf16.mxu0 0
        %4035 = vmatpush1.bf16.msra.mxu0 0
        %4036 = vmatprep.subr.bf16.mxu0 0
        %4037 = vmatpush1.bf16.msra.mxu0 0
        %4038 = vmatprep.subr.bf16.mxu0 0
        %4039 = vmatpush1.bf16.msra.mxu0 0
        %4040 = vmatprep.subr.bf16.mxu0 0
        %4041 = vmatpush1.bf16.msra.mxu0 0
        %4042 = vmatprep.subr.bf16.mxu0 0
        %4043 = vmatpush1.bf16.msra.mxu0 0
        %4044 = vmatprep.subr.bf16.mxu0 0
        %4045 = vmatpush1.bf16.msra.mxu0 0
        %4046 = vmatprep.mubr.bf16.mxu0 0
        %4047 = vmatmul.mubr.bf16.gmra.mrb[0].mxu0 %v3878
        %v4048 = vpop.f32.mrb[0].mxu0
        %v4049 = vadd.f32 0.0, %v4048
        %v4050 = vpop.f32.mrb[0].mxu0
        %v4051 = vadd.f32 0.0, %v4050
        %v4052 = vpop.f32.mrb[0].mxu0
        %v4053 = vadd.f32 0.0, %v4052
        %v4054 = vpop.f32.mrb[0].mxu0
        %v4055 = vadd.f32 0.0, %v4054
        %4056 = vmatprep.mubr.bf16.mxu0 0
        %4057 = vmatmul.mubr.bf16.gmra.mrb[0].mxu0 %v3881
        %v4058 = vpop.f32.mrb[0].mxu0
        %v4059 = vadd.f32 0.0, %v4058
        %v4060 = vpop.f32.mrb[0].mxu0
        %v4061 = vadd.f32 0.0, %v4060
        %v4062 = vpop.f32.mrb[0].mxu0
        %v4063 = vadd.f32 0.0, %v4062
        %v4064 = vpop.f32.mrb[0].mxu0
        %v4065 = vadd.f32 0.0, %v4064
        %4066 = vmatprep.mubr.bf16.mxu0 0
        %4067 = vmatmul.mubr.bf16.gmra.mrb[0].mxu0 %v3884
        %v4068 = vpop.f32.mrb[0].mxu0
        %v4069 = vadd.f32 0.0, %v4068
        %v4070 = vpop.f32.mrb[0].mxu0
        %v4071 = vadd.f32 0.0, %v4070
        %v4072 = vpop.f32.mrb[0].mxu0
        %v4073 = vadd.f32 0.0, %v4072
        %v4074 = vpop.f32.mrb[0].mxu0
        %v4075 = vadd.f32 0.0, %v4074
        %4076 = vmatprep.mubr.bf16.mxu0 0
        %4077 = vmatmul.mubr.bf16.gmra.mrb[0].mxu0 %v3887
        %v4078 = vpop.f32.mrb[0].mxu0
        %v4079 = vadd.f32 0.0, %v4078
        %v4080 = vpop.f32.mrb[0].mxu0
        %v4081 = vadd.f32 0.0, %v4080
        %v4082 = vpop.f32.mrb[0].mxu0
        %v4083 = vadd.f32 0.0, %v4082
        %v4084 = vpop.f32.mrb[0].mxu0
        %v4085 = vadd.f32 0.0, %v4084
        %4086 = vmatprep.mubr.bf16.mxu0 0
        %4087 = vmatmul.mubr.bf16.gmra.mrb[0].mxu0 %v3890
        %v4088 = vpop.f32.mrb[0].mxu0
        %v4089 = vadd.f32 0.0, %v4088
        %v4090 = vpop.f32.mrb[0].mxu0
        %v4091 = vadd.f32 0.0, %v4090
        %v4092 = vpop.f32.mrb[0].mxu0
        %v4093 = vadd.f32 0.0, %v4092
        %v4094 = vpop.f32.mrb[0].mxu0
        %v4095 = vadd.f32 0.0, %v4094
        %4096 = vmatprep.mubr.bf16.mxu0 0
        %4097 = vmatmul.mubr.bf16.gmra.mrb[0].mxu0 %v3893
        %v4098 = vpop.f32.mrb[0].mxu0
        %v4099 = vadd.f32 0.0, %v4098
        %v4100 = vpop.f32.mrb[0].mxu0
        %v4101 = vadd.f32 0.0, %v4100
        %v4102 = vpop.f32.mrb[0].mxu0
        %v4103 = vadd.f32 0.0, %v4102
        %v4104 = vpop.f32.mrb[0].mxu0
        %v4105 = vadd.f32 0.0, %v4104
        %4106 = vmatprep.mubr.bf16.mxu0 0
        %4107 = vmatmul.mubr.bf16.gmra.mrb[0].mxu0 %v3896
        %v4108 = vpop.f32.mrb[0].mxu0
        %v4109 = vadd.f32 0.0, %v4108
        %v4110 = vpop.f32.mrb[0].mxu0
        %v4111 = vadd.f32 0.0, %v4110
        %v4112 = vpop.f32.mrb[0].mxu0
        %v4113 = vadd.f32 0.0, %v4112
        %v4114 = vpop.f32.mrb[0].mxu0
        %v4115 = vadd.f32 0.0, %v4114
        %4116 = vmatprep.mubr.bf16.mxu0 0
        %4117 = vmatmul.mubr.bf16.gmra.mrb[0].mxu0 %v3899
        %v4118 = vpop.f32.mrb[0].mxu0
        %v4119 = vadd.f32 0.0, %v4118
        %v4120 = vpop.f32.mrb[0].mxu0
        %v4121 = vadd.f32 0.0, %v4120
        %v4122 = vpop.f32.mrb[0].mxu0
        %v4123 = vadd.f32 0.0, %v4122
        %v4124 = vpop.f32.mrb[0].mxu0
        %v4125 = vadd.f32 0.0, %v4124
        %4126 = vdwg.mxu0
        %v4127 = vpack.c.bf16 %v3940, %v3936
        %v4128 = vpack.c.bf16 %v3942, %v3938
        %v4129 = vpack.c.bf16 %v4053, %v4049
        %v4130 = vpack.c.bf16 %v4055, %v4051
        %v4131 = vpack.c.bf16 %v3950, %v3946
        %v4132 = vpack.c.bf16 %v3952, %v3948
        %v4133 = vpack.c.bf16 %v4063, %v4059
        %v4134 = vpack.c.bf16 %v4065, %v4061
        %v4135 = vpack.c.bf16 %v3960, %v3956
        %v4136 = vpack.c.bf16 %v3962, %v3958
        %v4137 = vpack.c.bf16 %v4073, %v4069
        %v4138 = vpack.c.bf16 %v4075, %v4071
        %v4139 = vpack.c.bf16 %v3970, %v3966
        %v4140 = vpack.c.bf16 %v3972, %v3968
        %v4141 = vpack.c.bf16 %v4083, %v4079
        %v4142 = vpack.c.bf16 %v4085, %v4081
        %v4143 = vpack.c.bf16 %v3980, %v3976
        %v4144 = vpack.c.bf16 %v3982, %v3978
        %v4145 = vpack.c.bf16 %v4093, %v4089
        %v4146 = vpack.c.bf16 %v4095, %v4091
        %v4147 = vpack.c.bf16 %v3990, %v3986
        %v4148 = vpack.c.bf16 %v3992, %v3988
        %v4149 = vpack.c.bf16 %v4103, %v4099
        %v4150 = vpack.c.bf16 %v4105, %v4101
        %v4151 = vpack.c.bf16 %v4000, %v3996
        %v4152 = vpack.c.bf16 %v4002, %v3998
        %v4153 = vpack.c.bf16 %v4113, %v4109
        %v4154 = vpack.c.bf16 %v4115, %v4111
        %v4155 = vpack.c.bf16 %v4010, %v4006
        %v4156 = vpack.c.bf16 %v4012, %v4008
        %v4157 = vpack.c.bf16 %v4123, %v4119
        %v4158 = vpack.c.bf16 %v4125, %v4121
        %v4159 = vld [vmem:[%s19] sm:$0xff]
        %v4160 = vld [vmem:[%s19 + $0x8] sm:$0xf]
        %v4161 = vld [vmem:[%s19 + $0xc] sm:$0xff]
        %v4162 = vld [vmem:[%s19 + $0x14] sm:$0xf]
        %v4163 = vld [vmem:[%s19 + $0x18] sm:$0xff]
        %v4164 = vld [vmem:[%s19 + $0x20] sm:$0xf]
        %v4165 = vld [vmem:[%s19 + $0x24] sm:$0xff]
        %v4166 = vld [vmem:[%s19 + $0x2c] sm:$0xf]
        %v4167 = vld [vmem:[%s19 + $0x30] sm:$0xff]
        %v4168 = vld [vmem:[%s19 + $0x38] sm:$0xf]
        %v4169 = vld [vmem:[%s19 + $0x3c] sm:$0xff]
        %v4170 = vld [vmem:[%s19 + $0x44] sm:$0xf]
        %v4171 = vld [vmem:[%s19 + $0x48] sm:$0xff]
        %v4172 = vld [vmem:[%s19 + $0x50] sm:$0xf]
        %v4173 = vld [vmem:[%s19 + $0x54] sm:$0xff]
        %v4174 = vld [vmem:[%s19 + $0x5c] sm:$0xf]
        %v4175 = vld [vmem:[%s19 + $0x60] sm:$0xff]
        %v4176 = vld [vmem:[%s19 + $0x68] sm:$0xf]
        %v4177 = vld [vmem:[%s19 + $0x6c] sm:$0xff]
        %v4178 = vld [vmem:[%s19 + $0x74] sm:$0xf]
        %v4179 = vld [vmem:[%s19 + $0x78] sm:$0xff]
        %v4180 = vld [vmem:[%s19 + $0x80] sm:$0xf]
        %v4181 = vld [vmem:[%s19 + $0x84] sm:$0xff]
        %v4182 = vld [vmem:[%s19 + $0x8c] sm:$0xf]
        %v4183 = vld [vmem:[%s19 + $0x90] sm:$0xff]
        %v4184 = vld [vmem:[%s19 + $0x98] sm:$0xf]
        %v4185 = vld [vmem:[%s19 + $0x9c] sm:$0xff]
        %v4186 = vld [vmem:[%s19 + $0xa4] sm:$0xf]
        %v4187 = vld [vmem:[%s19 + $0xa8] sm:$0xff]
        %v4188 = vld [vmem:[%s19 + $0xb0] sm:$0xf]
        %v4189 = vld [vmem:[%s19 + $0xb4] sm:$0xff]
        %v4190 = vld [vmem:[%s19 + $0xbc] sm:$0xf]
        %v4191 = vld [vmem:[%s19 + $0xc0] sm:$0xff]
        %v4192 = vld [vmem:[%s19 + $0xc8] sm:$0xf]
        %v4193 = vld [vmem:[%s19 + $0xcc] sm:$0xff]
        %v4194 = vld [vmem:[%s19 + $0xd4] sm:$0xf]
        %v4195 = vld [vmem:[%s19 + $0xd8] sm:$0xff]
        %v4196 = vld [vmem:[%s19 + $0xe0] sm:$0xf]
        %v4197 = vld [vmem:[%s19 + $0xe4] sm:$0xff]
        %v4198 = vld [vmem:[%s19 + $0xec] sm:$0xf]
        %v4199 = vld [vmem:[%s19 + $0xf0] sm:$0xff]
        %v4200 = vld [vmem:[%s19 + $0xf8] sm:$0xf]
        %v4201 = vld [vmem:[%s19 + $0xfc] sm:$0xff]
        %v4202 = vld [vmem:[%s19 + $0x104] sm:$0xf]
        %v4203 = vld [vmem:[%s19 + $0x108] sm:$0xff]
        %v4204 = vld [vmem:[%s19 + $0x110] sm:$0xf]
        %v4205 = vld [vmem:[%s19 + $0x114] sm:$0xff]
        %v4206 = vld [vmem:[%s19 + $0x11c] sm:$0xf]
        %v4207 = vld [vmem:[%s19 + $0x120] sm:$0xff]
        %v4208 = vld [vmem:[%s19 + $0x128] sm:$0xf]
        %v4209 = vld [vmem:[%s19 + $0x12c] sm:$0xff]
        %v4210 = vld [vmem:[%s19 + $0x134] sm:$0xf]
        %v4211 = vld [vmem:[%s19 + $0x138] sm:$0xff]
        %v4212 = vld [vmem:[%s19 + $0x140] sm:$0xf]
        %v4213 = vld [vmem:[%s19 + $0x144] sm:$0xff]
        %v4214 = vld [vmem:[%s19 + $0x14c] sm:$0xf]
        %v4215 = vld [vmem:[%s19 + $0x150] sm:$0xff]
        %v4216 = vld [vmem:[%s19 + $0x158] sm:$0xf]
        %v4217 = vld [vmem:[%s19 + $0x15c] sm:$0xff]
        %v4218 = vld [vmem:[%s19 + $0x164] sm:$0xf]
        %v4219 = vld [vmem:[%s19 + $0x168] sm:$0xff]
        %v4220 = vld [vmem:[%s19 + $0x170] sm:$0xf]
        %v4221 = vld [vmem:[%s19 + $0x174] sm:$0xff]
        %v4222 = vld [vmem:[%s19 + $0x17c] sm:$0xf]
        %v4223 = vld [vmem:[%s19 + $0x180] sm:$0xff]
        %v4224 = vld [vmem:[%s19 + $0x188] sm:$0xf]
        %v4225 = vld [vmem:[%s19 + $0x18c] sm:$0xff]
        %v4226 = vld [vmem:[%s19 + $0x194] sm:$0xf]
        %v4227 = vld [vmem:[%s19 + $0x198] sm:$0xff]
        %v4228 = vld [vmem:[%s19 + $0x1a0] sm:$0xf]
        %v4229 = vld [vmem:[%s19 + $0x1a4] sm:$0xff]
        %v4230 = vld [vmem:[%s19 + $0x1ac] sm:$0xf]
        %v4231 = vld [vmem:[%s19 + $0x1b0] sm:$0xff]
        %v4232 = vld [vmem:[%s19 + $0x1b8] sm:$0xf]
        %v4233 = vld [vmem:[%s19 + $0x1bc] sm:$0xff]
        %v4234 = vld [vmem:[%s19 + $0x1c4] sm:$0xf]
        %v4235 = vld [vmem:[%s19 + $0x1c8] sm:$0xff]
        %v4236 = vld [vmem:[%s19 + $0x1d0] sm:$0xf]
        %v4237 = vld [vmem:[%s19 + $0x1d4] sm:$0xff]
        %v4238 = vld [vmem:[%s19 + $0x1dc] sm:$0xf]
        %v4239 = vld [vmem:[%s19 + $0x1e0] sm:$0xff]
        %v4240 = vld [vmem:[%s19 + $0x1e8] sm:$0xf]
        %v4241 = vld [vmem:[%s19 + $0x1ec] sm:$0xff]
        %v4242 = vld [vmem:[%s19 + $0x1f4] sm:$0xf]
        %v4243 = vld [vmem:[%s19 + $0x1f8] sm:$0xff]
        %v4244 = vld [vmem:[%s19 + $0x200] sm:$0xf]
        %v4245 = vld [vmem:[%s19 + $0x204] sm:$0xff]
        %v4246 = vld [vmem:[%s19 + $0x20c] sm:$0xf]
        %v4247 = vld [vmem:[%s19 + $0x210] sm:$0xff]
        %v4248 = vld [vmem:[%s19 + $0x218] sm:$0xf]
        %v4249 = vld [vmem:[%s19 + $0x21c] sm:$0xff]
        %v4250 = vld [vmem:[%s19 + $0x224] sm:$0xf]
        %v4251 = vld [vmem:[%s19 + $0x228] sm:$0xff]
        %v4252 = vld [vmem:[%s19 + $0x230] sm:$0xf]
        %v4253 = vld [vmem:[%s19 + $0x234] sm:$0xff]
        %v4254 = vld [vmem:[%s19 + $0x23c] sm:$0xf]
        %v4255 = vld [vmem:[%s19 + $0x240] sm:$0xff]
        %v4256 = vld [vmem:[%s19 + $0x248] sm:$0xf]
        %v4257 = vld [vmem:[%s19 + $0x24c] sm:$0xff]
        %v4258 = vld [vmem:[%s19 + $0x254] sm:$0xf]
        %v4259 = vld [vmem:[%s19 + $0x258] sm:$0xff]
        %v4260 = vld [vmem:[%s19 + $0x260] sm:$0xf]
        %v4261 = vld [vmem:[%s19 + $0x264] sm:$0xff]
        %v4262 = vld [vmem:[%s19 + $0x26c] sm:$0xf]
        %v4263 = vld [vmem:[%s19 + $0x270] sm:$0xff]
        %v4264 = vld [vmem:[%s19 + $0x278] sm:$0xf]
        %v4265 = vld [vmem:[%s19 + $0x27c] sm:$0xff]
        %v4266 = vld [vmem:[%s19 + $0x284] sm:$0xf]
        %v4267 = vld [vmem:[%s19 + $0x288] sm:$0xff]
        %v4268 = vld [vmem:[%s19 + $0x290] sm:$0xf]
        %v4269 = vld [vmem:[%s19 + $0x294] sm:$0xff]
        %v4270 = vld [vmem:[%s19 + $0x29c] sm:$0xf]
        %v4271 = vld [vmem:[%s19 + $0x2a0] sm:$0xff]
        %v4272 = vld [vmem:[%s19 + $0x2a8] sm:$0xf]
        %v4273 = vld [vmem:[%s19 + $0x2ac] sm:$0xff]
        %v4274 = vld [vmem:[%s19 + $0x2b4] sm:$0xf]
        %v4275 = vld [vmem:[%s19 + $0x2b8] sm:$0xff]
        %v4276 = vld [vmem:[%s19 + $0x2c0] sm:$0xf]
        %v4277 = vld [vmem:[%s19 + $0x2c4] sm:$0xff]
        %v4278 = vld [vmem:[%s19 + $0x2cc] sm:$0xf]
        %v4279 = vld [vmem:[%s19 + $0x2d0] sm:$0xff]
        %v4280 = vld [vmem:[%s19 + $0x2d8] sm:$0xf]
        %v4281 = vld [vmem:[%s19 + $0x2dc] sm:$0xff]
        %v4282 = vld [vmem:[%s19 + $0x2e4] sm:$0xf]
        %v4283 = vld [vmem:[%s19 + $0x2e8] sm:$0xff]
        %v4284 = vld [vmem:[%s19 + $0x2f0] sm:$0xf]
        %v4285 = vld [vmem:[%s19 + $0x2f4] sm:$0xff]
        %v4286 = vld [vmem:[%s19 + $0x2fc] sm:$0xf]
        %v4415 = vunpack.c.l.b16 %v4159
        %v4416 = vunpack.c.h.b16 %v4159
        %v4417 = vunpack.c.l.b16 %v4160
        %v4418 = vunpack.c.l.b16 %v4161
        %v4419 = vunpack.c.h.b16 %v4161
        %v4420 = vunpack.c.l.b16 %v4162
        %v4421 = vunpack.c.l.b16 %v4163
        %v4422 = vunpack.c.h.b16 %v4163
        %v4423 = vunpack.c.l.b16 %v4164
        %v4424 = vunpack.c.l.b16 %v4165
        %v4425 = vunpack.c.h.b16 %v4165
        %v4426 = vunpack.c.l.b16 %v4166
        %v4427 = vunpack.c.l.b16 %v4167
        %v4428 = vunpack.c.h.b16 %v4167
        %v4429 = vunpack.c.l.b16 %v4168
        %v4430 = vunpack.c.l.b16 %v4169
        %v4431 = vunpack.c.h.b16 %v4169
        %v4432 = vunpack.c.l.b16 %v4170
        %v4433 = vunpack.c.l.b16 %v4171
        %v4434 = vunpack.c.h.b16 %v4171
        %v4435 = vunpack.c.l.b16 %v4172
        %v4436 = vunpack.c.l.b16 %v4173
        %v4437 = vunpack.c.h.b16 %v4173
        %v4438 = vunpack.c.l.b16 %v4174
        %v4439 = vunpack.c.l.b16 %v4175
        %v4440 = vunpack.c.h.b16 %v4175
        %v4441 = vunpack.c.l.b16 %v4176
        %v4442 = vunpack.c.l.b16 %v4177
        %v4443 = vunpack.c.h.b16 %v4177
        %v4444 = vunpack.c.l.b16 %v4178
        %v4445 = vunpack.c.l.b16 %v4179
        %v4446 = vunpack.c.h.b16 %v4179
        %v4447 = vunpack.c.l.b16 %v4180
        %v4448 = vunpack.c.l.b16 %v4181
        %v4449 = vunpack.c.h.b16 %v4181
        %v4450 = vunpack.c.l.b16 %v4182
        %v4451 = vunpack.c.l.b16 %v4183
        %v4452 = vunpack.c.h.b16 %v4183
        %v4453 = vunpack.c.l.b16 %v4184
        %v4454 = vunpack.c.l.b16 %v4185
        %v4455 = vunpack.c.h.b16 %v4185
        %v4456 = vunpack.c.l.b16 %v4186
        %v4457 = vunpack.c.l.b16 %v4187
        %v4458 = vunpack.c.h.b16 %v4187
        %v4459 = vunpack.c.l.b16 %v4188
        %v4460 = vunpack.c.l.b16 %v4189
        %v4461 = vunpack.c.h.b16 %v4189
        %v4462 = vunpack.c.l.b16 %v4190
        %v4463 = vunpack.c.l.b16 %v4191
        %v4464 = vunpack.c.h.b16 %v4191
        %v4465 = vunpack.c.l.b16 %v4192
        %v4466 = vunpack.c.l.b16 %v4193
        %v4467 = vunpack.c.h.b16 %v4193
        %v4468 = vunpack.c.l.b16 %v4194
        %v4469 = vunpack.c.l.b16 %v4195
        %v4470 = vunpack.c.h.b16 %v4195
        %v4471 = vunpack.c.l.b16 %v4196
        %v4472 = vunpack.c.l.b16 %v4197
        %v4473 = vunpack.c.h.b16 %v4197
        %v4474 = vunpack.c.l.b16 %v4198
        %v4475 = vunpack.c.l.b16 %v4199
        %v4476 = vunpack.c.h.b16 %v4199
        %v4477 = vunpack.c.l.b16 %v4200
        %v4478 = vunpack.c.l.b16 %v4201
        %v4479 = vunpack.c.h.b16 %v4201
        %v4480 = vunpack.c.l.b16 %v4202
        %v4481 = vunpack.c.l.b16 %v4203
        %v4482 = vunpack.c.h.b16 %v4203
        %v4483 = vunpack.c.l.b16 %v4204
        %v4484 = vunpack.c.l.b16 %v4205
        %v4485 = vunpack.c.h.b16 %v4205
        %v4486 = vunpack.c.l.b16 %v4206
        %v4487 = vunpack.c.l.b16 %v4207
        %v4488 = vunpack.c.h.b16 %v4207
        %v4489 = vunpack.c.l.b16 %v4208
        %v4490 = vunpack.c.l.b16 %v4209
        %v4491 = vunpack.c.h.b16 %v4209
        %v4492 = vunpack.c.l.b16 %v4210
        %v4493 = vunpack.c.l.b16 %v4211
        %v4494 = vunpack.c.h.b16 %v4211
        %v4495 = vunpack.c.l.b16 %v4212
        %v4496 = vunpack.c.l.b16 %v4213
        %v4497 = vunpack.c.h.b16 %v4213
        %v4498 = vunpack.c.l.b16 %v4214
        %v4499 = vunpack.c.l.b16 %v4215
        %v4500 = vunpack.c.h.b16 %v4215
        %v4501 = vunpack.c.l.b16 %v4216
        %v4502 = vunpack.c.l.b16 %v4217
        %v4503 = vunpack.c.h.b16 %v4217
        %v4504 = vunpack.c.l.b16 %v4218
        %v4505 = vunpack.c.l.b16 %v4219
        %v4506 = vunpack.c.h.b16 %v4219
        %v4507 = vunpack.c.l.b16 %v4220
        %v4508 = vunpack.c.l.b16 %v4221
        %v4509 = vunpack.c.h.b16 %v4221
        %v4510 = vunpack.c.l.b16 %v4222
        %v4511 = vunpack.c.l.b16 %v4223
        %v4512 = vunpack.c.h.b16 %v4223
        %v4513 = vunpack.c.l.b16 %v4224
        %v4514 = vunpack.c.l.b16 %v4225
        %v4515 = vunpack.c.h.b16 %v4225
        %v4516 = vunpack.c.l.b16 %v4226
        %v4517 = vunpack.c.l.b16 %v4227
        %v4518 = vunpack.c.h.b16 %v4227
        %v4519 = vunpack.c.l.b16 %v4228
        %v4520 = vunpack.c.l.b16 %v4229
        %v4521 = vunpack.c.h.b16 %v4229
        %v4522 = vunpack.c.l.b16 %v4230
        %v4523 = vunpack.c.l.b16 %v4231
        %v4524 = vunpack.c.h.b16 %v4231
        %v4525 = vunpack.c.l.b16 %v4232
        %v4526 = vunpack.c.l.b16 %v4233
        %v4527 = vunpack.c.h.b16 %v4233
        %v4528 = vunpack.c.l.b16 %v4234
        %v4529 = vunpack.c.l.b16 %v4235
        %v4530 = vunpack.c.h.b16 %v4235
        %v4531 = vunpack.c.l.b16 %v4236
        %v4532 = vunpack.c.l.b16 %v4237
        %v4533 = vunpack.c.h.b16 %v4237
        %v4534 = vunpack.c.l.b16 %v4238
        %v4535 = vunpack.c.l.b16 %v4239
        %v4536 = vunpack.c.h.b16 %v4239
        %v4537 = vunpack.c.l.b16 %v4240
        %v4538 = vunpack.c.l.b16 %v4241
        %v4539 = vunpack.c.h.b16 %v4241
        %v4540 = vunpack.c.l.b16 %v4242
        %v4541 = vunpack.c.l.b16 %v4243
        %v4542 = vunpack.c.h.b16 %v4243
        %v4543 = vunpack.c.l.b16 %v4244
        %v4544 = vunpack.c.l.b16 %v4245
        %v4545 = vunpack.c.h.b16 %v4245
        %v4546 = vunpack.c.l.b16 %v4246
        %v4547 = vunpack.c.l.b16 %v4247
        %v4548 = vunpack.c.h.b16 %v4247
        %v4549 = vunpack.c.l.b16 %v4248
        %v4550 = vunpack.c.l.b16 %v4249
        %v4551 = vunpack.c.h.b16 %v4249
        %v4552 = vunpack.c.l.b16 %v4250
        %v4553 = vunpack.c.l.b16 %v4251
        %v4554 = vunpack.c.h.b16 %v4251
        %v4555 = vunpack.c.l.b16 %v4252
        %v4556 = vunpack.c.l.b16 %v4253
        %v4557 = vunpack.c.h.b16 %v4253
        %v4558 = vunpack.c.l.b16 %v4254
        %v4559 = vunpack.c.l.b16 %v4255
        %v4560 = vunpack.c.h.b16 %v4255
        %v4561 = vunpack.c.l.b16 %v4256
        %v4562 = vunpack.c.l.b16 %v4257
        %v4563 = vunpack.c.h.b16 %v4257
        %v4564 = vunpack.c.l.b16 %v4258
        %v4565 = vunpack.c.l.b16 %v4259
        %v4566 = vunpack.c.h.b16 %v4259
        %v4567 = vunpack.c.l.b16 %v4260
        %v4568 = vunpack.c.l.b16 %v4261
        %v4569 = vunpack.c.h.b16 %v4261
        %v4570 = vunpack.c.l.b16 %v4262
        %v4571 = vunpack.c.l.b16 %v4263
        %v4572 = vunpack.c.h.b16 %v4263
        %v4573 = vunpack.c.l.b16 %v4264
        %v4574 = vunpack.c.l.b16 %v4265
        %v4575 = vunpack.c.h.b16 %v4265
        %v4576 = vunpack.c.l.b16 %v4266
        %v4577 = vunpack.c.l.b16 %v4267
        %v4578 = vunpack.c.h.b16 %v4267
        %v4579 = vunpack.c.l.b16 %v4268
        %v4580 = vunpack.c.l.b16 %v4269
        %v4581 = vunpack.c.h.b16 %v4269
        %v4582 = vunpack.c.l.b16 %v4270
        %v4583 = vunpack.c.l.b16 %v4271
        %v4584 = vunpack.c.h.b16 %v4271
        %v4585 = vunpack.c.l.b16 %v4272
        %v4586 = vunpack.c.l.b16 %v4273
        %v4587 = vunpack.c.h.b16 %v4273
        %v4588 = vunpack.c.l.b16 %v4274
        %v4589 = vunpack.c.l.b16 %v4275
        %v4590 = vunpack.c.h.b16 %v4275
        %v4591 = vunpack.c.l.b16 %v4276
        %v4592 = vunpack.c.l.b16 %v4277
        %v4593 = vunpack.c.h.b16 %v4277
        %v4594 = vunpack.c.l.b16 %v4278
        %v4595 = vunpack.c.l.b16 %v4279
        %v4596 = vunpack.c.h.b16 %v4279
        %v4597 = vunpack.c.l.b16 %v4280
        %v4598 = vunpack.c.l.b16 %v4281
        %v4599 = vunpack.c.h.b16 %v4281
        %v4600 = vunpack.c.l.b16 %v4282
        %v4601 = vunpack.c.l.b16 %v4283
        %v4602 = vunpack.c.h.b16 %v4283
        %v4603 = vunpack.c.l.b16 %v4284
        %v4604 = vunpack.c.l.b16 %v4285
        %v4605 = vunpack.c.h.b16 %v4285
        %v4606 = vunpack.c.l.b16 %v4286
        %v4607 = vpack.c.b16 %v4418, %v4415
        %v4608 = vpack.c.b16 %v4419, %v4416
        %v4609 = vpack.c.b16 %v4420, %v4417
        %v4610 = vpack.c.b16 %v4424, %v4421
        %v4611 = vpack.c.b16 %v4425, %v4422
        %v4612 = vpack.c.b16 %v4426, %v4423
        %v4613 = vpack.c.b16 %v4430, %v4427
        %v4614 = vpack.c.b16 %v4431, %v4428
        %v4615 = vpack.c.b16 %v4432, %v4429
        %v4616 = vpack.c.b16 %v4436, %v4433
        %v4617 = vpack.c.b16 %v4437, %v4434
        %v4618 = vpack.c.b16 %v4438, %v4435
        %v4619 = vpack.c.b16 %v4442, %v4439
        %v4620 = vpack.c.b16 %v4443, %v4440
        %v4621 = vpack.c.b16 %v4444, %v4441
        %v4622 = vpack.c.b16 %v4448, %v4445
        %v4623 = vpack.c.b16 %v4449, %v4446
        %v4624 = vpack.c.b16 %v4450, %v4447
        %v4625 = vpack.c.b16 %v4454, %v4451
        %v4626 = vpack.c.b16 %v4455, %v4452
        %v4627 = vpack.c.b16 %v4456, %v4453
        %v4628 = vpack.c.b16 %v4460, %v4457
        %v4629 = vpack.c.b16 %v4461, %v4458
        %v4630 = vpack.c.b16 %v4462, %v4459
        %v4631 = vpack.c.b16 %v4466, %v4463
        %v4632 = vpack.c.b16 %v4467, %v4464
        %v4633 = vpack.c.b16 %v4468, %v4465
        %v4634 = vpack.c.b16 %v4472, %v4469
        %v4635 = vpack.c.b16 %v4473, %v4470
        %v4636 = vpack.c.b16 %v4474, %v4471
        %v4637 = vpack.c.b16 %v4478, %v4475
        %v4638 = vpack.c.b16 %v4479, %v4476
        %v4639 = vpack.c.b16 %v4480, %v4477
        %v4640 = vpack.c.b16 %v4484, %v4481
        %v4641 = vpack.c.b16 %v4485, %v4482
        %v4642 = vpack.c.b16 %v4486, %v4483
        %v4643 = vpack.c.b16 %v4490, %v4487
        %v4644 = vpack.c.b16 %v4491, %v4488
        %v4645 = vpack.c.b16 %v4492, %v4489
        %v4646 = vpack.c.b16 %v4496, %v4493
        %v4647 = vpack.c.b16 %v4497, %v4494
        %v4648 = vpack.c.b16 %v4498, %v4495
        %v4649 = vpack.c.b16 %v4502, %v4499
        %v4650 = vpack.c.b16 %v4503, %v4500
        %v4651 = vpack.c.b16 %v4504, %v4501
        %v4652 = vpack.c.b16 %v4508, %v4505
        %v4653 = vpack.c.b16 %v4509, %v4506
        %v4654 = vpack.c.b16 %v4510, %v4507
        %v4655 = vpack.c.b16 %v4514, %v4511
        %v4656 = vpack.c.b16 %v4515, %v4512
        %v4657 = vpack.c.b16 %v4516, %v4513
        %v4658 = vpack.c.b16 %v4520, %v4517
        %v4659 = vpack.c.b16 %v4521, %v4518
        %v4660 = vpack.c.b16 %v4522, %v4519
        %v4661 = vpack.c.b16 %v4526, %v4523
        %v4662 = vpack.c.b16 %v4527, %v4524
        %v4663 = vpack.c.b16 %v4528, %v4525
        %v4664 = vpack.c.b16 %v4532, %v4529
        %v4665 = vpack.c.b16 %v4533, %v4530
        %v4666 = vpack.c.b16 %v4534, %v4531
        %v4667 = vpack.c.b16 %v4538, %v4535
        %v4668 = vpack.c.b16 %v4539, %v4536
        %v4669 = vpack.c.b16 %v4540, %v4537
        %v4670 = vpack.c.b16 %v4544, %v4541
        %v4671 = vpack.c.b16 %v4545, %v4542
        %v4672 = vpack.c.b16 %v4546, %v4543
        %v4673 = vpack.c.b16 %v4550, %v4547
        %v4674 = vpack.c.b16 %v4551, %v4548
        %v4675 = vpack.c.b16 %v4552, %v4549
        %v4676 = vpack.c.b16 %v4556, %v4553
        %v4677 = vpack.c.b16 %v4557, %v4554
        %v4678 = vpack.c.b16 %v4558, %v4555
        %v4679 = vpack.c.b16 %v4562, %v4559
        %v4680 = vpack.c.b16 %v4563, %v4560
        %v4681 = vpack.c.b16 %v4564, %v4561
        %v4682 = vpack.c.b16 %v4568, %v4565
        %v4683 = vpack.c.b16 %v4569, %v4566
        %v4684 = vpack.c.b16 %v4570, %v4567
        %v4685 = vpack.c.b16 %v4574, %v4571
        %v4686 = vpack.c.b16 %v4575, %v4572
        %v4687 = vpack.c.b16 %v4576, %v4573
        %v4688 = vpack.c.b16 %v4580, %v4577
        %v4689 = vpack.c.b16 %v4581, %v4578
        %v4690 = vpack.c.b16 %v4582, %v4579
        %v4691 = vpack.c.b16 %v4586, %v4583
        %v4692 = vpack.c.b16 %v4587, %v4584
        %v4693 = vpack.c.b16 %v4588, %v4585
        %v4694 = vpack.c.b16 %v4592, %v4589
        %v4695 = vpack.c.b16 %v4593, %v4590
        %v4696 = vpack.c.b16 %v4594, %v4591
        %v4697 = vpack.c.b16 %v4598, %v4595
        %v4698 = vpack.c.b16 %v4599, %v4596
        %v4699 = vpack.c.b16 %v4600, %v4597
        %v4700 = vpack.c.b16 %v4604, %v4601
        %v4701 = vpack.c.b16 %v4605, %v4602
        %v4702 = vpack.c.b16 %v4606, %v4603
        %4799 = vmatprep.subr.bf16.mxu0 %v4608
        %4800 = vmatpush1.bf16.msra.mxu0 %v4607
        %4801 = vmatprep.subr.bf16.mxu0 %v4611
        %4802 = vmatpush1.bf16.msra.mxu0 %v4610
        %4803 = vmatprep.subr.bf16.mxu0 %v4614
        %4804 = vmatpush1.bf16.msra.mxu0 %v4613
        %4805 = vmatprep.subr.bf16.mxu0 %v4617
        %4806 = vmatpush1.bf16.msra.mxu0 %v4616
        %4807 = vmatprep.subr.bf16.mxu0 %v4620
        %4808 = vmatpush1.bf16.msra.mxu0 %v4619
        %4809 = vmatprep.subr.bf16.mxu0 %v4623
        %4810 = vmatpush1.bf16.msra.mxu0 %v4622
        %4811 = vmatprep.subr.bf16.mxu0 %v4626
        %4812 = vmatpush1.bf16.msra.mxu0 %v4625
        %4813 = vmatprep.subr.bf16.mxu0 %v4629
        %4814 = vmatpush1.bf16.msra.mxu0 %v4628
        %4815 = vmatprep.subr.bf16.mxu0 %v4632
        %4816 = vmatpush1.bf16.msra.mxu0 %v4631
        %4817 = vmatprep.subr.bf16.mxu0 %v4635
        %4818 = vmatpush1.bf16.msra.mxu0 %v4634
        %4819 = vmatprep.subr.bf16.mxu0 %v4638
        %4820 = vmatpush1.bf16.msra.mxu0 %v4637
        %4821 = vmatprep.subr.bf16.mxu0 %v4641
        %4822 = vmatpush1.bf16.msra.mxu0 %v4640
        %4823 = vmatprep.subr.bf16.mxu0 %v4644
        %4824 = vmatpush1.bf16.msra.mxu0 %v4643
        %4825 = vmatprep.subr.bf16.mxu0 %v4647
        %4826 = vmatpush1.bf16.msra.mxu0 %v4646
        %4827 = vmatprep.subr.bf16.mxu0 %v4650
        %4828 = vmatpush1.bf16.msra.mxu0 %v4649
        %4829 = vmatprep.subr.bf16.mxu0 %v4653
        %4830 = vmatpush1.bf16.msra.mxu0 %v4652
        %4831 = vmatprep.mubr.bf16.mxu0 %v4128
        %4832 = vmatmul.mubr.bf16.gmra.mrb[0].mxu0 %v4127
        %v4833 = vpop.f32.mrb[0].mxu0
        %v4834 = vadd.f32 0.0, %v4833
        %v4835 = vpop.f32.mrb[0].mxu0
        %v4836 = vadd.f32 0.0, %v4835
        %v4837 = vpop.f32.mrb[0].mxu0
        %v4838 = vadd.f32 0.0, %v4837
        %v4839 = vpop.f32.mrb[0].mxu0
        %v4840 = vadd.f32 0.0, %v4839
        %4841 = vmatprep.mubr.bf16.mxu0 %v4132
        %4842 = vmatmul.mubr.bf16.gmra.mrb[0].mxu0 %v4131
        %v4843 = vpop.f32.mrb[0].mxu0
        %v4844 = vadd.f32 0.0, %v4843
        %v4845 = vpop.f32.mrb[0].mxu0
        %v4846 = vadd.f32 0.0, %v4845
        %v4847 = vpop.f32.mrb[0].mxu0
        %v4848 = vadd.f32 0.0, %v4847
        %v4849 = vpop.f32.mrb[0].mxu0
        %v4850 = vadd.f32 0.0, %v4849
        %4851 = vmatprep.mubr.bf16.mxu0 %v4136
        %4852 = vmatmul.mubr.bf16.gmra.mrb[0].mxu0 %v4135
        %v4853 = vpop.f32.mrb[0].mxu0
        %v4854 = vadd.f32 0.0, %v4853
        %v4855 = vpop.f32.mrb[0].mxu0
        %v4856 = vadd.f32 0.0, %v4855
        %v4857 = vpop.f32.mrb[0].mxu0
        %v4858 = vadd.f32 0.0, %v4857
        %v4859 = vpop.f32.mrb[0].mxu0
        %v4860 = vadd.f32 0.0, %v4859
        %4861 = vmatprep.mubr.bf16.mxu0 %v4140
        %4862 = vmatmul.mubr.bf16.gmra.mrb[0].mxu0 %v4139
        %v4863 = vpop.f32.mrb[0].mxu0
        %v4864 = vadd.f32 0.0, %v4863
        %v4865 = vpop.f32.mrb[0].mxu0
        %v4866 = vadd.f32 0.0, %v4865
        %v4867 = vpop.f32.mrb[0].mxu0
        %v4868 = vadd.f32 0.0, %v4867
        %v4869 = vpop.f32.mrb[0].mxu0
        %v4870 = vadd.f32 0.0, %v4869
        %4871 = vmatprep.mubr.bf16.mxu0 %v4144
        %4872 = vmatmul.mubr.bf16.gmra.mrb[0].mxu0 %v4143
        %v4873 = vpop.f32.mrb[0].mxu0
        %v4874 = vadd.f32 0.0, %v4873
        %v4875 = vpop.f32.mrb[0].mxu0
        %v4876 = vadd.f32 0.0, %v4875
        %v4877 = vpop.f32.mrb[0].mxu0
        %v4878 = vadd.f32 0.0, %v4877
        %v4879 = vpop.f32.mrb[0].mxu0
        %v4880 = vadd.f32 0.0, %v4879
        %4881 = vmatprep.mubr.bf16.mxu0 %v4148
        %4882 = vmatmul.mubr.bf16.gmra.mrb[0].mxu0 %v4147
        %v4883 = vpop.f32.mrb[0].mxu0
        %v4884 = vadd.f32 0.0, %v4883
        %v4885 = vpop.f32.mrb[0].mxu0
        %v4886 = vadd.f32 0.0, %v4885
        %v4887 = vpop.f32.mrb[0].mxu0
        %v4888 = vadd.f32 0.0, %v4887
        %v4889 = vpop.f32.mrb[0].mxu0
        %v4890 = vadd.f32 0.0, %v4889
        %4891 = vmatprep.mubr.bf16.mxu0 %v4152
        %4892 = vmatmul.mubr.bf16.gmra.mrb[0].mxu0 %v4151
        %v4893 = vpop.f32.mrb[0].mxu0
        %v4894 = vadd.f32 0.0, %v4893
        %v4895 = vpop.f32.mrb[0].mxu0
        %v4896 = vadd.f32 0.0, %v4895
        %v4897 = vpop.f32.mrb[0].mxu0
        %v4898 = vadd.f32 0.0, %v4897
        %v4899 = vpop.f32.mrb[0].mxu0
        %v4900 = vadd.f32 0.0, %v4899
        %4901 = vmatprep.mubr.bf16.mxu0 %v4156
        %4902 = vmatmul.mubr.bf16.gmra.mrb[0].mxu0 %v4155
        %v4903 = vpop.f32.mrb[0].mxu0
        %v4904 = vadd.f32 0.0, %v4903
        %v4905 = vpop.f32.mrb[0].mxu0
        %v4906 = vadd.f32 0.0, %v4905
        %v4907 = vpop.f32.mrb[0].mxu0
        %v4908 = vadd.f32 0.0, %v4907
        %v4909 = vpop.f32.mrb[0].mxu0
        %v4910 = vadd.f32 0.0, %v4909
        %4911 = vdwg.mxu0
        %4912 = vmatprep.subr.bf16.mxu0 %v4656
        %4913 = vmatpush1.bf16.msra.mxu0 %v4655
        %4914 = vmatprep.subr.bf16.mxu0 %v4659
        %4915 = vmatpush1.bf16.msra.mxu0 %v4658
        %4916 = vmatprep.subr.bf16.mxu0 %v4662
        %4917 = vmatpush1.bf16.msra.mxu0 %v4661
        %4918 = vmatprep.subr.bf16.mxu0 %v4665
        %4919 = vmatpush1.bf16.msra.mxu0 %v4664
        %4920 = vmatprep.subr.bf16.mxu0 %v4668
        %4921 = vmatpush1.bf16.msra.mxu0 %v4667
        %4922 = vmatprep.subr.bf16.mxu0 %v4671
        %4923 = vmatpush1.bf16.msra.mxu0 %v4670
        %4924 = vmatprep.subr.bf16.mxu0 %v4674
        %4925 = vmatpush1.bf16.msra.mxu0 %v4673
        %4926 = vmatprep.subr.bf16.mxu0 %v4677
        %4927 = vmatpush1.bf16.msra.mxu0 %v4676
        %4928 = vmatprep.subr.bf16.mxu0 %v4680
        %4929 = vmatpush1.bf16.msra.mxu0 %v4679
        %4930 = vmatprep.subr.bf16.mxu0 %v4683
        %4931 = vmatpush1.bf16.msra.mxu0 %v4682
        %4932 = vmatprep.subr.bf16.mxu0 %v4686
        %4933 = vmatpush1.bf16.msra.mxu0 %v4685
        %4934 = vmatprep.subr.bf16.mxu0 %v4689
        %4935 = vmatpush1.bf16.msra.mxu0 %v4688
        %4936 = vmatprep.subr.bf16.mxu0 %v4692
        %4937 = vmatpush1.bf16.msra.mxu0 %v4691
        %4938 = vmatprep.subr.bf16.mxu0 %v4695
        %4939 = vmatpush1.bf16.msra.mxu0 %v4694
        %4940 = vmatprep.subr.bf16.mxu0 %v4698
        %4941 = vmatpush1.bf16.msra.mxu0 %v4697
        %4942 = vmatprep.subr.bf16.mxu0 %v4701
        %4943 = vmatpush1.bf16.msra.mxu0 %v4700
        %4944 = vmatprep.mubr.bf16.mxu0 %v4130
        %4945 = vmatmul.mubr.bf16.gmra.mrb[0].mxu0 %v4129
        %v4946 = vpop.f32.mrb[0].mxu0
        %v4947 = vadd.f32 %v4834, %v4946
        %v4948 = vpop.f32.mrb[0].mxu0
        %v4949 = vadd.f32 %v4836, %v4948
        %v4950 = vpop.f32.mrb[0].mxu0
        %v4951 = vadd.f32 %v4838, %v4950
        %v4952 = vpop.f32.mrb[0].mxu0
        %v4953 = vadd.f32 %v4840, %v4952
        %4954 = vmatprep.mubr.bf16.mxu0 %v4134
        %4955 = vmatmul.mubr.bf16.gmra.mrb[0].mxu0 %v4133
        %v4956 = vpop.f32.mrb[0].mxu0
        %v4957 = vadd.f32 %v4844, %v4956
        %v4958 = vpop.f32.mrb[0].mxu0
        %v4959 = vadd.f32 %v4846, %v4958
        %v4960 = vpop.f32.mrb[0].mxu0
        %v4961 = vadd.f32 %v4848, %v4960
        %v4962 = vpop.f32.mrb[0].mxu0
        %v4963 = vadd.f32 %v4850, %v4962
        %4964 = vmatprep.mubr.bf16.mxu0 %v4138
        %4965 = vmatmul.mubr.bf16.gmra.mrb[0].mxu0 %v4137
        %v4966 = vpop.f32.mrb[0].mxu0
        %v4967 = vadd.f32 %v4854, %v4966
        %v4968 = vpop.f32.mrb[0].mxu0
        %v4969 = vadd.f32 %v4856, %v4968
        %v4970 = vpop.f32.mrb[0].mxu0
        %v4971 = vadd.f32 %v4858, %v4970
        %v4972 = vpop.f32.mrb[0].mxu0
        %v4973 = vadd.f32 %v4860, %v4972
        %4974 = vmatprep.mubr.bf16.mxu0 %v4142
        %4975 = vmatmul.mubr.bf16.gmra.mrb[0].mxu0 %v4141
        %v4976 = vpop.f32.mrb[0].mxu0
        %v4977 = vadd.f32 %v4864, %v4976
        %v4978 = vpop.f32.mrb[0].mxu0
        %v4979 = vadd.f32 %v4866, %v4978
        %v4980 = vpop.f32.mrb[0].mxu0
        %v4981 = vadd.f32 %v4868, %v4980
        %v4982 = vpop.f32.mrb[0].mxu0
        %v4983 = vadd.f32 %v4870, %v4982
        %4984 = vmatprep.mubr.bf16.mxu0 %v4146
        %4985 = vmatmul.mubr.bf16.gmra.mrb[0].mxu0 %v4145
        %v4986 = vpop.f32.mrb[0].mxu0
        %v4987 = vadd.f32 %v4874, %v4986
        %v4988 = vpop.f32.mrb[0].mxu0
        %v4989 = vadd.f32 %v4876, %v4988
        %v4990 = vpop.f32.mrb[0].mxu0
        %v4991 = vadd.f32 %v4878, %v4990
        %v4992 = vpop.f32.mrb[0].mxu0
        %v4993 = vadd.f32 %v4880, %v4992
        %4994 = vmatprep.mubr.bf16.mxu0 %v4150
        %4995 = vmatmul.mubr.bf16.gmra.mrb[0].mxu0 %v4149
        %v4996 = vpop.f32.mrb[0].mxu0
        %v4997 = vadd.f32 %v4884, %v4996
        %v4998 = vpop.f32.mrb[0].mxu0
        %v4999 = vadd.f32 %v4886, %v4998
        %v5000 = vpop.f32.mrb[0].mxu0
        %v5001 = vadd.f32 %v4888, %v5000
        %v5002 = vpop.f32.mrb[0].mxu0
        %v5003 = vadd.f32 %v4890, %v5002
        %5004 = vmatprep.mubr.bf16.mxu0 %v4154
        %5005 = vmatmul.mubr.bf16.gmra.mrb[0].mxu0 %v4153
        %v5006 = vpop.f32.mrb[0].mxu0
        %v5007 = vadd.f32 %v4894, %v5006
        %v5008 = vpop.f32.mrb[0].mxu0
        %v5009 = vadd.f32 %v4896, %v5008
        %v5010 = vpop.f32.mrb[0].mxu0
        %v5011 = vadd.f32 %v4898, %v5010
        %v5012 = vpop.f32.mrb[0].mxu0
        %v5013 = vadd.f32 %v4900, %v5012
        %5014 = vmatprep.mubr.bf16.mxu0 %v4158
        %5015 = vmatmul.mubr.bf16.gmra.mrb[0].mxu0 %v4157
        %v5016 = vpop.f32.mrb[0].mxu0
        %v5017 = vadd.f32 %v4904, %v5016
        %v5018 = vpop.f32.mrb[0].mxu0
        %v5019 = vadd.f32 %v4906, %v5018
        %v5020 = vpop.f32.mrb[0].mxu0
        %v5021 = vadd.f32 %v4908, %v5020
        %v5022 = vpop.f32.mrb[0].mxu0
        %v5023 = vadd.f32 %v4910, %v5022
        %5024 = vdwg.mxu0
        %5025 = vmatprep.subr.bf16.mxu0 0
        %5026 = vmatpush1.bf16.msra.mxu0 %v4609
        %5027 = vmatprep.subr.bf16.mxu0 0
        %5028 = vmatpush1.bf16.msra.mxu0 %v4612
        %5029 = vmatprep.subr.bf16.mxu0 0
        %5030 = vmatpush1.bf16.msra.mxu0 %v4615
        %5031 = vmatprep.subr.bf16.mxu0 0
        %5032 = vmatpush1.bf16.msra.mxu0 %v4618
        %5033 = vmatprep.subr.bf16.mxu0 0
        %5034 = vmatpush1.bf16.msra.mxu0 %v4621
        %5035 = vmatprep.subr.bf16.mxu0 0
        %5036 = vmatpush1.bf16.msra.mxu0 %v4624
        %5037 = vmatprep.subr.bf16.mxu0 0
        %5038 = vmatpush1.bf16.msra.mxu0 %v4627
        %5039 = vmatprep.subr.bf16.mxu0 0
        %5040 = vmatpush1.bf16.msra.mxu0 %v4630
        %5041 = vmatprep.subr.bf16.mxu0 0
        %5042 = vmatpush1.bf16.msra.mxu0 %v4633
        %5043 = vmatprep.subr.bf16.mxu0 0
        %5044 = vmatpush1.bf16.msra.mxu0 %v4636
        %5045 = vmatprep.subr.bf16.mxu0 0
        %5046 = vmatpush1.bf16.msra.mxu0 %v4639
        %5047 = vmatprep.subr.bf16.mxu0 0
        %5048 = vmatpush1.bf16.msra.mxu0 %v4642
        %5049 = vmatprep.subr.bf16.mxu0 0
        %5050 = vmatpush1.bf16.msra.mxu0 %v4645
        %5051 = vmatprep.subr.bf16.mxu0 0
        %5052 = vmatpush1.bf16.msra.mxu0 %v4648
        %5053 = vmatprep.subr.bf16.mxu0 0
        %5054 = vmatpush1.bf16.msra.mxu0 %v4651
        %5055 = vmatprep.subr.bf16.mxu0 0
        %5056 = vmatpush1.bf16.msra.mxu0 %v4654
        %5057 = vmatprep.mubr.bf16.mxu0 %v4128
        %5058 = vmatmul.mubr.bf16.gmra.mrb[0].mxu0 %v4127
        %v5059 = vpop.f32.mrb[0].mxu0
        %v5060 = vadd.f32 0.0, %v5059
        %v5061 = vpop.f32.mrb[0].mxu0
        %v5062 = vpop.f32.mrb[0].mxu0
        %v5063 = vadd.f32 0.0, %v5062
        %v5064 = vpop.f32.mrb[0].mxu0
        %5065 = vmatprep.mubr.bf16.mxu0 %v4132
        %5066 = vmatmul.mubr.bf16.gmra.mrb[0].mxu0 %v4131
        %v5067 = vpop.f32.mrb[0].mxu0
        %v5068 = vadd.f32 0.0, %v5067
        %v5069 = vpop.f32.mrb[0].mxu0
        %v5070 = vpop.f32.mrb[0].mxu0
        %v5071 = vadd.f32 0.0, %v5070
        %v5072 = vpop.f32.mrb[0].mxu0
        %5073 = vmatprep.mubr.bf16.mxu0 %v4136
        %5074 = vmatmul.mubr.bf16.gmra.mrb[0].mxu0 %v4135
        %v5075 = vpop.f32.mrb[0].mxu0
        %v5076 = vadd.f32 0.0, %v5075
        %v5077 = vpop.f32.mrb[0].mxu0
        %v5078 = vpop.f32.mrb[0].mxu0
        %v5079 = vadd.f32 0.0, %v5078
        %v5080 = vpop.f32.mrb[0].mxu0
        %5081 = vmatprep.mubr.bf16.mxu0 %v4140
        %5082 = vmatmul.mubr.bf16.gmra.mrb[0].mxu0 %v4139
        %v5083 = vpop.f32.mrb[0].mxu0
        %v5084 = vadd.f32 0.0, %v5083
        %v5085 = vpop.f32.mrb[0].mxu0
        %v5086 = vpop.f32.mrb[0].mxu0
        %v5087 = vadd.f32 0.0, %v5086
        %v5088 = vpop.f32.mrb[0].mxu0
        %5089 = vmatprep.mubr.bf16.mxu0 %v4144
        %5090 = vmatmul.mubr.bf16.gmra.mrb[0].mxu0 %v4143
        %v5091 = vpop.f32.mrb[0].mxu0
        %v5092 = vadd.f32 0.0, %v5091
        %v5093 = vpop.f32.mrb[0].mxu0
        %v5094 = vpop.f32.mrb[0].mxu0
        %v5095 = vadd.f32 0.0, %v5094
        %v5096 = vpop.f32.mrb[0].mxu0
        %5097 = vmatprep.mubr.bf16.mxu0 %v4148
        %5098 = vmatmul.mubr.bf16.gmra.mrb[0].mxu0 %v4147
        %v5099 = vpop.f32.mrb[0].mxu0
        %v5100 = vadd.f32 0.0, %v5099
        %v5101 = vpop.f32.mrb[0].mxu0
        %v5102 = vpop.f32.mrb[0].mxu0
        %v5103 = vadd.f32 0.0, %v5102
        %v5104 = vpop.f32.mrb[0].mxu0
        %5105 = vmatprep.mubr.bf16.mxu0 %v4152
        %5106 = vmatmul.mubr.bf16.gmra.mrb[0].mxu0 %v4151
        %v5107 = vpop.f32.mrb[0].mxu0
        %v5108 = vadd.f32 0.0, %v5107
        %v5109 = vpop.f32.mrb[0].mxu0
        %v5110 = vpop.f32.mrb[0].mxu0
        %v5111 = vadd.f32 0.0, %v5110
        %v5112 = vpop.f32.mrb[0].mxu0
        %5113 = vmatprep.mubr.bf16.mxu0 %v4156
        %5114 = vmatmul.mubr.bf16.gmra.mrb[0].mxu0 %v4155
        %v5115 = vpop.f32.mrb[0].mxu0
        %v5116 = vadd.f32 0.0, %v5115
        %v5117 = vpop.f32.mrb[0].mxu0
        %v5118 = vpop.f32.mrb[0].mxu0
        %v5119 = vadd.f32 0.0, %v5118
        %v5120 = vpop.f32.mrb[0].mxu0
        %5121 = vdwg.mxu0
        %5122 = vmatprep.subr.bf16.mxu0 0
        %5123 = vmatpush1.bf16.msra.mxu0 %v4657
        %5124 = vmatprep.subr.bf16.mxu0 0
        %5125 = vmatpush1.bf16.msra.mxu0 %v4660
        %5126 = vmatprep.subr.bf16.mxu0 0
        %5127 = vmatpush1.bf16.msra.mxu0 %v4663
        %5128 = vmatprep.subr.bf16.mxu0 0
        %5129 = vmatpush1.bf16.msra.mxu0 %v4666
        %5130 = vmatprep.subr.bf16.mxu0 0
        %5131 = vmatpush1.bf16.msra.mxu0 %v4669
        %5132 = vmatprep.subr.bf16.mxu0 0
        %5133 = vmatpush1.bf16.msra.mxu0 %v4672
        %5134 = vmatprep.subr.bf16.mxu0 0
        %5135 = vmatpush1.bf16.msra.mxu0 %v4675
        %5136 = vmatprep.subr.bf16.mxu0 0
        %5137 = vmatpush1.bf16.msra.mxu0 %v4678
        %5138 = vmatprep.subr.bf16.mxu0 0
        %5139 = vmatpush1.bf16.msra.mxu0 %v4681
        %5140 = vmatprep.subr.bf16.mxu0 0
        %5141 = vmatpush1.bf16.msra.mxu0 %v4684
        %5142 = vmatprep.subr.bf16.mxu0 0
        %5143 = vmatpush1.bf16.msra.mxu0 %v4687
        %5144 = vmatprep.subr.bf16.mxu0 0
        %5145 = vmatpush1.bf16.msra.mxu0 %v4690
        %5146 = vmatprep.subr.bf16.mxu0 0
        %5147 = vmatpush1.bf16.msra.mxu0 %v4693
        %5148 = vmatprep.subr.bf16.mxu0 0
        %5149 = vmatpush1.bf16.msra.mxu0 %v4696
        %5150 = vmatprep.subr.bf16.mxu0 0
        %5151 = vmatpush1.bf16.msra.mxu0 %v4699
        %5152 = vmatprep.subr.bf16.mxu0 0
        %5153 = vmatpush1.bf16.msra.mxu0 %v4702
        %5154 = vmatprep.mubr.bf16.mxu0 %v4130
        %5155 = vmatmul.mubr.bf16.gmra.mrb[0].mxu0 %v4129
        %v5156 = vpop.f32.mrb[0].mxu0
        %v5157 = vadd.f32 %v5060, %v5156
        %v5158 = vpop.f32.mrb[0].mxu0
        %v5159 = vpop.f32.mrb[0].mxu0
        %v5160 = vadd.f32 %v5063, %v5159
        %v5161 = vpop.f32.mrb[0].mxu0
        %5162 = vmatprep.mubr.bf16.mxu0 %v4134
        %5163 = vmatmul.mubr.bf16.gmra.mrb[0].mxu0 %v4133
        %v5164 = vpop.f32.mrb[0].mxu0
        %v5165 = vadd.f32 %v5068, %v5164
        %v5166 = vpop.f32.mrb[0].mxu0
        %v5167 = vpop.f32.mrb[0].mxu0
        %v5168 = vadd.f32 %v5071, %v5167
        %v5169 = vpop.f32.mrb[0].mxu0
        %5170 = vmatprep.mubr.bf16.mxu0 %v4138
        %5171 = vmatmul.mubr.bf16.gmra.mrb[0].mxu0 %v4137
        %v5172 = vpop.f32.mrb[0].mxu0
        %v5173 = vadd.f32 %v5076, %v5172
        %v5174 = vpop.f32.mrb[0].mxu0
        %v5175 = vpop.f32.mrb[0].mxu0
        %v5176 = vadd.f32 %v5079, %v5175
        %v5177 = vpop.f32.mrb[0].mxu0
        %5178 = vmatprep.mubr.bf16.mxu0 %v4142
        %5179 = vmatmul.mubr.bf16.gmra.mrb[0].mxu0 %v4141
        %v5180 = vpop.f32.mrb[0].mxu0
        %v5181 = vadd.f32 %v5084, %v5180
        %v5182 = vpop.f32.mrb[0].mxu0
        %v5183 = vpop.f32.mrb[0].mxu0
        %v5184 = vadd.f32 %v5087, %v5183
        %v5185 = vpop.f32.mrb[0].mxu0
        %5186 = vmatprep.mubr.bf16.mxu0 %v4146
        %5187 = vmatmul.mubr.bf16.gmra.mrb[0].mxu0 %v4145
        %v5188 = vpop.f32.mrb[0].mxu0
        %v5189 = vadd.f32 %v5092, %v5188
        %v5190 = vpop.f32.mrb[0].mxu0
        %v5191 = vpop.f32.mrb[0].mxu0
        %v5192 = vadd.f32 %v5095, %v5191
        %v5193 = vpop.f32.mrb[0].mxu0
        %5194 = vmatprep.mubr.bf16.mxu0 %v4150
        %5195 = vmatmul.mubr.bf16.gmra.mrb[0].mxu0 %v4149
        %v5196 = vpop.f32.mrb[0].mxu0
        %v5197 = vadd.f32 %v5100, %v5196
        %v5198 = vpop.f32.mrb[0].mxu0
        %v5199 = vpop.f32.mrb[0].mxu0
        %v5200 = vadd.f32 %v5103, %v5199
        %v5201 = vpop.f32.mrb[0].mxu0
        %5202 = vmatprep.mubr.bf16.mxu0 %v4154
        %5203 = vmatmul.mubr.bf16.gmra.mrb[0].mxu0 %v4153
        %v5204 = vpop.f32.mrb[0].mxu0
        %v5205 = vadd.f32 %v5108, %v5204
        %v5206 = vpop.f32.mrb[0].mxu0
        %v5207 = vpop.f32.mrb[0].mxu0
        %v5208 = vadd.f32 %v5111, %v5207
        %v5209 = vpop.f32.mrb[0].mxu0
        %5210 = vmatprep.mubr.bf16.mxu0 %v4158
        %5211 = vmatmul.mubr.bf16.gmra.mrb[0].mxu0 %v4157
        %v5212 = vpop.f32.mrb[0].mxu0
        %v5213 = vadd.f32 %v5116, %v5212
        %v5214 = vpop.f32.mrb[0].mxu0
        %v5215 = vpop.f32.mrb[0].mxu0
        %v5216 = vadd.f32 %v5119, %v5215
        %v5217 = vpop.f32.mrb[0].mxu0
        %5218 = vdwg.mxu0
        %v5347 = vunpack.c.l.b16 %v3693
        %v5348 = vunpack.c.h.b16 %v3693
        %v5349 = vunpack.c.l.b16 %v3694
        %v5350 = vunpack.c.l.b16 %v3695
        %v5351 = vunpack.c.h.b16 %v3695
        %v5352 = vunpack.c.l.b16 %v3696
        %v5353 = vunpack.c.l.b16 %v3697
        %v5354 = vunpack.c.h.b16 %v3697
        %v5355 = vunpack.c.l.b16 %v3698
        %v5356 = vunpack.c.l.b16 %v3699
        %v5357 = vunpack.c.h.b16 %v3699
        %v5358 = vunpack.c.l.b16 %v3700
        %v5359 = vunpack.c.l.b16 %v3701
        %v5360 = vunpack.c.h.b16 %v3701
        %v5361 = vunpack.c.l.b16 %v3702
        %v5362 = vunpack.c.l.b16 %v3703
        %v5363 = vunpack.c.h.b16 %v3703
        %v5364 = vunpack.c.l.b16 %v3704
        %v5365 = vunpack.c.l.b16 %v3705
        %v5366 = vunpack.c.h.b16 %v3705
        %v5367 = vunpack.c.l.b16 %v3706
        %v5368 = vunpack.c.l.b16 %v3707
        %v5369 = vunpack.c.h.b16 %v3707
        %v5370 = vunpack.c.l.b16 %v3708
        %v5371 = vunpack.c.l.b16 %v3709
        %v5372 = vunpack.c.h.b16 %v3709
        %v5373 = vunpack.c.l.b16 %v3710
        %v5374 = vunpack.c.l.b16 %v3711
        %v5375 = vunpack.c.h.b16 %v3711
        %v5376 = vunpack.c.l.b16 %v3712
        %v5377 = vunpack.c.l.b16 %v3713
        %v5378 = vunpack.c.h.b16 %v3713
        %v5379 = vunpack.c.l.b16 %v3714
        %v5380 = vunpack.c.l.b16 %v3715
        %v5381 = vunpack.c.h.b16 %v3715
        %v5382 = vunpack.c.l.b16 %v3716
        %v5383 = vunpack.c.l.b16 %v3717
        %v5384 = vunpack.c.h.b16 %v3717
        %v5385 = vunpack.c.l.b16 %v3718
        %v5386 = vunpack.c.l.b16 %v3719
        %v5387 = vunpack.c.h.b16 %v3719
        %v5388 = vunpack.c.l.b16 %v3720
        %v5389 = vunpack.c.l.b16 %v3721
        %v5390 = vunpack.c.h.b16 %v3721
        %v5391 = vunpack.c.l.b16 %v3722
        %v5392 = vunpack.c.l.b16 %v3723
        %v5393 = vunpack.c.h.b16 %v3723
        %v5394 = vunpack.c.l.b16 %v3724
        %v5395 = vunpack.c.l.b16 %v3725
        %v5396 = vunpack.c.h.b16 %v3725
        %v5397 = vunpack.c.l.b16 %v3726
        %v5398 = vunpack.c.l.b16 %v3727
        %v5399 = vunpack.c.h.b16 %v3727
        %v5400 = vunpack.c.l.b16 %v3728
        %v5401 = vunpack.c.l.b16 %v3729
        %v5402 = vunpack.c.h.b16 %v3729
        %v5403 = vunpack.c.l.b16 %v3730
        %v5404 = vunpack.c.l.b16 %v3731
        %v5405 = vunpack.c.h.b16 %v3731
        %v5406 = vunpack.c.l.b16 %v3732
        %v5407 = vunpack.c.l.b16 %v3733
        %v5408 = vunpack.c.h.b16 %v3733
        %v5409 = vunpack.c.l.b16 %v3734
        %v5410 = vunpack.c.l.b16 %v3735
        %v5411 = vunpack.c.h.b16 %v3735
        %v5412 = vunpack.c.l.b16 %v3736
        %v5413 = vunpack.c.l.b16 %v3737
        %v5414 = vunpack.c.h.b16 %v3737
        %v5415 = vunpack.c.l.b16 %v3738
        %v5416 = vunpack.c.l.b16 %v3739
        %v5417 = vunpack.c.h.b16 %v3739
        %v5418 = vunpack.c.l.b16 %v3740
        %v5419 = vunpack.c.l.b16 %v3741
        %v5420 = vunpack.c.h.b16 %v3741
        %v5421 = vunpack.c.l.b16 %v3742
        %v5422 = vunpack.c.l.b16 %v3743
        %v5423 = vunpack.c.h.b16 %v3743
        %v5424 = vunpack.c.l.b16 %v3744
        %v5425 = vunpack.c.l.b16 %v3745
        %v5426 = vunpack.c.h.b16 %v3745
        %v5427 = vunpack.c.l.b16 %v3746
        %v5428 = vunpack.c.l.b16 %v3747
        %v5429 = vunpack.c.h.b16 %v3747
        %v5430 = vunpack.c.l.b16 %v3748
        %v5431 = vunpack.c.l.b16 %v3749
        %v5432 = vunpack.c.h.b16 %v3749
        %v5433 = vunpack.c.l.b16 %v3750
        %v5434 = vunpack.c.l.b16 %v3751
        %v5435 = vunpack.c.h.b16 %v3751
        %v5436 = vunpack.c.l.b16 %v3752
        %v5437 = vunpack.c.l.b16 %v3753
        %v5438 = vunpack.c.h.b16 %v3753
        %v5439 = vunpack.c.l.b16 %v3754
        %v5440 = vunpack.c.l.b16 %v3755
        %v5441 = vunpack.c.h.b16 %v3755
        %v5442 = vunpack.c.l.b16 %v3756
        %v5443 = vunpack.c.l.b16 %v3757
        %v5444 = vunpack.c.h.b16 %v3757
        %v5445 = vunpack.c.l.b16 %v3758
        %v5446 = vunpack.c.l.b16 %v3759
        %v5447 = vunpack.c.h.b16 %v3759
        %v5448 = vunpack.c.l.b16 %v3760
        %v5449 = vunpack.c.l.b16 %v3761
        %v5450 = vunpack.c.h.b16 %v3761
        %v5451 = vunpack.c.l.b16 %v3762
        %v5452 = vunpack.c.l.b16 %v3763
        %v5453 = vunpack.c.h.b16 %v3763
        %v5454 = vunpack.c.l.b16 %v3764
        %v5455 = vunpack.c.l.b16 %v3765
        %v5456 = vunpack.c.h.b16 %v3765
        %v5457 = vunpack.c.l.b16 %v3766
        %v5458 = vunpack.c.l.b16 %v3767
        %v5459 = vunpack.c.h.b16 %v3767
        %v5460 = vunpack.c.l.b16 %v3768
        %v5461 = vunpack.c.l.b16 %v3769
        %v5462 = vunpack.c.h.b16 %v3769
        %v5463 = vunpack.c.l.b16 %v3770
        %v5464 = vunpack.c.l.b16 %v3771
        %v5465 = vunpack.c.h.b16 %v3771
        %v5466 = vunpack.c.l.b16 %v3772
        %v5467 = vunpack.c.l.b16 %v3773
        %v5468 = vunpack.c.h.b16 %v3773
        %v5469 = vunpack.c.l.b16 %v3774
        %v5470 = vunpack.c.l.b16 %v3775
        %v5471 = vunpack.c.h.b16 %v3775
        %v5472 = vunpack.c.l.b16 %v3776
        %v5473 = vunpack.c.l.b16 %v3777
        %v5474 = vunpack.c.h.b16 %v3777
        %v5475 = vunpack.c.l.b16 %v3778
        %v5476 = vunpack.c.l.b16 %v3779
        %v5477 = vunpack.c.h.b16 %v3779
        %v5478 = vunpack.c.l.b16 %v3780
        %v5479 = vunpack.c.l.b16 %v3781
        %v5480 = vunpack.c.h.b16 %v3781
        %v5481 = vunpack.c.l.b16 %v3782
        %v5482 = vunpack.c.l.b16 %v3783
        %v5483 = vunpack.c.h.b16 %v3783
        %v5484 = vunpack.c.l.b16 %v3784
        %v5485 = vunpack.c.l.b16 %v3785
        %v5486 = vunpack.c.h.b16 %v3785
        %v5487 = vunpack.c.l.b16 %v3786
        %v5488 = vunpack.c.l.b16 %v3787
        %v5489 = vunpack.c.h.b16 %v3787
        %v5490 = vunpack.c.l.b16 %v3788
        %v5491 = vunpack.c.l.b16 %v3789
        %v5492 = vunpack.c.h.b16 %v3789
        %v5493 = vunpack.c.l.b16 %v3790
        %v5494 = vunpack.c.l.b16 %v3791
        %v5495 = vunpack.c.h.b16 %v3791
        %v5496 = vunpack.c.l.b16 %v3792
        %v5497 = vunpack.c.l.b16 %v3793
        %v5498 = vunpack.c.h.b16 %v3793
        %v5499 = vunpack.c.l.b16 %v3794
        %v5500 = vunpack.c.l.b16 %v3795
        %v5501 = vunpack.c.h.b16 %v3795
        %v5502 = vunpack.c.l.b16 %v3796
        %v5503 = vunpack.c.l.b16 %v3797
        %v5504 = vunpack.c.h.b16 %v3797
        %v5505 = vunpack.c.l.b16 %v3798
        %v5506 = vunpack.c.l.b16 %v3799
        %v5507 = vunpack.c.h.b16 %v3799
        %v5508 = vunpack.c.l.b16 %v3800
        %v5509 = vunpack.c.l.b16 %v3801
        %v5510 = vunpack.c.h.b16 %v3801
        %v5511 = vunpack.c.l.b16 %v3802
        %v5512 = vunpack.c.l.b16 %v3803
        %v5513 = vunpack.c.h.b16 %v3803
        %v5514 = vunpack.c.l.b16 %v3804
        %v5515 = vunpack.c.l.b16 %v3805
        %v5516 = vunpack.c.h.b16 %v3805
        %v5517 = vunpack.c.l.b16 %v3806
        %v5518 = vunpack.c.l.b16 %v3807
        %v5519 = vunpack.c.h.b16 %v3807
        %v5520 = vunpack.c.l.b16 %v3808
        %v5521 = vunpack.c.l.b16 %v3809
        %v5522 = vunpack.c.h.b16 %v3809
        %v5523 = vunpack.c.l.b16 %v3810
        %v5524 = vunpack.c.l.b16 %v3811
        %v5525 = vunpack.c.h.b16 %v3811
        %v5526 = vunpack.c.l.b16 %v3812
        %v5527 = vunpack.c.l.b16 %v3813
        %v5528 = vunpack.c.h.b16 %v3813
        %v5529 = vunpack.c.l.b16 %v3814
        %v5530 = vunpack.c.l.b16 %v3815
        %v5531 = vunpack.c.h.b16 %v3815
        %v5532 = vunpack.c.l.b16 %v3816
        %v5533 = vunpack.c.l.b16 %v3817
        %v5534 = vunpack.c.h.b16 %v3817
        %v5535 = vunpack.c.l.b16 %v3818
        %v5536 = vunpack.c.l.b16 %v3819
        %v5537 = vunpack.c.h.b16 %v3819
        %v5538 = vunpack.c.l.b16 %v3820
        %v5539 = vpack.c.b16 %v5350, %v5347
        %v5540 = vpack.c.b16 %v5351, %v5348
        %v5541 = vpack.c.b16 %v5352, %v5349
        %v5542 = vpack.c.b16 %v5356, %v5353
        %v5543 = vpack.c.b16 %v5357, %v5354
        %v5544 = vpack.c.b16 %v5358, %v5355
        %v5545 = vpack.c.b16 %v5362, %v5359
        %v5546 = vpack.c.b16 %v5363, %v5360
        %v5547 = vpack.c.b16 %v5364, %v5361
        %v5548 = vpack.c.b16 %v5368, %v5365
        %v5549 = vpack.c.b16 %v5369, %v5366
        %v5550 = vpack.c.b16 %v5370, %v5367
        %v5551 = vpack.c.b16 %v5374, %v5371
        %v5552 = vpack.c.b16 %v5375, %v5372
        %v5553 = vpack.c.b16 %v5376, %v5373
        %v5554 = vpack.c.b16 %v5380, %v5377
        %v5555 = vpack.c.b16 %v5381, %v5378
        %v5556 = vpack.c.b16 %v5382, %v5379
        %v5557 = vpack.c.b16 %v5386, %v5383
        %v5558 = vpack.c.b16 %v5387, %v5384
        %v5559 = vpack.c.b16 %v5388, %v5385
        %v5560 = vpack.c.b16 %v5392, %v5389
        %v5561 = vpack.c.b16 %v5393, %v5390
        %v5562 = vpack.c.b16 %v5394, %v5391
        %v5563 = vpack.c.b16 %v5398, %v5395
        %v5564 = vpack.c.b16 %v5399, %v5396
        %v5565 = vpack.c.b16 %v5400, %v5397
        %v5566 = vpack.c.b16 %v5404, %v5401
        %v5567 = vpack.c.b16 %v5405, %v5402
        %v5568 = vpack.c.b16 %v5406, %v5403
        %v5569 = vpack.c.b16 %v5410, %v5407
        %v5570 = vpack.c.b16 %v5411, %v5408
        %v5571 = vpack.c.b16 %v5412, %v5409
        %v5572 = vpack.c.b16 %v5416, %v5413
        %v5573 = vpack.c.b16 %v5417, %v5414
        %v5574 = vpack.c.b16 %v5418, %v5415
        %v5575 = vpack.c.b16 %v5422, %v5419
        %v5576 = vpack.c.b16 %v5423, %v5420
        %v5577 = vpack.c.b16 %v5424, %v5421
        %v5578 = vpack.c.b16 %v5428, %v5425
        %v5579 = vpack.c.b16 %v5429, %v5426
        %v5580 = vpack.c.b16 %v5430, %v5427
        %v5581 = vpack.c.b16 %v5434, %v5431
        %v5582 = vpack.c.b16 %v5435, %v5432
        %v5583 = vpack.c.b16 %v5436, %v5433
        %v5584 = vpack.c.b16 %v5440, %v5437
        %v5585 = vpack.c.b16 %v5441, %v5438
        %v5586 = vpack.c.b16 %v5442, %v5439
        %v5587 = vpack.c.b16 %v5446, %v5443
        %v5588 = vpack.c.b16 %v5447, %v5444
        %v5589 = vpack.c.b16 %v5448, %v5445
        %v5590 = vpack.c.b16 %v5452, %v5449
        %v5591 = vpack.c.b16 %v5453, %v5450
        %v5592 = vpack.c.b16 %v5454, %v5451
        %v5593 = vpack.c.b16 %v5458, %v5455
        %v5594 = vpack.c.b16 %v5459, %v5456
        %v5595 = vpack.c.b16 %v5460, %v5457
        %v5596 = vpack.c.b16 %v5464, %v5461
        %v5597 = vpack.c.b16 %v5465, %v5462
        %v5598 = vpack.c.b16 %v5466, %v5463
        %v5599 = vpack.c.b16 %v5470, %v5467
        %v5600 = vpack.c.b16 %v5471, %v5468
        %v5601 = vpack.c.b16 %v5472, %v5469
        %v5602 = vpack.c.b16 %v5476, %v5473
        %v5603 = vpack.c.b16 %v5477, %v5474
        %v5604 = vpack.c.b16 %v5478, %v5475
        %v5605 = vpack.c.b16 %v5482, %v5479
        %v5606 = vpack.c.b16 %v5483, %v5480
        %v5607 = vpack.c.b16 %v5484, %v5481
        %v5608 = vpack.c.b16 %v5488, %v5485
        %v5609 = vpack.c.b16 %v5489, %v5486
        %v5610 = vpack.c.b16 %v5490, %v5487
        %v5611 = vpack.c.b16 %v5494, %v5491
        %v5612 = vpack.c.b16 %v5495, %v5492
        %v5613 = vpack.c.b16 %v5496, %v5493
        %v5614 = vpack.c.b16 %v5500, %v5497
        %v5615 = vpack.c.b16 %v5501, %v5498
        %v5616 = vpack.c.b16 %v5502, %v5499
        %v5617 = vpack.c.b16 %v5506, %v5503
        %v5618 = vpack.c.b16 %v5507, %v5504
        %v5619 = vpack.c.b16 %v5508, %v5505
        %v5620 = vpack.c.b16 %v5512, %v5509
        %v5621 = vpack.c.b16 %v5513, %v5510
        %v5622 = vpack.c.b16 %v5514, %v5511
        %v5623 = vpack.c.b16 %v5518, %v5515
        %v5624 = vpack.c.b16 %v5519, %v5516
        %v5625 = vpack.c.b16 %v5520, %v5517
        %v5626 = vpack.c.b16 %v5524, %v5521
        %v5627 = vpack.c.b16 %v5525, %v5522
        %v5628 = vpack.c.b16 %v5526, %v5523
        %v5629 = vpack.c.b16 %v5530, %v5527
        %v5630 = vpack.c.b16 %v5531, %v5528
        %v5631 = vpack.c.b16 %v5532, %v5529
        %v5632 = vpack.c.b16 %v5536, %v5533
        %v5633 = vpack.c.b16 %v5537, %v5534
        %v5634 = vpack.c.b16 %v5538, %v5535
        %5731 = vmatprep.subr.bf16.mxu0 %v5540
        %5732 = vmatpush1.bf16.msra.mxu0 %v5539
        %5733 = vmatprep.subr.bf16.mxu0 %v5543
        %5734 = vmatpush1.bf16.msra.mxu0 %v5542
        %5735 = vmatprep.subr.bf16.mxu0 %v5546
        %5736 = vmatpush1.bf16.msra.mxu0 %v5545
        %5737 = vmatprep.subr.bf16.mxu0 %v5549
        %5738 = vmatpush1.bf16.msra.mxu0 %v5548
        %5739 = vmatprep.subr.bf16.mxu0 %v5552
        %5740 = vmatpush1.bf16.msra.mxu0 %v5551
        %5741 = vmatprep.subr.bf16.mxu0 %v5555
        %5742 = vmatpush1.bf16.msra.mxu0 %v5554
        %5743 = vmatprep.subr.bf16.mxu0 %v5558
        %5744 = vmatpush1.bf16.msra.mxu0 %v5557
        %5745 = vmatprep.subr.bf16.mxu0 %v5561
        %5746 = vmatpush1.bf16.msra.mxu0 %v5560
        %5747 = vmatprep.subr.bf16.mxu0 %v5564
        %5748 = vmatpush1.bf16.msra.mxu0 %v5563
        %5749 = vmatprep.subr.bf16.mxu0 %v5567
        %5750 = vmatpush1.bf16.msra.mxu0 %v5566
        %5751 = vmatprep.subr.bf16.mxu0 %v5570
        %5752 = vmatpush1.bf16.msra.mxu0 %v5569
        %5753 = vmatprep.subr.bf16.mxu0 %v5573
        %5754 = vmatpush1.bf16.msra.mxu0 %v5572
        %5755 = vmatprep.subr.bf16.mxu0 %v5576
        %5756 = vmatpush1.bf16.msra.mxu0 %v5575
        %5757 = vmatprep.subr.bf16.mxu0 %v5579
        %5758 = vmatpush1.bf16.msra.mxu0 %v5578
        %5759 = vmatprep.subr.bf16.mxu0 %v5582
        %5760 = vmatpush1.bf16.msra.mxu0 %v5581
        %5761 = vmatprep.subr.bf16.mxu0 %v5585
        %5762 = vmatpush1.bf16.msra.mxu0 %v5584
        %5763 = vmatprep.mubr.bf16.mxu0 %v3662
        %5764 = vmatmul.mubr.bf16.gmra.mrb[0].mxu0 %v3661
        %v5765 = vpop.f32.mrb[0].mxu0
        %v5766 = vadd.f32 %v4947, %v5765
        %v5767 = vpop.f32.mrb[0].mxu0
        %v5768 = vadd.f32 %v4949, %v5767
        %v5769 = vpop.f32.mrb[0].mxu0
        %v5770 = vadd.f32 %v4951, %v5769
        %v5771 = vpop.f32.mrb[0].mxu0
        %v5772 = vadd.f32 %v4953, %v5771
        %5773 = vmatprep.mubr.bf16.mxu0 %v3666
        %5774 = vmatmul.mubr.bf16.gmra.mrb[0].mxu0 %v3665
        %v5775 = vpop.f32.mrb[0].mxu0
        %v5776 = vadd.f32 %v4957, %v5775
        %v5777 = vpop.f32.mrb[0].mxu0
        %v5778 = vadd.f32 %v4959, %v5777
        %v5779 = vpop.f32.mrb[0].mxu0
        %v5780 = vadd.f32 %v4961, %v5779
        %v5781 = vpop.f32.mrb[0].mxu0
        %v5782 = vadd.f32 %v4963, %v5781
        %5783 = vmatprep.mubr.bf16.mxu0 %v3670
        %5784 = vmatmul.mubr.bf16.gmra.mrb[0].mxu0 %v3669
        %v5785 = vpop.f32.mrb[0].mxu0
        %v5786 = vadd.f32 %v4967, %v5785
        %v5787 = vpop.f32.mrb[0].mxu0
        %v5788 = vadd.f32 %v4969, %v5787
        %v5789 = vpop.f32.mrb[0].mxu0
        %v5790 = vadd.f32 %v4971, %v5789
        %v5791 = vpop.f32.mrb[0].mxu0
        %v5792 = vadd.f32 %v4973, %v5791
        %5793 = vmatprep.mubr.bf16.mxu0 %v3674
        %5794 = vmatmul.mubr.bf16.gmra.mrb[0].mxu0 %v3673
        %v5795 = vpop.f32.mrb[0].mxu0
        %v5796 = vadd.f32 %v4977, %v5795
        %v5797 = vpop.f32.mrb[0].mxu0
        %v5798 = vadd.f32 %v4979, %v5797
        %v5799 = vpop.f32.mrb[0].mxu0
        %v5800 = vadd.f32 %v4981, %v5799
        %v5801 = vpop.f32.mrb[0].mxu0
        %v5802 = vadd.f32 %v4983, %v5801
        %5803 = vmatprep.mubr.bf16.mxu0 %v3678
        %5804 = vmatmul.mubr.bf16.gmra.mrb[0].mxu0 %v3677
        %v5805 = vpop.f32.mrb[0].mxu0
        %v5806 = vadd.f32 %v4987, %v5805
        %v5807 = vpop.f32.mrb[0].mxu0
        %v5808 = vadd.f32 %v4989, %v5807
        %v5809 = vpop.f32.mrb[0].mxu0
        %v5810 = vadd.f32 %v4991, %v5809
        %v5811 = vpop.f32.mrb[0].mxu0
        %v5812 = vadd.f32 %v4993, %v5811
        %5813 = vmatprep.mubr.bf16.mxu0 %v3682
        %5814 = vmatmul.mubr.bf16.gmra.mrb[0].mxu0 %v3681
        %v5815 = vpop.f32.mrb[0].mxu0
        %v5816 = vadd.f32 %v4997, %v5815
        %v5817 = vpop.f32.mrb[0].mxu0
        %v5818 = vadd.f32 %v4999, %v5817
        %v5819 = vpop.f32.mrb[0].mxu0
        %v5820 = vadd.f32 %v5001, %v5819
        %v5821 = vpop.f32.mrb[0].mxu0
        %v5822 = vadd.f32 %v5003, %v5821
        %5823 = vmatprep.mubr.bf16.mxu0 %v3686
        %5824 = vmatmul.mubr.bf16.gmra.mrb[0].mxu0 %v3685
        %v5825 = vpop.f32.mrb[0].mxu0
        %v5826 = vadd.f32 %v5007, %v5825
        %v5827 = vpop.f32.mrb[0].mxu0
        %v5828 = vadd.f32 %v5009, %v5827
        %v5829 = vpop.f32.mrb[0].mxu0
        %v5830 = vadd.f32 %v5011, %v5829
        %v5831 = vpop.f32.mrb[0].mxu0
        %v5832 = vadd.f32 %v5013, %v5831
        %5833 = vmatprep.mubr.bf16.mxu0 %v3690
        %5834 = vmatmul.mubr.bf16.gmra.mrb[0].mxu0 %v3689
        %v5835 = vpop.f32.mrb[0].mxu0
        %v5836 = vadd.f32 %v5017, %v5835
        %v5837 = vpop.f32.mrb[0].mxu0
        %v5838 = vadd.f32 %v5019, %v5837
        %v5839 = vpop.f32.mrb[0].mxu0
        %v5840 = vadd.f32 %v5021, %v5839
        %v5841 = vpop.f32.mrb[0].mxu0
        %v5842 = vadd.f32 %v5023, %v5841
        %5843 = vdwg.mxu0
        %5844 = vmatprep.subr.bf16.mxu0 %v5588
        %5845 = vmatpush1.bf16.msra.mxu0 %v5587
        %5846 = vmatprep.subr.bf16.mxu0 %v5591
        %5847 = vmatpush1.bf16.msra.mxu0 %v5590
        %5848 = vmatprep.subr.bf16.mxu0 %v5594
        %5849 = vmatpush1.bf16.msra.mxu0 %v5593
        %5850 = vmatprep.subr.bf16.mxu0 %v5597
        %5851 = vmatpush1.bf16.msra.mxu0 %v5596
        %5852 = vmatprep.subr.bf16.mxu0 %v5600
        %5853 = vmatpush1.bf16.msra.mxu0 %v5599
        %5854 = vmatprep.subr.bf16.mxu0 %v5603
        %5855 = vmatpush1.bf16.msra.mxu0 %v5602
        %5856 = vmatprep.subr.bf16.mxu0 %v5606
        %5857 = vmatpush1.bf16.msra.mxu0 %v5605
        %5858 = vmatprep.subr.bf16.mxu0 %v5609
        %5859 = vmatpush1.bf16.msra.mxu0 %v5608
        %5860 = vmatprep.subr.bf16.mxu0 %v5612
        %5861 = vmatpush1.bf16.msra.mxu0 %v5611
        %5862 = vmatprep.subr.bf16.mxu0 %v5615
        %5863 = vmatpush1.bf16.msra.mxu0 %v5614
        %5864 = vmatprep.subr.bf16.mxu0 %v5618
        %5865 = vmatpush1.bf16.msra.mxu0 %v5617
        %5866 = vmatprep.subr.bf16.mxu0 %v5621
        %5867 = vmatpush1.bf16.msra.mxu0 %v5620
        %5868 = vmatprep.subr.bf16.mxu0 %v5624
        %5869 = vmatpush1.bf16.msra.mxu0 %v5623
        %5870 = vmatprep.subr.bf16.mxu0 %v5627
        %5871 = vmatpush1.bf16.msra.mxu0 %v5626
        %5872 = vmatprep.subr.bf16.mxu0 %v5630
        %5873 = vmatpush1.bf16.msra.mxu0 %v5629
        %5874 = vmatprep.subr.bf16.mxu0 %v5633
        %5875 = vmatpush1.bf16.msra.mxu0 %v5632
        %5876 = vmatprep.mubr.bf16.mxu0 %v3664
        %5877 = vmatmul.mubr.bf16.gmra.mrb[0].mxu0 %v3663
        %v5878 = vpop.f32.mrb[0].mxu0
        %v5879 = vadd.f32 %v5766, %v5878
        %v5880 = vpop.f32.mrb[0].mxu0
        %v5881 = vadd.f32 %v5768, %v5880
        %v5882 = vpop.f32.mrb[0].mxu0
        %v5883 = vadd.f32 %v5770, %v5882
        %v5884 = vpop.f32.mrb[0].mxu0
        %v5885 = vadd.f32 %v5772, %v5884
        %5886 = vmatprep.mubr.bf16.mxu0 %v3668
        %5887 = vmatmul.mubr.bf16.gmra.mrb[0].mxu0 %v3667
        %v5888 = vpop.f32.mrb[0].mxu0
        %v5889 = vadd.f32 %v5776, %v5888
        %v5890 = vpop.f32.mrb[0].mxu0
        %v5891 = vadd.f32 %v5778, %v5890
        %v5892 = vpop.f32.mrb[0].mxu0
        %v5893 = vadd.f32 %v5780, %v5892
        %v5894 = vpop.f32.mrb[0].mxu0
        %v5895 = vadd.f32 %v5782, %v5894
        %5896 = vmatprep.mubr.bf16.mxu0 %v3672
        %5897 = vmatmul.mubr.bf16.gmra.mrb[0].mxu0 %v3671
        %v5898 = vpop.f32.mrb[0].mxu0
        %v5899 = vadd.f32 %v5786, %v5898
        %v5900 = vpop.f32.mrb[0].mxu0
        %v5901 = vadd.f32 %v5788, %v5900
        %v5902 = vpop.f32.mrb[0].mxu0
        %v5903 = vadd.f32 %v5790, %v5902
        %v5904 = vpop.f32.mrb[0].mxu0
        %v5905 = vadd.f32 %v5792, %v5904
        %5906 = vmatprep.mubr.bf16.mxu0 %v3676
        %5907 = vmatmul.mubr.bf16.gmra.mrb[0].mxu0 %v3675
        %v5908 = vpop.f32.mrb[0].mxu0
        %v5909 = vadd.f32 %v5796, %v5908
        %v5910 = vpop.f32.mrb[0].mxu0
        %v5911 = vadd.f32 %v5798, %v5910
        %v5912 = vpop.f32.mrb[0].mxu0
        %v5913 = vadd.f32 %v5800, %v5912
        %v5914 = vpop.f32.mrb[0].mxu0
        %v5915 = vadd.f32 %v5802, %v5914
        %5916 = vmatprep.mubr.bf16.mxu0 %v3680
        %5917 = vmatmul.mubr.bf16.gmra.mrb[0].mxu0 %v3679
        %v5918 = vpop.f32.mrb[0].mxu0
        %v5919 = vadd.f32 %v5806, %v5918
        %v5920 = vpop.f32.mrb[0].mxu0
        %v5921 = vadd.f32 %v5808, %v5920
        %v5922 = vpop.f32.mrb[0].mxu0
        %v5923 = vadd.f32 %v5810, %v5922
        %v5924 = vpop.f32.mrb[0].mxu0
        %v5925 = vadd.f32 %v5812, %v5924
        %5926 = vmatprep.mubr.bf16.mxu0 %v3684
        %5927 = vmatmul.mubr.bf16.gmra.mrb[0].mxu0 %v3683
        %v5928 = vpop.f32.mrb[0].mxu0
        %v5929 = vadd.f32 %v5816, %v5928
        %v5930 = vpop.f32.mrb[0].mxu0
        %v5931 = vadd.f32 %v5818, %v5930
        %v5932 = vpop.f32.mrb[0].mxu0
        %v5933 = vadd.f32 %v5820, %v5932
        %v5934 = vpop.f32.mrb[0].mxu0
        %v5935 = vadd.f32 %v5822, %v5934
        %5936 = vmatprep.mubr.bf16.mxu0 %v3688
        %5937 = vmatmul.mubr.bf16.gmra.mrb[0].mxu0 %v3687
        %v5938 = vpop.f32.mrb[0].mxu0
        %v5939 = vadd.f32 %v5826, %v5938
        %v5940 = vpop.f32.mrb[0].mxu0
        %v5941 = vadd.f32 %v5828, %v5940
        %v5942 = vpop.f32.mrb[0].mxu0
        %v5943 = vadd.f32 %v5830, %v5942
        %v5944 = vpop.f32.mrb[0].mxu0
        %v5945 = vadd.f32 %v5832, %v5944
        %5946 = vmatprep.mubr.bf16.mxu0 %v3692
        %5947 = vmatmul.mubr.bf16.gmra.mrb[0].mxu0 %v3691
        %v5948 = vpop.f32.mrb[0].mxu0
        %v5949 = vadd.f32 %v5836, %v5948
        %v5950 = vpop.f32.mrb[0].mxu0
        %v5951 = vadd.f32 %v5838, %v5950
        %v5952 = vpop.f32.mrb[0].mxu0
        %v5953 = vadd.f32 %v5840, %v5952
        %v5954 = vpop.f32.mrb[0].mxu0
        %v5955 = vadd.f32 %v5842, %v5954
        %5956 = vdwg.mxu0
        %5957 = vmatprep.subr.bf16.mxu0 0
        %5958 = vmatpush1.bf16.msra.mxu0 %v5541
        %5959 = vmatprep.subr.bf16.mxu0 0
        %5960 = vmatpush1.bf16.msra.mxu0 %v5544
        %5961 = vmatprep.subr.bf16.mxu0 0
        %5962 = vmatpush1.bf16.msra.mxu0 %v5547
        %5963 = vmatprep.subr.bf16.mxu0 0
        %5964 = vmatpush1.bf16.msra.mxu0 %v5550
        %5965 = vmatprep.subr.bf16.mxu0 0
        %5966 = vmatpush1.bf16.msra.mxu0 %v5553
        %5967 = vmatprep.subr.bf16.mxu0 0
        %5968 = vmatpush1.bf16.msra.mxu0 %v5556
        %5969 = vmatprep.subr.bf16.mxu0 0
        %5970 = vmatpush1.bf16.msra.mxu0 %v5559
        %5971 = vmatprep.subr.bf16.mxu0 0
        %5972 = vmatpush1.bf16.msra.mxu0 %v5562
        %5973 = vmatprep.subr.bf16.mxu0 0
        %5974 = vmatpush1.bf16.msra.mxu0 %v5565
        %5975 = vmatprep.subr.bf16.mxu0 0
        %5976 = vmatpush1.bf16.msra.mxu0 %v5568
        %5977 = vmatprep.subr.bf16.mxu0 0
        %5978 = vmatpush1.bf16.msra.mxu0 %v5571
        %5979 = vmatprep.subr.bf16.mxu0 0
        %5980 = vmatpush1.bf16.msra.mxu0 %v5574
        %5981 = vmatprep.subr.bf16.mxu0 0
        %5982 = vmatpush1.bf16.msra.mxu0 %v5577
        %5983 = vmatprep.subr.bf16.mxu0 0
        %5984 = vmatpush1.bf16.msra.mxu0 %v5580
        %5985 = vmatprep.subr.bf16.mxu0 0
        %5986 = vmatpush1.bf16.msra.mxu0 %v5583
        %5987 = vmatprep.subr.bf16.mxu0 0
        %5988 = vmatpush1.bf16.msra.mxu0 %v5586
        %5989 = vmatprep.mubr.bf16.mxu0 %v3662
        %5990 = vmatmul.mubr.bf16.gmra.mrb[0].mxu0 %v3661
        %v5991 = vpop.f32.mrb[0].mxu0
        %v5992 = vadd.f32 %v5157, %v5991
        %v5993 = vpop.f32.mrb[0].mxu0
        %v5994 = vpop.f32.mrb[0].mxu0
        %v5995 = vadd.f32 %v5160, %v5994
        %v5996 = vpop.f32.mrb[0].mxu0
        %5997 = vmatprep.mubr.bf16.mxu0 %v3666
        %5998 = vmatmul.mubr.bf16.gmra.mrb[0].mxu0 %v3665
        %v5999 = vpop.f32.mrb[0].mxu0
        %v6000 = vadd.f32 %v5165, %v5999
        %v6001 = vpop.f32.mrb[0].mxu0
        %v6002 = vpop.f32.mrb[0].mxu0
        %v6003 = vadd.f32 %v5168, %v6002
        %v6004 = vpop.f32.mrb[0].mxu0
        %6005 = vmatprep.mubr.bf16.mxu0 %v3670
        %6006 = vmatmul.mubr.bf16.gmra.mrb[0].mxu0 %v3669
        %v6007 = vpop.f32.mrb[0].mxu0
        %v6008 = vadd.f32 %v5173, %v6007
        %v6009 = vpop.f32.mrb[0].mxu0
        %v6010 = vpop.f32.mrb[0].mxu0
        %v6011 = vadd.f32 %v5176, %v6010
        %v6012 = vpop.f32.mrb[0].mxu0
        %6013 = vmatprep.mubr.bf16.mxu0 %v3674
        %6014 = vmatmul.mubr.bf16.gmra.mrb[0].mxu0 %v3673
        %v6015 = vpop.f32.mrb[0].mxu0
        %v6016 = vadd.f32 %v5181, %v6015
        %v6017 = vpop.f32.mrb[0].mxu0
        %v6018 = vpop.f32.mrb[0].mxu0
        %v6019 = vadd.f32 %v5184, %v6018
        %v6020 = vpop.f32.mrb[0].mxu0
        %6021 = vmatprep.mubr.bf16.mxu0 %v3678
        %6022 = vmatmul.mubr.bf16.gmra.mrb[0].mxu0 %v3677
        %v6023 = vpop.f32.mrb[0].mxu0
        %v6024 = vadd.f32 %v5189, %v6023
        %v6025 = vpop.f32.mrb[0].mxu0
        %v6026 = vpop.f32.mrb[0].mxu0
        %v6027 = vadd.f32 %v5192, %v6026
        %v6028 = vpop.f32.mrb[0].mxu0
        %6029 = vmatprep.mubr.bf16.mxu0 %v3682
        %6030 = vmatmul.mubr.bf16.gmra.mrb[0].mxu0 %v3681
        %v6031 = vpop.f32.mrb[0].mxu0
        %v6032 = vadd.f32 %v5197, %v6031
        %v6033 = vpop.f32.mrb[0].mxu0
        %v6034 = vpop.f32.mrb[0].mxu0
        %v6035 = vadd.f32 %v5200, %v6034
        %v6036 = vpop.f32.mrb[0].mxu0
        %6037 = vmatprep.mubr.bf16.mxu0 %v3686
        %6038 = vmatmul.mubr.bf16.gmra.mrb[0].mxu0 %v3685
        %v6039 = vpop.f32.mrb[0].mxu0
        %v6040 = vadd.f32 %v5205, %v6039
        %v6041 = vpop.f32.mrb[0].mxu0
        %v6042 = vpop.f32.mrb[0].mxu0
        %v6043 = vadd.f32 %v5208, %v6042
        %v6044 = vpop.f32.mrb[0].mxu0
        %6045 = vmatprep.mubr.bf16.mxu0 %v3690
        %6046 = vmatmul.mubr.bf16.gmra.mrb[0].mxu0 %v3689
        %v6047 = vpop.f32.mrb[0].mxu0
        %v6048 = vadd.f32 %v5213, %v6047
        %v6049 = vpop.f32.mrb[0].mxu0
        %v6050 = vpop.f32.mrb[0].mxu0
        %v6051 = vadd.f32 %v5216, %v6050
        %v6052 = vpop.f32.mrb[0].mxu0
        %6053 = vdwg.mxu0
        %6054 = vmatprep.subr.bf16.mxu0 0
        %6055 = vmatpush1.bf16.msra.mxu0 %v5589
        %6056 = vmatprep.subr.bf16.mxu0 0
        %6057 = vmatpush1.bf16.msra.mxu0 %v5592
        %6058 = vmatprep.subr.bf16.mxu0 0
        %6059 = vmatpush1.bf16.msra.mxu0 %v5595
        %6060 = vmatprep.subr.bf16.mxu0 0
        %6061 = vmatpush1.bf16.msra.mxu0 %v5598
        %6062 = vmatprep.subr.bf16.mxu0 0
        %6063 = vmatpush1.bf16.msra.mxu0 %v5601
        %6064 = vmatprep.subr.bf16.mxu0 0
        %6065 = vmatpush1.bf16.msra.mxu0 %v5604
        %6066 = vmatprep.subr.bf16.mxu0 0
        %6067 = vmatpush1.bf16.msra.mxu0 %v5607
        %6068 = vmatprep.subr.bf16.mxu0 0
        %6069 = vmatpush1.bf16.msra.mxu0 %v5610
        %6070 = vmatprep.subr.bf16.mxu0 0
        %6071 = vmatpush1.bf16.msra.mxu0 %v5613
        %6072 = vmatprep.subr.bf16.mxu0 0
        %6073 = vmatpush1.bf16.msra.mxu0 %v5616
        %6074 = vmatprep.subr.bf16.mxu0 0
        %6075 = vmatpush1.bf16.msra.mxu0 %v5619
        %6076 = vmatprep.subr.bf16.mxu0 0
        %6077 = vmatpush1.bf16.msra.mxu0 %v5622
        %6078 = vmatprep.subr.bf16.mxu0 0
        %6079 = vmatpush1.bf16.msra.mxu0 %v5625
        %6080 = vmatprep.subr.bf16.mxu0 0
        %6081 = vmatpush1.bf16.msra.mxu0 %v5628
        %6082 = vmatprep.subr.bf16.mxu0 0
        %6083 = vmatpush1.bf16.msra.mxu0 %v5631
        %6084 = vmatprep.subr.bf16.mxu0 0
        %6085 = vmatpush1.bf16.msra.mxu0 %v5634
        %6086 = vmatprep.mubr.bf16.mxu0 %v3664
        %6087 = vmatmul.mubr.bf16.gmra.mrb[0].mxu0 %v3663
        %v6088 = vpop.f32.mrb[0].mxu0
        %v6089 = vadd.f32 %v5992, %v6088
        %v6090 = vpop.f32.mrb[0].mxu0
        %v6091 = vpop.f32.mrb[0].mxu0
        %v6092 = vadd.f32 %v5995, %v6091
        %v6093 = vpop.f32.mrb[0].mxu0
        %6094 = vmatprep.mubr.bf16.mxu0 %v3668
        %6095 = vmatmul.mubr.bf16.gmra.mrb[0].mxu0 %v3667
        %v6096 = vpop.f32.mrb[0].mxu0
        %v6097 = vadd.f32 %v6000, %v6096
        %v6098 = vpop.f32.mrb[0].mxu0
        %v6099 = vpop.f32.mrb[0].mxu0
        %v6100 = vadd.f32 %v6003, %v6099
        %v6101 = vpop.f32.mrb[0].mxu0
        %6102 = vmatprep.mubr.bf16.mxu0 %v3672
        %6103 = vmatmul.mubr.bf16.gmra.mrb[0].mxu0 %v3671
        %v6104 = vpop.f32.mrb[0].mxu0
        %v6105 = vadd.f32 %v6008, %v6104
        %v6106 = vpop.f32.mrb[0].mxu0
        %v6107 = vpop.f32.mrb[0].mxu0
        %v6108 = vadd.f32 %v6011, %v6107
        %v6109 = vpop.f32.mrb[0].mxu0
        %6110 = vmatprep.mubr.bf16.mxu0 %v3676
        %6111 = vmatmul.mubr.bf16.gmra.mrb[0].mxu0 %v3675
        %v6112 = vpop.f32.mrb[0].mxu0
        %v6113 = vadd.f32 %v6016, %v6112
        %v6114 = vpop.f32.mrb[0].mxu0
        %v6115 = vpop.f32.mrb[0].mxu0
        %v6116 = vadd.f32 %v6019, %v6115
        %v6117 = vpop.f32.mrb[0].mxu0
        %6118 = vmatprep.mubr.bf16.mxu0 %v3680
        %6119 = vmatmul.mubr.bf16.gmra.mrb[0].mxu0 %v3679
        %v6120 = vpop.f32.mrb[0].mxu0
        %v6121 = vadd.f32 %v6024, %v6120
        %v6122 = vpop.f32.mrb[0].mxu0
        %v6123 = vpop.f32.mrb[0].mxu0
        %v6124 = vadd.f32 %v6027, %v6123
        %v6125 = vpop.f32.mrb[0].mxu0
        %6126 = vmatprep.mubr.bf16.mxu0 %v3684
        %6127 = vmatmul.mubr.bf16.gmra.mrb[0].mxu0 %v3683
        %v6128 = vpop.f32.mrb[0].mxu0
        %v6129 = vadd.f32 %v6032, %v6128
        %v6130 = vpop.f32.mrb[0].mxu0
        %v6131 = vpop.f32.mrb[0].mxu0
        %v6132 = vadd.f32 %v6035, %v6131
        %v6133 = vpop.f32.mrb[0].mxu0
        %6134 = vmatprep.mubr.bf16.mxu0 %v3688
        %6135 = vmatmul.mubr.bf16.gmra.mrb[0].mxu0 %v3687
        %v6136 = vpop.f32.mrb[0].mxu0
        %v6137 = vadd.f32 %v6040, %v6136
        %v6138 = vpop.f32.mrb[0].mxu0
        %v6139 = vpop.f32.mrb[0].mxu0
        %v6140 = vadd.f32 %v6043, %v6139
        %v6141 = vpop.f32.mrb[0].mxu0
        %6142 = vmatprep.mubr.bf16.mxu0 %v3692
        %6143 = vmatmul.mubr.bf16.gmra.mrb[0].mxu0 %v3691
        %v6144 = vpop.f32.mrb[0].mxu0
        %v6145 = vadd.f32 %v6048, %v6144
        %v6146 = vpop.f32.mrb[0].mxu0
        %v6147 = vpop.f32.mrb[0].mxu0
        %v6148 = vadd.f32 %v6051, %v6147
        %v6149 = vpop.f32.mrb[0].mxu0
        %6150 = vdwg.mxu0
        %v6151 = vld [vmem:[%s17] sm:$0xf]
        %v6152 = vld [vmem:[%s17 + $0x4] sm:$0xf]
        %v6153 = vld [vmem:[%s17 + $0x8] sm:$0xf]
        %v6154 = vld [vmem:[%s17 + $0xc] sm:$0xf]
        %v6155 = vld [vmem:[%s17 + $0x10] sm:$0xf]
        %v6156 = vld [vmem:[%s17 + $0x14] sm:$0xf]
        %v6157 = vld [vmem:[%s17 + $0x18] sm:$0xf]
        %v6158 = vld [vmem:[%s17 + $0x1c] sm:$0xf]
        %v6159 = vld [vmem:[%s17 + $0x20] sm:$0xf]
        %v6160 = vld [vmem:[%s17 + $0x24] sm:$0xf]
        %v6161 = vld [vmem:[%s17 + $0x28] sm:$0xf]
        %v6162 = vld [vmem:[%s17 + $0x2c] sm:$0xf]
        %v6163 = vld [vmem:[%s17 + $0x30] sm:$0xf]
        %v6164 = vld [vmem:[%s17 + $0x34] sm:$0xf]
        %v6165 = vld [vmem:[%s17 + $0x38] sm:$0xf]
        %v6166 = vld [vmem:[%s17 + $0x3c] sm:$0xf]
        %v6183 = vunpack.c.l.b16 %v6151
        %v6184 = vunpack.c.l.b16 %v6152
        %v6185 = vunpack.c.l.b16 %v6153
        %v6186 = vunpack.c.l.b16 %v6154
        %v6187 = vunpack.c.l.b16 %v6155
        %v6188 = vunpack.c.l.b16 %v6156
        %v6189 = vunpack.c.l.b16 %v6157
        %v6190 = vunpack.c.l.b16 %v6158
        %v6191 = vunpack.c.l.b16 %v6159
        %v6192 = vunpack.c.l.b16 %v6160
        %v6193 = vunpack.c.l.b16 %v6161
        %v6194 = vunpack.c.l.b16 %v6162
        %v6195 = vunpack.c.l.b16 %v6163
        %v6196 = vunpack.c.l.b16 %v6164
        %v6197 = vunpack.c.l.b16 %v6165
        %v6198 = vunpack.c.l.b16 %v6166
        %v6199 = vpack.c.b16 %v6184, %v6183
        %v6200 = vpack.c.b16 %v6186, %v6185
        %v6201 = vpack.c.b16 %v6188, %v6187
        %v6202 = vpack.c.b16 %v6190, %v6189
        %v6203 = vpack.c.b16 %v6192, %v6191
        %v6204 = vpack.c.b16 %v6194, %v6193
        %v6205 = vpack.c.b16 %v6196, %v6195
        %v6206 = vpack.c.b16 %v6198, %v6197
        %v6208 = vsel %vm890, %v6199, 0
        %v6211 = vsel %vm890, %v6200, 0
        %v6214 = vsel %vm890, %v6201, 0
        %v6217 = vsel %vm890, %v6202, 0
        %v6220 = vsel %vm890, %v6203, 0
        %v6223 = vsel %vm890, %v6204, 0
        %v6226 = vsel %vm890, %v6205, 0
        %v6229 = vsel %vm890, %v6206, 0
        %6231 = vmatprep.subr.bf16.mxu0 %v3340
        %6232 = vmatpush1.bf16.msra.mxu0 %v3339
        %6233 = vmatprep.subr.bf16.mxu0 %v3344
        %6234 = vmatpush1.bf16.msra.mxu0 %v3343
        %6235 = vmatprep.subr.bf16.mxu0 %v3348
        %6236 = vmatpush1.bf16.msra.mxu0 %v3347
        %6237 = vmatprep.subr.bf16.mxu0 %v3352
        %6238 = vmatpush1.bf16.msra.mxu0 %v3351
        %6239 = vmatprep.subr.bf16.mxu0 0
        %6240 = vmatpush1.bf16.msra.mxu0 0
        %6241 = vmatprep.subr.bf16.mxu0 0
        %6242 = vmatpush1.bf16.msra.mxu0 0
        %6243 = vmatprep.subr.bf16.mxu0 0
        %6244 = vmatpush1.bf16.msra.mxu0 0
        %6245 = vmatprep.subr.bf16.mxu0 0
        %6246 = vmatpush1.bf16.msra.mxu0 0
        %6247 = vmatprep.subr.bf16.mxu0 0
        %6248 = vmatpush1.bf16.msra.mxu0 0
        %6249 = vmatprep.subr.bf16.mxu0 0
        %6250 = vmatpush1.bf16.msra.mxu0 0
        %6251 = vmatprep.subr.bf16.mxu0 0
        %6252 = vmatpush1.bf16.msra.mxu0 0
        %6253 = vmatprep.subr.bf16.mxu0 0
        %6254 = vmatpush1.bf16.msra.mxu0 0
        %6255 = vmatprep.subr.bf16.mxu0 0
        %6256 = vmatpush1.bf16.msra.mxu0 0
        %6257 = vmatprep.subr.bf16.mxu0 0
        %6258 = vmatpush1.bf16.msra.mxu0 0
        %6259 = vmatprep.subr.bf16.mxu0 0
        %6260 = vmatpush1.bf16.msra.mxu0 0
        %6261 = vmatprep.subr.bf16.mxu0 0
        %6262 = vmatpush1.bf16.msra.mxu0 0
        %6263 = vmatprep.mubr.bf16.mxu0 0
        %6264 = vmatmul.mubr.bf16.gmra.mrb[0].mxu0 %v6208
        %v6265 = vpop.f32.mrb[0].mxu0
        %v6266 = vadd.f32 0.0, %v6265
        %v6267 = vpop.f32.mrb[0].mxu0
        %v6268 = vadd.f32 0.0, %v6267
        %v6269 = vpop.f32.mrb[0].mxu0
        %v6270 = vadd.f32 0.0, %v6269
        %v6271 = vpop.f32.mrb[0].mxu0
        %v6272 = vadd.f32 0.0, %v6271
        %6273 = vmatprep.mubr.bf16.mxu0 0
        %6274 = vmatmul.mubr.bf16.gmra.mrb[0].mxu0 %v6211
        %v6275 = vpop.f32.mrb[0].mxu0
        %v6276 = vadd.f32 0.0, %v6275
        %v6277 = vpop.f32.mrb[0].mxu0
        %v6278 = vadd.f32 0.0, %v6277
        %v6279 = vpop.f32.mrb[0].mxu0
        %v6280 = vadd.f32 0.0, %v6279
        %v6281 = vpop.f32.mrb[0].mxu0
        %v6282 = vadd.f32 0.0, %v6281
        %6283 = vmatprep.mubr.bf16.mxu0 0
        %6284 = vmatmul.mubr.bf16.gmra.mrb[0].mxu0 %v6214
        %v6285 = vpop.f32.mrb[0].mxu0
        %v6286 = vadd.f32 0.0, %v6285
        %v6287 = vpop.f32.mrb[0].mxu0
        %v6288 = vadd.f32 0.0, %v6287
        %v6289 = vpop.f32.mrb[0].mxu0
        %v6290 = vadd.f32 0.0, %v6289
        %v6291 = vpop.f32.mrb[0].mxu0
        %v6292 = vadd.f32 0.0, %v6291
        %6293 = vmatprep.mubr.bf16.mxu0 0
        %6294 = vmatmul.mubr.bf16.gmra.mrb[0].mxu0 %v6217
        %v6295 = vpop.f32.mrb[0].mxu0
        %v6296 = vadd.f32 0.0, %v6295
        %v6297 = vpop.f32.mrb[0].mxu0
        %v6298 = vadd.f32 0.0, %v6297
        %v6299 = vpop.f32.mrb[0].mxu0
        %v6300 = vadd.f32 0.0, %v6299
        %v6301 = vpop.f32.mrb[0].mxu0
        %v6302 = vadd.f32 0.0, %v6301
        %6303 = vmatprep.mubr.bf16.mxu0 0
        %6304 = vmatmul.mubr.bf16.gmra.mrb[0].mxu0 %v6220
        %v6305 = vpop.f32.mrb[0].mxu0
        %v6306 = vadd.f32 0.0, %v6305
        %v6307 = vpop.f32.mrb[0].mxu0
        %v6308 = vadd.f32 0.0, %v6307
        %v6309 = vpop.f32.mrb[0].mxu0
        %v6310 = vadd.f32 0.0, %v6309
        %v6311 = vpop.f32.mrb[0].mxu0
        %v6312 = vadd.f32 0.0, %v6311
        %6313 = vmatprep.mubr.bf16.mxu0 0
        %6314 = vmatmul.mubr.bf16.gmra.mrb[0].mxu0 %v6223
        %v6315 = vpop.f32.mrb[0].mxu0
        %v6316 = vadd.f32 0.0, %v6315
        %v6317 = vpop.f32.mrb[0].mxu0
        %v6318 = vadd.f32 0.0, %v6317
        %v6319 = vpop.f32.mrb[0].mxu0
        %v6320 = vadd.f32 0.0, %v6319
        %v6321 = vpop.f32.mrb[0].mxu0
        %v6322 = vadd.f32 0.0, %v6321
        %6323 = vmatprep.mubr.bf16.mxu0 0
        %6324 = vmatmul.mubr.bf16.gmra.mrb[0].mxu0 %v6226
        %v6325 = vpop.f32.mrb[0].mxu0
        %v6326 = vadd.f32 0.0, %v6325
        %v6327 = vpop.f32.mrb[0].mxu0
        %v6328 = vadd.f32 0.0, %v6327
        %v6329 = vpop.f32.mrb[0].mxu0
        %v6330 = vadd.f32 0.0, %v6329
        %v6331 = vpop.f32.mrb[0].mxu0
        %v6332 = vadd.f32 0.0, %v6331
        %6333 = vmatprep.mubr.bf16.mxu0 0
        %6334 = vmatmul.mubr.bf16.gmra.mrb[0].mxu0 %v6229
        %v6335 = vpop.f32.mrb[0].mxu0
        %v6336 = vadd.f32 0.0, %v6335
        %v6337 = vpop.f32.mrb[0].mxu0
        %v6338 = vadd.f32 0.0, %v6337
        %v6339 = vpop.f32.mrb[0].mxu0
        %v6340 = vadd.f32 0.0, %v6339
        %v6341 = vpop.f32.mrb[0].mxu0
        %v6342 = vadd.f32 0.0, %v6341
        %6343 = vdwg.mxu0
        %6344 = vmatprep.subr.bf16.mxu0 %v3342
        %6345 = vmatpush1.bf16.msra.mxu0 %v3341
        %6346 = vmatprep.subr.bf16.mxu0 %v3346
        %6347 = vmatpush1.bf16.msra.mxu0 %v3345
        %6348 = vmatprep.subr.bf16.mxu0 %v3350
        %6349 = vmatpush1.bf16.msra.mxu0 %v3349
        %6350 = vmatprep.subr.bf16.mxu0 %v3354
        %6351 = vmatpush1.bf16.msra.mxu0 %v3353
        %6352 = vmatprep.subr.bf16.mxu0 0
        %6353 = vmatpush1.bf16.msra.mxu0 0
        %6354 = vmatprep.subr.bf16.mxu0 0
        %6355 = vmatpush1.bf16.msra.mxu0 0
        %6356 = vmatprep.subr.bf16.mxu0 0
        %6357 = vmatpush1.bf16.msra.mxu0 0
        %6358 = vmatprep.subr.bf16.mxu0 0
        %6359 = vmatpush1.bf16.msra.mxu0 0
        %6360 = vmatprep.subr.bf16.mxu0 0
        %6361 = vmatpush1.bf16.msra.mxu0 0
        %6362 = vmatprep.subr.bf16.mxu0 0
        %6363 = vmatpush1.bf16.msra.mxu0 0
        %6364 = vmatprep.subr.bf16.mxu0 0
        %6365 = vmatpush1.bf16.msra.mxu0 0
        %6366 = vmatprep.subr.bf16.mxu0 0
        %6367 = vmatpush1.bf16.msra.mxu0 0
        %6368 = vmatprep.subr.bf16.mxu0 0
        %6369 = vmatpush1.bf16.msra.mxu0 0
        %6370 = vmatprep.subr.bf16.mxu0 0
        %6371 = vmatpush1.bf16.msra.mxu0 0
        %6372 = vmatprep.subr.bf16.mxu0 0
        %6373 = vmatpush1.bf16.msra.mxu0 0
        %6374 = vmatprep.subr.bf16.mxu0 0
        %6375 = vmatpush1.bf16.msra.mxu0 0
        %6376 = vmatprep.mubr.bf16.mxu0 0
        %6377 = vmatmul.mubr.bf16.gmra.mrb[0].mxu0 %v6208
        %v6378 = vpop.f32.mrb[0].mxu0
        %v6379 = vadd.f32 0.0, %v6378
        %v6380 = vpop.f32.mrb[0].mxu0
        %v6381 = vadd.f32 0.0, %v6380
        %v6382 = vpop.f32.mrb[0].mxu0
        %v6383 = vadd.f32 0.0, %v6382
        %v6384 = vpop.f32.mrb[0].mxu0
        %v6385 = vadd.f32 0.0, %v6384
        %6386 = vmatprep.mubr.bf16.mxu0 0
        %6387 = vmatmul.mubr.bf16.gmra.mrb[0].mxu0 %v6211
        %v6388 = vpop.f32.mrb[0].mxu0
        %v6389 = vadd.f32 0.0, %v6388
        %v6390 = vpop.f32.mrb[0].mxu0
        %v6391 = vadd.f32 0.0, %v6390
        %v6392 = vpop.f32.mrb[0].mxu0
        %v6393 = vadd.f32 0.0, %v6392
        %v6394 = vpop.f32.mrb[0].mxu0
        %v6395 = vadd.f32 0.0, %v6394
        %6396 = vmatprep.mubr.bf16.mxu0 0
        %6397 = vmatmul.mubr.bf16.gmra.mrb[0].mxu0 %v6214
        %v6398 = vpop.f32.mrb[0].mxu0
        %v6399 = vadd.f32 0.0, %v6398
        %v6400 = vpop.f32.mrb[0].mxu0
        %v6401 = vadd.f32 0.0, %v6400
        %v6402 = vpop.f32.mrb[0].mxu0
        %v6403 = vadd.f32 0.0, %v6402
        %v6404 = vpop.f32.mrb[0].mxu0
        %v6405 = vadd.f32 0.0, %v6404
        %6406 = vmatprep.mubr.bf16.mxu0 0
        %6407 = vmatmul.mubr.bf16.gmra.mrb[0].mxu0 %v6217
        %v6408 = vpop.f32.mrb[0].mxu0
        %v6409 = vadd.f32 0.0, %v6408
        %v6410 = vpop.f32.mrb[0].mxu0
        %v6411 = vadd.f32 0.0, %v6410
        %v6412 = vpop.f32.mrb[0].mxu0
        %v6413 = vadd.f32 0.0, %v6412
        %v6414 = vpop.f32.mrb[0].mxu0
        %v6415 = vadd.f32 0.0, %v6414
        %6416 = vmatprep.mubr.bf16.mxu0 0
        %6417 = vmatmul.mubr.bf16.gmra.mrb[0].mxu0 %v6220
        %v6418 = vpop.f32.mrb[0].mxu0
        %v6419 = vadd.f32 0.0, %v6418
        %v6420 = vpop.f32.mrb[0].mxu0
        %v6421 = vadd.f32 0.0, %v6420
        %v6422 = vpop.f32.mrb[0].mxu0
        %v6423 = vadd.f32 0.0, %v6422
        %v6424 = vpop.f32.mrb[0].mxu0
        %v6425 = vadd.f32 0.0, %v6424
        %6426 = vmatprep.mubr.bf16.mxu0 0
        %6427 = vmatmul.mubr.bf16.gmra.mrb[0].mxu0 %v6223
        %v6428 = vpop.f32.mrb[0].mxu0
        %v6429 = vadd.f32 0.0, %v6428
        %v6430 = vpop.f32.mrb[0].mxu0
        %v6431 = vadd.f32 0.0, %v6430
        %v6432 = vpop.f32.mrb[0].mxu0
        %v6433 = vadd.f32 0.0, %v6432
        %v6434 = vpop.f32.mrb[0].mxu0
        %v6435 = vadd.f32 0.0, %v6434
        %6436 = vmatprep.mubr.bf16.mxu0 0
        %6437 = vmatmul.mubr.bf16.gmra.mrb[0].mxu0 %v6226
        %v6438 = vpop.f32.mrb[0].mxu0
        %v6439 = vadd.f32 0.0, %v6438
        %v6440 = vpop.f32.mrb[0].mxu0
        %v6441 = vadd.f32 0.0, %v6440
        %v6442 = vpop.f32.mrb[0].mxu0
        %v6443 = vadd.f32 0.0, %v6442
        %v6444 = vpop.f32.mrb[0].mxu0
        %v6445 = vadd.f32 0.0, %v6444
        %6446 = vmatprep.mubr.bf16.mxu0 0
        %6447 = vmatmul.mubr.bf16.gmra.mrb[0].mxu0 %v6229
        %v6448 = vpop.f32.mrb[0].mxu0
        %v6449 = vadd.f32 0.0, %v6448
        %v6450 = vpop.f32.mrb[0].mxu0
        %v6451 = vadd.f32 0.0, %v6450
        %v6452 = vpop.f32.mrb[0].mxu0
        %v6453 = vadd.f32 0.0, %v6452
        %v6454 = vpop.f32.mrb[0].mxu0
        %v6455 = vadd.f32 0.0, %v6454
        %6456 = vdwg.mxu0
        %v6457 = vpack.c.bf16 %v6270, %v6266
        %v6458 = vpack.c.bf16 %v6272, %v6268
        %v6459 = vpack.c.bf16 %v6383, %v6379
        %v6460 = vpack.c.bf16 %v6385, %v6381
        %v6461 = vpack.c.bf16 %v6280, %v6276
        %v6462 = vpack.c.bf16 %v6282, %v6278
        %v6463 = vpack.c.bf16 %v6393, %v6389
        %v6464 = vpack.c.bf16 %v6395, %v6391
        %v6465 = vpack.c.bf16 %v6290, %v6286
        %v6466 = vpack.c.bf16 %v6292, %v6288
        %v6467 = vpack.c.bf16 %v6403, %v6399
        %v6468 = vpack.c.bf16 %v6405, %v6401
        %v6469 = vpack.c.bf16 %v6300, %v6296
        %v6470 = vpack.c.bf16 %v6302, %v6298
        %v6471 = vpack.c.bf16 %v6413, %v6409
        %v6472 = vpack.c.bf16 %v6415, %v6411
        %v6473 = vpack.c.bf16 %v6310, %v6306
        %v6474 = vpack.c.bf16 %v6312, %v6308
        %v6475 = vpack.c.bf16 %v6423, %v6419
        %v6476 = vpack.c.bf16 %v6425, %v6421
        %v6477 = vpack.c.bf16 %v6320, %v6316
        %v6478 = vpack.c.bf16 %v6322, %v6318
        %v6479 = vpack.c.bf16 %v6433, %v6429
        %v6480 = vpack.c.bf16 %v6435, %v6431
        %v6481 = vpack.c.bf16 %v6330, %v6326
        %v6482 = vpack.c.bf16 %v6332, %v6328
        %v6483 = vpack.c.bf16 %v6443, %v6439
        %v6484 = vpack.c.bf16 %v6445, %v6441
        %v6485 = vpack.c.bf16 %v6340, %v6336
        %v6486 = vpack.c.bf16 %v6342, %v6338
        %v6487 = vpack.c.bf16 %v6453, %v6449
        %v6488 = vpack.c.bf16 %v6455, %v6451
        %v6489 = vld [vmem:[%s20] sm:$0xff]
        %v6490 = vld [vmem:[%s20 + $0x8] sm:$0xf]
        %v6491 = vld [vmem:[%s20 + $0xc] sm:$0xff]
        %v6492 = vld [vmem:[%s20 + $0x14] sm:$0xf]
        %v6493 = vld [vmem:[%s20 + $0x18] sm:$0xff]
        %v6494 = vld [vmem:[%s20 + $0x20] sm:$0xf]
        %v6495 = vld [vmem:[%s20 + $0x24] sm:$0xff]
        %v6496 = vld [vmem:[%s20 + $0x2c] sm:$0xf]
        %v6497 = vld [vmem:[%s20 + $0x30] sm:$0xff]
        %v6498 = vld [vmem:[%s20 + $0x38] sm:$0xf]
        %v6499 = vld [vmem:[%s20 + $0x3c] sm:$0xff]
        %v6500 = vld [vmem:[%s20 + $0x44] sm:$0xf]
        %v6501 = vld [vmem:[%s20 + $0x48] sm:$0xff]
        %v6502 = vld [vmem:[%s20 + $0x50] sm:$0xf]
        %v6503 = vld [vmem:[%s20 + $0x54] sm:$0xff]
        %v6504 = vld [vmem:[%s20 + $0x5c] sm:$0xf]
        %v6505 = vld [vmem:[%s20 + $0x60] sm:$0xff]
        %v6506 = vld [vmem:[%s20 + $0x68] sm:$0xf]
        %v6507 = vld [vmem:[%s20 + $0x6c] sm:$0xff]
        %v6508 = vld [vmem:[%s20 + $0x74] sm:$0xf]
        %v6509 = vld [vmem:[%s20 + $0x78] sm:$0xff]
        %v6510 = vld [vmem:[%s20 + $0x80] sm:$0xf]
        %v6511 = vld [vmem:[%s20 + $0x84] sm:$0xff]
        %v6512 = vld [vmem:[%s20 + $0x8c] sm:$0xf]
        %v6513 = vld [vmem:[%s20 + $0x90] sm:$0xff]
        %v6514 = vld [vmem:[%s20 + $0x98] sm:$0xf]
        %v6515 = vld [vmem:[%s20 + $0x9c] sm:$0xff]
        %v6516 = vld [vmem:[%s20 + $0xa4] sm:$0xf]
        %v6517 = vld [vmem:[%s20 + $0xa8] sm:$0xff]
        %v6518 = vld [vmem:[%s20 + $0xb0] sm:$0xf]
        %v6519 = vld [vmem:[%s20 + $0xb4] sm:$0xff]
        %v6520 = vld [vmem:[%s20 + $0xbc] sm:$0xf]
        %v6521 = vld [vmem:[%s20 + $0xc0] sm:$0xff]
        %v6522 = vld [vmem:[%s20 + $0xc8] sm:$0xf]
        %v6523 = vld [vmem:[%s20 + $0xcc] sm:$0xff]
        %v6524 = vld [vmem:[%s20 + $0xd4] sm:$0xf]
        %v6525 = vld [vmem:[%s20 + $0xd8] sm:$0xff]
        %v6526 = vld [vmem:[%s20 + $0xe0] sm:$0xf]
        %v6527 = vld [vmem:[%s20 + $0xe4] sm:$0xff]
        %v6528 = vld [vmem:[%s20 + $0xec] sm:$0xf]
        %v6529 = vld [vmem:[%s20 + $0xf0] sm:$0xff]
        %v6530 = vld [vmem:[%s20 + $0xf8] sm:$0xf]
        %v6531 = vld [vmem:[%s20 + $0xfc] sm:$0xff]
        %v6532 = vld [vmem:[%s20 + $0x104] sm:$0xf]
        %v6533 = vld [vmem:[%s20 + $0x108] sm:$0xff]
        %v6534 = vld [vmem:[%s20 + $0x110] sm:$0xf]
        %v6535 = vld [vmem:[%s20 + $0x114] sm:$0xff]
        %v6536 = vld [vmem:[%s20 + $0x11c] sm:$0xf]
        %v6537 = vld [vmem:[%s20 + $0x120] sm:$0xff]
        %v6538 = vld [vmem:[%s20 + $0x128] sm:$0xf]
        %v6539 = vld [vmem:[%s20 + $0x12c] sm:$0xff]
        %v6540 = vld [vmem:[%s20 + $0x134] sm:$0xf]
        %v6541 = vld [vmem:[%s20 + $0x138] sm:$0xff]
        %v6542 = vld [vmem:[%s20 + $0x140] sm:$0xf]
        %v6543 = vld [vmem:[%s20 + $0x144] sm:$0xff]
        %v6544 = vld [vmem:[%s20 + $0x14c] sm:$0xf]
        %v6545 = vld [vmem:[%s20 + $0x150] sm:$0xff]
        %v6546 = vld [vmem:[%s20 + $0x158] sm:$0xf]
        %v6547 = vld [vmem:[%s20 + $0x15c] sm:$0xff]
        %v6548 = vld [vmem:[%s20 + $0x164] sm:$0xf]
        %v6549 = vld [vmem:[%s20 + $0x168] sm:$0xff]
        %v6550 = vld [vmem:[%s20 + $0x170] sm:$0xf]
        %v6551 = vld [vmem:[%s20 + $0x174] sm:$0xff]
        %v6552 = vld [vmem:[%s20 + $0x17c] sm:$0xf]
        %v6553 = vld [vmem:[%s20 + $0x180] sm:$0xff]
        %v6554 = vld [vmem:[%s20 + $0x188] sm:$0xf]
        %v6555 = vld [vmem:[%s20 + $0x18c] sm:$0xff]
        %v6556 = vld [vmem:[%s20 + $0x194] sm:$0xf]
        %v6557 = vld [vmem:[%s20 + $0x198] sm:$0xff]
        %v6558 = vld [vmem:[%s20 + $0x1a0] sm:$0xf]
        %v6559 = vld [vmem:[%s20 + $0x1a4] sm:$0xff]
        %v6560 = vld [vmem:[%s20 + $0x1ac] sm:$0xf]
        %v6561 = vld [vmem:[%s20 + $0x1b0] sm:$0xff]
        %v6562 = vld [vmem:[%s20 + $0x1b8] sm:$0xf]
        %v6563 = vld [vmem:[%s20 + $0x1bc] sm:$0xff]
        %v6564 = vld [vmem:[%s20 + $0x1c4] sm:$0xf]
        %v6565 = vld [vmem:[%s20 + $0x1c8] sm:$0xff]
        %v6566 = vld [vmem:[%s20 + $0x1d0] sm:$0xf]
        %v6567 = vld [vmem:[%s20 + $0x1d4] sm:$0xff]
        %v6568 = vld [vmem:[%s20 + $0x1dc] sm:$0xf]
        %v6569 = vld [vmem:[%s20 + $0x1e0] sm:$0xff]
        %v6570 = vld [vmem:[%s20 + $0x1e8] sm:$0xf]
        %v6571 = vld [vmem:[%s20 + $0x1ec] sm:$0xff]
        %v6572 = vld [vmem:[%s20 + $0x1f4] sm:$0xf]
        %v6573 = vld [vmem:[%s20 + $0x1f8] sm:$0xff]
        %v6574 = vld [vmem:[%s20 + $0x200] sm:$0xf]
        %v6575 = vld [vmem:[%s20 + $0x204] sm:$0xff]
        %v6576 = vld [vmem:[%s20 + $0x20c] sm:$0xf]
        %v6577 = vld [vmem:[%s20 + $0x210] sm:$0xff]
        %v6578 = vld [vmem:[%s20 + $0x218] sm:$0xf]
        %v6579 = vld [vmem:[%s20 + $0x21c] sm:$0xff]
        %v6580 = vld [vmem:[%s20 + $0x224] sm:$0xf]
        %v6581 = vld [vmem:[%s20 + $0x228] sm:$0xff]
        %v6582 = vld [vmem:[%s20 + $0x230] sm:$0xf]
        %v6583 = vld [vmem:[%s20 + $0x234] sm:$0xff]
        %v6584 = vld [vmem:[%s20 + $0x23c] sm:$0xf]
        %v6585 = vld [vmem:[%s20 + $0x240] sm:$0xff]
        %v6586 = vld [vmem:[%s20 + $0x248] sm:$0xf]
        %v6587 = vld [vmem:[%s20 + $0x24c] sm:$0xff]
        %v6588 = vld [vmem:[%s20 + $0x254] sm:$0xf]
        %v6589 = vld [vmem:[%s20 + $0x258] sm:$0xff]
        %v6590 = vld [vmem:[%s20 + $0x260] sm:$0xf]
        %v6591 = vld [vmem:[%s20 + $0x264] sm:$0xff]
        %v6592 = vld [vmem:[%s20 + $0x26c] sm:$0xf]
        %v6593 = vld [vmem:[%s20 + $0x270] sm:$0xff]
        %v6594 = vld [vmem:[%s20 + $0x278] sm:$0xf]
        %v6595 = vld [vmem:[%s20 + $0x27c] sm:$0xff]
        %v6596 = vld [vmem:[%s20 + $0x284] sm:$0xf]
        %v6597 = vld [vmem:[%s20 + $0x288] sm:$0xff]
        %v6598 = vld [vmem:[%s20 + $0x290] sm:$0xf]
        %v6599 = vld [vmem:[%s20 + $0x294] sm:$0xff]
        %v6600 = vld [vmem:[%s20 + $0x29c] sm:$0xf]
        %v6601 = vld [vmem:[%s20 + $0x2a0] sm:$0xff]
        %v6602 = vld [vmem:[%s20 + $0x2a8] sm:$0xf]
        %v6603 = vld [vmem:[%s20 + $0x2ac] sm:$0xff]
        %v6604 = vld [vmem:[%s20 + $0x2b4] sm:$0xf]
        %v6605 = vld [vmem:[%s20 + $0x2b8] sm:$0xff]
        %v6606 = vld [vmem:[%s20 + $0x2c0] sm:$0xf]
        %v6607 = vld [vmem:[%s20 + $0x2c4] sm:$0xff]
        %v6608 = vld [vmem:[%s20 + $0x2cc] sm:$0xf]
        %v6609 = vld [vmem:[%s20 + $0x2d0] sm:$0xff]
        %v6610 = vld [vmem:[%s20 + $0x2d8] sm:$0xf]
        %v6611 = vld [vmem:[%s20 + $0x2dc] sm:$0xff]
        %v6612 = vld [vmem:[%s20 + $0x2e4] sm:$0xf]
        %v6613 = vld [vmem:[%s20 + $0x2e8] sm:$0xff]
        %v6614 = vld [vmem:[%s20 + $0x2f0] sm:$0xf]
        %v6615 = vld [vmem:[%s20 + $0x2f4] sm:$0xff]
        %v6616 = vld [vmem:[%s20 + $0x2fc] sm:$0xf]
        %v6745 = vunpack.c.l.b16 %v6489
        %v6746 = vunpack.c.h.b16 %v6489
        %v6747 = vunpack.c.l.b16 %v6490
        %v6748 = vunpack.c.l.b16 %v6491
        %v6749 = vunpack.c.h.b16 %v6491
        %v6750 = vunpack.c.l.b16 %v6492
        %v6751 = vunpack.c.l.b16 %v6493
        %v6752 = vunpack.c.h.b16 %v6493
        %v6753 = vunpack.c.l.b16 %v6494
        %v6754 = vunpack.c.l.b16 %v6495
        %v6755 = vunpack.c.h.b16 %v6495
        %v6756 = vunpack.c.l.b16 %v6496
        %v6757 = vunpack.c.l.b16 %v6497
        %v6758 = vunpack.c.h.b16 %v6497
        %v6759 = vunpack.c.l.b16 %v6498
        %v6760 = vunpack.c.l.b16 %v6499
        %v6761 = vunpack.c.h.b16 %v6499
        %v6762 = vunpack.c.l.b16 %v6500
        %v6763 = vunpack.c.l.b16 %v6501
        %v6764 = vunpack.c.h.b16 %v6501
        %v6765 = vunpack.c.l.b16 %v6502
        %v6766 = vunpack.c.l.b16 %v6503
        %v6767 = vunpack.c.h.b16 %v6503
        %v6768 = vunpack.c.l.b16 %v6504
        %v6769 = vunpack.c.l.b16 %v6505
        %v6770 = vunpack.c.h.b16 %v6505
        %v6771 = vunpack.c.l.b16 %v6506
        %v6772 = vunpack.c.l.b16 %v6507
        %v6773 = vunpack.c.h.b16 %v6507
        %v6774 = vunpack.c.l.b16 %v6508
        %v6775 = vunpack.c.l.b16 %v6509
        %v6776 = vunpack.c.h.b16 %v6509
        %v6777 = vunpack.c.l.b16 %v6510
        %v6778 = vunpack.c.l.b16 %v6511
        %v6779 = vunpack.c.h.b16 %v6511
        %v6780 = vunpack.c.l.b16 %v6512
        %v6781 = vunpack.c.l.b16 %v6513
        %v6782 = vunpack.c.h.b16 %v6513
        %v6783 = vunpack.c.l.b16 %v6514
        %v6784 = vunpack.c.l.b16 %v6515
        %v6785 = vunpack.c.h.b16 %v6515
        %v6786 = vunpack.c.l.b16 %v6516
        %v6787 = vunpack.c.l.b16 %v6517
        %v6788 = vunpack.c.h.b16 %v6517
        %v6789 = vunpack.c.l.b16 %v6518
        %v6790 = vunpack.c.l.b16 %v6519
        %v6791 = vunpack.c.h.b16 %v6519
        %v6792 = vunpack.c.l.b16 %v6520
        %v6793 = vunpack.c.l.b16 %v6521
        %v6794 = vunpack.c.h.b16 %v6521
        %v6795 = vunpack.c.l.b16 %v6522
        %v6796 = vunpack.c.l.b16 %v6523
        %v6797 = vunpack.c.h.b16 %v6523
        %v6798 = vunpack.c.l.b16 %v6524
        %v6799 = vunpack.c.l.b16 %v6525
        %v6800 = vunpack.c.h.b16 %v6525
        %v6801 = vunpack.c.l.b16 %v6526
        %v6802 = vunpack.c.l.b16 %v6527
        %v6803 = vunpack.c.h.b16 %v6527
        %v6804 = vunpack.c.l.b16 %v6528
        %v6805 = vunpack.c.l.b16 %v6529
        %v6806 = vunpack.c.h.b16 %v6529
        %v6807 = vunpack.c.l.b16 %v6530
        %v6808 = vunpack.c.l.b16 %v6531
        %v6809 = vunpack.c.h.b16 %v6531
        %v6810 = vunpack.c.l.b16 %v6532
        %v6811 = vunpack.c.l.b16 %v6533
        %v6812 = vunpack.c.h.b16 %v6533
        %v6813 = vunpack.c.l.b16 %v6534
        %v6814 = vunpack.c.l.b16 %v6535
        %v6815 = vunpack.c.h.b16 %v6535
        %v6816 = vunpack.c.l.b16 %v6536
        %v6817 = vunpack.c.l.b16 %v6537
        %v6818 = vunpack.c.h.b16 %v6537
        %v6819 = vunpack.c.l.b16 %v6538
        %v6820 = vunpack.c.l.b16 %v6539
        %v6821 = vunpack.c.h.b16 %v6539
        %v6822 = vunpack.c.l.b16 %v6540
        %v6823 = vunpack.c.l.b16 %v6541
        %v6824 = vunpack.c.h.b16 %v6541
        %v6825 = vunpack.c.l.b16 %v6542
        %v6826 = vunpack.c.l.b16 %v6543
        %v6827 = vunpack.c.h.b16 %v6543
        %v6828 = vunpack.c.l.b16 %v6544
        %v6829 = vunpack.c.l.b16 %v6545
        %v6830 = vunpack.c.h.b16 %v6545
        %v6831 = vunpack.c.l.b16 %v6546
        %v6832 = vunpack.c.l.b16 %v6547
        %v6833 = vunpack.c.h.b16 %v6547
        %v6834 = vunpack.c.l.b16 %v6548
        %v6835 = vunpack.c.l.b16 %v6549
        %v6836 = vunpack.c.h.b16 %v6549
        %v6837 = vunpack.c.l.b16 %v6550
        %v6838 = vunpack.c.l.b16 %v6551
        %v6839 = vunpack.c.h.b16 %v6551
        %v6840 = vunpack.c.l.b16 %v6552
        %v6841 = vunpack.c.l.b16 %v6553
        %v6842 = vunpack.c.h.b16 %v6553
        %v6843 = vunpack.c.l.b16 %v6554
        %v6844 = vunpack.c.l.b16 %v6555
        %v6845 = vunpack.c.h.b16 %v6555
        %v6846 = vunpack.c.l.b16 %v6556
        %v6847 = vunpack.c.l.b16 %v6557
        %v6848 = vunpack.c.h.b16 %v6557
        %v6849 = vunpack.c.l.b16 %v6558
        %v6850 = vunpack.c.l.b16 %v6559
        %v6851 = vunpack.c.h.b16 %v6559
        %v6852 = vunpack.c.l.b16 %v6560
        %v6853 = vunpack.c.l.b16 %v6561
        %v6854 = vunpack.c.h.b16 %v6561
        %v6855 = vunpack.c.l.b16 %v6562
        %v6856 = vunpack.c.l.b16 %v6563
        %v6857 = vunpack.c.h.b16 %v6563
        %v6858 = vunpack.c.l.b16 %v6564
        %v6859 = vunpack.c.l.b16 %v6565
        %v6860 = vunpack.c.h.b16 %v6565
        %v6861 = vunpack.c.l.b16 %v6566
        %v6862 = vunpack.c.l.b16 %v6567
        %v6863 = vunpack.c.h.b16 %v6567
        %v6864 = vunpack.c.l.b16 %v6568
        %v6865 = vunpack.c.l.b16 %v6569
        %v6866 = vunpack.c.h.b16 %v6569
        %v6867 = vunpack.c.l.b16 %v6570
        %v6868 = vunpack.c.l.b16 %v6571
        %v6869 = vunpack.c.h.b16 %v6571
        %v6870 = vunpack.c.l.b16 %v6572
        %v6871 = vunpack.c.l.b16 %v6573
        %v6872 = vunpack.c.h.b16 %v6573
        %v6873 = vunpack.c.l.b16 %v6574
        %v6874 = vunpack.c.l.b16 %v6575
        %v6875 = vunpack.c.h.b16 %v6575
        %v6876 = vunpack.c.l.b16 %v6576
        %v6877 = vunpack.c.l.b16 %v6577
        %v6878 = vunpack.c.h.b16 %v6577
        %v6879 = vunpack.c.l.b16 %v6578
        %v6880 = vunpack.c.l.b16 %v6579
        %v6881 = vunpack.c.h.b16 %v6579
        %v6882 = vunpack.c.l.b16 %v6580
        %v6883 = vunpack.c.l.b16 %v6581
        %v6884 = vunpack.c.h.b16 %v6581
        %v6885 = vunpack.c.l.b16 %v6582
        %v6886 = vunpack.c.l.b16 %v6583
        %v6887 = vunpack.c.h.b16 %v6583
        %v6888 = vunpack.c.l.b16 %v6584
        %v6889 = vunpack.c.l.b16 %v6585
        %v6890 = vunpack.c.h.b16 %v6585
        %v6891 = vunpack.c.l.b16 %v6586
        %v6892 = vunpack.c.l.b16 %v6587
        %v6893 = vunpack.c.h.b16 %v6587
        %v6894 = vunpack.c.l.b16 %v6588
        %v6895 = vunpack.c.l.b16 %v6589
        %v6896 = vunpack.c.h.b16 %v6589
        %v6897 = vunpack.c.l.b16 %v6590
        %v6898 = vunpack.c.l.b16 %v6591
        %v6899 = vunpack.c.h.b16 %v6591
        %v6900 = vunpack.c.l.b16 %v6592
        %v6901 = vunpack.c.l.b16 %v6593
        %v6902 = vunpack.c.h.b16 %v6593
        %v6903 = vunpack.c.l.b16 %v6594
        %v6904 = vunpack.c.l.b16 %v6595
        %v6905 = vunpack.c.h.b16 %v6595
        %v6906 = vunpack.c.l.b16 %v6596
        %v6907 = vunpack.c.l.b16 %v6597
        %v6908 = vunpack.c.h.b16 %v6597
        %v6909 = vunpack.c.l.b16 %v6598
        %v6910 = vunpack.c.l.b16 %v6599
        %v6911 = vunpack.c.h.b16 %v6599
        %v6912 = vunpack.c.l.b16 %v6600
        %v6913 = vunpack.c.l.b16 %v6601
        %v6914 = vunpack.c.h.b16 %v6601
        %v6915 = vunpack.c.l.b16 %v6602
        %v6916 = vunpack.c.l.b16 %v6603
        %v6917 = vunpack.c.h.b16 %v6603
        %v6918 = vunpack.c.l.b16 %v6604
        %v6919 = vunpack.c.l.b16 %v6605
        %v6920 = vunpack.c.h.b16 %v6605
        %v6921 = vunpack.c.l.b16 %v6606
        %v6922 = vunpack.c.l.b16 %v6607
        %v6923 = vunpack.c.h.b16 %v6607
        %v6924 = vunpack.c.l.b16 %v6608
        %v6925 = vunpack.c.l.b16 %v6609
        %v6926 = vunpack.c.h.b16 %v6609
        %v6927 = vunpack.c.l.b16 %v6610
        %v6928 = vunpack.c.l.b16 %v6611
        %v6929 = vunpack.c.h.b16 %v6611
        %v6930 = vunpack.c.l.b16 %v6612
        %v6931 = vunpack.c.l.b16 %v6613
        %v6932 = vunpack.c.h.b16 %v6613
        %v6933 = vunpack.c.l.b16 %v6614
        %v6934 = vunpack.c.l.b16 %v6615
        %v6935 = vunpack.c.h.b16 %v6615
        %v6936 = vunpack.c.l.b16 %v6616
        %v6937 = vpack.c.b16 %v6748, %v6745
        %v6938 = vpack.c.b16 %v6749, %v6746
        %v6939 = vpack.c.b16 %v6750, %v6747
        %v6940 = vpack.c.b16 %v6754, %v6751
        %v6941 = vpack.c.b16 %v6755, %v6752
        %v6942 = vpack.c.b16 %v6756, %v6753
        %v6943 = vpack.c.b16 %v6760, %v6757
        %v6944 = vpack.c.b16 %v6761, %v6758
        %v6945 = vpack.c.b16 %v6762, %v6759
        %v6946 = vpack.c.b16 %v6766, %v6763
        %v6947 = vpack.c.b16 %v6767, %v6764
        %v6948 = vpack.c.b16 %v6768, %v6765
        %v6949 = vpack.c.b16 %v6772, %v6769
        %v6950 = vpack.c.b16 %v6773, %v6770
        %v6951 = vpack.c.b16 %v6774, %v6771
        %v6952 = vpack.c.b16 %v6778, %v6775
        %v6953 = vpack.c.b16 %v6779, %v6776
        %v6954 = vpack.c.b16 %v6780, %v6777
        %v6955 = vpack.c.b16 %v6784, %v6781
        %v6956 = vpack.c.b16 %v6785, %v6782
        %v6957 = vpack.c.b16 %v6786, %v6783
        %v6958 = vpack.c.b16 %v6790, %v6787
        %v6959 = vpack.c.b16 %v6791, %v6788
        %v6960 = vpack.c.b16 %v6792, %v6789
        %v6961 = vpack.c.b16 %v6796, %v6793
        %v6962 = vpack.c.b16 %v6797, %v6794
        %v6963 = vpack.c.b16 %v6798, %v6795
        %v6964 = vpack.c.b16 %v6802, %v6799
        %v6965 = vpack.c.b16 %v6803, %v6800
        %v6966 = vpack.c.b16 %v6804, %v6801
        %v6967 = vpack.c.b16 %v6808, %v6805
        %v6968 = vpack.c.b16 %v6809, %v6806
        %v6969 = vpack.c.b16 %v6810, %v6807
        %v6970 = vpack.c.b16 %v6814, %v6811
        %v6971 = vpack.c.b16 %v6815, %v6812
        %v6972 = vpack.c.b16 %v6816, %v6813
        %v6973 = vpack.c.b16 %v6820, %v6817
        %v6974 = vpack.c.b16 %v6821, %v6818
        %v6975 = vpack.c.b16 %v6822, %v6819
        %v6976 = vpack.c.b16 %v6826, %v6823
        %v6977 = vpack.c.b16 %v6827, %v6824
        %v6978 = vpack.c.b16 %v6828, %v6825
        %v6979 = vpack.c.b16 %v6832, %v6829
        %v6980 = vpack.c.b16 %v6833, %v6830
        %v6981 = vpack.c.b16 %v6834, %v6831
        %v6982 = vpack.c.b16 %v6838, %v6835
        %v6983 = vpack.c.b16 %v6839, %v6836
        %v6984 = vpack.c.b16 %v6840, %v6837
        %v6985 = vpack.c.b16 %v6844, %v6841
        %v6986 = vpack.c.b16 %v6845, %v6842
        %v6987 = vpack.c.b16 %v6846, %v6843
        %v6988 = vpack.c.b16 %v6850, %v6847
        %v6989 = vpack.c.b16 %v6851, %v6848
        %v6990 = vpack.c.b16 %v6852, %v6849
        %v6991 = vpack.c.b16 %v6856, %v6853
        %v6992 = vpack.c.b16 %v6857, %v6854
        %v6993 = vpack.c.b16 %v6858, %v6855
        %v6994 = vpack.c.b16 %v6862, %v6859
        %v6995 = vpack.c.b16 %v6863, %v6860
        %v6996 = vpack.c.b16 %v6864, %v6861
        %v6997 = vpack.c.b16 %v6868, %v6865
        %v6998 = vpack.c.b16 %v6869, %v6866
        %v6999 = vpack.c.b16 %v6870, %v6867
        %v7000 = vpack.c.b16 %v6874, %v6871
        %v7001 = vpack.c.b16 %v6875, %v6872
        %v7002 = vpack.c.b16 %v6876, %v6873
        %v7003 = vpack.c.b16 %v6880, %v6877
        %v7004 = vpack.c.b16 %v6881, %v6878
        %v7005 = vpack.c.b16 %v6882, %v6879
        %v7006 = vpack.c.b16 %v6886, %v6883
        %v7007 = vpack.c.b16 %v6887, %v6884
        %v7008 = vpack.c.b16 %v6888, %v6885
        %v7009 = vpack.c.b16 %v6892, %v6889
        %v7010 = vpack.c.b16 %v6893, %v6890
        %v7011 = vpack.c.b16 %v6894, %v6891
        %v7012 = vpack.c.b16 %v6898, %v6895
        %v7013 = vpack.c.b16 %v6899, %v6896
        %v7014 = vpack.c.b16 %v6900, %v6897
        %v7015 = vpack.c.b16 %v6904, %v6901
        %v7016 = vpack.c.b16 %v6905, %v6902
        %v7017 = vpack.c.b16 %v6906, %v6903
        %v7018 = vpack.c.b16 %v6910, %v6907
        %v7019 = vpack.c.b16 %v6911, %v6908
        %v7020 = vpack.c.b16 %v6912, %v6909
        %v7021 = vpack.c.b16 %v6916, %v6913
        %v7022 = vpack.c.b16 %v6917, %v6914
        %v7023 = vpack.c.b16 %v6918, %v6915
        %v7024 = vpack.c.b16 %v6922, %v6919
        %v7025 = vpack.c.b16 %v6923, %v6920
        %v7026 = vpack.c.b16 %v6924, %v6921
        %v7027 = vpack.c.b16 %v6928, %v6925
        %v7028 = vpack.c.b16 %v6929, %v6926
        %v7029 = vpack.c.b16 %v6930, %v6927
        %v7030 = vpack.c.b16 %v6934, %v6931
        %v7031 = vpack.c.b16 %v6935, %v6932
        %v7032 = vpack.c.b16 %v6936, %v6933
        %7129 = vmatprep.subr.bf16.mxu0 %v6938
        %7130 = vmatpush1.bf16.msra.mxu0 %v6937
        %7131 = vmatprep.subr.bf16.mxu0 %v6941
        %7132 = vmatpush1.bf16.msra.mxu0 %v6940
        %7133 = vmatprep.subr.bf16.mxu0 %v6944
        %7134 = vmatpush1.bf16.msra.mxu0 %v6943
        %7135 = vmatprep.subr.bf16.mxu0 %v6947
        %7136 = vmatpush1.bf16.msra.mxu0 %v6946
        %7137 = vmatprep.subr.bf16.mxu0 %v6950
        %7138 = vmatpush1.bf16.msra.mxu0 %v6949
        %7139 = vmatprep.subr.bf16.mxu0 %v6953
        %7140 = vmatpush1.bf16.msra.mxu0 %v6952
        %7141 = vmatprep.subr.bf16.mxu0 %v6956
        %7142 = vmatpush1.bf16.msra.mxu0 %v6955
        %7143 = vmatprep.subr.bf16.mxu0 %v6959
        %7144 = vmatpush1.bf16.msra.mxu0 %v6958
        %7145 = vmatprep.subr.bf16.mxu0 %v6962
        %7146 = vmatpush1.bf16.msra.mxu0 %v6961
        %7147 = vmatprep.subr.bf16.mxu0 %v6965
        %7148 = vmatpush1.bf16.msra.mxu0 %v6964
        %7149 = vmatprep.subr.bf16.mxu0 %v6968
        %7150 = vmatpush1.bf16.msra.mxu0 %v6967
        %7151 = vmatprep.subr.bf16.mxu0 %v6971
        %7152 = vmatpush1.bf16.msra.mxu0 %v6970
        %7153 = vmatprep.subr.bf16.mxu0 %v6974
        %7154 = vmatpush1.bf16.msra.mxu0 %v6973
        %7155 = vmatprep.subr.bf16.mxu0 %v6977
        %7156 = vmatpush1.bf16.msra.mxu0 %v6976
        %7157 = vmatprep.subr.bf16.mxu0 %v6980
        %7158 = vmatpush1.bf16.msra.mxu0 %v6979
        %7159 = vmatprep.subr.bf16.mxu0 %v6983
        %7160 = vmatpush1.bf16.msra.mxu0 %v6982
        %7161 = vmatprep.mubr.bf16.mxu0 %v6458
        %7162 = vmatmul.mubr.bf16.gmra.mrb[0].mxu0 %v6457
        %v7163 = vpop.f32.mrb[0].mxu0
        %v7164 = vadd.f32 0.0, %v7163
        %v7165 = vpop.f32.mrb[0].mxu0
        %v7166 = vadd.f32 0.0, %v7165
        %v7167 = vpop.f32.mrb[0].mxu0
        %v7168 = vadd.f32 0.0, %v7167
        %v7169 = vpop.f32.mrb[0].mxu0
        %v7170 = vadd.f32 0.0, %v7169
        %7171 = vmatprep.mubr.bf16.mxu0 %v6462
        %7172 = vmatmul.mubr.bf16.gmra.mrb[0].mxu0 %v6461
        %v7173 = vpop.f32.mrb[0].mxu0
        %v7174 = vadd.f32 0.0, %v7173
        %v7175 = vpop.f32.mrb[0].mxu0
        %v7176 = vadd.f32 0.0, %v7175
        %v7177 = vpop.f32.mrb[0].mxu0
        %v7178 = vadd.f32 0.0, %v7177
        %v7179 = vpop.f32.mrb[0].mxu0
        %v7180 = vadd.f32 0.0, %v7179
        %7181 = vmatprep.mubr.bf16.mxu0 %v6466
        %7182 = vmatmul.mubr.bf16.gmra.mrb[0].mxu0 %v6465
        %v7183 = vpop.f32.mrb[0].mxu0
        %v7184 = vadd.f32 0.0, %v7183
        %v7185 = vpop.f32.mrb[0].mxu0
        %v7186 = vadd.f32 0.0, %v7185
        %v7187 = vpop.f32.mrb[0].mxu0
        %v7188 = vadd.f32 0.0, %v7187
        %v7189 = vpop.f32.mrb[0].mxu0
        %v7190 = vadd.f32 0.0, %v7189
        %7191 = vmatprep.mubr.bf16.mxu0 %v6470
        %7192 = vmatmul.mubr.bf16.gmra.mrb[0].mxu0 %v6469
        %v7193 = vpop.f32.mrb[0].mxu0
        %v7194 = vadd.f32 0.0, %v7193
        %v7195 = vpop.f32.mrb[0].mxu0
        %v7196 = vadd.f32 0.0, %v7195
        %v7197 = vpop.f32.mrb[0].mxu0
        %v7198 = vadd.f32 0.0, %v7197
        %v7199 = vpop.f32.mrb[0].mxu0
        %v7200 = vadd.f32 0.0, %v7199
        %7201 = vmatprep.mubr.bf16.mxu0 %v6474
        %7202 = vmatmul.mubr.bf16.gmra.mrb[0].mxu0 %v6473
        %v7203 = vpop.f32.mrb[0].mxu0
        %v7204 = vadd.f32 0.0, %v7203
        %v7205 = vpop.f32.mrb[0].mxu0
        %v7206 = vadd.f32 0.0, %v7205
        %v7207 = vpop.f32.mrb[0].mxu0
        %v7208 = vadd.f32 0.0, %v7207
        %v7209 = vpop.f32.mrb[0].mxu0
        %v7210 = vadd.f32 0.0, %v7209
        %7211 = vmatprep.mubr.bf16.mxu0 %v6478
        %7212 = vmatmul.mubr.bf16.gmra.mrb[0].mxu0 %v6477
        %v7213 = vpop.f32.mrb[0].mxu0
        %v7214 = vadd.f32 0.0, %v7213
        %v7215 = vpop.f32.mrb[0].mxu0
        %v7216 = vadd.f32 0.0, %v7215
        %v7217 = vpop.f32.mrb[0].mxu0
        %v7218 = vadd.f32 0.0, %v7217
        %v7219 = vpop.f32.mrb[0].mxu0
        %v7220 = vadd.f32 0.0, %v7219
        %7221 = vmatprep.mubr.bf16.mxu0 %v6482
        %7222 = vmatmul.mubr.bf16.gmra.mrb[0].mxu0 %v6481
        %v7223 = vpop.f32.mrb[0].mxu0
        %v7224 = vadd.f32 0.0, %v7223
        %v7225 = vpop.f32.mrb[0].mxu0
        %v7226 = vadd.f32 0.0, %v7225
        %v7227 = vpop.f32.mrb[0].mxu0
        %v7228 = vadd.f32 0.0, %v7227
        %v7229 = vpop.f32.mrb[0].mxu0
        %v7230 = vadd.f32 0.0, %v7229
        %7231 = vmatprep.mubr.bf16.mxu0 %v6486
        %7232 = vmatmul.mubr.bf16.gmra.mrb[0].mxu0 %v6485
        %v7233 = vpop.f32.mrb[0].mxu0
        %v7234 = vadd.f32 0.0, %v7233
        %v7235 = vpop.f32.mrb[0].mxu0
        %v7236 = vadd.f32 0.0, %v7235
        %v7237 = vpop.f32.mrb[0].mxu0
        %v7238 = vadd.f32 0.0, %v7237
        %v7239 = vpop.f32.mrb[0].mxu0
        %v7240 = vadd.f32 0.0, %v7239
        %7241 = vdwg.mxu0
        %7242 = vmatprep.subr.bf16.mxu0 %v6986
        %7243 = vmatpush1.bf16.msra.mxu0 %v6985
        %7244 = vmatprep.subr.bf16.mxu0 %v6989
        %7245 = vmatpush1.bf16.msra.mxu0 %v6988
        %7246 = vmatprep.subr.bf16.mxu0 %v6992
        %7247 = vmatpush1.bf16.msra.mxu0 %v6991
        %7248 = vmatprep.subr.bf16.mxu0 %v6995
        %7249 = vmatpush1.bf16.msra.mxu0 %v6994
        %7250 = vmatprep.subr.bf16.mxu0 %v6998
        %7251 = vmatpush1.bf16.msra.mxu0 %v6997
        %7252 = vmatprep.subr.bf16.mxu0 %v7001
        %7253 = vmatpush1.bf16.msra.mxu0 %v7000
        %7254 = vmatprep.subr.bf16.mxu0 %v7004
        %7255 = vmatpush1.bf16.msra.mxu0 %v7003
        %7256 = vmatprep.subr.bf16.mxu0 %v7007
        %7257 = vmatpush1.bf16.msra.mxu0 %v7006
        %7258 = vmatprep.subr.bf16.mxu0 %v7010
        %7259 = vmatpush1.bf16.msra.mxu0 %v7009
        %7260 = vmatprep.subr.bf16.mxu0 %v7013
        %7261 = vmatpush1.bf16.msra.mxu0 %v7012
        %7262 = vmatprep.subr.bf16.mxu0 %v7016
        %7263 = vmatpush1.bf16.msra.mxu0 %v7015
        %7264 = vmatprep.subr.bf16.mxu0 %v7019
        %7265 = vmatpush1.bf16.msra.mxu0 %v7018
        %7266 = vmatprep.subr.bf16.mxu0 %v7022
        %7267 = vmatpush1.bf16.msra.mxu0 %v7021
        %7268 = vmatprep.subr.bf16.mxu0 %v7025
        %7269 = vmatpush1.bf16.msra.mxu0 %v7024
        %7270 = vmatprep.subr.bf16.mxu0 %v7028
        %7271 = vmatpush1.bf16.msra.mxu0 %v7027
        %7272 = vmatprep.subr.bf16.mxu0 %v7031
        %7273 = vmatpush1.bf16.msra.mxu0 %v7030
        %7274 = vmatprep.mubr.bf16.mxu0 %v6460
        %7275 = vmatmul.mubr.bf16.gmra.mrb[0].mxu0 %v6459
        %v7276 = vpop.f32.mrb[0].mxu0
        %v7277 = vadd.f32 %v7164, %v7276
        %v7278 = vpop.f32.mrb[0].mxu0
        %v7279 = vadd.f32 %v7166, %v7278
        %v7280 = vpop.f32.mrb[0].mxu0
        %v7281 = vadd.f32 %v7168, %v7280
        %v7282 = vpop.f32.mrb[0].mxu0
        %v7283 = vadd.f32 %v7170, %v7282
        %7284 = vmatprep.mubr.bf16.mxu0 %v6464
        %7285 = vmatmul.mubr.bf16.gmra.mrb[0].mxu0 %v6463
        %v7286 = vpop.f32.mrb[0].mxu0
        %v7287 = vadd.f32 %v7174, %v7286
        %v7288 = vpop.f32.mrb[0].mxu0
        %v7289 = vadd.f32 %v7176, %v7288
        %v7290 = vpop.f32.mrb[0].mxu0
        %v7291 = vadd.f32 %v7178, %v7290
        %v7292 = vpop.f32.mrb[0].mxu0
        %v7293 = vadd.f32 %v7180, %v7292
        %7294 = vmatprep.mubr.bf16.mxu0 %v6468
        %7295 = vmatmul.mubr.bf16.gmra.mrb[0].mxu0 %v6467
        %v7296 = vpop.f32.mrb[0].mxu0
        %v7297 = vadd.f32 %v7184, %v7296
        %v7298 = vpop.f32.mrb[0].mxu0
        %v7299 = vadd.f32 %v7186, %v7298
        %v7300 = vpop.f32.mrb[0].mxu0
        %v7301 = vadd.f32 %v7188, %v7300
        %v7302 = vpop.f32.mrb[0].mxu0
        %v7303 = vadd.f32 %v7190, %v7302
        %7304 = vmatprep.mubr.bf16.mxu0 %v6472
        %7305 = vmatmul.mubr.bf16.gmra.mrb[0].mxu0 %v6471
        %v7306 = vpop.f32.mrb[0].mxu0
        %v7307 = vadd.f32 %v7194, %v7306
        %v7308 = vpop.f32.mrb[0].mxu0
        %v7309 = vadd.f32 %v7196, %v7308
        %v7310 = vpop.f32.mrb[0].mxu0
        %v7311 = vadd.f32 %v7198, %v7310
        %v7312 = vpop.f32.mrb[0].mxu0
        %v7313 = vadd.f32 %v7200, %v7312
        %7314 = vmatprep.mubr.bf16.mxu0 %v6476
        %7315 = vmatmul.mubr.bf16.gmra.mrb[0].mxu0 %v6475
        %v7316 = vpop.f32.mrb[0].mxu0
        %v7317 = vadd.f32 %v7204, %v7316
        %v7318 = vpop.f32.mrb[0].mxu0
        %v7319 = vadd.f32 %v7206, %v7318
        %v7320 = vpop.f32.mrb[0].mxu0
        %v7321 = vadd.f32 %v7208, %v7320
        %v7322 = vpop.f32.mrb[0].mxu0
        %v7323 = vadd.f32 %v7210, %v7322
        %7324 = vmatprep.mubr.bf16.mxu0 %v6480
        %7325 = vmatmul.mubr.bf16.gmra.mrb[0].mxu0 %v6479
        %v7326 = vpop.f32.mrb[0].mxu0
        %v7327 = vadd.f32 %v7214, %v7326
        %v7328 = vpop.f32.mrb[0].mxu0
        %v7329 = vadd.f32 %v7216, %v7328
        %v7330 = vpop.f32.mrb[0].mxu0
        %v7331 = vadd.f32 %v7218, %v7330
        %v7332 = vpop.f32.mrb[0].mxu0
        %v7333 = vadd.f32 %v7220, %v7332
        %7334 = vmatprep.mubr.bf16.mxu0 %v6484
        %7335 = vmatmul.mubr.bf16.gmra.mrb[0].mxu0 %v6483
        %v7336 = vpop.f32.mrb[0].mxu0
        %v7337 = vadd.f32 %v7224, %v7336
        %v7338 = vpop.f32.mrb[0].mxu0
        %v7339 = vadd.f32 %v7226, %v7338
        %v7340 = vpop.f32.mrb[0].mxu0
        %v7341 = vadd.f32 %v7228, %v7340
        %v7342 = vpop.f32.mrb[0].mxu0
        %v7343 = vadd.f32 %v7230, %v7342
        %7344 = vmatprep.mubr.bf16.mxu0 %v6488
        %7345 = vmatmul.mubr.bf16.gmra.mrb[0].mxu0 %v6487
        %v7346 = vpop.f32.mrb[0].mxu0
        %v7347 = vadd.f32 %v7234, %v7346
        %v7348 = vpop.f32.mrb[0].mxu0
        %v7349 = vadd.f32 %v7236, %v7348
        %v7350 = vpop.f32.mrb[0].mxu0
        %v7351 = vadd.f32 %v7238, %v7350
        %v7352 = vpop.f32.mrb[0].mxu0
        %v7353 = vadd.f32 %v7240, %v7352
        %7354 = vdwg.mxu0
        %7355 = vmatprep.subr.bf16.mxu0 0
        %7356 = vmatpush1.bf16.msra.mxu0 %v6939
        %7357 = vmatprep.subr.bf16.mxu0 0
        %7358 = vmatpush1.bf16.msra.mxu0 %v6942
        %7359 = vmatprep.subr.bf16.mxu0 0
        %7360 = vmatpush1.bf16.msra.mxu0 %v6945
        %7361 = vmatprep.subr.bf16.mxu0 0
        %7362 = vmatpush1.bf16.msra.mxu0 %v6948
        %7363 = vmatprep.subr.bf16.mxu0 0
        %7364 = vmatpush1.bf16.msra.mxu0 %v6951
        %7365 = vmatprep.subr.bf16.mxu0 0
        %7366 = vmatpush1.bf16.msra.mxu0 %v6954
        %7367 = vmatprep.subr.bf16.mxu0 0
        %7368 = vmatpush1.bf16.msra.mxu0 %v6957
        %7369 = vmatprep.subr.bf16.mxu0 0
        %7370 = vmatpush1.bf16.msra.mxu0 %v6960
        %7371 = vmatprep.subr.bf16.mxu0 0
        %7372 = vmatpush1.bf16.msra.mxu0 %v6963
        %7373 = vmatprep.subr.bf16.mxu0 0
        %7374 = vmatpush1.bf16.msra.mxu0 %v6966
        %7375 = vmatprep.subr.bf16.mxu0 0
        %7376 = vmatpush1.bf16.msra.mxu0 %v6969
        %7377 = vmatprep.subr.bf16.mxu0 0
        %7378 = vmatpush1.bf16.msra.mxu0 %v6972
        %7379 = vmatprep.subr.bf16.mxu0 0
        %7380 = vmatpush1.bf16.msra.mxu0 %v6975
        %7381 = vmatprep.subr.bf16.mxu0 0
        %7382 = vmatpush1.bf16.msra.mxu0 %v6978
        %7383 = vmatprep.subr.bf16.mxu0 0
        %7384 = vmatpush1.bf16.msra.mxu0 %v6981
        %7385 = vmatprep.subr.bf16.mxu0 0
        %7386 = vmatpush1.bf16.msra.mxu0 %v6984
        %7387 = vmatprep.mubr.bf16.mxu0 %v6458
        %7388 = vmatmul.mubr.bf16.gmra.mrb[0].mxu0 %v6457
        %v7389 = vpop.f32.mrb[0].mxu0
        %v7390 = vadd.f32 0.0, %v7389
        %v7391 = vpop.f32.mrb[0].mxu0
        %v7392 = vpop.f32.mrb[0].mxu0
        %v7393 = vadd.f32 0.0, %v7392
        %v7394 = vpop.f32.mrb[0].mxu0
        %7395 = vmatprep.mubr.bf16.mxu0 %v6462
        %7396 = vmatmul.mubr.bf16.gmra.mrb[0].mxu0 %v6461
        %v7397 = vpop.f32.mrb[0].mxu0
        %v7398 = vadd.f32 0.0, %v7397
        %v7399 = vpop.f32.mrb[0].mxu0
        %v7400 = vpop.f32.mrb[0].mxu0
        %v7401 = vadd.f32 0.0, %v7400
        %v7402 = vpop.f32.mrb[0].mxu0
        %7403 = vmatprep.mubr.bf16.mxu0 %v6466
        %7404 = vmatmul.mubr.bf16.gmra.mrb[0].mxu0 %v6465
        %v7405 = vpop.f32.mrb[0].mxu0
        %v7406 = vadd.f32 0.0, %v7405
        %v7407 = vpop.f32.mrb[0].mxu0
        %v7408 = vpop.f32.mrb[0].mxu0
        %v7409 = vadd.f32 0.0, %v7408
        %v7410 = vpop.f32.mrb[0].mxu0
        %7411 = vmatprep.mubr.bf16.mxu0 %v6470
        %7412 = vmatmul.mubr.bf16.gmra.mrb[0].mxu0 %v6469
        %v7413 = vpop.f32.mrb[0].mxu0
        %v7414 = vadd.f32 0.0, %v7413
        %v7415 = vpop.f32.mrb[0].mxu0
        %v7416 = vpop.f32.mrb[0].mxu0
        %v7417 = vadd.f32 0.0, %v7416
        %v7418 = vpop.f32.mrb[0].mxu0
        %7419 = vmatprep.mubr.bf16.mxu0 %v6474
        %7420 = vmatmul.mubr.bf16.gmra.mrb[0].mxu0 %v6473
        %v7421 = vpop.f32.mrb[0].mxu0
        %v7422 = vadd.f32 0.0, %v7421
        %v7423 = vpop.f32.mrb[0].mxu0
        %v7424 = vpop.f32.mrb[0].mxu0
        %v7425 = vadd.f32 0.0, %v7424
        %v7426 = vpop.f32.mrb[0].mxu0
        %7427 = vmatprep.mubr.bf16.mxu0 %v6478
        %7428 = vmatmul.mubr.bf16.gmra.mrb[0].mxu0 %v6477
        %v7429 = vpop.f32.mrb[0].mxu0
        %v7430 = vadd.f32 0.0, %v7429
        %v7431 = vpop.f32.mrb[0].mxu0
        %v7432 = vpop.f32.mrb[0].mxu0
        %v7433 = vadd.f32 0.0, %v7432
        %v7434 = vpop.f32.mrb[0].mxu0
        %7435 = vmatprep.mubr.bf16.mxu0 %v6482
        %7436 = vmatmul.mubr.bf16.gmra.mrb[0].mxu0 %v6481
        %v7437 = vpop.f32.mrb[0].mxu0
        %v7438 = vadd.f32 0.0, %v7437
        %v7439 = vpop.f32.mrb[0].mxu0
        %v7440 = vpop.f32.mrb[0].mxu0
        %v7441 = vadd.f32 0.0, %v7440
        %v7442 = vpop.f32.mrb[0].mxu0
        %7443 = vmatprep.mubr.bf16.mxu0 %v6486
        %7444 = vmatmul.mubr.bf16.gmra.mrb[0].mxu0 %v6485
        %v7445 = vpop.f32.mrb[0].mxu0
        %v7446 = vadd.f32 0.0, %v7445
        %v7447 = vpop.f32.mrb[0].mxu0
        %v7448 = vpop.f32.mrb[0].mxu0
        %v7449 = vadd.f32 0.0, %v7448
        %v7450 = vpop.f32.mrb[0].mxu0
        %7451 = vdwg.mxu0
        %7452 = vmatprep.subr.bf16.mxu0 0
        %7453 = vmatpush1.bf16.msra.mxu0 %v6987
        %7454 = vmatprep.subr.bf16.mxu0 0
        %7455 = vmatpush1.bf16.msra.mxu0 %v6990
        %7456 = vmatprep.subr.bf16.mxu0 0
        %7457 = vmatpush1.bf16.msra.mxu0 %v6993
        %7458 = vmatprep.subr.bf16.mxu0 0
        %7459 = vmatpush1.bf16.msra.mxu0 %v6996
        %7460 = vmatprep.subr.bf16.mxu0 0
        %7461 = vmatpush1.bf16.msra.mxu0 %v6999
        %7462 = vmatprep.subr.bf16.mxu0 0
        %7463 = vmatpush1.bf16.msra.mxu0 %v7002
        %7464 = vmatprep.subr.bf16.mxu0 0
        %7465 = vmatpush1.bf16.msra.mxu0 %v7005
        %7466 = vmatprep.subr.bf16.mxu0 0
        %7467 = vmatpush1.bf16.msra.mxu0 %v7008
        %7468 = vmatprep.subr.bf16.mxu0 0
        %7469 = vmatpush1.bf16.msra.mxu0 %v7011
        %7470 = vmatprep.subr.bf16.mxu0 0
        %7471 = vmatpush1.bf16.msra.mxu0 %v7014
        %7472 = vmatprep.subr.bf16.mxu0 0
        %7473 = vmatpush1.bf16.msra.mxu0 %v7017
        %7474 = vmatprep.subr.bf16.mxu0 0
        %7475 = vmatpush1.bf16.msra.mxu0 %v7020
        %7476 = vmatprep.subr.bf16.mxu0 0
        %7477 = vmatpush1.bf16.msra.mxu0 %v7023
        %7478 = vmatprep.subr.bf16.mxu0 0
        %7479 = vmatpush1.bf16.msra.mxu0 %v7026
        %7480 = vmatprep.subr.bf16.mxu0 0
        %7481 = vmatpush1.bf16.msra.mxu0 %v7029
        %7482 = vmatprep.subr.bf16.mxu0 0
        %7483 = vmatpush1.bf16.msra.mxu0 %v7032
        %7484 = vmatprep.mubr.bf16.mxu0 %v6460
        %7485 = vmatmul.mubr.bf16.gmra.mrb[0].mxu0 %v6459
        %v7486 = vpop.f32.mrb[0].mxu0
        %v7487 = vadd.f32 %v7390, %v7486
        %v7488 = vpop.f32.mrb[0].mxu0
        %v7489 = vpop.f32.mrb[0].mxu0
        %v7490 = vadd.f32 %v7393, %v7489
        %v7491 = vpop.f32.mrb[0].mxu0
        %7492 = vmatprep.mubr.bf16.mxu0 %v6464
        %7493 = vmatmul.mubr.bf16.gmra.mrb[0].mxu0 %v6463
        %v7494 = vpop.f32.mrb[0].mxu0
        %v7495 = vadd.f32 %v7398, %v7494
        %v7496 = vpop.f32.mrb[0].mxu0
        %v7497 = vpop.f32.mrb[0].mxu0
        %v7498 = vadd.f32 %v7401, %v7497
        %v7499 = vpop.f32.mrb[0].mxu0
        %7500 = vmatprep.mubr.bf16.mxu0 %v6468
        %7501 = vmatmul.mubr.bf16.gmra.mrb[0].mxu0 %v6467
        %v7502 = vpop.f32.mrb[0].mxu0
        %v7503 = vadd.f32 %v7406, %v7502
        %v7504 = vpop.f32.mrb[0].mxu0
        %v7505 = vpop.f32.mrb[0].mxu0
        %v7506 = vadd.f32 %v7409, %v7505
        %v7507 = vpop.f32.mrb[0].mxu0
        %7508 = vmatprep.mubr.bf16.mxu0 %v6472
        %7509 = vmatmul.mubr.bf16.gmra.mrb[0].mxu0 %v6471
        %v7510 = vpop.f32.mrb[0].mxu0
        %v7511 = vadd.f32 %v7414, %v7510
        %v7512 = vpop.f32.mrb[0].mxu0
        %v7513 = vpop.f32.mrb[0].mxu0
        %v7514 = vadd.f32 %v7417, %v7513
        %v7515 = vpop.f32.mrb[0].mxu0
        %7516 = vmatprep.mubr.bf16.mxu0 %v6476
        %7517 = vmatmul.mubr.bf16.gmra.mrb[0].mxu0 %v6475
        %v7518 = vpop.f32.mrb[0].mxu0
        %v7519 = vadd.f32 %v7422, %v7518
        %v7520 = vpop.f32.mrb[0].mxu0
        %v7521 = vpop.f32.mrb[0].mxu0
        %v7522 = vadd.f32 %v7425, %v7521
        %v7523 = vpop.f32.mrb[0].mxu0
        %7524 = vmatprep.mubr.bf16.mxu0 %v6480
        %7525 = vmatmul.mubr.bf16.gmra.mrb[0].mxu0 %v6479
        %v7526 = vpop.f32.mrb[0].mxu0
        %v7527 = vadd.f32 %v7430, %v7526
        %v7528 = vpop.f32.mrb[0].mxu0
        %v7529 = vpop.f32.mrb[0].mxu0
        %v7530 = vadd.f32 %v7433, %v7529
        %v7531 = vpop.f32.mrb[0].mxu0
        %7532 = vmatprep.mubr.bf16.mxu0 %v6484
        %7533 = vmatmul.mubr.bf16.gmra.mrb[0].mxu0 %v6483
        %v7534 = vpop.f32.mrb[0].mxu0
        %v7535 = vadd.f32 %v7438, %v7534
        %v7536 = vpop.f32.mrb[0].mxu0
        %v7537 = vpop.f32.mrb[0].mxu0
        %v7538 = vadd.f32 %v7441, %v7537
        %v7539 = vpop.f32.mrb[0].mxu0
        %7540 = vmatprep.mubr.bf16.mxu0 %v6488
        %7541 = vmatmul.mubr.bf16.gmra.mrb[0].mxu0 %v6487
        %v7542 = vpop.f32.mrb[0].mxu0
        %v7543 = vadd.f32 %v7446, %v7542
        %v7544 = vpop.f32.mrb[0].mxu0
        %v7545 = vpop.f32.mrb[0].mxu0
        %v7546 = vadd.f32 %v7449, %v7545
        %v7547 = vpop.f32.mrb[0].mxu0
        %7548 = vdwg.mxu0
        %v7549 = vadd.f32 %v5879, %v7277
        %v7550 = vadd.f32 %v5881, %v7279
        %v7551 = vadd.f32 %v6089, %v7487
        %v7552 = vadd.f32 %v5883, %v7281
        %v7553 = vadd.f32 %v5885, %v7283
        %v7554 = vadd.f32 %v6092, %v7490
        %v7555 = vadd.f32 %v5889, %v7287
        %v7556 = vadd.f32 %v5891, %v7289
        %v7557 = vadd.f32 %v6097, %v7495
        %v7558 = vadd.f32 %v5893, %v7291
        %v7559 = vadd.f32 %v5895, %v7293
        %v7560 = vadd.f32 %v6100, %v7498
        %v7561 = vadd.f32 %v5899, %v7297
        %v7562 = vadd.f32 %v5901, %v7299
        %v7563 = vadd.f32 %v6105, %v7503
        %v7564 = vadd.f32 %v5903, %v7301
        %v7565 = vadd.f32 %v5905, %v7303
        %v7566 = vadd.f32 %v6108, %v7506
        %v7567 = vadd.f32 %v5909, %v7307
        %v7568 = vadd.f32 %v5911, %v7309
        %v7569 = vadd.f32 %v6113, %v7511
        %v7570 = vadd.f32 %v5913, %v7311
        %v7571 = vadd.f32 %v5915, %v7313
        %v7572 = vadd.f32 %v6116, %v7514
        %v7573 = vadd.f32 %v5919, %v7317
        %v7574 = vadd.f32 %v5921, %v7319
        %v7575 = vadd.f32 %v6121, %v7519
        %v7576 = vadd.f32 %v5923, %v7321
        %v7577 = vadd.f32 %v5925, %v7323
        %v7578 = vadd.f32 %v6124, %v7522
        %v7579 = vadd.f32 %v5929, %v7327
        %v7580 = vadd.f32 %v5931, %v7329
        %v7581 = vadd.f32 %v6129, %v7527
        %v7582 = vadd.f32 %v5933, %v7331
        %v7583 = vadd.f32 %v5935, %v7333
        %v7584 = vadd.f32 %v6132, %v7530
        %v7585 = vadd.f32 %v5939, %v7337
        %v7586 = vadd.f32 %v5941, %v7339
        %v7587 = vadd.f32 %v6137, %v7535
        %v7588 = vadd.f32 %v5943, %v7341
        %v7589 = vadd.f32 %v5945, %v7343
        %v7590 = vadd.f32 %v6140, %v7538
        %v7591 = vadd.f32 %v5949, %v7347
        %v7592 = vadd.f32 %v5951, %v7349
        %v7593 = vadd.f32 %v6145, %v7543
        %v7594 = vadd.f32 %v5953, %v7351
        %v7595 = vadd.f32 %v5955, %v7353
        %v7596 = vadd.f32 %v6148, %v7546
        %v7597 = vld [vmem:[%s21] sm:$0x7]
        %v7599 = vlaneseq
        %v7600 = vshrl.u32 %v7599, 7
        %v7601 = vsub.s32 0, %v7600
        %v7602 = vrot.slane %v7597, %v7601
        %v7603 = vlaneseq
        %v7604 = vshrl.u32 %v7603, 7
        %v7605 = vsub.s32 1, %v7604
        %v7606 = vrot.slane %v7597, %v7605
        %v7607 = vlaneseq
        %v7608 = vshrl.u32 %v7607, 7
        %v7609 = vsub.s32 2, %v7608
        %v7610 = vrot.slane %v7597, %v7609
        %v7614 = vadd.f32 %v7549, %v7602
        %v7615 = vadd.f32 %v7550, %v7606
        %v7616 = vadd.f32 %v7551, %v7610
        %v7617 = vadd.f32 %v7552, %v7602
        %v7618 = vadd.f32 %v7553, %v7606
        %v7619 = vadd.f32 %v7554, %v7610
        %v7620 = vadd.f32 %v7555, %v7602
        %v7621 = vadd.f32 %v7556, %v7606
        %v7622 = vadd.f32 %v7557, %v7610
        %v7623 = vadd.f32 %v7558, %v7602
        %v7624 = vadd.f32 %v7559, %v7606
        %v7625 = vadd.f32 %v7560, %v7610
        %v7626 = vadd.f32 %v7561, %v7602
        %v7627 = vadd.f32 %v7562, %v7606
        %v7628 = vadd.f32 %v7563, %v7610
        %v7629 = vadd.f32 %v7564, %v7602
        %v7630 = vadd.f32 %v7565, %v7606
        %v7631 = vadd.f32 %v7566, %v7610
        %v7632 = vadd.f32 %v7567, %v7602
        %v7633 = vadd.f32 %v7568, %v7606
        %v7634 = vadd.f32 %v7569, %v7610
        %v7635 = vadd.f32 %v7570, %v7602
        %v7636 = vadd.f32 %v7571, %v7606
        %v7637 = vadd.f32 %v7572, %v7610
        %v7638 = vadd.f32 %v7573, %v7602
        %v7639 = vadd.f32 %v7574, %v7606
        %v7640 = vadd.f32 %v7575, %v7610
        %v7641 = vadd.f32 %v7576, %v7602
        %v7642 = vadd.f32 %v7577, %v7606
        %v7643 = vadd.f32 %v7578, %v7610
        %v7644 = vadd.f32 %v7579, %v7602
        %v7645 = vadd.f32 %v7580, %v7606
        %v7646 = vadd.f32 %v7581, %v7610
        %v7647 = vadd.f32 %v7582, %v7602
        %v7648 = vadd.f32 %v7583, %v7606
        %v7649 = vadd.f32 %v7584, %v7610
        %v7650 = vadd.f32 %v7585, %v7602
        %v7651 = vadd.f32 %v7586, %v7606
        %v7652 = vadd.f32 %v7587, %v7610
        %v7653 = vadd.f32 %v7588, %v7602
        %v7654 = vadd.f32 %v7589, %v7606
        %v7655 = vadd.f32 %v7590, %v7610
        %v7656 = vadd.f32 %v7591, %v7602
        %v7657 = vadd.f32 %v7592, %v7606
        %v7658 = vadd.f32 %v7593, %v7610
        %v7659 = vadd.f32 %v7594, %v7602
        %v7660 = vadd.f32 %v7595, %v7606
        %v7661 = vadd.f32 %v7596, %v7610
        %v7662 = vsub.f32 0.0, %v7614
        %v7663 = vsub.f32 0.0, %v7615
        %v7664 = vsub.f32 0.0, %v7616
        %v7665 = vsub.f32 0.0, %v7617
        %v7666 = vsub.f32 0.0, %v7618
        %v7667 = vsub.f32 0.0, %v7619
        %v7668 = vsub.f32 0.0, %v7620
        %v7669 = vsub.f32 0.0, %v7621
        %v7670 = vsub.f32 0.0, %v7622
        %v7671 = vsub.f32 0.0, %v7623
        %v7672 = vsub.f32 0.0, %v7624
        %v7673 = vsub.f32 0.0, %v7625
        %v7674 = vsub.f32 0.0, %v7626
        %v7675 = vsub.f32 0.0, %v7627
        %v7676 = vsub.f32 0.0, %v7628
        %v7677 = vsub.f32 0.0, %v7629
        %v7678 = vsub.f32 0.0, %v7630
        %v7679 = vsub.f32 0.0, %v7631
        %v7680 = vsub.f32 0.0, %v7632
        %v7681 = vsub.f32 0.0, %v7633
        %v7682 = vsub.f32 0.0, %v7634
        %v7683 = vsub.f32 0.0, %v7635
        %v7684 = vsub.f32 0.0, %v7636
        %v7685 = vsub.f32 0.0, %v7637
        %v7686 = vsub.f32 0.0, %v7638
        %v7687 = vsub.f32 0.0, %v7639
        %v7688 = vsub.f32 0.0, %v7640
        %v7689 = vsub.f32 0.0, %v7641
        %v7690 = vsub.f32 0.0, %v7642
        %v7691 = vsub.f32 0.0, %v7643
        %v7692 = vsub.f32 0.0, %v7644
        %v7693 = vsub.f32 0.0, %v7645
        %v7694 = vsub.f32 0.0, %v7646
        %v7695 = vsub.f32 0.0, %v7647
        %v7696 = vsub.f32 0.0, %v7648
        %v7697 = vsub.f32 0.0, %v7649
        %v7698 = vsub.f32 0.0, %v7650
        %v7699 = vsub.f32 0.0, %v7651
        %v7700 = vsub.f32 0.0, %v7652
        %v7701 = vsub.f32 0.0, %v7653
        %v7702 = vsub.f32 0.0, %v7654
        %v7703 = vsub.f32 0.0, %v7655
        %v7704 = vsub.f32 0.0, %v7656
        %v7705 = vsub.f32 0.0, %v7657
        %v7706 = vsub.f32 0.0, %v7658
        %v7707 = vsub.f32 0.0, %v7659
        %v7708 = vsub.f32 0.0, %v7660
        %v7709 = vsub.f32 0.0, %v7661
        %v7710 = vmul.f32 %v7662, 1.442695
        %v7711 = vpow.pop %v7710
        %v7712 = vmul.f32 %v7663, 1.442695
        %v7713 = vpow.pop %v7712
        %v7714 = vmul.f32 %v7664, 1.442695
        %v7715 = vpow.pop %v7714
        %v7716 = vmul.f32 %v7665, 1.442695
        %v7717 = vpow.pop %v7716
        %v7718 = vmul.f32 %v7666, 1.442695
        %v7719 = vpow.pop %v7718
        %v7720 = vmul.f32 %v7667, 1.442695
        %v7721 = vpow.pop %v7720
        %v7722 = vmul.f32 %v7668, 1.442695
        %v7723 = vpow.pop %v7722
        %v7724 = vmul.f32 %v7669, 1.442695
        %v7725 = vpow.pop %v7724
        %v7726 = vmul.f32 %v7670, 1.442695
        %v7727 = vpow.pop %v7726
        %v7728 = vmul.f32 %v7671, 1.442695
        %v7729 = vpow.pop %v7728
        %v7730 = vmul.f32 %v7672, 1.442695
        %v7731 = vpow.pop %v7730
        %v7732 = vmul.f32 %v7673, 1.442695
        %v7733 = vpow.pop %v7732
        %v7734 = vmul.f32 %v7674, 1.442695
        %v7735 = vpow.pop %v7734
        %v7736 = vmul.f32 %v7675, 1.442695
        %v7737 = vpow.pop %v7736
        %v7738 = vmul.f32 %v7676, 1.442695
        %v7739 = vpow.pop %v7738
        %v7740 = vmul.f32 %v7677, 1.442695
        %v7741 = vpow.pop %v7740
        %v7742 = vmul.f32 %v7678, 1.442695
        %v7743 = vpow.pop %v7742
        %v7744 = vmul.f32 %v7679, 1.442695
        %v7745 = vpow.pop %v7744
        %v7746 = vmul.f32 %v7680, 1.442695
        %v7747 = vpow.pop %v7746
        %v7748 = vmul.f32 %v7681, 1.442695
        %v7749 = vpow.pop %v7748
        %v7750 = vmul.f32 %v7682, 1.442695
        %v7751 = vpow.pop %v7750
        %v7752 = vmul.f32 %v7683, 1.442695
        %v7753 = vpow.pop %v7752
        %v7754 = vmul.f32 %v7684, 1.442695
        %v7755 = vpow.pop %v7754
        %v7756 = vmul.f32 %v7685, 1.442695
        %v7757 = vpow.pop %v7756
        %v7758 = vmul.f32 %v7686, 1.442695
        %v7759 = vpow.pop %v7758
        %v7760 = vmul.f32 %v7687, 1.442695
        %v7761 = vpow.pop %v7760
        %v7762 = vmul.f32 %v7688, 1.442695
        %v7763 = vpow.pop %v7762
        %v7764 = vmul.f32 %v7689, 1.442695
        %v7765 = vpow.pop %v7764
        %v7766 = vmul.f32 %v7690, 1.442695
        %v7767 = vpow.pop %v7766
        %v7768 = vmul.f32 %v7691, 1.442695
        %v7769 = vpow.pop %v7768
        %v7770 = vmul.f32 %v7692, 1.442695
        %v7771 = vpow.pop %v7770
        %v7772 = vmul.f32 %v7693, 1.442695
        %v7773 = vpow.pop %v7772
        %v7774 = vmul.f32 %v7694, 1.442695
        %v7775 = vpow.pop %v7774
        %v7776 = vmul.f32 %v7695, 1.442695
        %v7777 = vpow.pop %v7776
        %v7778 = vmul.f32 %v7696, 1.442695
        %v7779 = vpow.pop %v7778
        %v7780 = vmul.f32 %v7697, 1.442695
        %v7781 = vpow.pop %v7780
        %v7782 = vmul.f32 %v7698, 1.442695
        %v7783 = vpow.pop %v7782
        %v7784 = vmul.f32 %v7699, 1.442695
        %v7785 = vpow.pop %v7784
        %v7786 = vmul.f32 %v7700, 1.442695
        %v7787 = vpow.pop %v7786
        %v7788 = vmul.f32 %v7701, 1.442695
        %v7789 = vpow.pop %v7788
        %v7790 = vmul.f32 %v7702, 1.442695
        %v7791 = vpow.pop %v7790
        %v7792 = vmul.f32 %v7703, 1.442695
        %v7793 = vpow.pop %v7792
        %v7794 = vmul.f32 %v7704, 1.442695
        %v7795 = vpow.pop %v7794
        %v7796 = vmul.f32 %v7705, 1.442695
        %v7797 = vpow.pop %v7796
        %v7798 = vmul.f32 %v7706, 1.442695
        %v7799 = vpow.pop %v7798
        %v7800 = vmul.f32 %v7707, 1.442695
        %v7801 = vpow.pop %v7800
        %v7802 = vmul.f32 %v7708, 1.442695
        %v7803 = vpow.pop %v7802
        %v7804 = vmul.f32 %v7709, 1.442695
        %v7805 = vpow.pop %v7804
        %v7806 = vadd.f32 %v7711, 1.0
        %v7807 = vadd.f32 %v7713, 1.0
        %v7808 = vadd.f32 %v7715, 1.0
        %v7809 = vadd.f32 %v7717, 1.0
        %v7810 = vadd.f32 %v7719, 1.0
        %v7811 = vadd.f32 %v7721, 1.0
        %v7812 = vadd.f32 %v7723, 1.0
        %v7813 = vadd.f32 %v7725, 1.0
        %v7814 = vadd.f32 %v7727, 1.0
        %v7815 = vadd.f32 %v7729, 1.0
        %v7816 = vadd.f32 %v7731, 1.0
        %v7817 = vadd.f32 %v7733, 1.0
        %v7818 = vadd.f32 %v7735, 1.0
        %v7819 = vadd.f32 %v7737, 1.0
        %v7820 = vadd.f32 %v7739, 1.0
        %v7821 = vadd.f32 %v7741, 1.0
        %v7822 = vadd.f32 %v7743, 1.0
        %v7823 = vadd.f32 %v7745, 1.0
        %v7824 = vadd.f32 %v7747, 1.0
        %v7825 = vadd.f32 %v7749, 1.0
        %v7826 = vadd.f32 %v7751, 1.0
        %v7827 = vadd.f32 %v7753, 1.0
        %v7828 = vadd.f32 %v7755, 1.0
        %v7829 = vadd.f32 %v7757, 1.0
        %v7830 = vadd.f32 %v7759, 1.0
        %v7831 = vadd.f32 %v7761, 1.0
        %v7832 = vadd.f32 %v7763, 1.0
        %v7833 = vadd.f32 %v7765, 1.0
        %v7834 = vadd.f32 %v7767, 1.0
        %v7835 = vadd.f32 %v7769, 1.0
        %v7836 = vadd.f32 %v7771, 1.0
        %v7837 = vadd.f32 %v7773, 1.0
        %v7838 = vadd.f32 %v7775, 1.0
        %v7839 = vadd.f32 %v7777, 1.0
        %v7840 = vadd.f32 %v7779, 1.0
        %v7841 = vadd.f32 %v7781, 1.0
        %v7842 = vadd.f32 %v7783, 1.0
        %v7843 = vadd.f32 %v7785, 1.0
        %v7844 = vadd.f32 %v7787, 1.0
        %v7845 = vadd.f32 %v7789, 1.0
        %v7846 = vadd.f32 %v7791, 1.0
        %v7847 = vadd.f32 %v7793, 1.0
        %v7848 = vadd.f32 %v7795, 1.0
        %v7849 = vadd.f32 %v7797, 1.0
        %v7850 = vadd.f32 %v7799, 1.0
        %v7851 = vadd.f32 %v7801, 1.0
        %v7852 = vadd.f32 %v7803, 1.0
        %v7853 = vadd.f32 %v7805, 1.0
        %v7854 = vrcp.pop %v7806
        %v7855 = vrcp.pop %v7807
        %v7856 = vrcp.pop %v7808
        %v7857 = vrcp.pop %v7809
        %v7858 = vrcp.pop %v7810
        %v7859 = vrcp.pop %v7811
        %v7860 = vrcp.pop %v7812
        %v7861 = vrcp.pop %v7813
        %v7862 = vrcp.pop %v7814
        %v7863 = vrcp.pop %v7815
        %v7864 = vrcp.pop %v7816
        %v7865 = vrcp.pop %v7817
        %v7866 = vrcp.pop %v7818
        %v7867 = vrcp.pop %v7819
        %v7868 = vrcp.pop %v7820
        %v7869 = vrcp.pop %v7821
        %v7870 = vrcp.pop %v7822
        %v7871 = vrcp.pop %v7823
        %v7872 = vrcp.pop %v7824
        %v7873 = vrcp.pop %v7825
        %v7874 = vrcp.pop %v7826
        %v7875 = vrcp.pop %v7827
        %v7876 = vrcp.pop %v7828
        %v7877 = vrcp.pop %v7829
        %v7878 = vrcp.pop %v7830
        %v7879 = vrcp.pop %v7831
        %v7880 = vrcp.pop %v7832
        %v7881 = vrcp.pop %v7833
        %v7882 = vrcp.pop %v7834
        %v7883 = vrcp.pop %v7835
        %v7884 = vrcp.pop %v7836
        %v7885 = vrcp.pop %v7837
        %v7886 = vrcp.pop %v7838
        %v7887 = vrcp.pop %v7839
        %v7888 = vrcp.pop %v7840
        %v7889 = vrcp.pop %v7841
        %v7890 = vrcp.pop %v7842
        %v7891 = vrcp.pop %v7843
        %v7892 = vrcp.pop %v7844
        %v7893 = vrcp.pop %v7845
        %v7894 = vrcp.pop %v7846
        %v7895 = vrcp.pop %v7847
        %v7896 = vrcp.pop %v7848
        %v7897 = vrcp.pop %v7849
        %v7898 = vrcp.pop %v7850
        %v7899 = vrcp.pop %v7851
        %v7900 = vrcp.pop %v7852
        %v7901 = vrcp.pop %v7853
        %7902 = vst [vmem:[%s676] sm:$0xff] %v7854
        %7903 = vst [vmem:[%s676 + $0x8] sm:$0xff] %v7857
        %7904 = vst [vmem:[%s676 + $0x10] sm:$0xff] %v7860
        %7905 = vst [vmem:[%s676 + $0x18] sm:$0xff] %v7863
        %7906 = vst [vmem:[%s676 + $0x20] sm:$0xff] %v7866
        %7907 = vst [vmem:[%s676 + $0x28] sm:$0xff] %v7869
        %7908 = vst [vmem:[%s676 + $0x30] sm:$0xff] %v7872
        %7909 = vst [vmem:[%s676 + $0x38] sm:$0xff] %v7875
        %7910 = vst [vmem:[%s676 + $0x40] sm:$0xff] %v7878
        %7911 = vst [vmem:[%s676 + $0x48] sm:$0xff] %v7881
        %7912 = vst [vmem:[%s676 + $0x50] sm:$0xff] %v7884
        %7913 = vst [vmem:[%s676 + $0x58] sm:$0xff] %v7887
        %7914 = vst [vmem:[%s676 + $0x60] sm:$0xff] %v7890
        %7915 = vst [vmem:[%s676 + $0x68] sm:$0xff] %v7893
        %7916 = vst [vmem:[%s676 + $0x70] sm:$0xff] %v7896
        %7917 = vst [vmem:[%s676 + $0x78] sm:$0xff] %v7899
        %s7918 = scalar_lea.vmem %s676, 128 [#allocation2]
        %7919 = vst [vmem:[%s7918] sm:$0xff] %v7855
        %7920 = vst [vmem:[%s7918 + $0x8] sm:$0xff] %v7858
        %7921 = vst [vmem:[%s7918 + $0x10] sm:$0xff] %v7861
        %7922 = vst [vmem:[%s7918 + $0x18] sm:$0xff] %v7864
        %7923 = vst [vmem:[%s7918 + $0x20] sm:$0xff] %v7867
        %7924 = vst [vmem:[%s7918 + $0x28] sm:$0xff] %v7870
        %7925 = vst [vmem:[%s7918 + $0x30] sm:$0xff] %v7873
        %7926 = vst [vmem:[%s7918 + $0x38] sm:$0xff] %v7876
        %7927 = vst [vmem:[%s7918 + $0x40] sm:$0xff] %v7879
        %7928 = vst [vmem:[%s7918 + $0x48] sm:$0xff] %v7882
        %7929 = vst [vmem:[%s7918 + $0x50] sm:$0xff] %v7885
        %7930 = vst [vmem:[%s7918 + $0x58] sm:$0xff] %v7888
        %7931 = vst [vmem:[%s7918 + $0x60] sm:$0xff] %v7891
        %7932 = vst [vmem:[%s7918 + $0x68] sm:$0xff] %v7894
        %7933 = vst [vmem:[%s7918 + $0x70] sm:$0xff] %v7897
        %7934 = vst [vmem:[%s7918 + $0x78] sm:$0xff] %v7900
        %s7935 = scalar_lea.vmem %s676, 256 [#allocation2]
        %7936 = vst [vmem:[%s7935] sm:$0xff] %v7856
        %7937 = vst [vmem:[%s7935 + $0x8] sm:$0xff] %v7859
        %7938 = vst [vmem:[%s7935 + $0x10] sm:$0xff] %v7862
        %7939 = vst [vmem:[%s7935 + $0x18] sm:$0xff] %v7865
        %7940 = vst [vmem:[%s7935 + $0x20] sm:$0xff] %v7868
        %7941 = vst [vmem:[%s7935 + $0x28] sm:$0xff] %v7871
        %7942 = vst [vmem:[%s7935 + $0x30] sm:$0xff] %v7874
        %7943 = vst [vmem:[%s7935 + $0x38] sm:$0xff] %v7877
        %7944 = vst [vmem:[%s7935 + $0x40] sm:$0xff] %v7880
        %7945 = vst [vmem:[%s7935 + $0x48] sm:$0xff] %v7883
        %7946 = vst [vmem:[%s7935 + $0x50] sm:$0xff] %v7886
        %7947 = vst [vmem:[%s7935 + $0x58] sm:$0xff] %v7889
        %7948 = vst [vmem:[%s7935 + $0x60] sm:$0xff] %v7892
        %7949 = vst [vmem:[%s7935 + $0x68] sm:$0xff] %v7895
        %7950 = vst [vmem:[%s7935 + $0x70] sm:$0xff] %v7898
        %7951 = vst [vmem:[%s7935 + $0x78] sm:$0xff] %v7901
        %s7952 = sand.u32 %s511, 1
        %s7953 = scalar_lea.sflag [#allocation3], %s7952
        %s7954 = sand.u32 %s511, 1
        %s7955 = smul.addr %s7954, 384
        %s7956 = scalar_lea.vmem [#allocation2], %s7955
        // Predicated region
        $region109: #{conv_decoder_forward.1} parent=107 // pred_check
          %p7957 = pneg %p521
        $region110: #{conv_decoder_forward.1} parent=107 // pred_check_branch
          %7959 = sbr.rel (%p7957) target = $region112
        $region111: #{conv_decoder_forward.1} parent=107 // pred_region
          %s7961 = ssub.s32 6144, 6144
          %7962 = vsyncadd %s7953, %s7961
          %s7963 = smul.addr %s36, 48
          %s7964 = smul.addr %s7963, 128
          %s7965 = scalar_lea.hbm %s22, %s7964
          %s7966 = sshll.u32 %s7956, 4
          %s7967 = int_to_ptr.vmem [resolvable:$true] %s7966
          %7972 = dma.vmem_to_hbm [thread:$0]  %s7967, 6144, %s7965, %s7953, 128, 128, 8
        $region112: #{conv_decoder_forward.1} parent=107 // pred_fallthru
          _
      $region108: #{conv_decoder_forward.1} parent=5 // pred_fallthru
        _
      %p7973 = scmp.le.s32.totalorder 2, %s31
      // Predicated region
      $region113: #{conv_decoder_forward.1} parent=5 // pred_check
        %p7974 = pneg %p7973
      $region114: #{conv_decoder_forward.1} parent=5 // pred_check_branch
        %7976 = sbr.rel (%p7974) target = $region116
      $region115: #{conv_decoder_forward.1} parent=5 // pred_region
        %s7977 = ssub.s32 %s31, 2
        // Predicated region
        $region117: #{conv_decoder_forward.1} parent=115 // pred_check
          %p7978 = pneg %p527
        $region118: #{conv_decoder_forward.1} parent=115 // pred_check_branch
          %7980 = sbr.rel (%p7978) target = $region120
        $region119: #{conv_decoder_forward.1} parent=115 // pred_region
          %s7981 = sand.u32 %s512, 1
          %s7982 = scalar_lea.sflag [#allocation3], %s7981
          %s7983 = sand.u32 %s512, 1
          %s7984 = smul.addr %s7983, 384
          %s7985 = scalar_lea.vmem [#allocation2], %s7984
          %7986 = dma.done %s7982, 6144
        $region120: #{conv_decoder_forward.1} parent=115 // pred_fallthru
          _
      $region116: #{conv_decoder_forward.1} parent=5 // pred_fallthru
        _
    $region6: #{conv_decoder_forward.1} parent=1 // loop_footer
      %s35 = sadd.s32 1, %s31
    $region7: #{conv_decoder_forward.1} parent=1 // loop_footer_branch
      %30 = sbr.rel target = $region3
    $region8: #{conv_decoder_forward.1} parent=1 // loop_exit
      _
    %7987 = vsyncpa [#allocation3], 1
    %s7988 = scalar_lea.sflag [#allocation3], 1
    %7989 = vsyncpa %s7988, 1

</llo_original>
